<compile_context>
chip_gen: v6e
topology: v6e:2x2x1
jax: 0.10.0
libtpu: 0.0.40
codegen_flags: <defaults>
</compile_context>

<pallas_src>
import functools

import jax
import jax.numpy as jnp
from jax.experimental import pallas as pl
from jax.experimental.pallas import tpu as pltpu


# ----------------------------------------------------------------------------
# Fused Pallas kernel
# ----------------------------------------------------------------------------
def _lstmvae_kernel(
    # inputs -------------------------------------------------------------
    x_ref,                     # (T*B, D)  time-major flattened input, bf16
    eps_ref,                   # (B, Z)    standard-normal noise, f32
    e0_wih, e0_whh, e0_b,      # encoder layer 0: (D,4H) bf16, (H,4H) bf16, (1,4H) f32
    e1_wih, e1_whh, e1_b,      # encoder layer 1: (H,4H), (H,4H), (1,4H)
    zm_w, zm_b,                # z_mean  linear:  (H,Z) bf16, (1,Z) f32
    zs_w, zs_b,                # z_sigma linear:  (H,Z) bf16, (1,Z) f32
    h0_wih, h0_whh, h0_b,      # hidden layer 0:  (Z,4H), (H,4H), (1,4H)
    h1_wih, h1_whh, h1_b,      # hidden layer 1:  (H,4H), (H,4H), (1,4H)
    o0_wih, o0_whh, o0_b,      # output layer 0:  (H,4D), (D,4D), (1,4D)
    o1_wih, o1_whh, o1_b,      # output layer 1:  (D,4D), (D,4D), (1,4D)
    # outputs ------------------------------------------------------------
    y_ref,                     # (T*B, D)  time-major flattened x_hat, f32
    # scratch ------------------------------------------------------------
    seq_h,                     # (T*B, H)  f32 VMEM sequence staging (H-wide layers)
    seq_d,                     # (T*B, D)  f32 VMEM sequence staging (D-wide layers)
    *, T, B, H, D, Z,
):
    f32 = jnp.float32
    bf16 = jnp.bfloat16

    def mm(a, w_ref):
        # MXU matmul: bf16 operands, f32 accumulation.
        return jnp.dot(a.astype(bf16), w_ref[...], preferred_element_type=f32)

    def lstm_layer(x_seq, wih_ref, whh_ref, b_ref, h_dim, out_ref=None, *,
                   const_input=False):
        """One LSTM layer over the full sequence (PyTorch cell math).

        x_seq : (T*B, Din) value, or (B, Din) when const_input=True (the
                per-step input is identical for every t, e.g. repeated z).
        Gate column order is (i, f, o, g).  The input projection (+ folded
        bias) is hoisted out of the recurrence as one batched MXU matmul.
        If out_ref is given, h_t is staged there at static row offsets;
        the final hidden state is always returned.
        """
        gin = mm(x_seq, wih_ref) + b_ref[...]          # (T*B, 4h) or (B, 4h), f32
        whh = whh_ref[...]                             # (h, 4h) bf16, loaded once
        h = jnp.zeros((B, h_dim), f32)
        c = jnp.zeros((B, h_dim), f32)
        for t in range(T):                             # static full unroll
            g_t = gin if const_input else gin[t * B:(t + 1) * B, :]
            gates = g_t + jnp.dot(h.astype(bf16), whh,
                                  preferred_element_type=f32)
            sig = jax.nn.sigmoid(gates[:, :3 * h_dim])   # i | f | o
            g = jnp.tanh(gates[:, 3 * h_dim:])           # g
            i_g = sig[:, :h_dim]
            f_g = sig[:, h_dim:2 * h_dim]
            o_g = sig[:, 2 * h_dim:3 * h_dim]
            c = f_g * c + i_g * g
            h = o_g * jnp.tanh(c)
            if out_ref is not None:
                out_ref[t * B:(t + 1) * B, :] = h        # static-offset VMEM store
        return h

    x = x_ref[...]                                       # (T*B, D) bf16

    # --- encoder_LSTM (2 layers).  Layer-1 output is only consumed at the
    #     final timestep, so it stores no sequence and takes tanh once.
    lstm_layer(x, e0_wih, e0_whh, e0_b, H, out_ref=seq_h)
    e1 = seq_h[...]
    h_last = jnp.tanh(lstm_layer(e1, e1_wih, e1_whh, e1_b, H))   # (B, H)

    # --- VAE head fused as the encoder epilogue (h_last still in vregs).
    mean = jnp.maximum(mm(h_last, zm_w) + zm_b[...], 0.0)
    sigma = jnp.maximum(mm(h_last, zs_w) + zs_b[...], 0.0)
    z = mean + jnp.exp(sigma * 0.5) * eps_ref[...]                # (B, Z)

    # --- hidden_LSTM on repeated z: per-step input projection is constant,
    #     so repeated_z is never materialized.
    lstm_layer(z, h0_wih, h0_whh, h0_b, H, out_ref=seq_h, const_input=True)
    d1 = seq_h[...]
    lstm_layer(d1, h1_wih, h1_whh, h1_b, H, out_ref=seq_h)
    dec = jnp.tanh(seq_h[...])                                    # decode_h

    # --- output_LSTM (hidden_size -> input_size, 2 layers) + tanh.
    lstm_layer(dec, o0_wih, o0_whh, o0_b, D, out_ref=seq_d)
    r1 = seq_d[...]
    lstm_layer(r1, o1_wih, o1_whh, o1_b, D, out_ref=seq_d)
    y_ref[...] = jnp.tanh(seq_d[...])                             # single slab store


# ----------------------------------------------------------------------------
# Wrapper around the single pallas_call
# ----------------------------------------------------------------------------
_VMEM_SPEC = pl.BlockSpec(memory_space=pltpu.MemorySpace.VMEM)


def lstmvae_forward(params, x, eps):
    """x: (B, T, input_size) batch-first; eps: (B, z_size). Returns x_hat (B, T, input_size)."""
    B, T, D = x.shape
    Z = eps.shape[1]
    H = params["enc0"][1].shape[0]          # whh is (H, 4H)

    # Time-major, flattened (T*B, D), bf16 so the hoisted x @ Wih uses the
    # bf16 MXU path.  Glue here is trivial XLA reshapes/transposes.
    x_tm = jnp.transpose(x, (1, 0, 2)).reshape(T * B, D).astype(jnp.bfloat16)

    flat = (
        list(params["enc0"]) + list(params["enc1"])
        + list(params["zm"]) + list(params["zs"])
        + list(params["hid0"]) + list(params["hid1"])
        + list(params["out0"]) + list(params["out1"])
    )

    kernel = functools.partial(_lstmvae_kernel, T=T, B=B, H=H, D=D, Z=Z)
    y = pl.pallas_call(
        kernel,
        out_shape=jax.ShapeDtypeStruct((T * B, D), jnp.float32),
        in_specs=[_VMEM_SPEC] * (2 + len(flat)),
        out_specs=_VMEM_SPEC,
        scratch_shapes=[
            pltpu.VMEM((T * B, H), jnp.float32),
            pltpu.VMEM((T * B, D), jnp.float32),
        ],
        # Working set ≈100 KiB: far below the scoped-VMEM default on v5e/v6e
        # (16/32 MiB) and v7x (32 MiB of 64 MiB physical) — no limit override.
    )(x_tm, eps, *flat)

    return jnp.transpose(y.reshape(T, B, D), (1, 0, 2))


# ----------------------------------------------------------------------------
# Parameter construction (PyTorch-style uniform init)
# ----------------------------------------------------------------------------
def _uniform(key, shape, k, dtype=jnp.float32):
    return jax.random.uniform(key, shape, jnp.float32, minval=-k, maxval=k).astype(dtype)


def make_lstm_layer_params(key, din, h):
    """One LSTM layer.  Gate columns are laid out (i, f, o, g).

    (PyTorch stores gate blocks as (i, f, g, o); to import real weights,
    permute the 4 gate blocks accordingly and transpose: wih = W_ih.T etc.)
    Weights are bf16 (MXU operands); bias (b_ih + b_hh folded) stays f32.
    """
    k = 1.0 / (h ** 0.5)
    k1, k2, k3, k4 = jax.random.split(key, 4)
    wih = _uniform(k1, (din, 4 * h), k, jnp.bfloat16)              # weight_ih.T
    whh = _uniform(k2, (h, 4 * h), k, jnp.bfloat16)                # weight_hh.T
    b = _uniform(k3, (1, 4 * h), k) + _uniform(k4, (1, 4 * h), k)  # b_ih + b_hh
    return (wih, whh, b)


def make_linear_params(key, din, dout):
    k = 1.0 / (din ** 0.5)
    k1, k2 = jax.random.split(key)
    w = _uniform(k1, (din, dout), k, jnp.bfloat16)                 # weight.T
    b = _uniform(k2, (1, dout), k)
    return (w, b)


def make_params(key, input_size, hidden_size, z_size):
    keys = jax.random.split(key, 8)
    return {
        "enc0": make_lstm_layer_params(keys[0], input_size, hidden_size),
        "enc1": make_lstm_layer_params(keys[1], hidden_size, hidden_size),
        "zm": make_linear_params(keys[2], hidden_size, z_size),
        "zs": make_linear_params(keys[3], hidden_size, z_size),
        "hid0": make_lstm_layer_params(keys[4], z_size, hidden_size),
        "hid1": make_lstm_layer_params(keys[5], hidden_size, hidden_size),
        # output_LSTM: hidden_size -> input_size (2 layers)
        "out0": make_lstm_layer_params(keys[6], hidden_size, input_size),
        "out1": make_lstm_layer_params(keys[7], input_size, input_size),
    }


# ----------------------------------------------------------------------------
if __name__ == "__main__":
    batch_size = 2
    time_step = 8
    input_size = 16
    hidden_size = 32
    z_size = 8

    root = jax.random.PRNGKey(0)
    k_params, k_x, k_eps = jax.random.split(root, 3)

    params = make_params(k_params, input_size, hidden_size, z_size)
    x = jax.random.normal(k_x, (batch_size, time_step, input_size), jnp.float32)
    # deterministic stand-in for torch.randn in reparameterization
    eps = jax.random.normal(k_eps, (batch_size, z_size), jnp.float32)

    x_hat = jax.jit(lstmvae_forward)(params, x, eps)
    jax.block_until_ready(x_hat)

    assert x_hat.shape == (batch_size, time_step, input_size)
    assert bool(jnp.all(jnp.isfinite(x_hat)))
    print("KERNEL_OK")
</pallas_src>

<mosaic_0001>
module attributes {stable_mosaic.version = 11 : i64} {
  func.func @_lstmvae_kernel(%arg0: memref<16x16xbf16, #tpu.memory_space<vmem>>, %arg1: memref<2x8xf32, #tpu.memory_space<vmem>>, %arg2: memref<16x128xbf16, #tpu.memory_space<vmem>>, %arg3: memref<32x128xbf16, #tpu.memory_space<vmem>>, %arg4: memref<1x128xf32, #tpu.memory_space<vmem>>, %arg5: memref<32x128xbf16, #tpu.memory_space<vmem>>, %arg6: memref<32x128xbf16, #tpu.memory_space<vmem>>, %arg7: memref<1x128xf32, #tpu.memory_space<vmem>>, %arg8: memref<32x8xbf16, #tpu.memory_space<vmem>>, %arg9: memref<1x8xf32, #tpu.memory_space<vmem>>, %arg10: memref<32x8xbf16, #tpu.memory_space<vmem>>, %arg11: memref<1x8xf32, #tpu.memory_space<vmem>>, %arg12: memref<8x128xbf16, #tpu.memory_space<vmem>>, %arg13: memref<32x128xbf16, #tpu.memory_space<vmem>>, %arg14: memref<1x128xf32, #tpu.memory_space<vmem>>, %arg15: memref<32x128xbf16, #tpu.memory_space<vmem>>, %arg16: memref<32x128xbf16, #tpu.memory_space<vmem>>, %arg17: memref<1x128xf32, #tpu.memory_space<vmem>>, %arg18: memref<32x64xbf16, #tpu.memory_space<vmem>>, %arg19: memref<16x64xbf16, #tpu.memory_space<vmem>>, %arg20: memref<1x64xf32, #tpu.memory_space<vmem>>, %arg21: memref<16x64xbf16, #tpu.memory_space<vmem>>, %arg22: memref<16x64xbf16, #tpu.memory_space<vmem>>, %arg23: memref<1x64xf32, #tpu.memory_space<vmem>>, %arg24: memref<16x16xf32, #tpu.memory_space<vmem>>, %arg25: memref<16x32xf32, #tpu.memory_space<vmem>>, %arg26: memref<16x16xf32, #tpu.memory_space<vmem>>) attributes {dimension_semantics = [], scalar_prefetch = 0 : i64, scratch_operands = 2 : i64, tpu.core_type = #tpu.core_type<tc>} {
    %c0 = arith.constant 0 : index
    %c0_0 = arith.constant 0 : index
    %0 = vector.load %arg0[%c0, %c0_0] : memref<16x16xbf16, #tpu.memory_space<vmem>>, vector<16x16xbf16>
    %c0_1 = arith.constant 0 : index
    %c0_2 = arith.constant 0 : index
    %1 = vector.load %arg2[%c0_1, %c0_2] : memref<16x128xbf16, #tpu.memory_space<vmem>>, vector<16x128xbf16>
    %cst = arith.constant dense<0.000000e+00> : vector<16x128xf32>
    %2 = tpu.matmul %0, %1, %cst {dimension_numbers = #tpu.dot_dimension_numbers<[1], [0], [0], [1], [0, 0, 1, 1], [], []>} : vector<16x16xbf16>, vector<16x128xbf16>, vector<16x128xf32> -> vector<16x128xf32>
    %c0_3 = arith.constant 0 : index
    %c0_4 = arith.constant 0 : index
    %3 = vector.load %arg4[%c0_3, %c0_4] : memref<1x128xf32, #tpu.memory_space<vmem>>, vector<1x128xf32>
    %4 = vector.broadcast %3 : vector<1x128xf32> to vector<16x128xf32>
    %5 = arith.addf %2, %4 : vector<16x128xf32>
    %c0_5 = arith.constant 0 : index
    %c0_6 = arith.constant 0 : index
    %6 = vector.load %arg3[%c0_5, %c0_6] : memref<32x128xbf16, #tpu.memory_space<vmem>>, vector<32x128xbf16>
    %cst_7 = arith.constant 0.000000e+00 : f32
    %7 = vector.broadcast %cst_7 : f32 to vector<2x32xf32>
    %cst_8 = arith.constant 0.000000e+00 : f32
    %8 = vector.broadcast %cst_8 : f32 to vector<2x32xf32>
    %9 = vector.extract_strided_slice %5 {offsets = [0, 0], sizes = [2, 128], strides = [1, 1]} : vector<16x128xf32> to vector<2x128xf32>
    %10 = arith.truncf %7 : vector<2x32xf32> to vector<2x32xbf16>
    %cst_9 = arith.constant dense<0.000000e+00> : vector<2x128xf32>
    %11 = tpu.matmul %10, %6, %cst_9 {dimension_numbers = #tpu.dot_dimension_numbers<[1], [0], [0], [1], [0, 0, 1, 1], [], []>} : vector<2x32xbf16>, vector<32x128xbf16>, vector<2x128xf32> -> vector<2x128xf32>
    %12 = arith.addf %9, %11 : vector<2x128xf32>
    %13 = vector.extract_strided_slice %12 {offsets = [0, 0], sizes = [2, 96], strides = [1, 1]} : vector<2x128xf32> to vector<2x96xf32>
    %14 = arith.negf %13 : vector<2x96xf32>
    %15 = math.exp %14 : vector<2x96xf32>
    %cst_10 = arith.constant 1.000000e+00 : f32
    %16 = vector.broadcast %cst_10 : f32 to vector<2x96xf32>
    %17 = arith.addf %16, %15 : vector<2x96xf32>
    %18 = arith.divf %16, %17 : vector<2x96xf32>
    %19 = vector.extract_strided_slice %12 {offsets = [0, 96], sizes = [2, 32], strides = [1, 1]} : vector<2x128xf32> to vector<2x32xf32>
    %20 = math.tanh %19 : vector<2x32xf32>
    %21 = vector.extract_strided_slice %18 {offsets = [0, 0], sizes = [2, 32], strides = [1, 1]} : vector<2x96xf32> to vector<2x32xf32>
    %22 = vector.extract_strided_slice %18 {offsets = [0, 32], sizes = [2, 32], strides = [1, 1]} : vector<2x96xf32> to vector<2x32xf32>
    %23 = vector.extract_strided_slice %18 {offsets = [0, 64], sizes = [2, 32], strides = [1, 1]} : vector<2x96xf32> to vector<2x32xf32>
    %24 = arith.mulf %22, %8 : vector<2x32xf32>
    %25 = arith.mulf %21, %20 : vector<2x32xf32>
    %26 = arith.addf %24, %25 : vector<2x32xf32>
    %27 = math.tanh %26 : vector<2x32xf32>
    %28 = arith.mulf %23, %27 : vector<2x32xf32>
    %c0_11 = arith.constant 0 : index
    %c0_12 = arith.constant 0 : index
    %29 = vector.load %arg25[%c0_11, %c0_12] : memref<16x32xf32, #tpu.memory_space<vmem>>, vector<2x32xf32>
    tpu.vector_store %arg25[%c0_11, %c0_12], %28 {strides = array<i32>} : memref<16x32xf32, #tpu.memory_space<vmem>>, vector<2x32xf32>,
    %30 = vector.extract_strided_slice %5 {offsets = [2, 0], sizes = [2, 128], strides = [1, 1]} : vector<16x128xf32> to vector<2x128xf32>
    %31 = arith.truncf %28 : vector<2x32xf32> to vector<2x32xbf16>
    %cst_13 = arith.constant dense<0.000000e+00> : vector<2x128xf32>
    %32 = tpu.matmul %31, %6, %cst_13 {dimension_numbers = #tpu.dot_dimension_numbers<[1], [0], [0], [1], [0, 0, 1, 1], [], []>} : vector<2x32xbf16>, vector<32x128xbf16>, vector<2x128xf32> -> vector<2x128xf32>
    %33 = arith.addf %30, %32 : vector<2x128xf32>
    %34 = vector.extract_strided_slice %33 {offsets = [0, 0], sizes = [2, 96], strides = [1, 1]} : vector<2x128xf32> to vector<2x96xf32>
    %35 = arith.negf %34 : vector<2x96xf32>
    %36 = math.exp %35 : vector<2x96xf32>
    %cst_14 = arith.constant 1.000000e+00 : f32
    %37 = vector.broadcast %cst_14 : f32 to vector<2x96xf32>
    %38 = arith.addf %37, %36 : vector<2x96xf32>
    %39 = arith.divf %37, %38 : vector<2x96xf32>
    %40 = vector.extract_strided_slice %33 {offsets = [0, 96], sizes = [2, 32], strides = [1, 1]} : vector<2x128xf32> to vector<2x32xf32>
    %41 = math.tanh %40 : vector<2x32xf32>
    %42 = vector.extract_strided_slice %39 {offsets = [0, 0], sizes = [2, 32], strides = [1, 1]} : vector<2x96xf32> to vector<2x32xf32>
    %43 = vector.extract_strided_slice %39 {offsets = [0, 32], sizes = [2, 32], strides = [1, 1]} : vector<2x96xf32> to vector<2x32xf32>
    %44 = vector.extract_strided_slice %39 {offsets = [0, 64], sizes = [2, 32], strides = [1, 1]} : vector<2x96xf32> to vector<2x32xf32>
    %45 = arith.mulf %43, %26 : vector<2x32xf32>
    %46 = arith.mulf %42, %41 : vector<2x32xf32>
    %47 = arith.addf %45, %46 : vector<2x32xf32>
    %48 = math.tanh %47 : vector<2x32xf32>
    %49 = arith.mulf %44, %48 : vector<2x32xf32>
    %c2 = arith.constant 2 : index
    %c0_15 = arith.constant 0 : index
    %50 = vector.load %arg25[%c2, %c0_15] : memref<16x32xf32, #tpu.memory_space<vmem>>, vector<2x32xf32>
    tpu.vector_store %arg25[%c2, %c0_15], %49 {strides = array<i32>} : memref<16x32xf32, #tpu.memory_space<vmem>>, vector<2x32xf32>,
    %51 = vector.extract_strided_slice %5 {offsets = [4, 0], sizes = [2, 128], strides = [1, 1]} : vector<16x128xf32> to vector<2x128xf32>
    %52 = arith.truncf %49 : vector<2x32xf32> to vector<2x32xbf16>
    %cst_16 = arith.constant dense<0.000000e+00> : vector<2x128xf32>
    %53 = tpu.matmul %52, %6, %cst_16 {dimension_numbers = #tpu.dot_dimension_numbers<[1], [0], [0], [1], [0, 0, 1, 1], [], []>} : vector<2x32xbf16>, vector<32x128xbf16>, vector<2x128xf32> -> vector<2x128xf32>
    %54 = arith.addf %51, %53 : vector<2x128xf32>
    %55 = vector.extract_strided_slice %54 {offsets = [0, 0], sizes = [2, 96], strides = [1, 1]} : vector<2x128xf32> to vector<2x96xf32>
    %56 = arith.negf %55 : vector<2x96xf32>
    %57 = math.exp %56 : vector<2x96xf32>
    %cst_17 = arith.constant 1.000000e+00 : f32
    %58 = vector.broadcast %cst_17 : f32 to vector<2x96xf32>
    %59 = arith.addf %58, %57 : vector<2x96xf32>
    %60 = arith.divf %58, %59 : vector<2x96xf32>
    %61 = vector.extract_strided_slice %54 {offsets = [0, 96], sizes = [2, 32], strides = [1, 1]} : vector<2x128xf32> to vector<2x32xf32>
    %62 = math.tanh %61 : vector<2x32xf32>
    %63 = vector.extract_strided_slice %60 {offsets = [0, 0], sizes = [2, 32], strides = [1, 1]} : vector<2x96xf32> to vector<2x32xf32>
    %64 = vector.extract_strided_slice %60 {offsets = [0, 32], sizes = [2, 32], strides = [1, 1]} : vector<2x96xf32> to vector<2x32xf32>
    %65 = vector.extract_strided_slice %60 {offsets = [0, 64], sizes = [2, 32], strides = [1, 1]} : vector<2x96xf32> to vector<2x32xf32>
    %66 = arith.mulf %64, %47 : vector<2x32xf32>
    %67 = arith.mulf %63, %62 : vector<2x32xf32>
    %68 = arith.addf %66, %67 : vector<2x32xf32>
    %69 = math.tanh %68 : vector<2x32xf32>
    %70 = arith.mulf %65, %69 : vector<2x32xf32>
    %c4 = arith.constant 4 : index
    %c0_18 = arith.constant 0 : index
    %71 = vector.load %arg25[%c4, %c0_18] : memref<16x32xf32, #tpu.memory_space<vmem>>, vector<2x32xf32>
    tpu.vector_store %arg25[%c4, %c0_18], %70 {strides = array<i32>} : memref<16x32xf32, #tpu.memory_space<vmem>>, vector<2x32xf32>,
    %72 = vector.extract_strided_slice %5 {offsets = [6, 0], sizes = [2, 128], strides = [1, 1]} : vector<16x128xf32> to vector<2x128xf32>
    %73 = arith.truncf %70 : vector<2x32xf32> to vector<2x32xbf16>
    %cst_19 = arith.constant dense<0.000000e+00> : vector<2x128xf32>
    %74 = tpu.matmul %73, %6, %cst_19 {dimension_numbers = #tpu.dot_dimension_numbers<[1], [0], [0], [1], [0, 0, 1, 1], [], []>} : vector<2x32xbf16>, vector<32x128xbf16>, vector<2x128xf32> -> vector<2x128xf32>
    %75 = arith.addf %72, %74 : vector<2x128xf32>
    %76 = vector.extract_strided_slice %75 {offsets = [0, 0], sizes = [2, 96], strides = [1, 1]} : vector<2x128xf32> to vector<2x96xf32>
    %77 = arith.negf %76 : vector<2x96xf32>
    %78 = math.exp %77 : vector<2x96xf32>
    %cst_20 = arith.constant 1.000000e+00 : f32
    %79 = vector.broadcast %cst_20 : f32 to vector<2x96xf32>
    %80 = arith.addf %79, %78 : vector<2x96xf32>
    %81 = arith.divf %79, %80 : vector<2x96xf32>
    %82 = vector.extract_strided_slice %75 {offsets = [0, 96], sizes = [2, 32], strides = [1, 1]} : vector<2x128xf32> to vector<2x32xf32>
    %83 = math.tanh %82 : vector<2x32xf32>
    %84 = vector.extract_strided_slice %81 {offsets = [0, 0], sizes = [2, 32], strides = [1, 1]} : vector<2x96xf32> to vector<2x32xf32>
    %85 = vector.extract_strided_slice %81 {offsets = [0, 32], sizes = [2, 32], strides = [1, 1]} : vector<2x96xf32> to vector<2x32xf32>
    %86 = vector.extract_strided_slice %81 {offsets = [0, 64], sizes = [2, 32], strides = [1, 1]} : vector<2x96xf32> to vector<2x32xf32>
    %87 = arith.mulf %85, %68 : vector<2x32xf32>
    %88 = arith.mulf %84, %83 : vector<2x32xf32>
    %89 = arith.addf %87, %88 : vector<2x32xf32>
    %90 = math.tanh %89 : vector<2x32xf32>
    %91 = arith.mulf %86, %90 : vector<2x32xf32>
    %c6 = arith.constant 6 : index
    %c0_21 = arith.constant 0 : index
    %92 = vector.load %arg25[%c6, %c0_21] : memref<16x32xf32, #tpu.memory_space<vmem>>, vector<2x32xf32>
    tpu.vector_store %arg25[%c6, %c0_21], %91 {strides = array<i32>} : memref<16x32xf32, #tpu.memory_space<vmem>>, vector<2x32xf32>,
    %93 = vector.extract_strided_slice %5 {offsets = [8, 0], sizes = [2, 128], strides = [1, 1]} : vector<16x128xf32> to vector<2x128xf32>
    %94 = arith.truncf %91 : vector<2x32xf32> to vector<2x32xbf16>
    %cst_22 = arith.constant dense<0.000000e+00> : vector<2x128xf32>
    %95 = tpu.matmul %94, %6, %cst_22 {dimension_numbers = #tpu.dot_dimension_numbers<[1], [0], [0], [1], [0, 0, 1, 1], [], []>} : vector<2x32xbf16>, vector<32x128xbf16>, vector<2x128xf32> -> vector<2x128xf32>
    %96 = arith.addf %93, %95 : vector<2x128xf32>
    %97 = vector.extract_strided_slice %96 {offsets = [0, 0], sizes = [2, 96], strides = [1, 1]} : vector<2x128xf32> to vector<2x96xf32>
    %98 = arith.negf %97 : vector<2x96xf32>
    %99 = math.exp %98 : vector<2x96xf32>
    %cst_23 = arith.constant 1.000000e+00 : f32
    %100 = vector.broadcast %cst_23 : f32 to vector<2x96xf32>
    %101 = arith.addf %100, %99 : vector<2x96xf32>
    %102 = arith.divf %100, %101 : vector<2x96xf32>
    %103 = vector.extract_strided_slice %96 {offsets = [0, 96], sizes = [2, 32], strides = [1, 1]} : vector<2x128xf32> to vector<2x32xf32>
    %104 = math.tanh %103 : vector<2x32xf32>
    %105 = vector.extract_strided_slice %102 {offsets = [0, 0], sizes = [2, 32], strides = [1, 1]} : vector<2x96xf32> to vector<2x32xf32>
    %106 = vector.extract_strided_slice %102 {offsets = [0, 32], sizes = [2, 32], strides = [1, 1]} : vector<2x96xf32> to vector<2x32xf32>
    %107 = vector.extract_strided_slice %102 {offsets = [0, 64], sizes = [2, 32], strides = [1, 1]} : vector<2x96xf32> to vector<2x32xf32>
    %108 = arith.mulf %106, %89 : vector<2x32xf32>
    %109 = arith.mulf %105, %104 : vector<2x32xf32>
    %110 = arith.addf %108, %109 : vector<2x32xf32>
    %111 = math.tanh %110 : vector<2x32xf32>
    %112 = arith.mulf %107, %111 : vector<2x32xf32>
    %c8 = arith.constant 8 : index
    %c0_24 = arith.constant 0 : index
    %113 = vector.load %arg25[%c8, %c0_24] : memref<16x32xf32, #tpu.memory_space<vmem>>, vector<2x32xf32>
    tpu.vector_store %arg25[%c8, %c0_24], %112 {strides = array<i32>} : memref<16x32xf32, #tpu.memory_space<vmem>>, vector<2x32xf32>,
    %114 = vector.extract_strided_slice %5 {offsets = [10, 0], sizes = [2, 128], strides = [1, 1]} : vector<16x128xf32> to vector<2x128xf32>
    %115 = arith.truncf %112 : vector<2x32xf32> to vector<2x32xbf16>
    %cst_25 = arith.constant dense<0.000000e+00> : vector<2x128xf32>
    %116 = tpu.matmul %115, %6, %cst_25 {dimension_numbers = #tpu.dot_dimension_numbers<[1], [0], [0], [1], [0, 0, 1, 1], [], []>} : vector<2x32xbf16>, vector<32x128xbf16>, vector<2x128xf32> -> vector<2x128xf32>
    %117 = arith.addf %114, %116 : vector<2x128xf32>
    %118 = vector.extract_strided_slice %117 {offsets = [0, 0], sizes = [2, 96], strides = [1, 1]} : vector<2x128xf32> to vector<2x96xf32>
    %119 = arith.negf %118 : vector<2x96xf32>
    %120 = math.exp %119 : vector<2x96xf32>
    %cst_26 = arith.constant 1.000000e+00 : f32
    %121 = vector.broadcast %cst_26 : f32 to vector<2x96xf32>
    %122 = arith.addf %121, %120 : vector<2x96xf32>
    %123 = arith.divf %121, %122 : vector<2x96xf32>
    %124 = vector.extract_strided_slice %117 {offsets = [0, 96], sizes = [2, 32], strides = [1, 1]} : vector<2x128xf32> to vector<2x32xf32>
    %125 = math.tanh %124 : vector<2x32xf32>
    %126 = vector.extract_strided_slice %123 {offsets = [0, 0], sizes = [2, 32], strides = [1, 1]} : vector<2x96xf32> to vector<2x32xf32>
    %127 = vector.extract_strided_slice %123 {offsets = [0, 32], sizes = [2, 32], strides = [1, 1]} : vector<2x96xf32> to vector<2x32xf32>
    %128 = vector.extract_strided_slice %123 {offsets = [0, 64], sizes = [2, 32], strides = [1, 1]} : vector<2x96xf32> to vector<2x32xf32>
    %129 = arith.mulf %127, %110 : vector<2x32xf32>
    %130 = arith.mulf %126, %125 : vector<2x32xf32>
    %131 = arith.addf %129, %130 : vector<2x32xf32>
    %132 = math.tanh %131 : vector<2x32xf32>
    %133 = arith.mulf %128, %132 : vector<2x32xf32>
    %c10 = arith.constant 10 : index
    %c0_27 = arith.constant 0 : index
    %134 = vector.load %arg25[%c10, %c0_27] : memref<16x32xf32, #tpu.memory_space<vmem>>, vector<2x32xf32>
    tpu.vector_store %arg25[%c10, %c0_27], %133 {strides = array<i32>} : memref<16x32xf32, #tpu.memory_space<vmem>>, vector<2x32xf32>,
    %135 = vector.extract_strided_slice %5 {offsets = [12, 0], sizes = [2, 128], strides = [1, 1]} : vector<16x128xf32> to vector<2x128xf32>
    %136 = arith.truncf %133 : vector<2x32xf32> to vector<2x32xbf16>
    %cst_28 = arith.constant dense<0.000000e+00> : vector<2x128xf32>
    %137 = tpu.matmul %136, %6, %cst_28 {dimension_numbers = #tpu.dot_dimension_numbers<[1], [0], [0], [1], [0, 0, 1, 1], [], []>} : vector<2x32xbf16>, vector<32x128xbf16>, vector<2x128xf32> -> vector<2x128xf32>
    %138 = arith.addf %135, %137 : vector<2x128xf32>
    %139 = vector.extract_strided_slice %138 {offsets = [0, 0], sizes = [2, 96], strides = [1, 1]} : vector<2x128xf32> to vector<2x96xf32>
    %140 = arith.negf %139 : vector<2x96xf32>
    %141 = math.exp %140 : vector<2x96xf32>
    %cst_29 = arith.constant 1.000000e+00 : f32
    %142 = vector.broadcast %cst_29 : f32 to vector<2x96xf32>
    %143 = arith.addf %142, %141 : vector<2x96xf32>
    %144 = arith.divf %142, %143 : vector<2x96xf32>
    %145 = vector.extract_strided_slice %138 {offsets = [0, 96], sizes = [2, 32], strides = [1, 1]} : vector<2x128xf32> to vector<2x32xf32>
    %146 = math.tanh %145 : vector<2x32xf32>
    %147 = vector.extract_strided_slice %144 {offsets = [0, 0], sizes = [2, 32], strides = [1, 1]} : vector<2x96xf32> to vector<2x32xf32>
    %148 = vector.extract_strided_slice %144 {offsets = [0, 32], sizes = [2, 32], strides = [1, 1]} : vector<2x96xf32> to vector<2x32xf32>
    %149 = vector.extract_strided_slice %144 {offsets = [0, 64], sizes = [2, 32], strides = [1, 1]} : vector<2x96xf32> to vector<2x32xf32>
    %150 = arith.mulf %148, %131 : vector<2x32xf32>
    %151 = arith.mulf %147, %146 : vector<2x32xf32>
    %152 = arith.addf %150, %151 : vector<2x32xf32>
    %153 = math.tanh %152 : vector<2x32xf32>
    %154 = arith.mulf %149, %153 : vector<2x32xf32>
    %c12 = arith.constant 12 : index
    %c0_30 = arith.constant 0 : index
    %155 = vector.load %arg25[%c12, %c0_30] : memref<16x32xf32, #tpu.memory_space<vmem>>, vector<2x32xf32>
    tpu.vector_store %arg25[%c12, %c0_30], %154 {strides = array<i32>} : memref<16x32xf32, #tpu.memory_space<vmem>>, vector<2x32xf32>,
    %156 = vector.extract_strided_slice %5 {offsets = [14, 0], sizes = [2, 128], strides = [1, 1]} : vector<16x128xf32> to vector<2x128xf32>
    %157 = arith.truncf %154 : vector<2x32xf32> to vector<2x32xbf16>
    %cst_31 = arith.constant dense<0.000000e+00> : vector<2x128xf32>
    %158 = tpu.matmul %157, %6, %cst_31 {dimension_numbers = #tpu.dot_dimension_numbers<[1], [0], [0], [1], [0, 0, 1, 1], [], []>} : vector<2x32xbf16>, vector<32x128xbf16>, vector<2x128xf32> -> vector<2x128xf32>
    %159 = arith.addf %156, %158 : vector<2x128xf32>
    %160 = vector.extract_strided_slice %159 {offsets = [0, 0], sizes = [2, 96], strides = [1, 1]} : vector<2x128xf32> to vector<2x96xf32>
    %161 = arith.negf %160 : vector<2x96xf32>
    %162 = math.exp %161 : vector<2x96xf32>
    %cst_32 = arith.constant 1.000000e+00 : f32
    %163 = vector.broadcast %cst_32 : f32 to vector<2x96xf32>
    %164 = arith.addf %163, %162 : vector<2x96xf32>
    %165 = arith.divf %163, %164 : vector<2x96xf32>
    %166 = vector.extract_strided_slice %159 {offsets = [0, 96], sizes = [2, 32], strides = [1, 1]} : vector<2x128xf32> to vector<2x32xf32>
    %167 = math.tanh %166 : vector<2x32xf32>
    %168 = vector.extract_strided_slice %165 {offsets = [0, 0], sizes = [2, 32], strides = [1, 1]} : vector<2x96xf32> to vector<2x32xf32>
    %169 = vector.extract_strided_slice %165 {offsets = [0, 32], sizes = [2, 32], strides = [1, 1]} : vector<2x96xf32> to vector<2x32xf32>
    %170 = vector.extract_strided_slice %165 {offsets = [0, 64], sizes = [2, 32], strides = [1, 1]} : vector<2x96xf32> to vector<2x32xf32>
    %171 = arith.mulf %169, %152 : vector<2x32xf32>
    %172 = arith.mulf %168, %167 : vector<2x32xf32>
    %173 = arith.addf %171, %172 : vector<2x32xf32>
    %174 = math.tanh %173 : vector<2x32xf32>
    %175 = arith.mulf %170, %174 : vector<2x32xf32>
    %c14 = arith.constant 14 : index
    %c0_33 = arith.constant 0 : index
    %176 = vector.load %arg25[%c14, %c0_33] : memref<16x32xf32, #tpu.memory_space<vmem>>, vector<2x32xf32>
    tpu.vector_store %arg25[%c14, %c0_33], %175 {strides = array<i32>} : memref<16x32xf32, #tpu.memory_space<vmem>>, vector<2x32xf32>,
    %c0_34 = arith.constant 0 : index
    %c0_35 = arith.constant 0 : index
    %177 = vector.load %arg25[%c0_34, %c0_35] : memref<16x32xf32, #tpu.memory_space<vmem>>, vector<16x32xf32>
    %178 = arith.truncf %177 : vector<16x32xf32> to vector<16x32xbf16>
    %c0_36 = arith.constant 0 : index
    %c0_37 = arith.constant 0 : index
    %179 = vector.load %arg5[%c0_36, %c0_37] : memref<32x128xbf16, #tpu.memory_space<vmem>>, vector<32x128xbf16>
    %cst_38 = arith.constant dense<0.000000e+00> : vector<16x128xf32>
    %180 = tpu.matmul %178, %179, %cst_38 {dimension_numbers = #tpu.dot_dimension_numbers<[1], [0], [0], [1], [0, 0, 1, 1], [], []>} : vector<16x32xbf16>, vector<32x128xbf16>, vector<16x128xf32> -> vector<16x128xf32>
    %c0_39 = arith.constant 0 : index
    %c0_40 = arith.constant 0 : index
    %181 = vector.load %arg7[%c0_39, %c0_40] : memref<1x128xf32, #tpu.memory_space<vmem>>, vector<1x128xf32>
    %182 = vector.broadcast %181 : vector<1x128xf32> to vector<16x128xf32>
    %183 = arith.addf %180, %182 : vector<16x128xf32>
    %c0_41 = arith.constant 0 : index
    %c0_42 = arith.constant 0 : index
    %184 = vector.load %arg6[%c0_41, %c0_42] : memref<32x128xbf16, #tpu.memory_space<vmem>>, vector<32x128xbf16>
    %cst_43 = arith.constant 0.000000e+00 : f32
    %185 = vector.broadcast %cst_43 : f32 to vector<2x32xf32>
    %cst_44 = arith.constant 0.000000e+00 : f32
    %186 = vector.broadcast %cst_44 : f32 to vector<2x32xf32>
    %187 = vector.extract_strided_slice %183 {offsets = [0, 0], sizes = [2, 128], strides = [1, 1]} : vector<16x128xf32> to vector<2x128xf32>
    %188 = arith.truncf %185 : vector<2x32xf32> to vector<2x32xbf16>
    %cst_45 = arith.constant dense<0.000000e+00> : vector<2x128xf32>
    %189 = tpu.matmul %188, %184, %cst_45 {dimension_numbers = #tpu.dot_dimension_numbers<[1], [0], [0], [1], [0, 0, 1, 1], [], []>} : vector<2x32xbf16>, vector<32x128xbf16>, vector<2x128xf32> -> vector<2x128xf32>
    %190 = arith.addf %187, %189 : vector<2x128xf32>
    %191 = vector.extract_strided_slice %190 {offsets = [0, 0], sizes = [2, 96], strides = [1, 1]} : vector<2x128xf32> to vector<2x96xf32>
    %192 = arith.negf %191 : vector<2x96xf32>
    %193 = math.exp %192 : vector<2x96xf32>
    %cst_46 = arith.constant 1.000000e+00 : f32
    %194 = vector.broadcast %cst_46 : f32 to vector<2x96xf32>
    %195 = arith.addf %194, %193 : vector<2x96xf32>
    %196 = arith.divf %194, %195 : vector<2x96xf32>
    %197 = vector.extract_strided_slice %190 {offsets = [0, 96], sizes = [2, 32], strides = [1, 1]} : vector<2x128xf32> to vector<2x32xf32>
    %198 = math.tanh %197 : vector<2x32xf32>
    %199 = vector.extract_strided_slice %196 {offsets = [0, 0], sizes = [2, 32], strides = [1, 1]} : vector<2x96xf32> to vector<2x32xf32>
    %200 = vector.extract_strided_slice %196 {offsets = [0, 32], sizes = [2, 32], strides = [1, 1]} : vector<2x96xf32> to vector<2x32xf32>
    %201 = vector.extract_strided_slice %196 {offsets = [0, 64], sizes = [2, 32], strides = [1, 1]} : vector<2x96xf32> to vector<2x32xf32>
    %202 = arith.mulf %200, %186 : vector<2x32xf32>
    %203 = arith.mulf %199, %198 : vector<2x32xf32>
    %204 = arith.addf %202, %203 : vector<2x32xf32>
    %205 = math.tanh %204 : vector<2x32xf32>
    %206 = arith.mulf %201, %205 : vector<2x32xf32>
    %207 = vector.extract_strided_slice %183 {offsets = [2, 0], sizes = [2, 128], strides = [1, 1]} : vector<16x128xf32> to vector<2x128xf32>
    %208 = arith.truncf %206 : vector<2x32xf32> to vector<2x32xbf16>
    %cst_47 = arith.constant dense<0.000000e+00> : vector<2x128xf32>
    %209 = tpu.matmul %208, %184, %cst_47 {dimension_numbers = #tpu.dot_dimension_numbers<[1], [0], [0], [1], [0, 0, 1, 1], [], []>} : vector<2x32xbf16>, vector<32x128xbf16>, vector<2x128xf32> -> vector<2x128xf32>
    %210 = arith.addf %207, %209 : vector<2x128xf32>
    %211 = vector.extract_strided_slice %210 {offsets = [0, 0], sizes = [2, 96], strides = [1, 1]} : vector<2x128xf32> to vector<2x96xf32>
    %212 = arith.negf %211 : vector<2x96xf32>
    %213 = math.exp %212 : vector<2x96xf32>
    %cst_48 = arith.constant 1.000000e+00 : f32
    %214 = vector.broadcast %cst_48 : f32 to vector<2x96xf32>
    %215 = arith.addf %214, %213 : vector<2x96xf32>
    %216 = arith.divf %214, %215 : vector<2x96xf32>
    %217 = vector.extract_strided_slice %210 {offsets = [0, 96], sizes = [2, 32], strides = [1, 1]} : vector<2x128xf32> to vector<2x32xf32>
    %218 = math.tanh %217 : vector<2x32xf32>
    %219 = vector.extract_strided_slice %216 {offsets = [0, 0], sizes = [2, 32], strides = [1, 1]} : vector<2x96xf32> to vector<2x32xf32>
    %220 = vector.extract_strided_slice %216 {offsets = [0, 32], sizes = [2, 32], strides = [1, 1]} : vector<2x96xf32> to vector<2x32xf32>
    %221 = vector.extract_strided_slice %216 {offsets = [0, 64], sizes = [2, 32], strides = [1, 1]} : vector<2x96xf32> to vector<2x32xf32>
    %222 = arith.mulf %220, %204 : vector<2x32xf32>
    %223 = arith.mulf %219, %218 : vector<2x32xf32>
    %224 = arith.addf %222, %223 : vector<2x32xf32>
    %225 = math.tanh %224 : vector<2x32xf32>
    %226 = arith.mulf %221, %225 : vector<2x32xf32>
    %227 = vector.extract_strided_slice %183 {offsets = [4, 0], sizes = [2, 128], strides = [1, 1]} : vector<16x128xf32> to vector<2x128xf32>
    %228 = arith.truncf %226 : vector<2x32xf32> to vector<2x32xbf16>
    %cst_49 = arith.constant dense<0.000000e+00> : vector<2x128xf32>
    %229 = tpu.matmul %228, %184, %cst_49 {dimension_numbers = #tpu.dot_dimension_numbers<[1], [0], [0], [1], [0, 0, 1, 1], [], []>} : vector<2x32xbf16>, vector<32x128xbf16>, vector<2x128xf32> -> vector<2x128xf32>
    %230 = arith.addf %227, %229 : vector<2x128xf32>
    %231 = vector.extract_strided_slice %230 {offsets = [0, 0], sizes = [2, 96], strides = [1, 1]} : vector<2x128xf32> to vector<2x96xf32>
    %232 = arith.negf %231 : vector<2x96xf32>
    %233 = math.exp %232 : vector<2x96xf32>
    %cst_50 = arith.constant 1.000000e+00 : f32
    %234 = vector.broadcast %cst_50 : f32 to vector<2x96xf32>
    %235 = arith.addf %234, %233 : vector<2x96xf32>
    %236 = arith.divf %234, %235 : vector<2x96xf32>
    %237 = vector.extract_strided_slice %230 {offsets = [0, 96], sizes = [2, 32], strides = [1, 1]} : vector<2x128xf32> to vector<2x32xf32>
    %238 = math.tanh %237 : vector<2x32xf32>
    %239 = vector.extract_strided_slice %236 {offsets = [0, 0], sizes = [2, 32], strides = [1, 1]} : vector<2x96xf32> to vector<2x32xf32>
    %240 = vector.extract_strided_slice %236 {offsets = [0, 32], sizes = [2, 32], strides = [1, 1]} : vector<2x96xf32> to vector<2x32xf32>
    %241 = vector.extract_strided_slice %236 {offsets = [0, 64], sizes = [2, 32], strides = [1, 1]} : vector<2x96xf32> to vector<2x32xf32>
    %242 = arith.mulf %240, %224 : vector<2x32xf32>
    %243 = arith.mulf %239, %238 : vector<2x32xf32>
    %244 = arith.addf %242, %243 : vector<2x32xf32>
    %245 = math.tanh %244 : vector<2x32xf32>
    %246 = arith.mulf %241, %245 : vector<2x32xf32>
    %247 = vector.extract_strided_slice %183 {offsets = [6, 0], sizes = [2, 128], strides = [1, 1]} : vector<16x128xf32> to vector<2x128xf32>
    %248 = arith.truncf %246 : vector<2x32xf32> to vector<2x32xbf16>
    %cst_51 = arith.constant dense<0.000000e+00> : vector<2x128xf32>
    %249 = tpu.matmul %248, %184, %cst_51 {dimension_numbers = #tpu.dot_dimension_numbers<[1], [0], [0], [1], [0, 0, 1, 1], [], []>} : vector<2x32xbf16>, vector<32x128xbf16>, vector<2x128xf32> -> vector<2x128xf32>
    %250 = arith.addf %247, %249 : vector<2x128xf32>
    %251 = vector.extract_strided_slice %250 {offsets = [0, 0], sizes = [2, 96], strides = [1, 1]} : vector<2x128xf32> to vector<2x96xf32>
    %252 = arith.negf %251 : vector<2x96xf32>
    %253 = math.exp %252 : vector<2x96xf32>
    %cst_52 = arith.constant 1.000000e+00 : f32
    %254 = vector.broadcast %cst_52 : f32 to vector<2x96xf32>
    %255 = arith.addf %254, %253 : vector<2x96xf32>
    %256 = arith.divf %254, %255 : vector<2x96xf32>
    %257 = vector.extract_strided_slice %250 {offsets = [0, 96], sizes = [2, 32], strides = [1, 1]} : vector<2x128xf32> to vector<2x32xf32>
    %258 = math.tanh %257 : vector<2x32xf32>
    %259 = vector.extract_strided_slice %256 {offsets = [0, 0], sizes = [2, 32], strides = [1, 1]} : vector<2x96xf32> to vector<2x32xf32>
    %260 = vector.extract_strided_slice %256 {offsets = [0, 32], sizes = [2, 32], strides = [1, 1]} : vector<2x96xf32> to vector<2x32xf32>
    %261 = vector.extract_strided_slice %256 {offsets = [0, 64], sizes = [2, 32], strides = [1, 1]} : vector<2x96xf32> to vector<2x32xf32>
    %262 = arith.mulf %260, %244 : vector<2x32xf32>
    %263 = arith.mulf %259, %258 : vector<2x32xf32>
    %264 = arith.addf %262, %263 : vector<2x32xf32>
    %265 = math.tanh %264 : vector<2x32xf32>
    %266 = arith.mulf %261, %265 : vector<2x32xf32>
    %267 = vector.extract_strided_slice %183 {offsets = [8, 0], sizes = [2, 128], strides = [1, 1]} : vector<16x128xf32> to vector<2x128xf32>
    %268 = arith.truncf %266 : vector<2x32xf32> to vector<2x32xbf16>
    %cst_53 = arith.constant dense<0.000000e+00> : vector<2x128xf32>
    %269 = tpu.matmul %268, %184, %cst_53 {dimension_numbers = #tpu.dot_dimension_numbers<[1], [0], [0], [1], [0, 0, 1, 1], [], []>} : vector<2x32xbf16>, vector<32x128xbf16>, vector<2x128xf32> -> vector<2x128xf32>
    %270 = arith.addf %267, %269 : vector<2x128xf32>
    %271 = vector.extract_strided_slice %270 {offsets = [0, 0], sizes = [2, 96], strides = [1, 1]} : vector<2x128xf32> to vector<2x96xf32>
    %272 = arith.negf %271 : vector<2x96xf32>
    %273 = math.exp %272 : vector<2x96xf32>
    %cst_54 = arith.constant 1.000000e+00 : f32
    %274 = vector.broadcast %cst_54 : f32 to vector<2x96xf32>
    %275 = arith.addf %274, %273 : vector<2x96xf32>
    %276 = arith.divf %274, %275 : vector<2x96xf32>
    %277 = vector.extract_strided_slice %270 {offsets = [0, 96], sizes = [2, 32], strides = [1, 1]} : vector<2x128xf32> to vector<2x32xf32>
    %278 = math.tanh %277 : vector<2x32xf32>
    %279 = vector.extract_strided_slice %276 {offsets = [0, 0], sizes = [2, 32], strides = [1, 1]} : vector<2x96xf32> to vector<2x32xf32>
    %280 = vector.extract_strided_slice %276 {offsets = [0, 32], sizes = [2, 32], strides = [1, 1]} : vector<2x96xf32> to vector<2x32xf32>
    %281 = vector.extract_strided_slice %276 {offsets = [0, 64], sizes = [2, 32], strides = [1, 1]} : vector<2x96xf32> to vector<2x32xf32>
    %282 = arith.mulf %280, %264 : vector<2x32xf32>
    %283 = arith.mulf %279, %278 : vector<2x32xf32>
    %284 = arith.addf %282, %283 : vector<2x32xf32>
    %285 = math.tanh %284 : vector<2x32xf32>
    %286 = arith.mulf %281, %285 : vector<2x32xf32>
    %287 = vector.extract_strided_slice %183 {offsets = [10, 0], sizes = [2, 128], strides = [1, 1]} : vector<16x128xf32> to vector<2x128xf32>
    %288 = arith.truncf %286 : vector<2x32xf32> to vector<2x32xbf16>
    %cst_55 = arith.constant dense<0.000000e+00> : vector<2x128xf32>
    %289 = tpu.matmul %288, %184, %cst_55 {dimension_numbers = #tpu.dot_dimension_numbers<[1], [0], [0], [1], [0, 0, 1, 1], [], []>} : vector<2x32xbf16>, vector<32x128xbf16>, vector<2x128xf32> -> vector<2x128xf32>
    %290 = arith.addf %287, %289 : vector<2x128xf32>
    %291 = vector.extract_strided_slice %290 {offsets = [0, 0], sizes = [2, 96], strides = [1, 1]} : vector<2x128xf32> to vector<2x96xf32>
    %292 = arith.negf %291 : vector<2x96xf32>
    %293 = math.exp %292 : vector<2x96xf32>
    %cst_56 = arith.constant 1.000000e+00 : f32
    %294 = vector.broadcast %cst_56 : f32 to vector<2x96xf32>
    %295 = arith.addf %294, %293 : vector<2x96xf32>
    %296 = arith.divf %294, %295 : vector<2x96xf32>
    %297 = vector.extract_strided_slice %290 {offsets = [0, 96], sizes = [2, 32], strides = [1, 1]} : vector<2x128xf32> to vector<2x32xf32>
    %298 = math.tanh %297 : vector<2x32xf32>
    %299 = vector.extract_strided_slice %296 {offsets = [0, 0], sizes = [2, 32], strides = [1, 1]} : vector<2x96xf32> to vector<2x32xf32>
    %300 = vector.extract_strided_slice %296 {offsets = [0, 32], sizes = [2, 32], strides = [1, 1]} : vector<2x96xf32> to vector<2x32xf32>
    %301 = vector.extract_strided_slice %296 {offsets = [0, 64], sizes = [2, 32], strides = [1, 1]} : vector<2x96xf32> to vector<2x32xf32>
    %302 = arith.mulf %300, %284 : vector<2x32xf32>
    %303 = arith.mulf %299, %298 : vector<2x32xf32>
    %304 = arith.addf %302, %303 : vector<2x32xf32>
    %305 = math.tanh %304 : vector<2x32xf32>
    %306 = arith.mulf %301, %305 : vector<2x32xf32>
    %307 = vector.extract_strided_slice %183 {offsets = [12, 0], sizes = [2, 128], strides = [1, 1]} : vector<16x128xf32> to vector<2x128xf32>
    %308 = arith.truncf %306 : vector<2x32xf32> to vector<2x32xbf16>
    %cst_57 = arith.constant dense<0.000000e+00> : vector<2x128xf32>
    %309 = tpu.matmul %308, %184, %cst_57 {dimension_numbers = #tpu.dot_dimension_numbers<[1], [0], [0], [1], [0, 0, 1, 1], [], []>} : vector<2x32xbf16>, vector<32x128xbf16>, vector<2x128xf32> -> vector<2x128xf32>
    %310 = arith.addf %307, %309 : vector<2x128xf32>
    %311 = vector.extract_strided_slice %310 {offsets = [0, 0], sizes = [2, 96], strides = [1, 1]} : vector<2x128xf32> to vector<2x96xf32>
    %312 = arith.negf %311 : vector<2x96xf32>
    %313 = math.exp %312 : vector<2x96xf32>
    %cst_58 = arith.constant 1.000000e+00 : f32
    %314 = vector.broadcast %cst_58 : f32 to vector<2x96xf32>
    %315 = arith.addf %314, %313 : vector<2x96xf32>
    %316 = arith.divf %314, %315 : vector<2x96xf32>
    %317 = vector.extract_strided_slice %310 {offsets = [0, 96], sizes = [2, 32], strides = [1, 1]} : vector<2x128xf32> to vector<2x32xf32>
    %318 = math.tanh %317 : vector<2x32xf32>
    %319 = vector.extract_strided_slice %316 {offsets = [0, 0], sizes = [2, 32], strides = [1, 1]} : vector<2x96xf32> to vector<2x32xf32>
    %320 = vector.extract_strided_slice %316 {offsets = [0, 32], sizes = [2, 32], strides = [1, 1]} : vector<2x96xf32> to vector<2x32xf32>
    %321 = vector.extract_strided_slice %316 {offsets = [0, 64], sizes = [2, 32], strides = [1, 1]} : vector<2x96xf32> to vector<2x32xf32>
    %322 = arith.mulf %320, %304 : vector<2x32xf32>
    %323 = arith.mulf %319, %318 : vector<2x32xf32>
    %324 = arith.addf %322, %323 : vector<2x32xf32>
    %325 = math.tanh %324 : vector<2x32xf32>
    %326 = arith.mulf %321, %325 : vector<2x32xf32>
    %327 = vector.extract_strided_slice %183 {offsets = [14, 0], sizes = [2, 128], strides = [1, 1]} : vector<16x128xf32> to vector<2x128xf32>
    %328 = arith.truncf %326 : vector<2x32xf32> to vector<2x32xbf16>
    %cst_59 = arith.constant dense<0.000000e+00> : vector<2x128xf32>
    %329 = tpu.matmul %328, %184, %cst_59 {dimension_numbers = #tpu.dot_dimension_numbers<[1], [0], [0], [1], [0, 0, 1, 1], [], []>} : vector<2x32xbf16>, vector<32x128xbf16>, vector<2x128xf32> -> vector<2x128xf32>
    %330 = arith.addf %327, %329 : vector<2x128xf32>
    %331 = vector.extract_strided_slice %330 {offsets = [0, 0], sizes = [2, 96], strides = [1, 1]} : vector<2x128xf32> to vector<2x96xf32>
    %332 = arith.negf %331 : vector<2x96xf32>
    %333 = math.exp %332 : vector<2x96xf32>
    %cst_60 = arith.constant 1.000000e+00 : f32
    %334 = vector.broadcast %cst_60 : f32 to vector<2x96xf32>
    %335 = arith.addf %334, %333 : vector<2x96xf32>
    %336 = arith.divf %334, %335 : vector<2x96xf32>
    %337 = vector.extract_strided_slice %330 {offsets = [0, 96], sizes = [2, 32], strides = [1, 1]} : vector<2x128xf32> to vector<2x32xf32>
    %338 = math.tanh %337 : vector<2x32xf32>
    %339 = vector.extract_strided_slice %336 {offsets = [0, 0], sizes = [2, 32], strides = [1, 1]} : vector<2x96xf32> to vector<2x32xf32>
    %340 = vector.extract_strided_slice %336 {offsets = [0, 32], sizes = [2, 32], strides = [1, 1]} : vector<2x96xf32> to vector<2x32xf32>
    %341 = vector.extract_strided_slice %336 {offsets = [0, 64], sizes = [2, 32], strides = [1, 1]} : vector<2x96xf32> to vector<2x32xf32>
    %342 = arith.mulf %340, %324 : vector<2x32xf32>
    %343 = arith.mulf %339, %338 : vector<2x32xf32>
    %344 = arith.addf %342, %343 : vector<2x32xf32>
    %345 = math.tanh %344 : vector<2x32xf32>
    %346 = arith.mulf %341, %345 : vector<2x32xf32>
    %347 = math.tanh %346 : vector<2x32xf32>
    %348 = arith.truncf %347 : vector<2x32xf32> to vector<2x32xbf16>
    %c0_61 = arith.constant 0 : index
    %c0_62 = arith.constant 0 : index
    %349 = vector.load %arg8[%c0_61, %c0_62] : memref<32x8xbf16, #tpu.memory_space<vmem>>, vector<32x8xbf16>
    %cst_63 = arith.constant dense<0.000000e+00> : vector<2x8xf32>
    %350 = tpu.matmul %348, %349, %cst_63 {dimension_numbers = #tpu.dot_dimension_numbers<[1], [0], [0], [1], [0, 0, 1, 1], [], []>} : vector<2x32xbf16>, vector<32x8xbf16>, vector<2x8xf32> -> vector<2x8xf32>
    %c0_64 = arith.constant 0 : index
    %c0_65 = arith.constant 0 : index
    %351 = vector.load %arg9[%c0_64, %c0_65] : memref<1x8xf32, #tpu.memory_space<vmem>>, vector<1x8xf32>
    %352 = vector.broadcast %351 : vector<1x8xf32> to vector<2x8xf32>
    %353 = arith.addf %350, %352 : vector<2x8xf32>
    %cst_66 = arith.constant 0.000000e+00 : f32
    %354 = vector.broadcast %cst_66 : f32 to vector<2x8xf32>
    %355 = arith.maximumf %353, %354 : vector<2x8xf32>
    %356 = arith.truncf %347 : vector<2x32xf32> to vector<2x32xbf16>
    %c0_67 = arith.constant 0 : index
    %c0_68 = arith.constant 0 : index
    %357 = vector.load %arg10[%c0_67, %c0_68] : memref<32x8xbf16, #tpu.memory_space<vmem>>, vector<32x8xbf16>
    %cst_69 = arith.constant dense<0.000000e+00> : vector<2x8xf32>
    %358 = tpu.matmul %356, %357, %cst_69 {dimension_numbers = #tpu.dot_dimension_numbers<[1], [0], [0], [1], [0, 0, 1, 1], [], []>} : vector<2x32xbf16>, vector<32x8xbf16>, vector<2x8xf32> -> vector<2x8xf32>
    %c0_70 = arith.constant 0 : index
    %c0_71 = arith.constant 0 : index
    %359 = vector.load %arg11[%c0_70, %c0_71] : memref<1x8xf32, #tpu.memory_space<vmem>>, vector<1x8xf32>
    %360 = vector.broadcast %359 : vector<1x8xf32> to vector<2x8xf32>
    %361 = arith.addf %358, %360 : vector<2x8xf32>
    %cst_72 = arith.constant 0.000000e+00 : f32
    %362 = vector.broadcast %cst_72 : f32 to vector<2x8xf32>
    %363 = arith.maximumf %361, %362 : vector<2x8xf32>
    %cst_73 = arith.constant 5.000000e-01 : f32
    %364 = vector.broadcast %cst_73 : f32 to vector<2x8xf32>
    %365 = arith.mulf %363, %364 : vector<2x8xf32>
    %366 = math.exp %365 : vector<2x8xf32>
    %c0_74 = arith.constant 0 : index
    %c0_75 = arith.constant 0 : index
    %367 = vector.load %arg1[%c0_74, %c0_75] : memref<2x8xf32, #tpu.memory_space<vmem>>, vector<2x8xf32>
    %368 = arith.mulf %366, %367 : vector<2x8xf32>
    %369 = arith.addf %355, %368 : vector<2x8xf32>
    %370 = arith.truncf %369 : vector<2x8xf32> to vector<2x8xbf16>
    %c0_76 = arith.constant 0 : index
    %c0_77 = arith.constant 0 : index
    %371 = vector.load %arg12[%c0_76, %c0_77] : memref<8x128xbf16, #tpu.memory_space<vmem>>, vector<8x128xbf16>
    %cst_78 = arith.constant dense<0.000000e+00> : vector<2x128xf32>
    %372 = tpu.matmul %370, %371, %cst_78 {dimension_numbers = #tpu.dot_dimension_numbers<[1], [0], [0], [1], [0, 0, 1, 1], [], []>} : vector<2x8xbf16>, vector<8x128xbf16>, vector<2x128xf32> -> vector<2x128xf32>
    %c0_79 = arith.constant 0 : index
    %c0_80 = arith.constant 0 : index
    %373 = vector.load %arg14[%c0_79, %c0_80] : memref<1x128xf32, #tpu.memory_space<vmem>>, vector<1x128xf32>
    %374 = vector.broadcast %373 : vector<1x128xf32> to vector<2x128xf32>
    %375 = arith.addf %372, %374 : vector<2x128xf32>
    %c0_81 = arith.constant 0 : index
    %c0_82 = arith.constant 0 : index
    %376 = vector.load %arg13[%c0_81, %c0_82] : memref<32x128xbf16, #tpu.memory_space<vmem>>, vector<32x128xbf16>
    %cst_83 = arith.constant 0.000000e+00 : f32
    %377 = vector.broadcast %cst_83 : f32 to vector<2x32xf32>
    %cst_84 = arith.constant 0.000000e+00 : f32
    %378 = vector.broadcast %cst_84 : f32 to vector<2x32xf32>
    %379 = arith.truncf %377 : vector<2x32xf32> to vector<2x32xbf16>
    %cst_85 = arith.constant dense<0.000000e+00> : vector<2x128xf32>
    %380 = tpu.matmul %379, %376, %cst_85 {dimension_numbers = #tpu.dot_dimension_numbers<[1], [0], [0], [1], [0, 0, 1, 1], [], []>} : vector<2x32xbf16>, vector<32x128xbf16>, vector<2x128xf32> -> vector<2x128xf32>
    %381 = arith.addf %375, %380 : vector<2x128xf32>
    %382 = vector.extract_strided_slice %381 {offsets = [0, 0], sizes = [2, 96], strides = [1, 1]} : vector<2x128xf32> to vector<2x96xf32>
    %383 = arith.negf %382 : vector<2x96xf32>
    %384 = math.exp %383 : vector<2x96xf32>
    %cst_86 = arith.constant 1.000000e+00 : f32
    %385 = vector.broadcast %cst_86 : f32 to vector<2x96xf32>
    %386 = arith.addf %385, %384 : vector<2x96xf32>
    %387 = arith.divf %385, %386 : vector<2x96xf32>
    %388 = vector.extract_strided_slice %381 {offsets = [0, 96], sizes = [2, 32], strides = [1, 1]} : vector<2x128xf32> to vector<2x32xf32>
    %389 = math.tanh %388 : vector<2x32xf32>
    %390 = vector.extract_strided_slice %387 {offsets = [0, 0], sizes = [2, 32], strides = [1, 1]} : vector<2x96xf32> to vector<2x32xf32>
    %391 = vector.extract_strided_slice %387 {offsets = [0, 32], sizes = [2, 32], strides = [1, 1]} : vector<2x96xf32> to vector<2x32xf32>
    %392 = vector.extract_strided_slice %387 {offsets = [0, 64], sizes = [2, 32], strides = [1, 1]} : vector<2x96xf32> to vector<2x32xf32>
    %393 = arith.mulf %391, %378 : vector<2x32xf32>
    %394 = arith.mulf %390, %389 : vector<2x32xf32>
    %395 = arith.addf %393, %394 : vector<2x32xf32>
    %396 = math.tanh %395 : vector<2x32xf32>
    %397 = arith.mulf %392, %396 : vector<2x32xf32>
    %c0_87 = arith.constant 0 : index
    %c0_88 = arith.constant 0 : index
    %398 = vector.load %arg25[%c0_87, %c0_88] : memref<16x32xf32, #tpu.memory_space<vmem>>, vector<2x32xf32>
    tpu.vector_store %arg25[%c0_87, %c0_88], %397 {strides = array<i32>} : memref<16x32xf32, #tpu.memory_space<vmem>>, vector<2x32xf32>,
    %399 = arith.truncf %397 : vector<2x32xf32> to vector<2x32xbf16>
    %cst_89 = arith.constant dense<0.000000e+00> : vector<2x128xf32>
    %400 = tpu.matmul %399, %376, %cst_89 {dimension_numbers = #tpu.dot_dimension_numbers<[1], [0], [0], [1], [0, 0, 1, 1], [], []>} : vector<2x32xbf16>, vector<32x128xbf16>, vector<2x128xf32> -> vector<2x128xf32>
    %401 = arith.addf %375, %400 : vector<2x128xf32>
    %402 = vector.extract_strided_slice %401 {offsets = [0, 0], sizes = [2, 96], strides = [1, 1]} : vector<2x128xf32> to vector<2x96xf32>
    %403 = arith.negf %402 : vector<2x96xf32>
    %404 = math.exp %403 : vector<2x96xf32>
    %cst_90 = arith.constant 1.000000e+00 : f32
    %405 = vector.broadcast %cst_90 : f32 to vector<2x96xf32>
    %406 = arith.addf %405, %404 : vector<2x96xf32>
    %407 = arith.divf %405, %406 : vector<2x96xf32>
    %408 = vector.extract_strided_slice %401 {offsets = [0, 96], sizes = [2, 32], strides = [1, 1]} : vector<2x128xf32> to vector<2x32xf32>
    %409 = math.tanh %408 : vector<2x32xf32>
    %410 = vector.extract_strided_slice %407 {offsets = [0, 0], sizes = [2, 32], strides = [1, 1]} : vector<2x96xf32> to vector<2x32xf32>
    %411 = vector.extract_strided_slice %407 {offsets = [0, 32], sizes = [2, 32], strides = [1, 1]} : vector<2x96xf32> to vector<2x32xf32>
    %412 = vector.extract_strided_slice %407 {offsets = [0, 64], sizes = [2, 32], strides = [1, 1]} : vector<2x96xf32> to vector<2x32xf32>
    %413 = arith.mulf %411, %395 : vector<2x32xf32>
    %414 = arith.mulf %410, %409 : vector<2x32xf32>
    %415 = arith.addf %413, %414 : vector<2x32xf32>
    %416 = math.tanh %415 : vector<2x32xf32>
    %417 = arith.mulf %412, %416 : vector<2x32xf32>
    %c2_91 = arith.constant 2 : index
    %c0_92 = arith.constant 0 : index
    %418 = vector.load %arg25[%c2_91, %c0_92] : memref<16x32xf32, #tpu.memory_space<vmem>>, vector<2x32xf32>
    tpu.vector_store %arg25[%c2_91, %c0_92], %417 {strides = array<i32>} : memref<16x32xf32, #tpu.memory_space<vmem>>, vector<2x32xf32>,
    %419 = arith.truncf %417 : vector<2x32xf32> to vector<2x32xbf16>
    %cst_93 = arith.constant dense<0.000000e+00> : vector<2x128xf32>
    %420 = tpu.matmul %419, %376, %cst_93 {dimension_numbers = #tpu.dot_dimension_numbers<[1], [0], [0], [1], [0, 0, 1, 1], [], []>} : vector<2x32xbf16>, vector<32x128xbf16>, vector<2x128xf32> -> vector<2x128xf32>
    %421 = arith.addf %375, %420 : vector<2x128xf32>
    %422 = vector.extract_strided_slice %421 {offsets = [0, 0], sizes = [2, 96], strides = [1, 1]} : vector<2x128xf32> to vector<2x96xf32>
    %423 = arith.negf %422 : vector<2x96xf32>
    %424 = math.exp %423 : vector<2x96xf32>
    %cst_94 = arith.constant 1.000000e+00 : f32
    %425 = vector.broadcast %cst_94 : f32 to vector<2x96xf32>
    %426 = arith.addf %425, %424 : vector<2x96xf32>
    %427 = arith.divf %425, %426 : vector<2x96xf32>
    %428 = vector.extract_strided_slice %421 {offsets = [0, 96], sizes = [2, 32], strides = [1, 1]} : vector<2x128xf32> to vector<2x32xf32>
    %429 = math.tanh %428 : vector<2x32xf32>
    %430 = vector.extract_strided_slice %427 {offsets = [0, 0], sizes = [2, 32], strides = [1, 1]} : vector<2x96xf32> to vector<2x32xf32>
    %431 = vector.extract_strided_slice %427 {offsets = [0, 32], sizes = [2, 32], strides = [1, 1]} : vector<2x96xf32> to vector<2x32xf32>
    %432 = vector.extract_strided_slice %427 {offsets = [0, 64], sizes = [2, 32], strides = [1, 1]} : vector<2x96xf32> to vector<2x32xf32>
    %433 = arith.mulf %431, %415 : vector<2x32xf32>
    %434 = arith.mulf %430, %429 : vector<2x32xf32>
    %435 = arith.addf %433, %434 : vector<2x32xf32>
    %436 = math.tanh %435 : vector<2x32xf32>
    %437 = arith.mulf %432, %436 : vector<2x32xf32>
    %c4_95 = arith.constant 4 : index
    %c0_96 = arith.constant 0 : index
    %438 = vector.load %arg25[%c4_95, %c0_96] : memref<16x32xf32, #tpu.memory_space<vmem>>, vector<2x32xf32>
    tpu.vector_store %arg25[%c4_95, %c0_96], %437 {strides = array<i32>} : memref<16x32xf32, #tpu.memory_space<vmem>>, vector<2x32xf32>,
    %439 = arith.truncf %437 : vector<2x32xf32> to vector<2x32xbf16>
    %cst_97 = arith.constant dense<0.000000e+00> : vector<2x128xf32>
    %440 = tpu.matmul %439, %376, %cst_97 {dimension_numbers = #tpu.dot_dimension_numbers<[1], [0], [0], [1], [0, 0, 1, 1], [], []>} : vector<2x32xbf16>, vector<32x128xbf16>, vector<2x128xf32> -> vector<2x128xf32>
    %441 = arith.addf %375, %440 : vector<2x128xf32>
    %442 = vector.extract_strided_slice %441 {offsets = [0, 0], sizes = [2, 96], strides = [1, 1]} : vector<2x128xf32> to vector<2x96xf32>
    %443 = arith.negf %442 : vector<2x96xf32>
    %444 = math.exp %443 : vector<2x96xf32>
    %cst_98 = arith.constant 1.000000e+00 : f32
    %445 = vector.broadcast %cst_98 : f32 to vector<2x96xf32>
    %446 = arith.addf %445, %444 : vector<2x96xf32>
    %447 = arith.divf %445, %446 : vector<2x96xf32>
    %448 = vector.extract_strided_slice %441 {offsets = [0, 96], sizes = [2, 32], strides = [1, 1]} : vector<2x128xf32> to vector<2x32xf32>
    %449 = math.tanh %448 : vector<2x32xf32>
    %450 = vector.extract_strided_slice %447 {offsets = [0, 0], sizes = [2, 32], strides = [1, 1]} : vector<2x96xf32> to vector<2x32xf32>
    %451 = vector.extract_strided_slice %447 {offsets = [0, 32], sizes = [2, 32], strides = [1, 1]} : vector<2x96xf32> to vector<2x32xf32>
    %452 = vector.extract_strided_slice %447 {offsets = [0, 64], sizes = [2, 32], strides = [1, 1]} : vector<2x96xf32> to vector<2x32xf32>
    %453 = arith.mulf %451, %435 : vector<2x32xf32>
    %454 = arith.mulf %450, %449 : vector<2x32xf32>
    %455 = arith.addf %453, %454 : vector<2x32xf32>
    %456 = math.tanh %455 : vector<2x32xf32>
    %457 = arith.mulf %452, %456 : vector<2x32xf32>
    %c6_99 = arith.constant 6 : index
    %c0_100 = arith.constant 0 : index
    %458 = vector.load %arg25[%c6_99, %c0_100] : memref<16x32xf32, #tpu.memory_space<vmem>>, vector<2x32xf32>
    tpu.vector_store %arg25[%c6_99, %c0_100], %457 {strides = array<i32>} : memref<16x32xf32, #tpu.memory_space<vmem>>, vector<2x32xf32>,
    %459 = arith.truncf %457 : vector<2x32xf32> to vector<2x32xbf16>
    %cst_101 = arith.constant dense<0.000000e+00> : vector<2x128xf32>
    %460 = tpu.matmul %459, %376, %cst_101 {dimension_numbers = #tpu.dot_dimension_numbers<[1], [0], [0], [1], [0, 0, 1, 1], [], []>} : vector<2x32xbf16>, vector<32x128xbf16>, vector<2x128xf32> -> vector<2x128xf32>
    %461 = arith.addf %375, %460 : vector<2x128xf32>
    %462 = vector.extract_strided_slice %461 {offsets = [0, 0], sizes = [2, 96], strides = [1, 1]} : vector<2x128xf32> to vector<2x96xf32>
    %463 = arith.negf %462 : vector<2x96xf32>
    %464 = math.exp %463 : vector<2x96xf32>
    %cst_102 = arith.constant 1.000000e+00 : f32
    %465 = vector.broadcast %cst_102 : f32 to vector<2x96xf32>
    %466 = arith.addf %465, %464 : vector<2x96xf32>
    %467 = arith.divf %465, %466 : vector<2x96xf32>
    %468 = vector.extract_strided_slice %461 {offsets = [0, 96], sizes = [2, 32], strides = [1, 1]} : vector<2x128xf32> to vector<2x32xf32>
    %469 = math.tanh %468 : vector<2x32xf32>
    %470 = vector.extract_strided_slice %467 {offsets = [0, 0], sizes = [2, 32], strides = [1, 1]} : vector<2x96xf32> to vector<2x32xf32>
    %471 = vector.extract_strided_slice %467 {offsets = [0, 32], sizes = [2, 32], strides = [1, 1]} : vector<2x96xf32> to vector<2x32xf32>
    %472 = vector.extract_strided_slice %467 {offsets = [0, 64], sizes = [2, 32], strides = [1, 1]} : vector<2x96xf32> to vector<2x32xf32>
    %473 = arith.mulf %471, %455 : vector<2x32xf32>
    %474 = arith.mulf %470, %469 : vector<2x32xf32>
    %475 = arith.addf %473, %474 : vector<2x32xf32>
    %476 = math.tanh %475 : vector<2x32xf32>
    %477 = arith.mulf %472, %476 : vector<2x32xf32>
    %c8_103 = arith.constant 8 : index
    %c0_104 = arith.constant 0 : index
    %478 = vector.load %arg25[%c8_103, %c0_104] : memref<16x32xf32, #tpu.memory_space<vmem>>, vector<2x32xf32>
    tpu.vector_store %arg25[%c8_103, %c0_104], %477 {strides = array<i32>} : memref<16x32xf32, #tpu.memory_space<vmem>>, vector<2x32xf32>,
    %479 = arith.truncf %477 : vector<2x32xf32> to vector<2x32xbf16>
    %cst_105 = arith.constant dense<0.000000e+00> : vector<2x128xf32>
    %480 = tpu.matmul %479, %376, %cst_105 {dimension_numbers = #tpu.dot_dimension_numbers<[1], [0], [0], [1], [0, 0, 1, 1], [], []>} : vector<2x32xbf16>, vector<32x128xbf16>, vector<2x128xf32> -> vector<2x128xf32>
    %481 = arith.addf %375, %480 : vector<2x128xf32>
    %482 = vector.extract_strided_slice %481 {offsets = [0, 0], sizes = [2, 96], strides = [1, 1]} : vector<2x128xf32> to vector<2x96xf32>
    %483 = arith.negf %482 : vector<2x96xf32>
    %484 = math.exp %483 : vector<2x96xf32>
    %cst_106 = arith.constant 1.000000e+00 : f32
    %485 = vector.broadcast %cst_106 : f32 to vector<2x96xf32>
    %486 = arith.addf %485, %484 : vector<2x96xf32>
    %487 = arith.divf %485, %486 : vector<2x96xf32>
    %488 = vector.extract_strided_slice %481 {offsets = [0, 96], sizes = [2, 32], strides = [1, 1]} : vector<2x128xf32> to vector<2x32xf32>
    %489 = math.tanh %488 : vector<2x32xf32>
    %490 = vector.extract_strided_slice %487 {offsets = [0, 0], sizes = [2, 32], strides = [1, 1]} : vector<2x96xf32> to vector<2x32xf32>
    %491 = vector.extract_strided_slice %487 {offsets = [0, 32], sizes = [2, 32], strides = [1, 1]} : vector<2x96xf32> to vector<2x32xf32>
    %492 = vector.extract_strided_slice %487 {offsets = [0, 64], sizes = [2, 32], strides = [1, 1]} : vector<2x96xf32> to vector<2x32xf32>
    %493 = arith.mulf %491, %475 : vector<2x32xf32>
    %494 = arith.mulf %490, %489 : vector<2x32xf32>
    %495 = arith.addf %493, %494 : vector<2x32xf32>
    %496 = math.tanh %495 : vector<2x32xf32>
    %497 = arith.mulf %492, %496 : vector<2x32xf32>
    %c10_107 = arith.constant 10 : index
    %c0_108 = arith.constant 0 : index
    %498 = vector.load %arg25[%c10_107, %c0_108] : memref<16x32xf32, #tpu.memory_space<vmem>>, vector<2x32xf32>
    tpu.vector_store %arg25[%c10_107, %c0_108], %497 {strides = array<i32>} : memref<16x32xf32, #tpu.memory_space<vmem>>, vector<2x32xf32>,
    %499 = arith.truncf %497 : vector<2x32xf32> to vector<2x32xbf16>
    %cst_109 = arith.constant dense<0.000000e+00> : vector<2x128xf32>
    %500 = tpu.matmul %499, %376, %cst_109 {dimension_numbers = #tpu.dot_dimension_numbers<[1], [0], [0], [1], [0, 0, 1, 1], [], []>} : vector<2x32xbf16>, vector<32x128xbf16>, vector<2x128xf32> -> vector<2x128xf32>
    %501 = arith.addf %375, %500 : vector<2x128xf32>
    %502 = vector.extract_strided_slice %501 {offsets = [0, 0], sizes = [2, 96], strides = [1, 1]} : vector<2x128xf32> to vector<2x96xf32>
    %503 = arith.negf %502 : vector<2x96xf32>
    %504 = math.exp %503 : vector<2x96xf32>
    %cst_110 = arith.constant 1.000000e+00 : f32
    %505 = vector.broadcast %cst_110 : f32 to vector<2x96xf32>
    %506 = arith.addf %505, %504 : vector<2x96xf32>
    %507 = arith.divf %505, %506 : vector<2x96xf32>
    %508 = vector.extract_strided_slice %501 {offsets = [0, 96], sizes = [2, 32], strides = [1, 1]} : vector<2x128xf32> to vector<2x32xf32>
    %509 = math.tanh %508 : vector<2x32xf32>
    %510 = vector.extract_strided_slice %507 {offsets = [0, 0], sizes = [2, 32], strides = [1, 1]} : vector<2x96xf32> to vector<2x32xf32>
    %511 = vector.extract_strided_slice %507 {offsets = [0, 32], sizes = [2, 32], strides = [1, 1]} : vector<2x96xf32> to vector<2x32xf32>
    %512 = vector.extract_strided_slice %507 {offsets = [0, 64], sizes = [2, 32], strides = [1, 1]} : vector<2x96xf32> to vector<2x32xf32>
    %513 = arith.mulf %511, %495 : vector<2x32xf32>
    %514 = arith.mulf %510, %509 : vector<2x32xf32>
    %515 = arith.addf %513, %514 : vector<2x32xf32>
    %516 = math.tanh %515 : vector<2x32xf32>
    %517 = arith.mulf %512, %516 : vector<2x32xf32>
    %c12_111 = arith.constant 12 : index
    %c0_112 = arith.constant 0 : index
    %518 = vector.load %arg25[%c12_111, %c0_112] : memref<16x32xf32, #tpu.memory_space<vmem>>, vector<2x32xf32>
    tpu.vector_store %arg25[%c12_111, %c0_112], %517 {strides = array<i32>} : memref<16x32xf32, #tpu.memory_space<vmem>>, vector<2x32xf32>,
    %519 = arith.truncf %517 : vector<2x32xf32> to vector<2x32xbf16>
    %cst_113 = arith.constant dense<0.000000e+00> : vector<2x128xf32>
    %520 = tpu.matmul %519, %376, %cst_113 {dimension_numbers = #tpu.dot_dimension_numbers<[1], [0], [0], [1], [0, 0, 1, 1], [], []>} : vector<2x32xbf16>, vector<32x128xbf16>, vector<2x128xf32> -> vector<2x128xf32>
    %521 = arith.addf %375, %520 : vector<2x128xf32>
    %522 = vector.extract_strided_slice %521 {offsets = [0, 0], sizes = [2, 96], strides = [1, 1]} : vector<2x128xf32> to vector<2x96xf32>
    %523 = arith.negf %522 : vector<2x96xf32>
    %524 = math.exp %523 : vector<2x96xf32>
    %cst_114 = arith.constant 1.000000e+00 : f32
    %525 = vector.broadcast %cst_114 : f32 to vector<2x96xf32>
    %526 = arith.addf %525, %524 : vector<2x96xf32>
    %527 = arith.divf %525, %526 : vector<2x96xf32>
    %528 = vector.extract_strided_slice %521 {offsets = [0, 96], sizes = [2, 32], strides = [1, 1]} : vector<2x128xf32> to vector<2x32xf32>
    %529 = math.tanh %528 : vector<2x32xf32>
    %530 = vector.extract_strided_slice %527 {offsets = [0, 0], sizes = [2, 32], strides = [1, 1]} : vector<2x96xf32> to vector<2x32xf32>
    %531 = vector.extract_strided_slice %527 {offsets = [0, 32], sizes = [2, 32], strides = [1, 1]} : vector<2x96xf32> to vector<2x32xf32>
    %532 = vector.extract_strided_slice %527 {offsets = [0, 64], sizes = [2, 32], strides = [1, 1]} : vector<2x96xf32> to vector<2x32xf32>
    %533 = arith.mulf %531, %515 : vector<2x32xf32>
    %534 = arith.mulf %530, %529 : vector<2x32xf32>
    %535 = arith.addf %533, %534 : vector<2x32xf32>
    %536 = math.tanh %535 : vector<2x32xf32>
    %537 = arith.mulf %532, %536 : vector<2x32xf32>
    %c14_115 = arith.constant 14 : index
    %c0_116 = arith.constant 0 : index
    %538 = vector.load %arg25[%c14_115, %c0_116] : memref<16x32xf32, #tpu.memory_space<vmem>>, vector<2x32xf32>
    tpu.vector_store %arg25[%c14_115, %c0_116], %537 {strides = array<i32>} : memref<16x32xf32, #tpu.memory_space<vmem>>, vector<2x32xf32>,
    %c0_117 = arith.constant 0 : index
    %c0_118 = arith.constant 0 : index
    %539 = vector.load %arg25[%c0_117, %c0_118] : memref<16x32xf32, #tpu.memory_space<vmem>>, vector<16x32xf32>
    %540 = arith.truncf %539 : vector<16x32xf32> to vector<16x32xbf16>
    %c0_119 = arith.constant 0 : index
    %c0_120 = arith.constant 0 : index
    %541 = vector.load %arg15[%c0_119, %c0_120] : memref<32x128xbf16, #tpu.memory_space<vmem>>, vector<32x128xbf16>
    %cst_121 = arith.constant dense<0.000000e+00> : vector<16x128xf32>
    %542 = tpu.matmul %540, %541, %cst_121 {dimension_numbers = #tpu.dot_dimension_numbers<[1], [0], [0], [1], [0, 0, 1, 1], [], []>} : vector<16x32xbf16>, vector<32x128xbf16>, vector<16x128xf32> -> vector<16x128xf32>
    %c0_122 = arith.constant 0 : index
    %c0_123 = arith.constant 0 : index
    %543 = vector.load %arg17[%c0_122, %c0_123] : memref<1x128xf32, #tpu.memory_space<vmem>>, vector<1x128xf32>
    %544 = vector.broadcast %543 : vector<1x128xf32> to vector<16x128xf32>
    %545 = arith.addf %542, %544 : vector<16x128xf32>
    %c0_124 = arith.constant 0 : index
    %c0_125 = arith.constant 0 : index
    %546 = vector.load %arg16[%c0_124, %c0_125] : memref<32x128xbf16, #tpu.memory_space<vmem>>, vector<32x128xbf16>
    %cst_126 = arith.constant 0.000000e+00 : f32
    %547 = vector.broadcast %cst_126 : f32 to vector<2x32xf32>
    %cst_127 = arith.constant 0.000000e+00 : f32
    %548 = vector.broadcast %cst_127 : f32 to vector<2x32xf32>
    %549 = vector.extract_strided_slice %545 {offsets = [0, 0], sizes = [2, 128], strides = [1, 1]} : vector<16x128xf32> to vector<2x128xf32>
    %550 = arith.truncf %547 : vector<2x32xf32> to vector<2x32xbf16>
    %cst_128 = arith.constant dense<0.000000e+00> : vector<2x128xf32>
    %551 = tpu.matmul %550, %546, %cst_128 {dimension_numbers = #tpu.dot_dimension_numbers<[1], [0], [0], [1], [0, 0, 1, 1], [], []>} : vector<2x32xbf16>, vector<32x128xbf16>, vector<2x128xf32> -> vector<2x128xf32>
    %552 = arith.addf %549, %551 : vector<2x128xf32>
    %553 = vector.extract_strided_slice %552 {offsets = [0, 0], sizes = [2, 96], strides = [1, 1]} : vector<2x128xf32> to vector<2x96xf32>
    %554 = arith.negf %553 : vector<2x96xf32>
    %555 = math.exp %554 : vector<2x96xf32>
    %cst_129 = arith.constant 1.000000e+00 : f32
    %556 = vector.broadcast %cst_129 : f32 to vector<2x96xf32>
    %557 = arith.addf %556, %555 : vector<2x96xf32>
    %558 = arith.divf %556, %557 : vector<2x96xf32>
    %559 = vector.extract_strided_slice %552 {offsets = [0, 96], sizes = [2, 32], strides = [1, 1]} : vector<2x128xf32> to vector<2x32xf32>
    %560 = math.tanh %559 : vector<2x32xf32>
    %561 = vector.extract_strided_slice %558 {offsets = [0, 0], sizes = [2, 32], strides = [1, 1]} : vector<2x96xf32> to vector<2x32xf32>
    %562 = vector.extract_strided_slice %558 {offsets = [0, 32], sizes = [2, 32], strides = [1, 1]} : vector<2x96xf32> to vector<2x32xf32>
    %563 = vector.extract_strided_slice %558 {offsets = [0, 64], sizes = [2, 32], strides = [1, 1]} : vector<2x96xf32> to vector<2x32xf32>
    %564 = arith.mulf %562, %548 : vector<2x32xf32>
    %565 = arith.mulf %561, %560 : vector<2x32xf32>
    %566 = arith.addf %564, %565 : vector<2x32xf32>
    %567 = math.tanh %566 : vector<2x32xf32>
    %568 = arith.mulf %563, %567 : vector<2x32xf32>
    %c0_130 = arith.constant 0 : index
    %c0_131 = arith.constant 0 : index
    %569 = vector.load %arg25[%c0_130, %c0_131] : memref<16x32xf32, #tpu.memory_space<vmem>>, vector<2x32xf32>
    tpu.vector_store %arg25[%c0_130, %c0_131], %568 {strides = array<i32>} : memref<16x32xf32, #tpu.memory_space<vmem>>, vector<2x32xf32>,
    %570 = vector.extract_strided_slice %545 {offsets = [2, 0], sizes = [2, 128], strides = [1, 1]} : vector<16x128xf32> to vector<2x128xf32>
    %571 = arith.truncf %568 : vector<2x32xf32> to vector<2x32xbf16>
    %cst_132 = arith.constant dense<0.000000e+00> : vector<2x128xf32>
    %572 = tpu.matmul %571, %546, %cst_132 {dimension_numbers = #tpu.dot_dimension_numbers<[1], [0], [0], [1], [0, 0, 1, 1], [], []>} : vector<2x32xbf16>, vector<32x128xbf16>, vector<2x128xf32> -> vector<2x128xf32>
    %573 = arith.addf %570, %572 : vector<2x128xf32>
    %574 = vector.extract_strided_slice %573 {offsets = [0, 0], sizes = [2, 96], strides = [1, 1]} : vector<2x128xf32> to vector<2x96xf32>
    %575 = arith.negf %574 : vector<2x96xf32>
    %576 = math.exp %575 : vector<2x96xf32>
    %cst_133 = arith.constant 1.000000e+00 : f32
    %577 = vector.broadcast %cst_133 : f32 to vector<2x96xf32>
    %578 = arith.addf %577, %576 : vector<2x96xf32>
    %579 = arith.divf %577, %578 : vector<2x96xf32>
    %580 = vector.extract_strided_slice %573 {offsets = [0, 96], sizes = [2, 32], strides = [1, 1]} : vector<2x128xf32> to vector<2x32xf32>
    %581 = math.tanh %580 : vector<2x32xf32>
    %582 = vector.extract_strided_slice %579 {offsets = [0, 0], sizes = [2, 32], strides = [1, 1]} : vector<2x96xf32> to vector<2x32xf32>
    %583 = vector.extract_strided_slice %579 {offsets = [0, 32], sizes = [2, 32], strides = [1, 1]} : vector<2x96xf32> to vector<2x32xf32>
    %584 = vector.extract_strided_slice %579 {offsets = [0, 64], sizes = [2, 32], strides = [1, 1]} : vector<2x96xf32> to vector<2x32xf32>
    %585 = arith.mulf %583, %566 : vector<2x32xf32>
    %586 = arith.mulf %582, %581 : vector<2x32xf32>
    %587 = arith.addf %585, %586 : vector<2x32xf32>
    %588 = math.tanh %587 : vector<2x32xf32>
    %589 = arith.mulf %584, %588 : vector<2x32xf32>
    %c2_134 = arith.constant 2 : index
    %c0_135 = arith.constant 0 : index
    %590 = vector.load %arg25[%c2_134, %c0_135] : memref<16x32xf32, #tpu.memory_space<vmem>>, vector<2x32xf32>
    tpu.vector_store %arg25[%c2_134, %c0_135], %589 {strides = array<i32>} : memref<16x32xf32, #tpu.memory_space<vmem>>, vector<2x32xf32>,
    %591 = vector.extract_strided_slice %545 {offsets = [4, 0], sizes = [2, 128], strides = [1, 1]} : vector<16x128xf32> to vector<2x128xf32>
    %592 = arith.truncf %589 : vector<2x32xf32> to vector<2x32xbf16>
    %cst_136 = arith.constant dense<0.000000e+00> : vector<2x128xf32>
    %593 = tpu.matmul %592, %546, %cst_136 {dimension_numbers = #tpu.dot_dimension_numbers<[1], [0], [0], [1], [0, 0, 1, 1], [], []>} : vector<2x32xbf16>, vector<32x128xbf16>, vector<2x128xf32> -> vector<2x128xf32>
    %594 = arith.addf %591, %593 : vector<2x128xf32>
    %595 = vector.extract_strided_slice %594 {offsets = [0, 0], sizes = [2, 96], strides = [1, 1]} : vector<2x128xf32> to vector<2x96xf32>
    %596 = arith.negf %595 : vector<2x96xf32>
    %597 = math.exp %596 : vector<2x96xf32>
    %cst_137 = arith.constant 1.000000e+00 : f32
    %598 = vector.broadcast %cst_137 : f32 to vector<2x96xf32>
    %599 = arith.addf %598, %597 : vector<2x96xf32>
    %600 = arith.divf %598, %599 : vector<2x96xf32>
    %601 = vector.extract_strided_slice %594 {offsets = [0, 96], sizes = [2, 32], strides = [1, 1]} : vector<2x128xf32> to vector<2x32xf32>
    %602 = math.tanh %601 : vector<2x32xf32>
    %603 = vector.extract_strided_slice %600 {offsets = [0, 0], sizes = [2, 32], strides = [1, 1]} : vector<2x96xf32> to vector<2x32xf32>
    %604 = vector.extract_strided_slice %600 {offsets = [0, 32], sizes = [2, 32], strides = [1, 1]} : vector<2x96xf32> to vector<2x32xf32>
    %605 = vector.extract_strided_slice %600 {offsets = [0, 64], sizes = [2, 32], strides = [1, 1]} : vector<2x96xf32> to vector<2x32xf32>
    %606 = arith.mulf %604, %587 : vector<2x32xf32>
    %607 = arith.mulf %603, %602 : vector<2x32xf32>
    %608 = arith.addf %606, %607 : vector<2x32xf32>
    %609 = math.tanh %608 : vector<2x32xf32>
    %610 = arith.mulf %605, %609 : vector<2x32xf32>
    %c4_138 = arith.constant 4 : index
    %c0_139 = arith.constant 0 : index
    %611 = vector.load %arg25[%c4_138, %c0_139] : memref<16x32xf32, #tpu.memory_space<vmem>>, vector<2x32xf32>
    tpu.vector_store %arg25[%c4_138, %c0_139], %610 {strides = array<i32>} : memref<16x32xf32, #tpu.memory_space<vmem>>, vector<2x32xf32>,
    %612 = vector.extract_strided_slice %545 {offsets = [6, 0], sizes = [2, 128], strides = [1, 1]} : vector<16x128xf32> to vector<2x128xf32>
    %613 = arith.truncf %610 : vector<2x32xf32> to vector<2x32xbf16>
    %cst_140 = arith.constant dense<0.000000e+00> : vector<2x128xf32>
    %614 = tpu.matmul %613, %546, %cst_140 {dimension_numbers = #tpu.dot_dimension_numbers<[1], [0], [0], [1], [0, 0, 1, 1], [], []>} : vector<2x32xbf16>, vector<32x128xbf16>, vector<2x128xf32> -> vector<2x128xf32>
    %615 = arith.addf %612, %614 : vector<2x128xf32>
    %616 = vector.extract_strided_slice %615 {offsets = [0, 0], sizes = [2, 96], strides = [1, 1]} : vector<2x128xf32> to vector<2x96xf32>
    %617 = arith.negf %616 : vector<2x96xf32>
    %618 = math.exp %617 : vector<2x96xf32>
    %cst_141 = arith.constant 1.000000e+00 : f32
    %619 = vector.broadcast %cst_141 : f32 to vector<2x96xf32>
    %620 = arith.addf %619, %618 : vector<2x96xf32>
    %621 = arith.divf %619, %620 : vector<2x96xf32>
    %622 = vector.extract_strided_slice %615 {offsets = [0, 96], sizes = [2, 32], strides = [1, 1]} : vector<2x128xf32> to vector<2x32xf32>
    %623 = math.tanh %622 : vector<2x32xf32>
    %624 = vector.extract_strided_slice %621 {offsets = [0, 0], sizes = [2, 32], strides = [1, 1]} : vector<2x96xf32> to vector<2x32xf32>
    %625 = vector.extract_strided_slice %621 {offsets = [0, 32], sizes = [2, 32], strides = [1, 1]} : vector<2x96xf32> to vector<2x32xf32>
    %626 = vector.extract_strided_slice %621 {offsets = [0, 64], sizes = [2, 32], strides = [1, 1]} : vector<2x96xf32> to vector<2x32xf32>
    %627 = arith.mulf %625, %608 : vector<2x32xf32>
    %628 = arith.mulf %624, %623 : vector<2x32xf32>
    %629 = arith.addf %627, %628 : vector<2x32xf32>
    %630 = math.tanh %629 : vector<2x32xf32>
    %631 = arith.mulf %626, %630 : vector<2x32xf32>
    %c6_142 = arith.constant 6 : index
    %c0_143 = arith.constant 0 : index
    %632 = vector.load %arg25[%c6_142, %c0_143] : memref<16x32xf32, #tpu.memory_space<vmem>>, vector<2x32xf32>
    tpu.vector_store %arg25[%c6_142, %c0_143], %631 {strides = array<i32>} : memref<16x32xf32, #tpu.memory_space<vmem>>, vector<2x32xf32>,
    %633 = vector.extract_strided_slice %545 {offsets = [8, 0], sizes = [2, 128], strides = [1, 1]} : vector<16x128xf32> to vector<2x128xf32>
    %634 = arith.truncf %631 : vector<2x32xf32> to vector<2x32xbf16>
    %cst_144 = arith.constant dense<0.000000e+00> : vector<2x128xf32>
    %635 = tpu.matmul %634, %546, %cst_144 {dimension_numbers = #tpu.dot_dimension_numbers<[1], [0], [0], [1], [0, 0, 1, 1], [], []>} : vector<2x32xbf16>, vector<32x128xbf16>, vector<2x128xf32> -> vector<2x128xf32>
    %636 = arith.addf %633, %635 : vector<2x128xf32>
    %637 = vector.extract_strided_slice %636 {offsets = [0, 0], sizes = [2, 96], strides = [1, 1]} : vector<2x128xf32> to vector<2x96xf32>
    %638 = arith.negf %637 : vector<2x96xf32>
    %639 = math.exp %638 : vector<2x96xf32>
    %cst_145 = arith.constant 1.000000e+00 : f32
    %640 = vector.broadcast %cst_145 : f32 to vector<2x96xf32>
    %641 = arith.addf %640, %639 : vector<2x96xf32>
    %642 = arith.divf %640, %641 : vector<2x96xf32>
    %643 = vector.extract_strided_slice %636 {offsets = [0, 96], sizes = [2, 32], strides = [1, 1]} : vector<2x128xf32> to vector<2x32xf32>
    %644 = math.tanh %643 : vector<2x32xf32>
    %645 = vector.extract_strided_slice %642 {offsets = [0, 0], sizes = [2, 32], strides = [1, 1]} : vector<2x96xf32> to vector<2x32xf32>
    %646 = vector.extract_strided_slice %642 {offsets = [0, 32], sizes = [2, 32], strides = [1, 1]} : vector<2x96xf32> to vector<2x32xf32>
    %647 = vector.extract_strided_slice %642 {offsets = [0, 64], sizes = [2, 32], strides = [1, 1]} : vector<2x96xf32> to vector<2x32xf32>
    %648 = arith.mulf %646, %629 : vector<2x32xf32>
    %649 = arith.mulf %645, %644 : vector<2x32xf32>
    %650 = arith.addf %648, %649 : vector<2x32xf32>
    %651 = math.tanh %650 : vector<2x32xf32>
    %652 = arith.mulf %647, %651 : vector<2x32xf32>
    %c8_146 = arith.constant 8 : index
    %c0_147 = arith.constant 0 : index
    %653 = vector.load %arg25[%c8_146, %c0_147] : memref<16x32xf32, #tpu.memory_space<vmem>>, vector<2x32xf32>
    tpu.vector_store %arg25[%c8_146, %c0_147], %652 {strides = array<i32>} : memref<16x32xf32, #tpu.memory_space<vmem>>, vector<2x32xf32>,
    %654 = vector.extract_strided_slice %545 {offsets = [10, 0], sizes = [2, 128], strides = [1, 1]} : vector<16x128xf32> to vector<2x128xf32>
    %655 = arith.truncf %652 : vector<2x32xf32> to vector<2x32xbf16>
    %cst_148 = arith.constant dense<0.000000e+00> : vector<2x128xf32>
    %656 = tpu.matmul %655, %546, %cst_148 {dimension_numbers = #tpu.dot_dimension_numbers<[1], [0], [0], [1], [0, 0, 1, 1], [], []>} : vector<2x32xbf16>, vector<32x128xbf16>, vector<2x128xf32> -> vector<2x128xf32>
    %657 = arith.addf %654, %656 : vector<2x128xf32>
    %658 = vector.extract_strided_slice %657 {offsets = [0, 0], sizes = [2, 96], strides = [1, 1]} : vector<2x128xf32> to vector<2x96xf32>
    %659 = arith.negf %658 : vector<2x96xf32>
    %660 = math.exp %659 : vector<2x96xf32>
    %cst_149 = arith.constant 1.000000e+00 : f32
    %661 = vector.broadcast %cst_149 : f32 to vector<2x96xf32>
    %662 = arith.addf %661, %660 : vector<2x96xf32>
    %663 = arith.divf %661, %662 : vector<2x96xf32>
    %664 = vector.extract_strided_slice %657 {offsets = [0, 96], sizes = [2, 32], strides = [1, 1]} : vector<2x128xf32> to vector<2x32xf32>
    %665 = math.tanh %664 : vector<2x32xf32>
    %666 = vector.extract_strided_slice %663 {offsets = [0, 0], sizes = [2, 32], strides = [1, 1]} : vector<2x96xf32> to vector<2x32xf32>
    %667 = vector.extract_strided_slice %663 {offsets = [0, 32], sizes = [2, 32], strides = [1, 1]} : vector<2x96xf32> to vector<2x32xf32>
    %668 = vector.extract_strided_slice %663 {offsets = [0, 64], sizes = [2, 32], strides = [1, 1]} : vector<2x96xf32> to vector<2x32xf32>
    %669 = arith.mulf %667, %650 : vector<2x32xf32>
    %670 = arith.mulf %666, %665 : vector<2x32xf32>
    %671 = arith.addf %669, %670 : vector<2x32xf32>
    %672 = math.tanh %671 : vector<2x32xf32>
    %673 = arith.mulf %668, %672 : vector<2x32xf32>
    %c10_150 = arith.constant 10 : index
    %c0_151 = arith.constant 0 : index
    %674 = vector.load %arg25[%c10_150, %c0_151] : memref<16x32xf32, #tpu.memory_space<vmem>>, vector<2x32xf32>
    tpu.vector_store %arg25[%c10_150, %c0_151], %673 {strides = array<i32>} : memref<16x32xf32, #tpu.memory_space<vmem>>, vector<2x32xf32>,
    %675 = vector.extract_strided_slice %545 {offsets = [12, 0], sizes = [2, 128], strides = [1, 1]} : vector<16x128xf32> to vector<2x128xf32>
    %676 = arith.truncf %673 : vector<2x32xf32> to vector<2x32xbf16>
    %cst_152 = arith.constant dense<0.000000e+00> : vector<2x128xf32>
    %677 = tpu.matmul %676, %546, %cst_152 {dimension_numbers = #tpu.dot_dimension_numbers<[1], [0], [0], [1], [0, 0, 1, 1], [], []>} : vector<2x32xbf16>, vector<32x128xbf16>, vector<2x128xf32> -> vector<2x128xf32>
    %678 = arith.addf %675, %677 : vector<2x128xf32>
    %679 = vector.extract_strided_slice %678 {offsets = [0, 0], sizes = [2, 96], strides = [1, 1]} : vector<2x128xf32> to vector<2x96xf32>
    %680 = arith.negf %679 : vector<2x96xf32>
    %681 = math.exp %680 : vector<2x96xf32>
    %cst_153 = arith.constant 1.000000e+00 : f32
    %682 = vector.broadcast %cst_153 : f32 to vector<2x96xf32>
    %683 = arith.addf %682, %681 : vector<2x96xf32>
    %684 = arith.divf %682, %683 : vector<2x96xf32>
    %685 = vector.extract_strided_slice %678 {offsets = [0, 96], sizes = [2, 32], strides = [1, 1]} : vector<2x128xf32> to vector<2x32xf32>
    %686 = math.tanh %685 : vector<2x32xf32>
    %687 = vector.extract_strided_slice %684 {offsets = [0, 0], sizes = [2, 32], strides = [1, 1]} : vector<2x96xf32> to vector<2x32xf32>
    %688 = vector.extract_strided_slice %684 {offsets = [0, 32], sizes = [2, 32], strides = [1, 1]} : vector<2x96xf32> to vector<2x32xf32>
    %689 = vector.extract_strided_slice %684 {offsets = [0, 64], sizes = [2, 32], strides = [1, 1]} : vector<2x96xf32> to vector<2x32xf32>
    %690 = arith.mulf %688, %671 : vector<2x32xf32>
    %691 = arith.mulf %687, %686 : vector<2x32xf32>
    %692 = arith.addf %690, %691 : vector<2x32xf32>
    %693 = math.tanh %692 : vector<2x32xf32>
    %694 = arith.mulf %689, %693 : vector<2x32xf32>
    %c12_154 = arith.constant 12 : index
    %c0_155 = arith.constant 0 : index
    %695 = vector.load %arg25[%c12_154, %c0_155] : memref<16x32xf32, #tpu.memory_space<vmem>>, vector<2x32xf32>
    tpu.vector_store %arg25[%c12_154, %c0_155], %694 {strides = array<i32>} : memref<16x32xf32, #tpu.memory_space<vmem>>, vector<2x32xf32>,
    %696 = vector.extract_strided_slice %545 {offsets = [14, 0], sizes = [2, 128], strides = [1, 1]} : vector<16x128xf32> to vector<2x128xf32>
    %697 = arith.truncf %694 : vector<2x32xf32> to vector<2x32xbf16>
    %cst_156 = arith.constant dense<0.000000e+00> : vector<2x128xf32>
    %698 = tpu.matmul %697, %546, %cst_156 {dimension_numbers = #tpu.dot_dimension_numbers<[1], [0], [0], [1], [0, 0, 1, 1], [], []>} : vector<2x32xbf16>, vector<32x128xbf16>, vector<2x128xf32> -> vector<2x128xf32>
    %699 = arith.addf %696, %698 : vector<2x128xf32>
    %700 = vector.extract_strided_slice %699 {offsets = [0, 0], sizes = [2, 96], strides = [1, 1]} : vector<2x128xf32> to vector<2x96xf32>
    %701 = arith.negf %700 : vector<2x96xf32>
    %702 = math.exp %701 : vector<2x96xf32>
    %cst_157 = arith.constant 1.000000e+00 : f32
    %703 = vector.broadcast %cst_157 : f32 to vector<2x96xf32>
    %704 = arith.addf %703, %702 : vector<2x96xf32>
    %705 = arith.divf %703, %704 : vector<2x96xf32>
    %706 = vector.extract_strided_slice %699 {offsets = [0, 96], sizes = [2, 32], strides = [1, 1]} : vector<2x128xf32> to vector<2x32xf32>
    %707 = math.tanh %706 : vector<2x32xf32>
    %708 = vector.extract_strided_slice %705 {offsets = [0, 0], sizes = [2, 32], strides = [1, 1]} : vector<2x96xf32> to vector<2x32xf32>
    %709 = vector.extract_strided_slice %705 {offsets = [0, 32], sizes = [2, 32], strides = [1, 1]} : vector<2x96xf32> to vector<2x32xf32>
    %710 = vector.extract_strided_slice %705 {offsets = [0, 64], sizes = [2, 32], strides = [1, 1]} : vector<2x96xf32> to vector<2x32xf32>
    %711 = arith.mulf %709, %692 : vector<2x32xf32>
    %712 = arith.mulf %708, %707 : vector<2x32xf32>
    %713 = arith.addf %711, %712 : vector<2x32xf32>
    %714 = math.tanh %713 : vector<2x32xf32>
    %715 = arith.mulf %710, %714 : vector<2x32xf32>
    %c14_158 = arith.constant 14 : index
    %c0_159 = arith.constant 0 : index
    %716 = vector.load %arg25[%c14_158, %c0_159] : memref<16x32xf32, #tpu.memory_space<vmem>>, vector<2x32xf32>
    tpu.vector_store %arg25[%c14_158, %c0_159], %715 {strides = array<i32>} : memref<16x32xf32, #tpu.memory_space<vmem>>, vector<2x32xf32>,
    %c0_160 = arith.constant 0 : index
    %c0_161 = arith.constant 0 : index
    %717 = vector.load %arg25[%c0_160, %c0_161] : memref<16x32xf32, #tpu.memory_space<vmem>>, vector<16x32xf32>
    %718 = math.tanh %717 : vector<16x32xf32>
    %719 = arith.truncf %718 : vector<16x32xf32> to vector<16x32xbf16>
    %c0_162 = arith.constant 0 : index
    %c0_163 = arith.constant 0 : index
    %720 = vector.load %arg18[%c0_162, %c0_163] : memref<32x64xbf16, #tpu.memory_space<vmem>>, vector<32x64xbf16>
    %cst_164 = arith.constant dense<0.000000e+00> : vector<16x64xf32>
    %721 = tpu.matmul %719, %720, %cst_164 {dimension_numbers = #tpu.dot_dimension_numbers<[1], [0], [0], [1], [0, 0, 1, 1], [], []>} : vector<16x32xbf16>, vector<32x64xbf16>, vector<16x64xf32> -> vector<16x64xf32>
    %c0_165 = arith.constant 0 : index
    %c0_166 = arith.constant 0 : index
    %722 = vector.load %arg20[%c0_165, %c0_166] : memref<1x64xf32, #tpu.memory_space<vmem>>, vector<1x64xf32>
    %723 = vector.broadcast %722 : vector<1x64xf32> to vector<16x64xf32>
    %724 = arith.addf %721, %723 : vector<16x64xf32>
    %c0_167 = arith.constant 0 : index
    %c0_168 = arith.constant 0 : index
    %725 = vector.load %arg19[%c0_167, %c0_168] : memref<16x64xbf16, #tpu.memory_space<vmem>>, vector<16x64xbf16>
    %cst_169 = arith.constant 0.000000e+00 : f32
    %726 = vector.broadcast %cst_169 : f32 to vector<2x16xf32>
    %cst_170 = arith.constant 0.000000e+00 : f32
    %727 = vector.broadcast %cst_170 : f32 to vector<2x16xf32>
    %728 = vector.extract_strided_slice %724 {offsets = [0, 0], sizes = [2, 64], strides = [1, 1]} : vector<16x64xf32> to vector<2x64xf32>
    %729 = arith.truncf %726 : vector<2x16xf32> to vector<2x16xbf16>
    %cst_171 = arith.constant dense<0.000000e+00> : vector<2x64xf32>
    %730 = tpu.matmul %729, %725, %cst_171 {dimension_numbers = #tpu.dot_dimension_numbers<[1], [0], [0], [1], [0, 0, 1, 1], [], []>} : vector<2x16xbf16>, vector<16x64xbf16>, vector<2x64xf32> -> vector<2x64xf32>
    %731 = arith.addf %728, %730 : vector<2x64xf32>
    %732 = vector.extract_strided_slice %731 {offsets = [0, 0], sizes = [2, 48], strides = [1, 1]} : vector<2x64xf32> to vector<2x48xf32>
    %733 = arith.negf %732 : vector<2x48xf32>
    %734 = math.exp %733 : vector<2x48xf32>
    %cst_172 = arith.constant 1.000000e+00 : f32
    %735 = vector.broadcast %cst_172 : f32 to vector<2x48xf32>
    %736 = arith.addf %735, %734 : vector<2x48xf32>
    %737 = arith.divf %735, %736 : vector<2x48xf32>
    %738 = vector.extract_strided_slice %731 {offsets = [0, 48], sizes = [2, 16], strides = [1, 1]} : vector<2x64xf32> to vector<2x16xf32>
    %739 = math.tanh %738 : vector<2x16xf32>
    %740 = vector.extract_strided_slice %737 {offsets = [0, 0], sizes = [2, 16], strides = [1, 1]} : vector<2x48xf32> to vector<2x16xf32>
    %741 = vector.extract_strided_slice %737 {offsets = [0, 16], sizes = [2, 16], strides = [1, 1]} : vector<2x48xf32> to vector<2x16xf32>
    %742 = vector.extract_strided_slice %737 {offsets = [0, 32], sizes = [2, 16], strides = [1, 1]} : vector<2x48xf32> to vector<2x16xf32>
    %743 = arith.mulf %741, %727 : vector<2x16xf32>
    %744 = arith.mulf %740, %739 : vector<2x16xf32>
    %745 = arith.addf %743, %744 : vector<2x16xf32>
    %746 = math.tanh %745 : vector<2x16xf32>
    %747 = arith.mulf %742, %746 : vector<2x16xf32>
    %c0_173 = arith.constant 0 : index
    %c0_174 = arith.constant 0 : index
    %748 = vector.load %arg26[%c0_173, %c0_174] : memref<16x16xf32, #tpu.memory_space<vmem>>, vector<2x16xf32>
    tpu.vector_store %arg26[%c0_173, %c0_174], %747 {strides = array<i32>} : memref<16x16xf32, #tpu.memory_space<vmem>>, vector<2x16xf32>,
    %749 = vector.extract_strided_slice %724 {offsets = [2, 0], sizes = [2, 64], strides = [1, 1]} : vector<16x64xf32> to vector<2x64xf32>
    %750 = arith.truncf %747 : vector<2x16xf32> to vector<2x16xbf16>
    %cst_175 = arith.constant dense<0.000000e+00> : vector<2x64xf32>
    %751 = tpu.matmul %750, %725, %cst_175 {dimension_numbers = #tpu.dot_dimension_numbers<[1], [0], [0], [1], [0, 0, 1, 1], [], []>} : vector<2x16xbf16>, vector<16x64xbf16>, vector<2x64xf32> -> vector<2x64xf32>
    %752 = arith.addf %749, %751 : vector<2x64xf32>
    %753 = vector.extract_strided_slice %752 {offsets = [0, 0], sizes = [2, 48], strides = [1, 1]} : vector<2x64xf32> to vector<2x48xf32>
    %754 = arith.negf %753 : vector<2x48xf32>
    %755 = math.exp %754 : vector<2x48xf32>
    %cst_176 = arith.constant 1.000000e+00 : f32
    %756 = vector.broadcast %cst_176 : f32 to vector<2x48xf32>
    %757 = arith.addf %756, %755 : vector<2x48xf32>
    %758 = arith.divf %756, %757 : vector<2x48xf32>
    %759 = vector.extract_strided_slice %752 {offsets = [0, 48], sizes = [2, 16], strides = [1, 1]} : vector<2x64xf32> to vector<2x16xf32>
    %760 = math.tanh %759 : vector<2x16xf32>
    %761 = vector.extract_strided_slice %758 {offsets = [0, 0], sizes = [2, 16], strides = [1, 1]} : vector<2x48xf32> to vector<2x16xf32>
    %762 = vector.extract_strided_slice %758 {offsets = [0, 16], sizes = [2, 16], strides = [1, 1]} : vector<2x48xf32> to vector<2x16xf32>
    %763 = vector.extract_strided_slice %758 {offsets = [0, 32], sizes = [2, 16], strides = [1, 1]} : vector<2x48xf32> to vector<2x16xf32>
    %764 = arith.mulf %762, %745 : vector<2x16xf32>
    %765 = arith.mulf %761, %760 : vector<2x16xf32>
    %766 = arith.addf %764, %765 : vector<2x16xf32>
    %767 = math.tanh %766 : vector<2x16xf32>
    %768 = arith.mulf %763, %767 : vector<2x16xf32>
    %c2_177 = arith.constant 2 : index
    %c0_178 = arith.constant 0 : index
    %769 = vector.load %arg26[%c2_177, %c0_178] : memref<16x16xf32, #tpu.memory_space<vmem>>, vector<2x16xf32>
    tpu.vector_store %arg26[%c2_177, %c0_178], %768 {strides = array<i32>} : memref<16x16xf32, #tpu.memory_space<vmem>>, vector<2x16xf32>,
    %770 = vector.extract_strided_slice %724 {offsets = [4, 0], sizes = [2, 64], strides = [1, 1]} : vector<16x64xf32> to vector<2x64xf32>
    %771 = arith.truncf %768 : vector<2x16xf32> to vector<2x16xbf16>
    %cst_179 = arith.constant dense<0.000000e+00> : vector<2x64xf32>
    %772 = tpu.matmul %771, %725, %cst_179 {dimension_numbers = #tpu.dot_dimension_numbers<[1], [0], [0], [1], [0, 0, 1, 1], [], []>} : vector<2x16xbf16>, vector<16x64xbf16>, vector<2x64xf32> -> vector<2x64xf32>
    %773 = arith.addf %770, %772 : vector<2x64xf32>
    %774 = vector.extract_strided_slice %773 {offsets = [0, 0], sizes = [2, 48], strides = [1, 1]} : vector<2x64xf32> to vector<2x48xf32>
    %775 = arith.negf %774 : vector<2x48xf32>
    %776 = math.exp %775 : vector<2x48xf32>
    %cst_180 = arith.constant 1.000000e+00 : f32
    %777 = vector.broadcast %cst_180 : f32 to vector<2x48xf32>
    %778 = arith.addf %777, %776 : vector<2x48xf32>
    %779 = arith.divf %777, %778 : vector<2x48xf32>
    %780 = vector.extract_strided_slice %773 {offsets = [0, 48], sizes = [2, 16], strides = [1, 1]} : vector<2x64xf32> to vector<2x16xf32>
    %781 = math.tanh %780 : vector<2x16xf32>
    %782 = vector.extract_strided_slice %779 {offsets = [0, 0], sizes = [2, 16], strides = [1, 1]} : vector<2x48xf32> to vector<2x16xf32>
    %783 = vector.extract_strided_slice %779 {offsets = [0, 16], sizes = [2, 16], strides = [1, 1]} : vector<2x48xf32> to vector<2x16xf32>
    %784 = vector.extract_strided_slice %779 {offsets = [0, 32], sizes = [2, 16], strides = [1, 1]} : vector<2x48xf32> to vector<2x16xf32>
    %785 = arith.mulf %783, %766 : vector<2x16xf32>
    %786 = arith.mulf %782, %781 : vector<2x16xf32>
    %787 = arith.addf %785, %786 : vector<2x16xf32>
    %788 = math.tanh %787 : vector<2x16xf32>
    %789 = arith.mulf %784, %788 : vector<2x16xf32>
    %c4_181 = arith.constant 4 : index
    %c0_182 = arith.constant 0 : index
    %790 = vector.load %arg26[%c4_181, %c0_182] : memref<16x16xf32, #tpu.memory_space<vmem>>, vector<2x16xf32>
    tpu.vector_store %arg26[%c4_181, %c0_182], %789 {strides = array<i32>} : memref<16x16xf32, #tpu.memory_space<vmem>>, vector<2x16xf32>,
    %791 = vector.extract_strided_slice %724 {offsets = [6, 0], sizes = [2, 64], strides = [1, 1]} : vector<16x64xf32> to vector<2x64xf32>
    %792 = arith.truncf %789 : vector<2x16xf32> to vector<2x16xbf16>
    %cst_183 = arith.constant dense<0.000000e+00> : vector<2x64xf32>
    %793 = tpu.matmul %792, %725, %cst_183 {dimension_numbers = #tpu.dot_dimension_numbers<[1], [0], [0], [1], [0, 0, 1, 1], [], []>} : vector<2x16xbf16>, vector<16x64xbf16>, vector<2x64xf32> -> vector<2x64xf32>
    %794 = arith.addf %791, %793 : vector<2x64xf32>
    %795 = vector.extract_strided_slice %794 {offsets = [0, 0], sizes = [2, 48], strides = [1, 1]} : vector<2x64xf32> to vector<2x48xf32>
    %796 = arith.negf %795 : vector<2x48xf32>
    %797 = math.exp %796 : vector<2x48xf32>
    %cst_184 = arith.constant 1.000000e+00 : f32
    %798 = vector.broadcast %cst_184 : f32 to vector<2x48xf32>
    %799 = arith.addf %798, %797 : vector<2x48xf32>
    %800 = arith.divf %798, %799 : vector<2x48xf32>
    %801 = vector.extract_strided_slice %794 {offsets = [0, 48], sizes = [2, 16], strides = [1, 1]} : vector<2x64xf32> to vector<2x16xf32>
    %802 = math.tanh %801 : vector<2x16xf32>
    %803 = vector.extract_strided_slice %800 {offsets = [0, 0], sizes = [2, 16], strides = [1, 1]} : vector<2x48xf32> to vector<2x16xf32>
    %804 = vector.extract_strided_slice %800 {offsets = [0, 16], sizes = [2, 16], strides = [1, 1]} : vector<2x48xf32> to vector<2x16xf32>
    %805 = vector.extract_strided_slice %800 {offsets = [0, 32], sizes = [2, 16], strides = [1, 1]} : vector<2x48xf32> to vector<2x16xf32>
    %806 = arith.mulf %804, %787 : vector<2x16xf32>
    %807 = arith.mulf %803, %802 : vector<2x16xf32>
    %808 = arith.addf %806, %807 : vector<2x16xf32>
    %809 = math.tanh %808 : vector<2x16xf32>
    %810 = arith.mulf %805, %809 : vector<2x16xf32>
    %c6_185 = arith.constant 6 : index
    %c0_186 = arith.constant 0 : index
    %811 = vector.load %arg26[%c6_185, %c0_186] : memref<16x16xf32, #tpu.memory_space<vmem>>, vector<2x16xf32>
    tpu.vector_store %arg26[%c6_185, %c0_186], %810 {strides = array<i32>} : memref<16x16xf32, #tpu.memory_space<vmem>>, vector<2x16xf32>,
    %812 = vector.extract_strided_slice %724 {offsets = [8, 0], sizes = [2, 64], strides = [1, 1]} : vector<16x64xf32> to vector<2x64xf32>
    %813 = arith.truncf %810 : vector<2x16xf32> to vector<2x16xbf16>
    %cst_187 = arith.constant dense<0.000000e+00> : vector<2x64xf32>
    %814 = tpu.matmul %813, %725, %cst_187 {dimension_numbers = #tpu.dot_dimension_numbers<[1], [0], [0], [1], [0, 0, 1, 1], [], []>} : vector<2x16xbf16>, vector<16x64xbf16>, vector<2x64xf32> -> vector<2x64xf32>
    %815 = arith.addf %812, %814 : vector<2x64xf32>
    %816 = vector.extract_strided_slice %815 {offsets = [0, 0], sizes = [2, 48], strides = [1, 1]} : vector<2x64xf32> to vector<2x48xf32>
    %817 = arith.negf %816 : vector<2x48xf32>
    %818 = math.exp %817 : vector<2x48xf32>
    %cst_188 = arith.constant 1.000000e+00 : f32
    %819 = vector.broadcast %cst_188 : f32 to vector<2x48xf32>
    %820 = arith.addf %819, %818 : vector<2x48xf32>
    %821 = arith.divf %819, %820 : vector<2x48xf32>
    %822 = vector.extract_strided_slice %815 {offsets = [0, 48], sizes = [2, 16], strides = [1, 1]} : vector<2x64xf32> to vector<2x16xf32>
    %823 = math.tanh %822 : vector<2x16xf32>
    %824 = vector.extract_strided_slice %821 {offsets = [0, 0], sizes = [2, 16], strides = [1, 1]} : vector<2x48xf32> to vector<2x16xf32>
    %825 = vector.extract_strided_slice %821 {offsets = [0, 16], sizes = [2, 16], strides = [1, 1]} : vector<2x48xf32> to vector<2x16xf32>
    %826 = vector.extract_strided_slice %821 {offsets = [0, 32], sizes = [2, 16], strides = [1, 1]} : vector<2x48xf32> to vector<2x16xf32>
    %827 = arith.mulf %825, %808 : vector<2x16xf32>
    %828 = arith.mulf %824, %823 : vector<2x16xf32>
    %829 = arith.addf %827, %828 : vector<2x16xf32>
    %830 = math.tanh %829 : vector<2x16xf32>
    %831 = arith.mulf %826, %830 : vector<2x16xf32>
    %c8_189 = arith.constant 8 : index
    %c0_190 = arith.constant 0 : index
    %832 = vector.load %arg26[%c8_189, %c0_190] : memref<16x16xf32, #tpu.memory_space<vmem>>, vector<2x16xf32>
    tpu.vector_store %arg26[%c8_189, %c0_190], %831 {strides = array<i32>} : memref<16x16xf32, #tpu.memory_space<vmem>>, vector<2x16xf32>,
    %833 = vector.extract_strided_slice %724 {offsets = [10, 0], sizes = [2, 64], strides = [1, 1]} : vector<16x64xf32> to vector<2x64xf32>
    %834 = arith.truncf %831 : vector<2x16xf32> to vector<2x16xbf16>
    %cst_191 = arith.constant dense<0.000000e+00> : vector<2x64xf32>
    %835 = tpu.matmul %834, %725, %cst_191 {dimension_numbers = #tpu.dot_dimension_numbers<[1], [0], [0], [1], [0, 0, 1, 1], [], []>} : vector<2x16xbf16>, vector<16x64xbf16>, vector<2x64xf32> -> vector<2x64xf32>
    %836 = arith.addf %833, %835 : vector<2x64xf32>
    %837 = vector.extract_strided_slice %836 {offsets = [0, 0], sizes = [2, 48], strides = [1, 1]} : vector<2x64xf32> to vector<2x48xf32>
    %838 = arith.negf %837 : vector<2x48xf32>
    %839 = math.exp %838 : vector<2x48xf32>
    %cst_192 = arith.constant 1.000000e+00 : f32
    %840 = vector.broadcast %cst_192 : f32 to vector<2x48xf32>
    %841 = arith.addf %840, %839 : vector<2x48xf32>
    %842 = arith.divf %840, %841 : vector<2x48xf32>
    %843 = vector.extract_strided_slice %836 {offsets = [0, 48], sizes = [2, 16], strides = [1, 1]} : vector<2x64xf32> to vector<2x16xf32>
    %844 = math.tanh %843 : vector<2x16xf32>
    %845 = vector.extract_strided_slice %842 {offsets = [0, 0], sizes = [2, 16], strides = [1, 1]} : vector<2x48xf32> to vector<2x16xf32>
    %846 = vector.extract_strided_slice %842 {offsets = [0, 16], sizes = [2, 16], strides = [1, 1]} : vector<2x48xf32> to vector<2x16xf32>
    %847 = vector.extract_strided_slice %842 {offsets = [0, 32], sizes = [2, 16], strides = [1, 1]} : vector<2x48xf32> to vector<2x16xf32>
    %848 = arith.mulf %846, %829 : vector<2x16xf32>
    %849 = arith.mulf %845, %844 : vector<2x16xf32>
    %850 = arith.addf %848, %849 : vector<2x16xf32>
    %851 = math.tanh %850 : vector<2x16xf32>
    %852 = arith.mulf %847, %851 : vector<2x16xf32>
    %c10_193 = arith.constant 10 : index
    %c0_194 = arith.constant 0 : index
    %853 = vector.load %arg26[%c10_193, %c0_194] : memref<16x16xf32, #tpu.memory_space<vmem>>, vector<2x16xf32>
    tpu.vector_store %arg26[%c10_193, %c0_194], %852 {strides = array<i32>} : memref<16x16xf32, #tpu.memory_space<vmem>>, vector<2x16xf32>,
    %854 = vector.extract_strided_slice %724 {offsets = [12, 0], sizes = [2, 64], strides = [1, 1]} : vector<16x64xf32> to vector<2x64xf32>
    %855 = arith.truncf %852 : vector<2x16xf32> to vector<2x16xbf16>
    %cst_195 = arith.constant dense<0.000000e+00> : vector<2x64xf32>
    %856 = tpu.matmul %855, %725, %cst_195 {dimension_numbers = #tpu.dot_dimension_numbers<[1], [0], [0], [1], [0, 0, 1, 1], [], []>} : vector<2x16xbf16>, vector<16x64xbf16>, vector<2x64xf32> -> vector<2x64xf32>
    %857 = arith.addf %854, %856 : vector<2x64xf32>
    %858 = vector.extract_strided_slice %857 {offsets = [0, 0], sizes = [2, 48], strides = [1, 1]} : vector<2x64xf32> to vector<2x48xf32>
    %859 = arith.negf %858 : vector<2x48xf32>
    %860 = math.exp %859 : vector<2x48xf32>
    %cst_196 = arith.constant 1.000000e+00 : f32
    %861 = vector.broadcast %cst_196 : f32 to vector<2x48xf32>
    %862 = arith.addf %861, %860 : vector<2x48xf32>
    %863 = arith.divf %861, %862 : vector<2x48xf32>
    %864 = vector.extract_strided_slice %857 {offsets = [0, 48], sizes = [2, 16], strides = [1, 1]} : vector<2x64xf32> to vector<2x16xf32>
    %865 = math.tanh %864 : vector<2x16xf32>
    %866 = vector.extract_strided_slice %863 {offsets = [0, 0], sizes = [2, 16], strides = [1, 1]} : vector<2x48xf32> to vector<2x16xf32>
    %867 = vector.extract_strided_slice %863 {offsets = [0, 16], sizes = [2, 16], strides = [1, 1]} : vector<2x48xf32> to vector<2x16xf32>
    %868 = vector.extract_strided_slice %863 {offsets = [0, 32], sizes = [2, 16], strides = [1, 1]} : vector<2x48xf32> to vector<2x16xf32>
    %869 = arith.mulf %867, %850 : vector<2x16xf32>
    %870 = arith.mulf %866, %865 : vector<2x16xf32>
    %871 = arith.addf %869, %870 : vector<2x16xf32>
    %872 = math.tanh %871 : vector<2x16xf32>
    %873 = arith.mulf %868, %872 : vector<2x16xf32>
    %c12_197 = arith.constant 12 : index
    %c0_198 = arith.constant 0 : index
    %874 = vector.load %arg26[%c12_197, %c0_198] : memref<16x16xf32, #tpu.memory_space<vmem>>, vector<2x16xf32>
    tpu.vector_store %arg26[%c12_197, %c0_198], %873 {strides = array<i32>} : memref<16x16xf32, #tpu.memory_space<vmem>>, vector<2x16xf32>,
    %875 = vector.extract_strided_slice %724 {offsets = [14, 0], sizes = [2, 64], strides = [1, 1]} : vector<16x64xf32> to vector<2x64xf32>
    %876 = arith.truncf %873 : vector<2x16xf32> to vector<2x16xbf16>
    %cst_199 = arith.constant dense<0.000000e+00> : vector<2x64xf32>
    %877 = tpu.matmul %876, %725, %cst_199 {dimension_numbers = #tpu.dot_dimension_numbers<[1], [0], [0], [1], [0, 0, 1, 1], [], []>} : vector<2x16xbf16>, vector<16x64xbf16>, vector<2x64xf32> -> vector<2x64xf32>
    %878 = arith.addf %875, %877 : vector<2x64xf32>
    %879 = vector.extract_strided_slice %878 {offsets = [0, 0], sizes = [2, 48], strides = [1, 1]} : vector<2x64xf32> to vector<2x48xf32>
    %880 = arith.negf %879 : vector<2x48xf32>
    %881 = math.exp %880 : vector<2x48xf32>
    %cst_200 = arith.constant 1.000000e+00 : f32
    %882 = vector.broadcast %cst_200 : f32 to vector<2x48xf32>
    %883 = arith.addf %882, %881 : vector<2x48xf32>
    %884 = arith.divf %882, %883 : vector<2x48xf32>
    %885 = vector.extract_strided_slice %878 {offsets = [0, 48], sizes = [2, 16], strides = [1, 1]} : vector<2x64xf32> to vector<2x16xf32>
    %886 = math.tanh %885 : vector<2x16xf32>
    %887 = vector.extract_strided_slice %884 {offsets = [0, 0], sizes = [2, 16], strides = [1, 1]} : vector<2x48xf32> to vector<2x16xf32>
    %888 = vector.extract_strided_slice %884 {offsets = [0, 16], sizes = [2, 16], strides = [1, 1]} : vector<2x48xf32> to vector<2x16xf32>
    %889 = vector.extract_strided_slice %884 {offsets = [0, 32], sizes = [2, 16], strides = [1, 1]} : vector<2x48xf32> to vector<2x16xf32>
    %890 = arith.mulf %888, %871 : vector<2x16xf32>
    %891 = arith.mulf %887, %886 : vector<2x16xf32>
    %892 = arith.addf %890, %891 : vector<2x16xf32>
    %893 = math.tanh %892 : vector<2x16xf32>
    %894 = arith.mulf %889, %893 : vector<2x16xf32>
    %c14_201 = arith.constant 14 : index
    %c0_202 = arith.constant 0 : index
    %895 = vector.load %arg26[%c14_201, %c0_202] : memref<16x16xf32, #tpu.memory_space<vmem>>, vector<2x16xf32>
    tpu.vector_store %arg26[%c14_201, %c0_202], %894 {strides = array<i32>} : memref<16x16xf32, #tpu.memory_space<vmem>>, vector<2x16xf32>,
    %c0_203 = arith.constant 0 : index
    %c0_204 = arith.constant 0 : index
    %896 = vector.load %arg26[%c0_203, %c0_204] : memref<16x16xf32, #tpu.memory_space<vmem>>, vector<16x16xf32>
    %897 = arith.truncf %896 : vector<16x16xf32> to vector<16x16xbf16>
    %c0_205 = arith.constant 0 : index
    %c0_206 = arith.constant 0 : index
    %898 = vector.load %arg21[%c0_205, %c0_206] : memref<16x64xbf16, #tpu.memory_space<vmem>>, vector<16x64xbf16>
    %cst_207 = arith.constant dense<0.000000e+00> : vector<16x64xf32>
    %899 = tpu.matmul %897, %898, %cst_207 {dimension_numbers = #tpu.dot_dimension_numbers<[1], [0], [0], [1], [0, 0, 1, 1], [], []>} : vector<16x16xbf16>, vector<16x64xbf16>, vector<16x64xf32> -> vector<16x64xf32>
    %c0_208 = arith.constant 0 : index
    %c0_209 = arith.constant 0 : index
    %900 = vector.load %arg23[%c0_208, %c0_209] : memref<1x64xf32, #tpu.memory_space<vmem>>, vector<1x64xf32>
    %901 = vector.broadcast %900 : vector<1x64xf32> to vector<16x64xf32>
    %902 = arith.addf %899, %901 : vector<16x64xf32>
    %c0_210 = arith.constant 0 : index
    %c0_211 = arith.constant 0 : index
    %903 = vector.load %arg22[%c0_210, %c0_211] : memref<16x64xbf16, #tpu.memory_space<vmem>>, vector<16x64xbf16>
    %cst_212 = arith.constant 0.000000e+00 : f32
    %904 = vector.broadcast %cst_212 : f32 to vector<2x16xf32>
    %cst_213 = arith.constant 0.000000e+00 : f32
    %905 = vector.broadcast %cst_213 : f32 to vector<2x16xf32>
    %906 = vector.extract_strided_slice %902 {offsets = [0, 0], sizes = [2, 64], strides = [1, 1]} : vector<16x64xf32> to vector<2x64xf32>
    %907 = arith.truncf %904 : vector<2x16xf32> to vector<2x16xbf16>
    %cst_214 = arith.constant dense<0.000000e+00> : vector<2x64xf32>
    %908 = tpu.matmul %907, %903, %cst_214 {dimension_numbers = #tpu.dot_dimension_numbers<[1], [0], [0], [1], [0, 0, 1, 1], [], []>} : vector<2x16xbf16>, vector<16x64xbf16>, vector<2x64xf32> -> vector<2x64xf32>
    %909 = arith.addf %906, %908 : vector<2x64xf32>
    %910 = vector.extract_strided_slice %909 {offsets = [0, 0], sizes = [2, 48], strides = [1, 1]} : vector<2x64xf32> to vector<2x48xf32>
    %911 = arith.negf %910 : vector<2x48xf32>
    %912 = math.exp %911 : vector<2x48xf32>
    %cst_215 = arith.constant 1.000000e+00 : f32
    %913 = vector.broadcast %cst_215 : f32 to vector<2x48xf32>
    %914 = arith.addf %913, %912 : vector<2x48xf32>
    %915 = arith.divf %913, %914 : vector<2x48xf32>
    %916 = vector.extract_strided_slice %909 {offsets = [0, 48], sizes = [2, 16], strides = [1, 1]} : vector<2x64xf32> to vector<2x16xf32>
    %917 = math.tanh %916 : vector<2x16xf32>
    %918 = vector.extract_strided_slice %915 {offsets = [0, 0], sizes = [2, 16], strides = [1, 1]} : vector<2x48xf32> to vector<2x16xf32>
    %919 = vector.extract_strided_slice %915 {offsets = [0, 16], sizes = [2, 16], strides = [1, 1]} : vector<2x48xf32> to vector<2x16xf32>
    %920 = vector.extract_strided_slice %915 {offsets = [0, 32], sizes = [2, 16], strides = [1, 1]} : vector<2x48xf32> to vector<2x16xf32>
    %921 = arith.mulf %919, %905 : vector<2x16xf32>
    %922 = arith.mulf %918, %917 : vector<2x16xf32>
    %923 = arith.addf %921, %922 : vector<2x16xf32>
    %924 = math.tanh %923 : vector<2x16xf32>
    %925 = arith.mulf %920, %924 : vector<2x16xf32>
    %c0_216 = arith.constant 0 : index
    %c0_217 = arith.constant 0 : index
    %926 = vector.load %arg26[%c0_216, %c0_217] : memref<16x16xf32, #tpu.memory_space<vmem>>, vector<2x16xf32>
    tpu.vector_store %arg26[%c0_216, %c0_217], %925 {strides = array<i32>} : memref<16x16xf32, #tpu.memory_space<vmem>>, vector<2x16xf32>,
    %927 = vector.extract_strided_slice %902 {offsets = [2, 0], sizes = [2, 64], strides = [1, 1]} : vector<16x64xf32> to vector<2x64xf32>
    %928 = arith.truncf %925 : vector<2x16xf32> to vector<2x16xbf16>
    %cst_218 = arith.constant dense<0.000000e+00> : vector<2x64xf32>
    %929 = tpu.matmul %928, %903, %cst_218 {dimension_numbers = #tpu.dot_dimension_numbers<[1], [0], [0], [1], [0, 0, 1, 1], [], []>} : vector<2x16xbf16>, vector<16x64xbf16>, vector<2x64xf32> -> vector<2x64xf32>
    %930 = arith.addf %927, %929 : vector<2x64xf32>
    %931 = vector.extract_strided_slice %930 {offsets = [0, 0], sizes = [2, 48], strides = [1, 1]} : vector<2x64xf32> to vector<2x48xf32>
    %932 = arith.negf %931 : vector<2x48xf32>
    %933 = math.exp %932 : vector<2x48xf32>
    %cst_219 = arith.constant 1.000000e+00 : f32
    %934 = vector.broadcast %cst_219 : f32 to vector<2x48xf32>
    %935 = arith.addf %934, %933 : vector<2x48xf32>
    %936 = arith.divf %934, %935 : vector<2x48xf32>
    %937 = vector.extract_strided_slice %930 {offsets = [0, 48], sizes = [2, 16], strides = [1, 1]} : vector<2x64xf32> to vector<2x16xf32>
    %938 = math.tanh %937 : vector<2x16xf32>
    %939 = vector.extract_strided_slice %936 {offsets = [0, 0], sizes = [2, 16], strides = [1, 1]} : vector<2x48xf32> to vector<2x16xf32>
    %940 = vector.extract_strided_slice %936 {offsets = [0, 16], sizes = [2, 16], strides = [1, 1]} : vector<2x48xf32> to vector<2x16xf32>
    %941 = vector.extract_strided_slice %936 {offsets = [0, 32], sizes = [2, 16], strides = [1, 1]} : vector<2x48xf32> to vector<2x16xf32>
    %942 = arith.mulf %940, %923 : vector<2x16xf32>
    %943 = arith.mulf %939, %938 : vector<2x16xf32>
    %944 = arith.addf %942, %943 : vector<2x16xf32>
    %945 = math.tanh %944 : vector<2x16xf32>
    %946 = arith.mulf %941, %945 : vector<2x16xf32>
    %c2_220 = arith.constant 2 : index
    %c0_221 = arith.constant 0 : index
    %947 = vector.load %arg26[%c2_220, %c0_221] : memref<16x16xf32, #tpu.memory_space<vmem>>, vector<2x16xf32>
    tpu.vector_store %arg26[%c2_220, %c0_221], %946 {strides = array<i32>} : memref<16x16xf32, #tpu.memory_space<vmem>>, vector<2x16xf32>,
    %948 = vector.extract_strided_slice %902 {offsets = [4, 0], sizes = [2, 64], strides = [1, 1]} : vector<16x64xf32> to vector<2x64xf32>
    %949 = arith.truncf %946 : vector<2x16xf32> to vector<2x16xbf16>
    %cst_222 = arith.constant dense<0.000000e+00> : vector<2x64xf32>
    %950 = tpu.matmul %949, %903, %cst_222 {dimension_numbers = #tpu.dot_dimension_numbers<[1], [0], [0], [1], [0, 0, 1, 1], [], []>} : vector<2x16xbf16>, vector<16x64xbf16>, vector<2x64xf32> -> vector<2x64xf32>
    %951 = arith.addf %948, %950 : vector<2x64xf32>
    %952 = vector.extract_strided_slice %951 {offsets = [0, 0], sizes = [2, 48], strides = [1, 1]} : vector<2x64xf32> to vector<2x48xf32>
    %953 = arith.negf %952 : vector<2x48xf32>
    %954 = math.exp %953 : vector<2x48xf32>
    %cst_223 = arith.constant 1.000000e+00 : f32
    %955 = vector.broadcast %cst_223 : f32 to vector<2x48xf32>
    %956 = arith.addf %955, %954 : vector<2x48xf32>
    %957 = arith.divf %955, %956 : vector<2x48xf32>
    %958 = vector.extract_strided_slice %951 {offsets = [0, 48], sizes = [2, 16], strides = [1, 1]} : vector<2x64xf32> to vector<2x16xf32>
    %959 = math.tanh %958 : vector<2x16xf32>
    %960 = vector.extract_strided_slice %957 {offsets = [0, 0], sizes = [2, 16], strides = [1, 1]} : vector<2x48xf32> to vector<2x16xf32>
    %961 = vector.extract_strided_slice %957 {offsets = [0, 16], sizes = [2, 16], strides = [1, 1]} : vector<2x48xf32> to vector<2x16xf32>
    %962 = vector.extract_strided_slice %957 {offsets = [0, 32], sizes = [2, 16], strides = [1, 1]} : vector<2x48xf32> to vector<2x16xf32>
    %963 = arith.mulf %961, %944 : vector<2x16xf32>
    %964 = arith.mulf %960, %959 : vector<2x16xf32>
    %965 = arith.addf %963, %964 : vector<2x16xf32>
    %966 = math.tanh %965 : vector<2x16xf32>
    %967 = arith.mulf %962, %966 : vector<2x16xf32>
    %c4_224 = arith.constant 4 : index
    %c0_225 = arith.constant 0 : index
    %968 = vector.load %arg26[%c4_224, %c0_225] : memref<16x16xf32, #tpu.memory_space<vmem>>, vector<2x16xf32>
    tpu.vector_store %arg26[%c4_224, %c0_225], %967 {strides = array<i32>} : memref<16x16xf32, #tpu.memory_space<vmem>>, vector<2x16xf32>,
    %969 = vector.extract_strided_slice %902 {offsets = [6, 0], sizes = [2, 64], strides = [1, 1]} : vector<16x64xf32> to vector<2x64xf32>
    %970 = arith.truncf %967 : vector<2x16xf32> to vector<2x16xbf16>
    %cst_226 = arith.constant dense<0.000000e+00> : vector<2x64xf32>
    %971 = tpu.matmul %970, %903, %cst_226 {dimension_numbers = #tpu.dot_dimension_numbers<[1], [0], [0], [1], [0, 0, 1, 1], [], []>} : vector<2x16xbf16>, vector<16x64xbf16>, vector<2x64xf32> -> vector<2x64xf32>
    %972 = arith.addf %969, %971 : vector<2x64xf32>
    %973 = vector.extract_strided_slice %972 {offsets = [0, 0], sizes = [2, 48], strides = [1, 1]} : vector<2x64xf32> to vector<2x48xf32>
    %974 = arith.negf %973 : vector<2x48xf32>
    %975 = math.exp %974 : vector<2x48xf32>
    %cst_227 = arith.constant 1.000000e+00 : f32
    %976 = vector.broadcast %cst_227 : f32 to vector<2x48xf32>
    %977 = arith.addf %976, %975 : vector<2x48xf32>
    %978 = arith.divf %976, %977 : vector<2x48xf32>
    %979 = vector.extract_strided_slice %972 {offsets = [0, 48], sizes = [2, 16], strides = [1, 1]} : vector<2x64xf32> to vector<2x16xf32>
    %980 = math.tanh %979 : vector<2x16xf32>
    %981 = vector.extract_strided_slice %978 {offsets = [0, 0], sizes = [2, 16], strides = [1, 1]} : vector<2x48xf32> to vector<2x16xf32>
    %982 = vector.extract_strided_slice %978 {offsets = [0, 16], sizes = [2, 16], strides = [1, 1]} : vector<2x48xf32> to vector<2x16xf32>
    %983 = vector.extract_strided_slice %978 {offsets = [0, 32], sizes = [2, 16], strides = [1, 1]} : vector<2x48xf32> to vector<2x16xf32>
    %984 = arith.mulf %982, %965 : vector<2x16xf32>
    %985 = arith.mulf %981, %980 : vector<2x16xf32>
    %986 = arith.addf %984, %985 : vector<2x16xf32>
    %987 = math.tanh %986 : vector<2x16xf32>
    %988 = arith.mulf %983, %987 : vector<2x16xf32>
    %c6_228 = arith.constant 6 : index
    %c0_229 = arith.constant 0 : index
    %989 = vector.load %arg26[%c6_228, %c0_229] : memref<16x16xf32, #tpu.memory_space<vmem>>, vector<2x16xf32>
    tpu.vector_store %arg26[%c6_228, %c0_229], %988 {strides = array<i32>} : memref<16x16xf32, #tpu.memory_space<vmem>>, vector<2x16xf32>,
    %990 = vector.extract_strided_slice %902 {offsets = [8, 0], sizes = [2, 64], strides = [1, 1]} : vector<16x64xf32> to vector<2x64xf32>
    %991 = arith.truncf %988 : vector<2x16xf32> to vector<2x16xbf16>
    %cst_230 = arith.constant dense<0.000000e+00> : vector<2x64xf32>
    %992 = tpu.matmul %991, %903, %cst_230 {dimension_numbers = #tpu.dot_dimension_numbers<[1], [0], [0], [1], [0, 0, 1, 1], [], []>} : vector<2x16xbf16>, vector<16x64xbf16>, vector<2x64xf32> -> vector<2x64xf32>
    %993 = arith.addf %990, %992 : vector<2x64xf32>
    %994 = vector.extract_strided_slice %993 {offsets = [0, 0], sizes = [2, 48], strides = [1, 1]} : vector<2x64xf32> to vector<2x48xf32>
    %995 = arith.negf %994 : vector<2x48xf32>
    %996 = math.exp %995 : vector<2x48xf32>
    %cst_231 = arith.constant 1.000000e+00 : f32
    %997 = vector.broadcast %cst_231 : f32 to vector<2x48xf32>
    %998 = arith.addf %997, %996 : vector<2x48xf32>
    %999 = arith.divf %997, %998 : vector<2x48xf32>
    %1000 = vector.extract_strided_slice %993 {offsets = [0, 48], sizes = [2, 16], strides = [1, 1]} : vector<2x64xf32> to vector<2x16xf32>
    %1001 = math.tanh %1000 : vector<2x16xf32>
    %1002 = vector.extract_strided_slice %999 {offsets = [0, 0], sizes = [2, 16], strides = [1, 1]} : vector<2x48xf32> to vector<2x16xf32>
    %1003 = vector.extract_strided_slice %999 {offsets = [0, 16], sizes = [2, 16], strides = [1, 1]} : vector<2x48xf32> to vector<2x16xf32>
    %1004 = vector.extract_strided_slice %999 {offsets = [0, 32], sizes = [2, 16], strides = [1, 1]} : vector<2x48xf32> to vector<2x16xf32>
    %1005 = arith.mulf %1003, %986 : vector<2x16xf32>
    %1006 = arith.mulf %1002, %1001 : vector<2x16xf32>
    %1007 = arith.addf %1005, %1006 : vector<2x16xf32>
    %1008 = math.tanh %1007 : vector<2x16xf32>
    %1009 = arith.mulf %1004, %1008 : vector<2x16xf32>
    %c8_232 = arith.constant 8 : index
    %c0_233 = arith.constant 0 : index
    %1010 = vector.load %arg26[%c8_232, %c0_233] : memref<16x16xf32, #tpu.memory_space<vmem>>, vector<2x16xf32>
    tpu.vector_store %arg26[%c8_232, %c0_233], %1009 {strides = array<i32>} : memref<16x16xf32, #tpu.memory_space<vmem>>, vector<2x16xf32>,
    %1011 = vector.extract_strided_slice %902 {offsets = [10, 0], sizes = [2, 64], strides = [1, 1]} : vector<16x64xf32> to vector<2x64xf32>
    %1012 = arith.truncf %1009 : vector<2x16xf32> to vector<2x16xbf16>
    %cst_234 = arith.constant dense<0.000000e+00> : vector<2x64xf32>
    %1013 = tpu.matmul %1012, %903, %cst_234 {dimension_numbers = #tpu.dot_dimension_numbers<[1], [0], [0], [1], [0, 0, 1, 1], [], []>} : vector<2x16xbf16>, vector<16x64xbf16>, vector<2x64xf32> -> vector<2x64xf32>
    %1014 = arith.addf %1011, %1013 : vector<2x64xf32>
    %1015 = vector.extract_strided_slice %1014 {offsets = [0, 0], sizes = [2, 48], strides = [1, 1]} : vector<2x64xf32> to vector<2x48xf32>
    %1016 = arith.negf %1015 : vector<2x48xf32>
    %1017 = math.exp %1016 : vector<2x48xf32>
    %cst_235 = arith.constant 1.000000e+00 : f32
    %1018 = vector.broadcast %cst_235 : f32 to vector<2x48xf32>
    %1019 = arith.addf %1018, %1017 : vector<2x48xf32>
    %1020 = arith.divf %1018, %1019 : vector<2x48xf32>
    %1021 = vector.extract_strided_slice %1014 {offsets = [0, 48], sizes = [2, 16], strides = [1, 1]} : vector<2x64xf32> to vector<2x16xf32>
    %1022 = math.tanh %1021 : vector<2x16xf32>
    %1023 = vector.extract_strided_slice %1020 {offsets = [0, 0], sizes = [2, 16], strides = [1, 1]} : vector<2x48xf32> to vector<2x16xf32>
    %1024 = vector.extract_strided_slice %1020 {offsets = [0, 16], sizes = [2, 16], strides = [1, 1]} : vector<2x48xf32> to vector<2x16xf32>
    %1025 = vector.extract_strided_slice %1020 {offsets = [0, 32], sizes = [2, 16], strides = [1, 1]} : vector<2x48xf32> to vector<2x16xf32>
    %1026 = arith.mulf %1024, %1007 : vector<2x16xf32>
    %1027 = arith.mulf %1023, %1022 : vector<2x16xf32>
    %1028 = arith.addf %1026, %1027 : vector<2x16xf32>
    %1029 = math.tanh %1028 : vector<2x16xf32>
    %1030 = arith.mulf %1025, %1029 : vector<2x16xf32>
    %c10_236 = arith.constant 10 : index
    %c0_237 = arith.constant 0 : index
    %1031 = vector.load %arg26[%c10_236, %c0_237] : memref<16x16xf32, #tpu.memory_space<vmem>>, vector<2x16xf32>
    tpu.vector_store %arg26[%c10_236, %c0_237], %1030 {strides = array<i32>} : memref<16x16xf32, #tpu.memory_space<vmem>>, vector<2x16xf32>,
    %1032 = vector.extract_strided_slice %902 {offsets = [12, 0], sizes = [2, 64], strides = [1, 1]} : vector<16x64xf32> to vector<2x64xf32>
    %1033 = arith.truncf %1030 : vector<2x16xf32> to vector<2x16xbf16>
    %cst_238 = arith.constant dense<0.000000e+00> : vector<2x64xf32>
    %1034 = tpu.matmul %1033, %903, %cst_238 {dimension_numbers = #tpu.dot_dimension_numbers<[1], [0], [0], [1], [0, 0, 1, 1], [], []>} : vector<2x16xbf16>, vector<16x64xbf16>, vector<2x64xf32> -> vector<2x64xf32>
    %1035 = arith.addf %1032, %1034 : vector<2x64xf32>
    %1036 = vector.extract_strided_slice %1035 {offsets = [0, 0], sizes = [2, 48], strides = [1, 1]} : vector<2x64xf32> to vector<2x48xf32>
    %1037 = arith.negf %1036 : vector<2x48xf32>
    %1038 = math.exp %1037 : vector<2x48xf32>
    %cst_239 = arith.constant 1.000000e+00 : f32
    %1039 = vector.broadcast %cst_239 : f32 to vector<2x48xf32>
    %1040 = arith.addf %1039, %1038 : vector<2x48xf32>
    %1041 = arith.divf %1039, %1040 : vector<2x48xf32>
    %1042 = vector.extract_strided_slice %1035 {offsets = [0, 48], sizes = [2, 16], strides = [1, 1]} : vector<2x64xf32> to vector<2x16xf32>
    %1043 = math.tanh %1042 : vector<2x16xf32>
    %1044 = vector.extract_strided_slice %1041 {offsets = [0, 0], sizes = [2, 16], strides = [1, 1]} : vector<2x48xf32> to vector<2x16xf32>
    %1045 = vector.extract_strided_slice %1041 {offsets = [0, 16], sizes = [2, 16], strides = [1, 1]} : vector<2x48xf32> to vector<2x16xf32>
    %1046 = vector.extract_strided_slice %1041 {offsets = [0, 32], sizes = [2, 16], strides = [1, 1]} : vector<2x48xf32> to vector<2x16xf32>
    %1047 = arith.mulf %1045, %1028 : vector<2x16xf32>
    %1048 = arith.mulf %1044, %1043 : vector<2x16xf32>
    %1049 = arith.addf %1047, %1048 : vector<2x16xf32>
    %1050 = math.tanh %1049 : vector<2x16xf32>
    %1051 = arith.mulf %1046, %1050 : vector<2x16xf32>
    %c12_240 = arith.constant 12 : index
    %c0_241 = arith.constant 0 : index
    %1052 = vector.load %arg26[%c12_240, %c0_241] : memref<16x16xf32, #tpu.memory_space<vmem>>, vector<2x16xf32>
    tpu.vector_store %arg26[%c12_240, %c0_241], %1051 {strides = array<i32>} : memref<16x16xf32, #tpu.memory_space<vmem>>, vector<2x16xf32>,
    %1053 = vector.extract_strided_slice %902 {offsets = [14, 0], sizes = [2, 64], strides = [1, 1]} : vector<16x64xf32> to vector<2x64xf32>
    %1054 = arith.truncf %1051 : vector<2x16xf32> to vector<2x16xbf16>
    %cst_242 = arith.constant dense<0.000000e+00> : vector<2x64xf32>
    %1055 = tpu.matmul %1054, %903, %cst_242 {dimension_numbers = #tpu.dot_dimension_numbers<[1], [0], [0], [1], [0, 0, 1, 1], [], []>} : vector<2x16xbf16>, vector<16x64xbf16>, vector<2x64xf32> -> vector<2x64xf32>
    %1056 = arith.addf %1053, %1055 : vector<2x64xf32>
    %1057 = vector.extract_strided_slice %1056 {offsets = [0, 0], sizes = [2, 48], strides = [1, 1]} : vector<2x64xf32> to vector<2x48xf32>
    %1058 = arith.negf %1057 : vector<2x48xf32>
    %1059 = math.exp %1058 : vector<2x48xf32>
    %cst_243 = arith.constant 1.000000e+00 : f32
    %1060 = vector.broadcast %cst_243 : f32 to vector<2x48xf32>
    %1061 = arith.addf %1060, %1059 : vector<2x48xf32>
    %1062 = arith.divf %1060, %1061 : vector<2x48xf32>
    %1063 = vector.extract_strided_slice %1056 {offsets = [0, 48], sizes = [2, 16], strides = [1, 1]} : vector<2x64xf32> to vector<2x16xf32>
    %1064 = math.tanh %1063 : vector<2x16xf32>
    %1065 = vector.extract_strided_slice %1062 {offsets = [0, 0], sizes = [2, 16], strides = [1, 1]} : vector<2x48xf32> to vector<2x16xf32>
    %1066 = vector.extract_strided_slice %1062 {offsets = [0, 16], sizes = [2, 16], strides = [1, 1]} : vector<2x48xf32> to vector<2x16xf32>
    %1067 = vector.extract_strided_slice %1062 {offsets = [0, 32], sizes = [2, 16], strides = [1, 1]} : vector<2x48xf32> to vector<2x16xf32>
    %1068 = arith.mulf %1066, %1049 : vector<2x16xf32>
    %1069 = arith.mulf %1065, %1064 : vector<2x16xf32>
    %1070 = arith.addf %1068, %1069 : vector<2x16xf32>
    %1071 = math.tanh %1070 : vector<2x16xf32>
    %1072 = arith.mulf %1067, %1071 : vector<2x16xf32>
    %c14_244 = arith.constant 14 : index
    %c0_245 = arith.constant 0 : index
    %1073 = vector.load %arg26[%c14_244, %c0_245] : memref<16x16xf32, #tpu.memory_space<vmem>>, vector<2x16xf32>
    tpu.vector_store %arg26[%c14_244, %c0_245], %1072 {strides = array<i32>} : memref<16x16xf32, #tpu.memory_space<vmem>>, vector<2x16xf32>,
    %c0_246 = arith.constant 0 : index
    %c0_247 = arith.constant 0 : index
    %1074 = vector.load %arg26[%c0_246, %c0_247] : memref<16x16xf32, #tpu.memory_space<vmem>>, vector<16x16xf32>
    %1075 = math.tanh %1074 : vector<16x16xf32>
    %c0_248 = arith.constant 0 : index
    %c0_249 = arith.constant 0 : index
    %1076 = vector.load %arg24[%c0_248, %c0_249] : memref<16x16xf32, #tpu.memory_space<vmem>>, vector<16x16xf32>
    tpu.vector_store %arg24[%c0_248, %c0_249], %1075 {strides = array<i32>} : memref<16x16xf32, #tpu.memory_space<vmem>>, vector<16x16xf32>,
    return
  }
}

</mosaic_0001>

<llo_original>
// kernel: lstmvae_forward.1
$region0: #{lstmvae_forward.1}
  #allocation0 [shape = 'u32[]', space=smem, size = 0x4, offset = 0x4, fixed_abs, tag = 'smem constant byte address 0x4 - core index']
  #allocation1 [shape = 'u32[144,128]{1,0:T(1,128)}', space=vmem, size = 0x12000, scoped, tag = 'internal scratch']
  #allocation2 [shape = 'f32[16,32]{1,0:T(8,128)}', space=vmem, size = 0x2000, scoped, tag = 'scratch operand']
  #allocation3 [shape = 'f32[16,16]{1,0:T(8,128)}', space=vmem, size = 0x2000, scoped, tag = 'scratch operand']
  %s0 = inlined_call_operand.vmem [shape: bf16[16,16], index: 0, kind: input, shape index: {}]
  %s1 = inlined_call_operand.vmem [shape: f32[2,8], index: 1, kind: input, shape index: {}]
  %s2 = inlined_call_operand.hbm [shape: bf16[16,128], index: 2, kind: input, shape index: {}]
  %s3 = inlined_call_operand.vmem [shape: bf16[32,128], index: 3, kind: input, shape index: {}]
  %s4 = inlined_call_operand.hbm [shape: f32[1,128], index: 4, kind: input, shape index: {}]
  %s5 = inlined_call_operand.vmem [shape: bf16[32,128], index: 5, kind: input, shape index: {}]
  %s6 = inlined_call_operand.vmem [shape: bf16[32,128], index: 6, kind: input, shape index: {}]
  %s7 = inlined_call_operand.hbm [shape: f32[1,128], index: 7, kind: input, shape index: {}]
  %s8 = inlined_call_operand.vmem [shape: bf16[32,8], index: 8, kind: input, shape index: {}]
  %s9 = inlined_call_operand.hbm [shape: f32[1,8], index: 9, kind: input, shape index: {}]
  %s10 = inlined_call_operand.vmem [shape: bf16[32,8], index: 10, kind: input, shape index: {}]
  %s11 = inlined_call_operand.vmem [shape: f32[1,8], index: 11, kind: input, shape index: {}]
  %s12 = inlined_call_operand.hbm [shape: bf16[8,128], index: 12, kind: input, shape index: {}]
  %s13 = inlined_call_operand.vmem [shape: bf16[32,128], index: 13, kind: input, shape index: {}]
  %s14 = inlined_call_operand.hbm [shape: f32[1,128], index: 14, kind: input, shape index: {}]
  %s15 = inlined_call_operand.vmem [shape: bf16[32,128], index: 15, kind: input, shape index: {}]
  %s16 = inlined_call_operand.vmem [shape: bf16[32,128], index: 16, kind: input, shape index: {}]
  %s17 = inlined_call_operand.hbm [shape: f32[1,128], index: 17, kind: input, shape index: {}]
  %s18 = inlined_call_operand.hbm [shape: bf16[32,64], index: 18, kind: input, shape index: {}]
  %s19 = inlined_call_operand.hbm [shape: bf16[16,64], index: 19, kind: input, shape index: {}]
  %s20 = inlined_call_operand.hbm [shape: f32[1,64], index: 20, kind: input, shape index: {}]
  %s21 = inlined_call_operand.hbm [shape: bf16[16,64], index: 21, kind: input, shape index: {}]
  %s22 = inlined_call_operand.hbm [shape: bf16[16,64], index: 22, kind: input, shape index: {}]
  %s23 = inlined_call_operand.hbm [shape: f32[1,64], index: 23, kind: input, shape index: {}]
  %s24 = inlined_call_operand.vmem [shape: f32[16,16], index: 24, kind: output, shape index: {}]
  %s25 = sld [smem:[#allocation0]]
  $region158: #{lstmvae_forward.1} parent=0
    _
  %s27 = ssub.s32 1, %s25
  %s28 = scalar_select 0, %s27, %s25
  $region1: #{lstmvae_forward.1} parent=0
    #allocation4 [shape = 'u8[4096]{0}', space=vmem, size = 0x1000, scoped, tag = 'input window, operand 2, single buffered']
    #allocation5 [shape = 's32[1]{0}', space=sflag, size = 0x4, scoped, tag = 'scoped memory for lstmvae_forward.1']
    #allocation6 [shape = 'u8[512]{0}', space=vmem, size = 0x400, scoped, tag = 'input window, operand 4, single buffered']
    #allocation7 [shape = 's32[1]{0}', space=sflag, size = 0x4, scoped, tag = 'scoped memory for lstmvae_forward.1']
    #allocation8 [shape = 'u8[512]{0}', space=vmem, size = 0x400, scoped, tag = 'input window, operand 7, single buffered']
    #allocation9 [shape = 'u8[512]{0}', space=vmem, size = 0x400, scoped, tag = 'input window, operand 9, single buffered']
    #allocation10 [shape = 's32[1]{0}', space=sflag, size = 0x4, scoped, tag = 'scoped memory for lstmvae_forward.1']
    #allocation11 [shape = 'u8[2048]{0}', space=vmem, size = 0x800, scoped, tag = 'input window, operand 12, single buffered']
    #allocation12 [shape = 'u8[512]{0}', space=vmem, size = 0x400, scoped, tag = 'input window, operand 14, single buffered']
    #allocation13 [shape = 's32[1]{0}', space=sflag, size = 0x4, scoped, tag = 'scoped memory for lstmvae_forward.1']
    #allocation14 [shape = 'u8[512]{0}', space=vmem, size = 0x400, scoped, tag = 'input window, operand 17, single buffered']
    #allocation15 [shape = 'u8[8192]{0}', space=vmem, size = 0x2000, scoped, tag = 'input window, operand 18, single buffered']
    #allocation16 [shape = 's32[1]{0}', space=sflag, size = 0x4, scoped, tag = 'scoped memory for lstmvae_forward.1']
    #allocation17 [shape = 'u8[4096]{0}', space=vmem, size = 0x1000, scoped, tag = 'input window, operand 19, single buffered']
    #allocation18 [shape = 'u8[512]{0}', space=vmem, size = 0x400, scoped, tag = 'input window, operand 20, single buffered']
    #allocation19 [shape = 's32[1]{0}', space=sflag, size = 0x4, scoped, tag = 'scoped memory for lstmvae_forward.1']
    #allocation20 [shape = 'u8[4096]{0}', space=vmem, size = 0x1000, scoped, tag = 'input window, operand 21, single buffered']
    #allocation21 [shape = 'u8[4096]{0}', space=vmem, size = 0x1000, scoped, tag = 'input window, operand 22, single buffered']
    #allocation22 [shape = 's32[1]{0}', space=sflag, size = 0x4, scoped, tag = 'scoped memory for lstmvae_forward.1']
    #allocation23 [shape = 'u8[512]{0}', space=vmem, size = 0x400, scoped, tag = 'input window, operand 23, single buffered']
    %29 = vsyncpa [#allocation5], 0
    %30 = vsyncpa [#allocation7], 0
    %31 = vsyncpa [#allocation10], 0
    %32 = vsyncpa [#allocation13], 0
    %33 = vsyncpa [#allocation16], 0
    %34 = vsyncpa [#allocation19], 0
    %35 = vsyncpa [#allocation22], 0
    // Predicated region
    $region2: #{lstmvae_forward.1} parent=1 // pred_check
      _
    $region3: #{lstmvae_forward.1} parent=1 // pred_check_branch
      %37 = sbr.rel (0) target = $region5
    $region4: #{lstmvae_forward.1} parent=1 // pred_region
      _
    $region5: #{lstmvae_forward.1} parent=1 // pred_fallthru
      _
    // Predicated region
    $region6: #{lstmvae_forward.1} parent=1 // pred_check
      _
    $region7: #{lstmvae_forward.1} parent=1 // pred_check_branch
      %39 = sbr.rel (0) target = $region9
    $region8: #{lstmvae_forward.1} parent=1 // pred_region
      _
    $region9: #{lstmvae_forward.1} parent=1 // pred_fallthru
      _
    // Predicated region
    $region10: #{lstmvae_forward.1} parent=1 // pred_check
      _
    $region11: #{lstmvae_forward.1} parent=1 // pred_check_branch
      %41 = sbr.rel (0) target = $region13
    $region12: #{lstmvae_forward.1} parent=1 // pred_region
      %s43 = ssub.s32 128, 128
      %44 = vsyncadd [#allocation5], %s43
      %s45 = sshll.u32 [#allocation4], 4
      %s46 = int_to_ptr.vmem [resolvable:$true] %s45
      %51 = dma.hbm_to_vmem [thread:$0]  %s2, 128, %s46, [#allocation5], 64, 64, 4
    $region13: #{lstmvae_forward.1} parent=1 // pred_fallthru
      _
    // Predicated region
    $region14: #{lstmvae_forward.1} parent=1 // pred_check
      _
    $region15: #{lstmvae_forward.1} parent=1 // pred_check_branch
      %53 = sbr.rel (0) target = $region17
    $region16: #{lstmvae_forward.1} parent=1 // pred_region
      _
    $region17: #{lstmvae_forward.1} parent=1 // pred_fallthru
      _
    // Predicated region
    $region18: #{lstmvae_forward.1} parent=1 // pred_check
      _
    $region19: #{lstmvae_forward.1} parent=1 // pred_check_branch
      %55 = sbr.rel (0) target = $region21
    $region20: #{lstmvae_forward.1} parent=1 // pred_region
      %s57 = ssub.s32 16, 16
      %58 = vsyncadd [#allocation7], %s57
      %s60 = sshll.u32 [#allocation6], 4
      %s61 = int_to_ptr.vmem [resolvable:$true] %s60
      %63 = dma.hbm_to_vmem [thread:$0]  %s4, 16, %s61, [#allocation7]
    $region21: #{lstmvae_forward.1} parent=1 // pred_fallthru
      _
    // Predicated region
    $region22: #{lstmvae_forward.1} parent=1 // pred_check
      _
    $region23: #{lstmvae_forward.1} parent=1 // pred_check_branch
      %65 = sbr.rel (0) target = $region25
    $region24: #{lstmvae_forward.1} parent=1 // pred_region
      _
    $region25: #{lstmvae_forward.1} parent=1 // pred_fallthru
      _
    // Predicated region
    $region26: #{lstmvae_forward.1} parent=1 // pred_check
      _
    $region27: #{lstmvae_forward.1} parent=1 // pred_check_branch
      %67 = sbr.rel (0) target = $region29
    $region28: #{lstmvae_forward.1} parent=1 // pred_region
      _
    $region29: #{lstmvae_forward.1} parent=1 // pred_fallthru
      _
    // Predicated region
    $region30: #{lstmvae_forward.1} parent=1 // pred_check
      _
    $region31: #{lstmvae_forward.1} parent=1 // pred_check_branch
      %69 = sbr.rel (0) target = $region33
    $region32: #{lstmvae_forward.1} parent=1 // pred_region
      %s71 = ssub.s32 16, 16
      %72 = vsyncadd [#allocation7], %s71
      %s74 = sshll.u32 [#allocation8], 4
      %s75 = int_to_ptr.vmem [resolvable:$true] %s74
      %77 = dma.hbm_to_vmem [thread:$0]  %s7, 16, %s75, [#allocation7]
    $region33: #{lstmvae_forward.1} parent=1 // pred_fallthru
      _
    // Predicated region
    $region34: #{lstmvae_forward.1} parent=1 // pred_check
      _
    $region35: #{lstmvae_forward.1} parent=1 // pred_check_branch
      %79 = sbr.rel (0) target = $region37
    $region36: #{lstmvae_forward.1} parent=1 // pred_region
      _
    $region37: #{lstmvae_forward.1} parent=1 // pred_fallthru
      _
    // Predicated region
    $region38: #{lstmvae_forward.1} parent=1 // pred_check
      _
    $region39: #{lstmvae_forward.1} parent=1 // pred_check_branch
      %81 = sbr.rel (0) target = $region41
    $region40: #{lstmvae_forward.1} parent=1 // pred_region
      %s83 = ssub.s32 16, 16
      %84 = vsyncadd [#allocation10], %s83
      %s86 = sshll.u32 [#allocation9], 4
      %s87 = int_to_ptr.vmem [resolvable:$true] %s86
      %89 = dma.hbm_to_vmem [thread:$0]  %s9, 16, %s87, [#allocation10]
    $region41: #{lstmvae_forward.1} parent=1 // pred_fallthru
      _
    // Predicated region
    $region42: #{lstmvae_forward.1} parent=1 // pred_check
      _
    $region43: #{lstmvae_forward.1} parent=1 // pred_check_branch
      %91 = sbr.rel (0) target = $region45
    $region44: #{lstmvae_forward.1} parent=1 // pred_region
      _
    $region45: #{lstmvae_forward.1} parent=1 // pred_fallthru
      _
    // Predicated region
    $region46: #{lstmvae_forward.1} parent=1 // pred_check
      _
    $region47: #{lstmvae_forward.1} parent=1 // pred_check_branch
      %93 = sbr.rel (0) target = $region49
    $region48: #{lstmvae_forward.1} parent=1 // pred_region
      _
    $region49: #{lstmvae_forward.1} parent=1 // pred_fallthru
      _
    // Predicated region
    $region50: #{lstmvae_forward.1} parent=1 // pred_check
      _
    $region51: #{lstmvae_forward.1} parent=1 // pred_check_branch
      %95 = sbr.rel (0) target = $region53
    $region52: #{lstmvae_forward.1} parent=1 // pred_region
      %s97 = ssub.s32 64, 64
      %98 = vsyncadd [#allocation10], %s97
      %s100 = sshll.u32 [#allocation11], 4
      %s101 = int_to_ptr.vmem [resolvable:$true] %s100
      %103 = dma.hbm_to_vmem [thread:$0]  %s12, 64, %s101, [#allocation10]
    $region53: #{lstmvae_forward.1} parent=1 // pred_fallthru
      _
    // Predicated region
    $region54: #{lstmvae_forward.1} parent=1 // pred_check
      _
    $region55: #{lstmvae_forward.1} parent=1 // pred_check_branch
      %105 = sbr.rel (0) target = $region57
    $region56: #{lstmvae_forward.1} parent=1 // pred_region
      _
    $region57: #{lstmvae_forward.1} parent=1 // pred_fallthru
      _
    // Predicated region
    $region58: #{lstmvae_forward.1} parent=1 // pred_check
      _
    $region59: #{lstmvae_forward.1} parent=1 // pred_check_branch
      %107 = sbr.rel (0) target = $region61
    $region60: #{lstmvae_forward.1} parent=1 // pred_region
      %s109 = ssub.s32 16, 16
      %110 = vsyncadd [#allocation13], %s109
      %s112 = sshll.u32 [#allocation12], 4
      %s113 = int_to_ptr.vmem [resolvable:$true] %s112
      %115 = dma.hbm_to_vmem [thread:$0]  %s14, 16, %s113, [#allocation13]
    $region61: #{lstmvae_forward.1} parent=1 // pred_fallthru
      _
    // Predicated region
    $region62: #{lstmvae_forward.1} parent=1 // pred_check
      _
    $region63: #{lstmvae_forward.1} parent=1 // pred_check_branch
      %117 = sbr.rel (0) target = $region65
    $region64: #{lstmvae_forward.1} parent=1 // pred_region
      _
    $region65: #{lstmvae_forward.1} parent=1 // pred_fallthru
      _
    // Predicated region
    $region66: #{lstmvae_forward.1} parent=1 // pred_check
      _
    $region67: #{lstmvae_forward.1} parent=1 // pred_check_branch
      %119 = sbr.rel (0) target = $region69
    $region68: #{lstmvae_forward.1} parent=1 // pred_region
      _
    $region69: #{lstmvae_forward.1} parent=1 // pred_fallthru
      _
    // Predicated region
    $region70: #{lstmvae_forward.1} parent=1 // pred_check
      _
    $region71: #{lstmvae_forward.1} parent=1 // pred_check_branch
      %121 = sbr.rel (0) target = $region73
    $region72: #{lstmvae_forward.1} parent=1 // pred_region
      %s123 = ssub.s32 16, 16
      %124 = vsyncadd [#allocation13], %s123
      %s126 = sshll.u32 [#allocation14], 4
      %s127 = int_to_ptr.vmem [resolvable:$true] %s126
      %129 = dma.hbm_to_vmem [thread:$0]  %s17, 16, %s127, [#allocation13]
    $region73: #{lstmvae_forward.1} parent=1 // pred_fallthru
      _
    // Predicated region
    $region74: #{lstmvae_forward.1} parent=1 // pred_check
      _
    $region75: #{lstmvae_forward.1} parent=1 // pred_check_branch
      %131 = sbr.rel (0) target = $region77
    $region76: #{lstmvae_forward.1} parent=1 // pred_region
      %s133 = ssub.s32 256, 256
      %134 = vsyncadd [#allocation16], %s133
      %s135 = sshll.u32 [#allocation15], 4
      %s136 = int_to_ptr.vmem [resolvable:$true] %s135
      %141 = dma.hbm_to_vmem [thread:$0]  %s18, 256, %s136, [#allocation16], 64, 64, 4
    $region77: #{lstmvae_forward.1} parent=1 // pred_fallthru
      _
    // Predicated region
    $region78: #{lstmvae_forward.1} parent=1 // pred_check
      _
    $region79: #{lstmvae_forward.1} parent=1 // pred_check_branch
      %143 = sbr.rel (0) target = $region81
    $region80: #{lstmvae_forward.1} parent=1 // pred_region
      %s145 = ssub.s32 128, 128
      %146 = vsyncadd [#allocation16], %s145
      %s147 = sshll.u32 [#allocation17], 4
      %s148 = int_to_ptr.vmem [resolvable:$true] %s147
      %153 = dma.hbm_to_vmem [thread:$0]  %s19, 128, %s148, [#allocation16], 64, 64, 4
    $region81: #{lstmvae_forward.1} parent=1 // pred_fallthru
      _
    // Predicated region
    $region82: #{lstmvae_forward.1} parent=1 // pred_check
      _
    $region83: #{lstmvae_forward.1} parent=1 // pred_check_branch
      %155 = sbr.rel (0) target = $region85
    $region84: #{lstmvae_forward.1} parent=1 // pred_region
      %s157 = ssub.s32 16, 16
      %158 = vsyncadd [#allocation19], %s157
      %s160 = sshll.u32 [#allocation18], 4
      %s161 = int_to_ptr.vmem [resolvable:$true] %s160
      %163 = dma.hbm_to_vmem [thread:$0]  %s20, 16, %s161, [#allocation19]
    $region85: #{lstmvae_forward.1} parent=1 // pred_fallthru
      _
    // Predicated region
    $region86: #{lstmvae_forward.1} parent=1 // pred_check
      _
    $region87: #{lstmvae_forward.1} parent=1 // pred_check_branch
      %165 = sbr.rel (0) target = $region89
    $region88: #{lstmvae_forward.1} parent=1 // pred_region
      %s167 = ssub.s32 128, 128
      %168 = vsyncadd [#allocation19], %s167
      %s169 = sshll.u32 [#allocation20], 4
      %s170 = int_to_ptr.vmem [resolvable:$true] %s169
      %175 = dma.hbm_to_vmem [thread:$0]  %s21, 128, %s170, [#allocation19], 64, 64, 4
    $region89: #{lstmvae_forward.1} parent=1 // pred_fallthru
      _
    // Predicated region
    $region90: #{lstmvae_forward.1} parent=1 // pred_check
      _
    $region91: #{lstmvae_forward.1} parent=1 // pred_check_branch
      %177 = sbr.rel (0) target = $region93
    $region92: #{lstmvae_forward.1} parent=1 // pred_region
      %s179 = ssub.s32 128, 128
      %180 = vsyncadd [#allocation22], %s179
      %s181 = sshll.u32 [#allocation21], 4
      %s182 = int_to_ptr.vmem [resolvable:$true] %s181
      %187 = dma.hbm_to_vmem [thread:$0]  %s22, 128, %s182, [#allocation22], 64, 64, 4
    $region93: #{lstmvae_forward.1} parent=1 // pred_fallthru
      _
    // Predicated region
    $region94: #{lstmvae_forward.1} parent=1 // pred_check
      _
    $region95: #{lstmvae_forward.1} parent=1 // pred_check_branch
      %189 = sbr.rel (0) target = $region97
    $region96: #{lstmvae_forward.1} parent=1 // pred_region
      %s191 = ssub.s32 16, 16
      %192 = vsyncadd [#allocation22], %s191
      %s194 = sshll.u32 [#allocation23], 4
      %s195 = int_to_ptr.vmem [resolvable:$true] %s194
      %197 = dma.hbm_to_vmem [thread:$0]  %s23, 16, %s195, [#allocation22]
    $region97: #{lstmvae_forward.1} parent=1 // pred_fallthru
      _
    // Predicated region
    $region98: #{lstmvae_forward.1} parent=1 // pred_check
      _
    $region99: #{lstmvae_forward.1} parent=1 // pred_check_branch
      %199 = sbr.rel (0) target = $region101
    $region100: #{lstmvae_forward.1} parent=1 // pred_region
      %200 = dma.done [#allocation5], 128
    $region101: #{lstmvae_forward.1} parent=1 // pred_fallthru
      _
    // Predicated region
    $region102: #{lstmvae_forward.1} parent=1 // pred_check
      _
    $region103: #{lstmvae_forward.1} parent=1 // pred_check_branch
      %202 = sbr.rel (0) target = $region105
    $region104: #{lstmvae_forward.1} parent=1 // pred_region
      %203 = dma.done [#allocation7], 16
    $region105: #{lstmvae_forward.1} parent=1 // pred_fallthru
      _
    // Predicated region
    $region106: #{lstmvae_forward.1} parent=1 // pred_check
      _
    $region107: #{lstmvae_forward.1} parent=1 // pred_check_branch
      %205 = sbr.rel (0) target = $region109
    $region108: #{lstmvae_forward.1} parent=1 // pred_region
      %206 = dma.done [#allocation7], 16
    $region109: #{lstmvae_forward.1} parent=1 // pred_fallthru
      _
    // Predicated region
    $region110: #{lstmvae_forward.1} parent=1 // pred_check
      _
    $region111: #{lstmvae_forward.1} parent=1 // pred_check_branch
      %208 = sbr.rel (0) target = $region113
    $region112: #{lstmvae_forward.1} parent=1 // pred_region
      %209 = dma.done [#allocation10], 16
    $region113: #{lstmvae_forward.1} parent=1 // pred_fallthru
      _
    // Predicated region
    $region114: #{lstmvae_forward.1} parent=1 // pred_check
      _
    $region115: #{lstmvae_forward.1} parent=1 // pred_check_branch
      %211 = sbr.rel (0) target = $region117
    $region116: #{lstmvae_forward.1} parent=1 // pred_region
      %212 = dma.done [#allocation10], 64
    $region117: #{lstmvae_forward.1} parent=1 // pred_fallthru
      _
    // Predicated region
    $region118: #{lstmvae_forward.1} parent=1 // pred_check
      _
    $region119: #{lstmvae_forward.1} parent=1 // pred_check_branch
      %214 = sbr.rel (0) target = $region121
    $region120: #{lstmvae_forward.1} parent=1 // pred_region
      %215 = dma.done [#allocation13], 16
    $region121: #{lstmvae_forward.1} parent=1 // pred_fallthru
      _
    // Predicated region
    $region122: #{lstmvae_forward.1} parent=1 // pred_check
      _
    $region123: #{lstmvae_forward.1} parent=1 // pred_check_branch
      %217 = sbr.rel (0) target = $region125
    $region124: #{lstmvae_forward.1} parent=1 // pred_region
      %218 = dma.done [#allocation13], 16
    $region125: #{lstmvae_forward.1} parent=1 // pred_fallthru
      _
    // Predicated region
    $region126: #{lstmvae_forward.1} parent=1 // pred_check
      _
    $region127: #{lstmvae_forward.1} parent=1 // pred_check_branch
      %220 = sbr.rel (0) target = $region129
    $region128: #{lstmvae_forward.1} parent=1 // pred_region
      %221 = dma.done [#allocation16], 256
    $region129: #{lstmvae_forward.1} parent=1 // pred_fallthru
      _
    // Predicated region
    $region130: #{lstmvae_forward.1} parent=1 // pred_check
      _
    $region131: #{lstmvae_forward.1} parent=1 // pred_check_branch
      %223 = sbr.rel (0) target = $region133
    $region132: #{lstmvae_forward.1} parent=1 // pred_region
      %224 = dma.done [#allocation16], 128
    $region133: #{lstmvae_forward.1} parent=1 // pred_fallthru
      _
    // Predicated region
    $region134: #{lstmvae_forward.1} parent=1 // pred_check
      _
    $region135: #{lstmvae_forward.1} parent=1 // pred_check_branch
      %226 = sbr.rel (0) target = $region137
    $region136: #{lstmvae_forward.1} parent=1 // pred_region
      %227 = dma.done [#allocation19], 16
    $region137: #{lstmvae_forward.1} parent=1 // pred_fallthru
      _
    // Predicated region
    $region138: #{lstmvae_forward.1} parent=1 // pred_check
      _
    $region139: #{lstmvae_forward.1} parent=1 // pred_check_branch
      %229 = sbr.rel (0) target = $region141
    $region140: #{lstmvae_forward.1} parent=1 // pred_region
      %230 = dma.done [#allocation19], 128
    $region141: #{lstmvae_forward.1} parent=1 // pred_fallthru
      _
    // Predicated region
    $region142: #{lstmvae_forward.1} parent=1 // pred_check
      _
    $region143: #{lstmvae_forward.1} parent=1 // pred_check_branch
      %232 = sbr.rel (0) target = $region145
    $region144: #{lstmvae_forward.1} parent=1 // pred_region
      %233 = dma.done [#allocation22], 128
    $region145: #{lstmvae_forward.1} parent=1 // pred_fallthru
      _
    // Predicated region
    $region146: #{lstmvae_forward.1} parent=1 // pred_check
      _
    $region147: #{lstmvae_forward.1} parent=1 // pred_check_branch
      %235 = sbr.rel (0) target = $region149
    $region148: #{lstmvae_forward.1} parent=1 // pred_region
      %236 = dma.done [#allocation22], 16
    $region149: #{lstmvae_forward.1} parent=1 // pred_fallthru
      _
    %v238 = vld [vmem:[%s0] sm:$0xf]
    %v239 = vld [vmem:[%s0 + $0x4] sm:$0xf]
    %v240 = vld [vmem:[#allocation4] sm:$0xf]
    %v241 = vld [vmem:[#allocation4 + $0x4] sm:$0xf]
    %v242 = vld [vmem:[#allocation6] sm:$0x1]
    %v244 = vlaneseq
    %v245 = vshrl.u32 %v244, 7
    %v246 = vsub.s32 0, %v245
    %v247 = vrot.slane %v242, %v246
    %v251 = vunpack.c.l.b16 %v238
    %v252 = vunpack.c.l.b16 %v239
    %v253 = vpack.c.b16 %v252, %v251
    %v256 = vunpack.c.l.b16 %v240
    %v257 = vunpack.c.l.b16 %v241
    %v258 = vpack.c.b16 %v257, %v256
    %vm260 = vcmask 130048
    %v262 = vsel %vm260, %v253, 0
    %264 = vmatprep.subr.bf16.mxu0 0
    %265 = vmatpush1.bf16.msra.mxu0 0
    %266 = vmatprep.subr.bf16.mxu0 0
    %267 = vmatpush1.bf16.msra.mxu0 0
    %268 = vmatprep.subr.bf16.mxu0 0
    %269 = vmatpush1.bf16.msra.mxu0 0
    %270 = vmatprep.subr.bf16.mxu0 0
    %271 = vmatpush1.bf16.msra.mxu0 0
    %272 = vmatprep.subr.bf16.mxu0 0
    %273 = vmatpush1.bf16.msra.mxu0 0
    %274 = vmatprep.subr.bf16.mxu0 0
    %275 = vmatpush1.bf16.msra.mxu0 0
    %276 = vmatprep.subr.bf16.mxu0 0
    %277 = vmatpush1.bf16.msra.mxu0 0
    %278 = vmatprep.subr.bf16.mxu0 0
    %279 = vmatpush1.bf16.msra.mxu0 %v258
    %280 = vmatprep.subr.bf16.mxu0 0
    %281 = vmatpush2.bf16.msra.mxu0 0
    %282 = vmatprep.subr.bf16.mxu0 0
    %283 = vmatpush2.bf16.msra.mxu0 0
    %284 = vmatprep.subr.bf16.mxu0 0
    %285 = vmatpush2.bf16.msra.mxu0 0
    %286 = vmatprep.subr.bf16.mxu0 0
    %287 = vmatpush2.bf16.msra.mxu0 0
    %288 = vmatprep.subr.bf16.mxu0 0
    %289 = vmatpush2.bf16.msra.mxu0 0
    %290 = vmatprep.subr.bf16.mxu0 0
    %291 = vmatpush2.bf16.msra.mxu0 0
    %292 = vmatprep.subr.bf16.mxu0 0
    %293 = vmatpush2.bf16.msra.mxu0 0
    %294 = vmatprep.subr.bf16.mxu0 0
    %295 = vmatpush2.bf16.msra.mxu0 0
    %296 = vmatprep.mubr.bf16.mxu0 0
    %297 = vmatmul.mubr.bf16.gmra.mxu0 %v262
    %v298 = vpop.f32.mrf.mxu0
    %v299 = vadd.f32 %v247, %v298
    %v300 = vpop.f32.mrf.mxu0
    %v301 = vpop.f32.mrf.mxu0
    %v302 = vadd.f32 %v247, %v301
    %v303 = vpop.f32.mrf.mxu0
    %304 = vdwg.mxu0
    %v305 = vld [vmem:[%s3] sm:$0xf]
    %v306 = vld [vmem:[%s3 + $0x4] sm:$0xf]
    %v307 = vld [vmem:[%s3 + $0x8] sm:$0xf]
    %v308 = vld [vmem:[%s3 + $0xc] sm:$0xf]
    %v313 = vunpack.c.l.b16 %v305
    %v314 = vunpack.c.l.b16 %v306
    %v315 = vunpack.c.l.b16 %v307
    %v316 = vunpack.c.l.b16 %v308
    %v317 = vpack.c.b16 %v314, %v313
    %v318 = vpack.c.b16 %v316, %v315
    %vm321 = vcmask 261120
    %v323 = vsel %vm321, 0, 0
    %325 = vmatprep.subr.bf16.mxu0 0
    %326 = vmatpush1.bf16.msra.mxu0 0
    %327 = vmatprep.subr.bf16.mxu0 0
    %328 = vmatpush1.bf16.msra.mxu0 0
    %329 = vmatprep.subr.bf16.mxu0 0
    %330 = vmatpush1.bf16.msra.mxu0 0
    %331 = vmatprep.subr.bf16.mxu0 0
    %332 = vmatpush1.bf16.msra.mxu0 0
    %333 = vmatprep.subr.bf16.mxu0 0
    %334 = vmatpush1.bf16.msra.mxu0 0
    %335 = vmatprep.subr.bf16.mxu0 0
    %336 = vmatpush1.bf16.msra.mxu0 0
    %337 = vmatprep.subr.bf16.mxu0 0
    %338 = vmatpush1.bf16.msra.mxu0 %v318
    %339 = vmatprep.subr.bf16.mxu0 0
    %340 = vmatpush1.bf16.msra.mxu0 %v317
    %341 = vmatprep.subr.bf16.mxu0 0
    %342 = vmatpush2.bf16.msra.mxu0 0
    %343 = vmatprep.subr.bf16.mxu0 0
    %344 = vmatpush2.bf16.msra.mxu0 0
    %345 = vmatprep.subr.bf16.mxu0 0
    %346 = vmatpush2.bf16.msra.mxu0 0
    %347 = vmatprep.subr.bf16.mxu0 0
    %348 = vmatpush2.bf16.msra.mxu0 0
    %349 = vmatprep.subr.bf16.mxu0 0
    %350 = vmatpush2.bf16.msra.mxu0 0
    %351 = vmatprep.subr.bf16.mxu0 0
    %352 = vmatpush2.bf16.msra.mxu0 0
    %353 = vmatprep.subr.bf16.mxu0 0
    %354 = vmatpush2.bf16.msra.mxu0 0
    %355 = vmatprep.subr.bf16.mxu0 0
    %356 = vmatpush2.bf16.msra.mxu0 0
    %357 = vmatprep.mubr.bf16.mxu0 0
    %358 = vmatmul.mubr.bf16.gmra.mxu0 %v323
    %v359 = vpop.f32.mrf.mxu0
    %v360 = vadd.f32 0.0, %v359
    %v361 = vpop.f32.mrf.mxu0
    %v362 = vpop.f32.mrf.mxu0
    %v363 = vpop.f32.mrf.mxu0
    %364 = vdwg.mxu0
    %v365 = vadd.f32 %v299, %v360
    %v366 = vxor.u32 %v365, 2147483648
    %v367 = vmul.f32 %v366, 1.442695
    %v368 = vpow.pop %v367
    %v369 = vadd.f32 %v368, 1.0
    %v370 = vrcp.pop %v369
    %v371 = vmul.f32 1.0, %v370
    %v372 = vtanh.pop %v365
    %v373 = vmul.f32 %v371, 0.0
    %375 = vrot.lane.b32.xlu0 %v372, 32
    %v376 = vpop.permute.xlu0 %375
    %v378 = vmul.f32 %v371, %v376
    %380 = vrot.lane.b32.xlu0 %v378, 32
    %v381 = vpop.permute.xlu0 %380
    %v383 = vadd.f32 %v373, %v381
    %v384 = vtanh.pop %v383
    %386 = vrot.lane.b32.xlu0 %v384, 32
    %v387 = vpop.permute.xlu0 %386
    %v389 = vmul.f32 %v371, %v387
    %391 = vrot.lane.b32.xlu0 %v389, 64
    %v392 = vpop.permute.xlu0 %391
    %vm394 = vcmask 254976
    %395 = vst.msk [vmem:[#allocation2] sm:$0x3] %vm394, %v392
    %v396 = vpack.c.bf16 %v389, %v389
    %398 = vrot.lane.b32.xlu0 %v396, 64
    %v399 = vpop.permute.xlu0 %398
    %v401 = vsel %vm321, %v399, 0
    %403 = vmatprep.subr.bf16.mxu0 0
    %404 = vmatpush1.bf16.msra.mxu0 0
    %405 = vmatprep.subr.bf16.mxu0 0
    %406 = vmatpush1.bf16.msra.mxu0 0
    %407 = vmatprep.subr.bf16.mxu0 0
    %408 = vmatpush1.bf16.msra.mxu0 0
    %409 = vmatprep.subr.bf16.mxu0 0
    %410 = vmatpush1.bf16.msra.mxu0 0
    %411 = vmatprep.subr.bf16.mxu0 0
    %412 = vmatpush1.bf16.msra.mxu0 0
    %413 = vmatprep.subr.bf16.mxu0 0
    %414 = vmatpush1.bf16.msra.mxu0 0
    %415 = vmatprep.subr.bf16.mxu0 0
    %416 = vmatpush1.bf16.msra.mxu0 %v318
    %417 = vmatprep.subr.bf16.mxu0 0
    %418 = vmatpush1.bf16.msra.mxu0 %v317
    %419 = vmatprep.subr.bf16.mxu0 0
    %420 = vmatpush2.bf16.msra.mxu0 0
    %421 = vmatprep.subr.bf16.mxu0 0
    %422 = vmatpush2.bf16.msra.mxu0 0
    %423 = vmatprep.subr.bf16.mxu0 0
    %424 = vmatpush2.bf16.msra.mxu0 0
    %425 = vmatprep.subr.bf16.mxu0 0
    %426 = vmatpush2.bf16.msra.mxu0 0
    %427 = vmatprep.subr.bf16.mxu0 0
    %428 = vmatpush2.bf16.msra.mxu0 0
    %429 = vmatprep.subr.bf16.mxu0 0
    %430 = vmatpush2.bf16.msra.mxu0 0
    %431 = vmatprep.subr.bf16.mxu0 0
    %432 = vmatpush2.bf16.msra.mxu0 0
    %433 = vmatprep.subr.bf16.mxu0 0
    %434 = vmatpush2.bf16.msra.mxu0 0
    %435 = vmatprep.mubr.bf16.mxu0 0
    %436 = vmatmul.mubr.bf16.gmra.mxu0 %v401
    %v437 = vpop.f32.mrf.mxu0
    %v438 = vadd.f32 0.0, %v437
    %v439 = vpop.f32.mrf.mxu0
    %v440 = vpop.f32.mrf.mxu0
    %v441 = vpop.f32.mrf.mxu0
    %442 = vdwg.mxu0
    %v444 = vrot.slane %v438, 6
    %v446 = vadd.f32 %v299, %v444
    %v447 = vxor.u32 %v446, 2147483648
    %v448 = vmul.f32 %v447, 1.442695
    %v449 = vpow.pop %v448
    %v450 = vadd.f32 %v449, 1.0
    %v451 = vrcp.pop %v450
    %v452 = vmul.f32 1.0, %v451
    %v453 = vtanh.pop %v446
    %v455 = vrot.slane %v383, 6
    %v457 = vmul.f32 %v452, %v455
    %459 = vrot.lane.b32.xlu0 %v453, 32
    %v460 = vpop.permute.xlu0 %459
    %v462 = vmul.f32 %v452, %v460
    %464 = vrot.lane.b32.xlu0 %v462, 32
    %v465 = vpop.permute.xlu0 %464
    %v467 = vadd.f32 %v457, %v465
    %v468 = vtanh.pop %v467
    %470 = vrot.lane.b32.xlu0 %v468, 32
    %v471 = vpop.permute.xlu0 %470
    %v473 = vmul.f32 %v452, %v471
    %475 = vrot.lane.b32.xlu0 %v473, 64
    %v476 = vpop.permute.xlu0 %475
    %vm478 = vcmask 257026
    %479 = vst.msk [vmem:[#allocation2] sm:$0xc] %vm478, %v476
    %v480 = vpack.c.bf16 %v473, %v473
    %v482 = vrot.slane %v480, 1
    %483 = vrot.lane.b32.xlu0 %v482, 64
    %v484 = vpop.permute.xlu0 %483
    %v486 = vsel %vm321, %v484, 0
    %488 = vmatprep.subr.bf16.mxu0 0
    %489 = vmatpush1.bf16.msra.mxu0 0
    %490 = vmatprep.subr.bf16.mxu0 0
    %491 = vmatpush1.bf16.msra.mxu0 0
    %492 = vmatprep.subr.bf16.mxu0 0
    %493 = vmatpush1.bf16.msra.mxu0 0
    %494 = vmatprep.subr.bf16.mxu0 0
    %495 = vmatpush1.bf16.msra.mxu0 0
    %496 = vmatprep.subr.bf16.mxu0 0
    %497 = vmatpush1.bf16.msra.mxu0 0
    %498 = vmatprep.subr.bf16.mxu0 0
    %499 = vmatpush1.bf16.msra.mxu0 0
    %500 = vmatprep.subr.bf16.mxu0 0
    %501 = vmatpush1.bf16.msra.mxu0 %v318
    %502 = vmatprep.subr.bf16.mxu0 0
    %503 = vmatpush1.bf16.msra.mxu0 %v317
    %504 = vmatprep.subr.bf16.mxu0 0
    %505 = vmatpush2.bf16.msra.mxu0 0
    %506 = vmatprep.subr.bf16.mxu0 0
    %507 = vmatpush2.bf16.msra.mxu0 0
    %508 = vmatprep.subr.bf16.mxu0 0
    %509 = vmatpush2.bf16.msra.mxu0 0
    %510 = vmatprep.subr.bf16.mxu0 0
    %511 = vmatpush2.bf16.msra.mxu0 0
    %512 = vmatprep.subr.bf16.mxu0 0
    %513 = vmatpush2.bf16.msra.mxu0 0
    %514 = vmatprep.subr.bf16.mxu0 0
    %515 = vmatpush2.bf16.msra.mxu0 0
    %516 = vmatprep.subr.bf16.mxu0 0
    %517 = vmatpush2.bf16.msra.mxu0 0
    %518 = vmatprep.subr.bf16.mxu0 0
    %519 = vmatpush2.bf16.msra.mxu0 0
    %520 = vmatprep.mubr.bf16.mxu0 0
    %521 = vmatmul.mubr.bf16.gmra.mxu0 %v486
    %v522 = vpop.f32.mrf.mxu0
    %v523 = vadd.f32 0.0, %v522
    %v524 = vpop.f32.mrf.mxu0
    %v525 = vpop.f32.mrf.mxu0
    %v526 = vpop.f32.mrf.mxu0
    %527 = vdwg.mxu0
    %v529 = vrot.slane %v523, 4
    %v531 = vadd.f32 %v299, %v529
    %v532 = vxor.u32 %v531, 2147483648
    %v533 = vmul.f32 %v532, 1.442695
    %v534 = vpow.pop %v533
    %v535 = vadd.f32 %v534, 1.0
    %v536 = vrcp.pop %v535
    %v537 = vmul.f32 1.0, %v536
    %v538 = vtanh.pop %v531
    %v540 = vrot.slane %v467, 6
    %v542 = vmul.f32 %v537, %v540
    %544 = vrot.lane.b32.xlu0 %v538, 32
    %v545 = vpop.permute.xlu0 %544
    %v547 = vmul.f32 %v537, %v545
    %549 = vrot.lane.b32.xlu0 %v547, 32
    %v550 = vpop.permute.xlu0 %549
    %v552 = vadd.f32 %v542, %v550
    %v553 = vtanh.pop %v552
    %555 = vrot.lane.b32.xlu0 %v553, 32
    %v556 = vpop.permute.xlu0 %555
    %v558 = vmul.f32 %v537, %v556
    %560 = vrot.lane.b32.xlu0 %v558, 64
    %v561 = vpop.permute.xlu0 %560
    %vm563 = vcmask 259076
    %564 = vst.msk [vmem:[#allocation2] sm:$0x30] %vm563, %v561
    %v565 = vpack.c.bf16 %v558, %v558
    %v567 = vrot.slane %v565, 2
    %568 = vrot.lane.b32.xlu0 %v567, 64
    %v569 = vpop.permute.xlu0 %568
    %v571 = vsel %vm321, %v569, 0
    %573 = vmatprep.subr.bf16.mxu0 0
    %574 = vmatpush1.bf16.msra.mxu0 0
    %575 = vmatprep.subr.bf16.mxu0 0
    %576 = vmatpush1.bf16.msra.mxu0 0
    %577 = vmatprep.subr.bf16.mxu0 0
    %578 = vmatpush1.bf16.msra.mxu0 0
    %579 = vmatprep.subr.bf16.mxu0 0
    %580 = vmatpush1.bf16.msra.mxu0 0
    %581 = vmatprep.subr.bf16.mxu0 0
    %582 = vmatpush1.bf16.msra.mxu0 0
    %583 = vmatprep.subr.bf16.mxu0 0
    %584 = vmatpush1.bf16.msra.mxu0 0
    %585 = vmatprep.subr.bf16.mxu0 0
    %586 = vmatpush1.bf16.msra.mxu0 %v318
    %587 = vmatprep.subr.bf16.mxu0 0
    %588 = vmatpush1.bf16.msra.mxu0 %v317
    %589 = vmatprep.subr.bf16.mxu0 0
    %590 = vmatpush2.bf16.msra.mxu0 0
    %591 = vmatprep.subr.bf16.mxu0 0
    %592 = vmatpush2.bf16.msra.mxu0 0
    %593 = vmatprep.subr.bf16.mxu0 0
    %594 = vmatpush2.bf16.msra.mxu0 0
    %595 = vmatprep.subr.bf16.mxu0 0
    %596 = vmatpush2.bf16.msra.mxu0 0
    %597 = vmatprep.subr.bf16.mxu0 0
    %598 = vmatpush2.bf16.msra.mxu0 0
    %599 = vmatprep.subr.bf16.mxu0 0
    %600 = vmatpush2.bf16.msra.mxu0 0
    %601 = vmatprep.subr.bf16.mxu0 0
    %602 = vmatpush2.bf16.msra.mxu0 0
    %603 = vmatprep.subr.bf16.mxu0 0
    %604 = vmatpush2.bf16.msra.mxu0 0
    %605 = vmatprep.mubr.bf16.mxu0 0
    %606 = vmatmul.mubr.bf16.gmra.mxu0 %v571
    %v607 = vpop.f32.mrf.mxu0
    %v608 = vadd.f32 0.0, %v607
    %v609 = vpop.f32.mrf.mxu0
    %v610 = vpop.f32.mrf.mxu0
    %v611 = vpop.f32.mrf.mxu0
    %612 = vdwg.mxu0
    %v614 = vrot.slane %v608, 2
    %v616 = vadd.f32 %v299, %v614
    %v617 = vxor.u32 %v616, 2147483648
    %v618 = vmul.f32 %v617, 1.442695
    %v619 = vpow.pop %v618
    %v620 = vadd.f32 %v619, 1.0
    %v621 = vrcp.pop %v620
    %v622 = vmul.f32 1.0, %v621
    %v623 = vtanh.pop %v616
    %v625 = vrot.slane %v552, 6
    %v627 = vmul.f32 %v622, %v625
    %629 = vrot.lane.b32.xlu0 %v623, 32
    %v630 = vpop.permute.xlu0 %629
    %v632 = vmul.f32 %v622, %v630
    %634 = vrot.lane.b32.xlu0 %v632, 32
    %v635 = vpop.permute.xlu0 %634
    %v637 = vadd.f32 %v627, %v635
    %v638 = vtanh.pop %v637
    %640 = vrot.lane.b32.xlu0 %v638, 32
    %v641 = vpop.permute.xlu0 %640
    %v643 = vmul.f32 %v622, %v641
    %645 = vrot.lane.b32.xlu0 %v643, 64
    %v646 = vpop.permute.xlu0 %645
    %vm648 = vcmask 261126
    %649 = vst.msk [vmem:[#allocation2] sm:$0xc0] %vm648, %v646
    %v650 = vpack.c.bf16 %v643, %v643
    %v652 = vrot.slane %v650, 3
    %653 = vrot.lane.b32.xlu0 %v652, 64
    %v654 = vpop.permute.xlu0 %653
    %v656 = vsel %vm321, %v654, 0
    %658 = vmatprep.subr.bf16.mxu0 0
    %659 = vmatpush1.bf16.msra.mxu0 0
    %660 = vmatprep.subr.bf16.mxu0 0
    %661 = vmatpush1.bf16.msra.mxu0 0
    %662 = vmatprep.subr.bf16.mxu0 0
    %663 = vmatpush1.bf16.msra.mxu0 0
    %664 = vmatprep.subr.bf16.mxu0 0
    %665 = vmatpush1.bf16.msra.mxu0 0
    %666 = vmatprep.subr.bf16.mxu0 0
    %667 = vmatpush1.bf16.msra.mxu0 0
    %668 = vmatprep.subr.bf16.mxu0 0
    %669 = vmatpush1.bf16.msra.mxu0 0
    %670 = vmatprep.subr.bf16.mxu0 0
    %671 = vmatpush1.bf16.msra.mxu0 %v318
    %672 = vmatprep.subr.bf16.mxu0 0
    %673 = vmatpush1.bf16.msra.mxu0 %v317
    %674 = vmatprep.subr.bf16.mxu0 0
    %675 = vmatpush2.bf16.msra.mxu0 0
    %676 = vmatprep.subr.bf16.mxu0 0
    %677 = vmatpush2.bf16.msra.mxu0 0
    %678 = vmatprep.subr.bf16.mxu0 0
    %679 = vmatpush2.bf16.msra.mxu0 0
    %680 = vmatprep.subr.bf16.mxu0 0
    %681 = vmatpush2.bf16.msra.mxu0 0
    %682 = vmatprep.subr.bf16.mxu0 0
    %683 = vmatpush2.bf16.msra.mxu0 0
    %684 = vmatprep.subr.bf16.mxu0 0
    %685 = vmatpush2.bf16.msra.mxu0 0
    %686 = vmatprep.subr.bf16.mxu0 0
    %687 = vmatpush2.bf16.msra.mxu0 0
    %688 = vmatprep.subr.bf16.mxu0 0
    %689 = vmatpush2.bf16.msra.mxu0 0
    %690 = vmatprep.mubr.bf16.mxu0 0
    %691 = vmatmul.mubr.bf16.gmra.mxu0 %v656
    %v692 = vpop.f32.mrf.mxu0
    %v693 = vadd.f32 0.0, %v692
    %v694 = vpop.f32.mrf.mxu0
    %v695 = vpop.f32.mrf.mxu0
    %v696 = vpop.f32.mrf.mxu0
    %697 = vdwg.mxu0
    %v698 = vadd.f32 %v302, %v693
    %v699 = vxor.u32 %v698, 2147483648
    %v700 = vmul.f32 %v699, 1.442695
    %v701 = vpow.pop %v700
    %v702 = vadd.f32 %v701, 1.0
    %v703 = vrcp.pop %v702
    %v704 = vmul.f32 1.0, %v703
    %v705 = vtanh.pop %v698
    %v707 = vrot.slane %v637, 6
    %v709 = vmul.f32 %v704, %v707
    %711 = vrot.lane.b32.xlu0 %v705, 32
    %v712 = vpop.permute.xlu0 %711
    %v714 = vmul.f32 %v704, %v712
    %716 = vrot.lane.b32.xlu0 %v714, 32
    %v717 = vpop.permute.xlu0 %716
    %v719 = vadd.f32 %v709, %v717
    %v720 = vtanh.pop %v719
    %722 = vrot.lane.b32.xlu0 %v720, 32
    %v723 = vpop.permute.xlu0 %722
    %v725 = vmul.f32 %v704, %v723
    %727 = vrot.lane.b32.xlu0 %v725, 64
    %v728 = vpop.permute.xlu0 %727
    %730 = vst.msk [vmem:[#allocation2 + $0x8] sm:$0x3] %vm394, %v728
    %v731 = vpack.c.bf16 %v725, %v725
    %733 = vrot.lane.b32.xlu0 %v731, 64
    %v734 = vpop.permute.xlu0 %733
    %v736 = vsel %vm321, %v734, 0
    %738 = vmatprep.subr.bf16.mxu0 0
    %739 = vmatpush1.bf16.msra.mxu0 0
    %740 = vmatprep.subr.bf16.mxu0 0
    %741 = vmatpush1.bf16.msra.mxu0 0
    %742 = vmatprep.subr.bf16.mxu0 0
    %743 = vmatpush1.bf16.msra.mxu0 0
    %744 = vmatprep.subr.bf16.mxu0 0
    %745 = vmatpush1.bf16.msra.mxu0 0
    %746 = vmatprep.subr.bf16.mxu0 0
    %747 = vmatpush1.bf16.msra.mxu0 0
    %748 = vmatprep.subr.bf16.mxu0 0
    %749 = vmatpush1.bf16.msra.mxu0 0
    %750 = vmatprep.subr.bf16.mxu0 0
    %751 = vmatpush1.bf16.msra.mxu0 %v318
    %752 = vmatprep.subr.bf16.mxu0 0
    %753 = vmatpush1.bf16.msra.mxu0 %v317
    %754 = vmatprep.subr.bf16.mxu0 0
    %755 = vmatpush2.bf16.msra.mxu0 0
    %756 = vmatprep.subr.bf16.mxu0 0
    %757 = vmatpush2.bf16.msra.mxu0 0
    %758 = vmatprep.subr.bf16.mxu0 0
    %759 = vmatpush2.bf16.msra.mxu0 0
    %760 = vmatprep.subr.bf16.mxu0 0
    %761 = vmatpush2.bf16.msra.mxu0 0
    %762 = vmatprep.subr.bf16.mxu0 0
    %763 = vmatpush2.bf16.msra.mxu0 0
    %764 = vmatprep.subr.bf16.mxu0 0
    %765 = vmatpush2.bf16.msra.mxu0 0
    %766 = vmatprep.subr.bf16.mxu0 0
    %767 = vmatpush2.bf16.msra.mxu0 0
    %768 = vmatprep.subr.bf16.mxu0 0
    %769 = vmatpush2.bf16.msra.mxu0 0
    %770 = vmatprep.mubr.bf16.mxu0 0
    %771 = vmatmul.mubr.bf16.gmra.mxu0 %v736
    %v772 = vpop.f32.mrf.mxu0
    %v773 = vadd.f32 0.0, %v772
    %v774 = vpop.f32.mrf.mxu0
    %v775 = vpop.f32.mrf.mxu0
    %v776 = vpop.f32.mrf.mxu0
    %777 = vdwg.mxu0
    %v779 = vrot.slane %v773, 6
    %v781 = vadd.f32 %v302, %v779
    %v782 = vxor.u32 %v781, 2147483648
    %v783 = vmul.f32 %v782, 1.442695
    %v784 = vpow.pop %v783
    %v785 = vadd.f32 %v784, 1.0
    %v786 = vrcp.pop %v785
    %v787 = vmul.f32 1.0, %v786
    %v788 = vtanh.pop %v781
    %v790 = vrot.slane %v719, 6
    %v792 = vmul.f32 %v787, %v790
    %794 = vrot.lane.b32.xlu0 %v788, 32
    %v795 = vpop.permute.xlu0 %794
    %v797 = vmul.f32 %v787, %v795
    %799 = vrot.lane.b32.xlu0 %v797, 32
    %v800 = vpop.permute.xlu0 %799
    %v802 = vadd.f32 %v792, %v800
    %v803 = vtanh.pop %v802
    %805 = vrot.lane.b32.xlu0 %v803, 32
    %v806 = vpop.permute.xlu0 %805
    %v808 = vmul.f32 %v787, %v806
    %810 = vrot.lane.b32.xlu0 %v808, 64
    %v811 = vpop.permute.xlu0 %810
    %813 = vst.msk [vmem:[#allocation2 + $0x8] sm:$0xc] %vm478, %v811
    %v814 = vpack.c.bf16 %v808, %v808
    %v816 = vrot.slane %v814, 1
    %817 = vrot.lane.b32.xlu0 %v816, 64
    %v818 = vpop.permute.xlu0 %817
    %v820 = vsel %vm321, %v818, 0
    %822 = vmatprep.subr.bf16.mxu0 0
    %823 = vmatpush1.bf16.msra.mxu0 0
    %824 = vmatprep.subr.bf16.mxu0 0
    %825 = vmatpush1.bf16.msra.mxu0 0
    %826 = vmatprep.subr.bf16.mxu0 0
    %827 = vmatpush1.bf16.msra.mxu0 0
    %828 = vmatprep.subr.bf16.mxu0 0
    %829 = vmatpush1.bf16.msra.mxu0 0
    %830 = vmatprep.subr.bf16.mxu0 0
    %831 = vmatpush1.bf16.msra.mxu0 0
    %832 = vmatprep.subr.bf16.mxu0 0
    %833 = vmatpush1.bf16.msra.mxu0 0
    %834 = vmatprep.subr.bf16.mxu0 0
    %835 = vmatpush1.bf16.msra.mxu0 %v318
    %836 = vmatprep.subr.bf16.mxu0 0
    %837 = vmatpush1.bf16.msra.mxu0 %v317
    %838 = vmatprep.subr.bf16.mxu0 0
    %839 = vmatpush2.bf16.msra.mxu0 0
    %840 = vmatprep.subr.bf16.mxu0 0
    %841 = vmatpush2.bf16.msra.mxu0 0
    %842 = vmatprep.subr.bf16.mxu0 0
    %843 = vmatpush2.bf16.msra.mxu0 0
    %844 = vmatprep.subr.bf16.mxu0 0
    %845 = vmatpush2.bf16.msra.mxu0 0
    %846 = vmatprep.subr.bf16.mxu0 0
    %847 = vmatpush2.bf16.msra.mxu0 0
    %848 = vmatprep.subr.bf16.mxu0 0
    %849 = vmatpush2.bf16.msra.mxu0 0
    %850 = vmatprep.subr.bf16.mxu0 0
    %851 = vmatpush2.bf16.msra.mxu0 0
    %852 = vmatprep.subr.bf16.mxu0 0
    %853 = vmatpush2.bf16.msra.mxu0 0
    %854 = vmatprep.mubr.bf16.mxu0 0
    %855 = vmatmul.mubr.bf16.gmra.mxu0 %v820
    %v856 = vpop.f32.mrf.mxu0
    %v857 = vadd.f32 0.0, %v856
    %v858 = vpop.f32.mrf.mxu0
    %v859 = vpop.f32.mrf.mxu0
    %v860 = vpop.f32.mrf.mxu0
    %861 = vdwg.mxu0
    %v863 = vrot.slane %v857, 4
    %v865 = vadd.f32 %v302, %v863
    %v866 = vxor.u32 %v865, 2147483648
    %v867 = vmul.f32 %v866, 1.442695
    %v868 = vpow.pop %v867
    %v869 = vadd.f32 %v868, 1.0
    %v870 = vrcp.pop %v869
    %v871 = vmul.f32 1.0, %v870
    %v872 = vtanh.pop %v865
    %v874 = vrot.slane %v802, 6
    %v876 = vmul.f32 %v871, %v874
    %878 = vrot.lane.b32.xlu0 %v872, 32
    %v879 = vpop.permute.xlu0 %878
    %v881 = vmul.f32 %v871, %v879
    %883 = vrot.lane.b32.xlu0 %v881, 32
    %v884 = vpop.permute.xlu0 %883
    %v886 = vadd.f32 %v876, %v884
    %v887 = vtanh.pop %v886
    %889 = vrot.lane.b32.xlu0 %v887, 32
    %v890 = vpop.permute.xlu0 %889
    %v892 = vmul.f32 %v871, %v890
    %894 = vrot.lane.b32.xlu0 %v892, 64
    %v895 = vpop.permute.xlu0 %894
    %897 = vst.msk [vmem:[#allocation2 + $0x8] sm:$0x30] %vm563, %v895
    %v898 = vpack.c.bf16 %v892, %v892
    %v900 = vrot.slane %v898, 2
    %901 = vrot.lane.b32.xlu0 %v900, 64
    %v902 = vpop.permute.xlu0 %901
    %v904 = vsel %vm321, %v902, 0
    %906 = vmatprep.subr.bf16.mxu0 0
    %907 = vmatpush1.bf16.msra.mxu0 0
    %908 = vmatprep.subr.bf16.mxu0 0
    %909 = vmatpush1.bf16.msra.mxu0 0
    %910 = vmatprep.subr.bf16.mxu0 0
    %911 = vmatpush1.bf16.msra.mxu0 0
    %912 = vmatprep.subr.bf16.mxu0 0
    %913 = vmatpush1.bf16.msra.mxu0 0
    %914 = vmatprep.subr.bf16.mxu0 0
    %915 = vmatpush1.bf16.msra.mxu0 0
    %916 = vmatprep.subr.bf16.mxu0 0
    %917 = vmatpush1.bf16.msra.mxu0 0
    %918 = vmatprep.subr.bf16.mxu0 0
    %919 = vmatpush1.bf16.msra.mxu0 %v318
    %920 = vmatprep.subr.bf16.mxu0 0
    %921 = vmatpush1.bf16.msra.mxu0 %v317
    %922 = vmatprep.subr.bf16.mxu0 0
    %923 = vmatpush2.bf16.msra.mxu0 0
    %924 = vmatprep.subr.bf16.mxu0 0
    %925 = vmatpush2.bf16.msra.mxu0 0
    %926 = vmatprep.subr.bf16.mxu0 0
    %927 = vmatpush2.bf16.msra.mxu0 0
    %928 = vmatprep.subr.bf16.mxu0 0
    %929 = vmatpush2.bf16.msra.mxu0 0
    %930 = vmatprep.subr.bf16.mxu0 0
    %931 = vmatpush2.bf16.msra.mxu0 0
    %932 = vmatprep.subr.bf16.mxu0 0
    %933 = vmatpush2.bf16.msra.mxu0 0
    %934 = vmatprep.subr.bf16.mxu0 0
    %935 = vmatpush2.bf16.msra.mxu0 0
    %936 = vmatprep.subr.bf16.mxu0 0
    %937 = vmatpush2.bf16.msra.mxu0 0
    %938 = vmatprep.mubr.bf16.mxu0 0
    %939 = vmatmul.mubr.bf16.gmra.mxu0 %v904
    %v940 = vpop.f32.mrf.mxu0
    %v941 = vadd.f32 0.0, %v940
    %v942 = vpop.f32.mrf.mxu0
    %v943 = vpop.f32.mrf.mxu0
    %v944 = vpop.f32.mrf.mxu0
    %945 = vdwg.mxu0
    %v947 = vrot.slane %v941, 2
    %v949 = vadd.f32 %v302, %v947
    %v950 = vxor.u32 %v949, 2147483648
    %v951 = vmul.f32 %v950, 1.442695
    %v952 = vpow.pop %v951
    %v953 = vadd.f32 %v952, 1.0
    %v954 = vrcp.pop %v953
    %v955 = vmul.f32 1.0, %v954
    %v956 = vtanh.pop %v949
    %v958 = vrot.slane %v886, 6
    %v960 = vmul.f32 %v955, %v958
    %962 = vrot.lane.b32.xlu0 %v956, 32
    %v963 = vpop.permute.xlu0 %962
    %v965 = vmul.f32 %v955, %v963
    %967 = vrot.lane.b32.xlu0 %v965, 32
    %v968 = vpop.permute.xlu0 %967
    %v970 = vadd.f32 %v960, %v968
    %v971 = vtanh.pop %v970
    %973 = vrot.lane.b32.xlu0 %v971, 32
    %v974 = vpop.permute.xlu0 %973
    %v976 = vmul.f32 %v955, %v974
    %978 = vrot.lane.b32.xlu0 %v976, 64
    %v979 = vpop.permute.xlu0 %978
    %981 = vst.msk [vmem:[#allocation2 + $0x8] sm:$0xc0] %vm648, %v979
    %v982 = vld [vmem:[#allocation2] sm:$0xff]
    %v983 = vld [vmem:[#allocation2 + $0x8] sm:$0xff]
    %v984 = vpack.c.bf16 %v983, %v982
    %v985 = vld [vmem:[%s5] sm:$0xf]
    %v986 = vld [vmem:[%s5 + $0x4] sm:$0xf]
    %v987 = vld [vmem:[%s5 + $0x8] sm:$0xf]
    %v988 = vld [vmem:[%s5 + $0xc] sm:$0xf]
    %v989 = vld [vmem:[#allocation8] sm:$0x1]
    %v991 = vlaneseq
    %v992 = vshrl.u32 %v991, 7
    %v993 = vsub.s32 0, %v992
    %v994 = vrot.slane %v989, %v993
    %v1000 = vunpack.c.l.b16 %v985
    %v1001 = vunpack.c.l.b16 %v986
    %v1002 = vunpack.c.l.b16 %v987
    %v1003 = vunpack.c.l.b16 %v988
    %v1004 = vpack.c.b16 %v1001, %v1000
    %v1005 = vpack.c.b16 %v1003, %v1002
    %v1009 = vsel %vm321, %v984, 0
    %1011 = vmatprep.subr.bf16.mxu0 0
    %1012 = vmatpush1.bf16.msra.mxu0 0
    %1013 = vmatprep.subr.bf16.mxu0 0
    %1014 = vmatpush1.bf16.msra.mxu0 0
    %1015 = vmatprep.subr.bf16.mxu0 0
    %1016 = vmatpush1.bf16.msra.mxu0 0
    %1017 = vmatprep.subr.bf16.mxu0 0
    %1018 = vmatpush1.bf16.msra.mxu0 0
    %1019 = vmatprep.subr.bf16.mxu0 0
    %1020 = vmatpush1.bf16.msra.mxu0 0
    %1021 = vmatprep.subr.bf16.mxu0 0
    %1022 = vmatpush1.bf16.msra.mxu0 0
    %1023 = vmatprep.subr.bf16.mxu0 0
    %1024 = vmatpush1.bf16.msra.mxu0 %v1005
    %1025 = vmatprep.subr.bf16.mxu0 0
    %1026 = vmatpush1.bf16.msra.mxu0 %v1004
    %1027 = vmatprep.subr.bf16.mxu0 0
    %1028 = vmatpush2.bf16.msra.mxu0 0
    %1029 = vmatprep.subr.bf16.mxu0 0
    %1030 = vmatpush2.bf16.msra.mxu0 0
    %1031 = vmatprep.subr.bf16.mxu0 0
    %1032 = vmatpush2.bf16.msra.mxu0 0
    %1033 = vmatprep.subr.bf16.mxu0 0
    %1034 = vmatpush2.bf16.msra.mxu0 0
    %1035 = vmatprep.subr.bf16.mxu0 0
    %1036 = vmatpush2.bf16.msra.mxu0 0
    %1037 = vmatprep.subr.bf16.mxu0 0
    %1038 = vmatpush2.bf16.msra.mxu0 0
    %1039 = vmatprep.subr.bf16.mxu0 0
    %1040 = vmatpush2.bf16.msra.mxu0 0
    %1041 = vmatprep.subr.bf16.mxu0 0
    %1042 = vmatpush2.bf16.msra.mxu0 0
    %1043 = vmatprep.mubr.bf16.mxu0 0
    %1044 = vmatmul.mubr.bf16.gmra.mxu0 %v1009
    %v1045 = vpop.f32.mrf.mxu0
    %v1046 = vadd.f32 %v994, %v1045
    %v1047 = vpop.f32.mrf.mxu0
    %v1048 = vpop.f32.mrf.mxu0
    %v1049 = vadd.f32 %v994, %v1048
    %v1050 = vpop.f32.mrf.mxu0
    %1051 = vdwg.mxu0
    %v1052 = vld [vmem:[%s6] sm:$0xf]
    %v1053 = vld [vmem:[%s6 + $0x4] sm:$0xf]
    %v1054 = vld [vmem:[%s6 + $0x8] sm:$0xf]
    %v1055 = vld [vmem:[%s6 + $0xc] sm:$0xf]
    %v1060 = vunpack.c.l.b16 %v1052
    %v1061 = vunpack.c.l.b16 %v1053
    %v1062 = vunpack.c.l.b16 %v1054
    %v1063 = vunpack.c.l.b16 %v1055
    %v1064 = vpack.c.b16 %v1061, %v1060
    %v1065 = vpack.c.b16 %v1063, %v1062
    %1068 = vmatprep.subr.bf16.mxu0 0
    %1069 = vmatpush1.bf16.msra.mxu0 0
    %1070 = vmatprep.subr.bf16.mxu0 0
    %1071 = vmatpush1.bf16.msra.mxu0 0
    %1072 = vmatprep.subr.bf16.mxu0 0
    %1073 = vmatpush1.bf16.msra.mxu0 0
    %1074 = vmatprep.subr.bf16.mxu0 0
    %1075 = vmatpush1.bf16.msra.mxu0 0
    %1076 = vmatprep.subr.bf16.mxu0 0
    %1077 = vmatpush1.bf16.msra.mxu0 0
    %1078 = vmatprep.subr.bf16.mxu0 0
    %1079 = vmatpush1.bf16.msra.mxu0 0
    %1080 = vmatprep.subr.bf16.mxu0 0
    %1081 = vmatpush1.bf16.msra.mxu0 %v1065
    %1082 = vmatprep.subr.bf16.mxu0 0
    %1083 = vmatpush1.bf16.msra.mxu0 %v1064
    %1084 = vmatprep.subr.bf16.mxu0 0
    %1085 = vmatpush2.bf16.msra.mxu0 0
    %1086 = vmatprep.subr.bf16.mxu0 0
    %1087 = vmatpush2.bf16.msra.mxu0 0
    %1088 = vmatprep.subr.bf16.mxu0 0
    %1089 = vmatpush2.bf16.msra.mxu0 0
    %1090 = vmatprep.subr.bf16.mxu0 0
    %1091 = vmatpush2.bf16.msra.mxu0 0
    %1092 = vmatprep.subr.bf16.mxu0 0
    %1093 = vmatpush2.bf16.msra.mxu0 0
    %1094 = vmatprep.subr.bf16.mxu0 0
    %1095 = vmatpush2.bf16.msra.mxu0 0
    %1096 = vmatprep.subr.bf16.mxu0 0
    %1097 = vmatpush2.bf16.msra.mxu0 0
    %1098 = vmatprep.subr.bf16.mxu0 0
    %1099 = vmatpush2.bf16.msra.mxu0 0
    %1100 = vmatprep.mubr.bf16.mxu0 0
    %1101 = vmatmul.mubr.bf16.gmra.mxu0 %v323
    %v1102 = vpop.f32.mrf.mxu0
    %v1103 = vadd.f32 0.0, %v1102
    %v1104 = vpop.f32.mrf.mxu0
    %v1105 = vpop.f32.mrf.mxu0
    %v1106 = vpop.f32.mrf.mxu0
    %1107 = vdwg.mxu0
    %v1108 = vadd.f32 %v1046, %v1103
    %v1109 = vxor.u32 %v1108, 2147483648
    %v1110 = vmul.f32 %v1109, 1.442695
    %v1111 = vpow.pop %v1110
    %v1112 = vadd.f32 %v1111, 1.0
    %v1113 = vrcp.pop %v1112
    %v1114 = vmul.f32 1.0, %v1113
    %v1115 = vtanh.pop %v1108
    %v1116 = vmul.f32 %v1114, 0.0
    %1118 = vrot.lane.b32.xlu0 %v1115, 32
    %v1119 = vpop.permute.xlu0 %1118
    %v1121 = vmul.f32 %v1114, %v1119
    %1123 = vrot.lane.b32.xlu0 %v1121, 32
    %v1124 = vpop.permute.xlu0 %1123
    %v1126 = vadd.f32 %v1116, %v1124
    %v1127 = vtanh.pop %v1126
    %1129 = vrot.lane.b32.xlu0 %v1127, 32
    %v1130 = vpop.permute.xlu0 %1129
    %v1132 = vmul.f32 %v1114, %v1130
    %v1133 = vpack.c.bf16 %v1132, %v1132
    %1135 = vrot.lane.b32.xlu0 %v1133, 64
    %v1136 = vpop.permute.xlu0 %1135
    %v1138 = vsel %vm321, %v1136, 0
    %1140 = vmatprep.subr.bf16.mxu0 0
    %1141 = vmatpush1.bf16.msra.mxu0 0
    %1142 = vmatprep.subr.bf16.mxu0 0
    %1143 = vmatpush1.bf16.msra.mxu0 0
    %1144 = vmatprep.subr.bf16.mxu0 0
    %1145 = vmatpush1.bf16.msra.mxu0 0
    %1146 = vmatprep.subr.bf16.mxu0 0
    %1147 = vmatpush1.bf16.msra.mxu0 0
    %1148 = vmatprep.subr.bf16.mxu0 0
    %1149 = vmatpush1.bf16.msra.mxu0 0
    %1150 = vmatprep.subr.bf16.mxu0 0
    %1151 = vmatpush1.bf16.msra.mxu0 0
    %1152 = vmatprep.subr.bf16.mxu0 0
    %1153 = vmatpush1.bf16.msra.mxu0 %v1065
    %1154 = vmatprep.subr.bf16.mxu0 0
    %1155 = vmatpush1.bf16.msra.mxu0 %v1064
    %1156 = vmatprep.subr.bf16.mxu0 0
    %1157 = vmatpush2.bf16.msra.mxu0 0
    %1158 = vmatprep.subr.bf16.mxu0 0
    %1159 = vmatpush2.bf16.msra.mxu0 0
    %1160 = vmatprep.subr.bf16.mxu0 0
    %1161 = vmatpush2.bf16.msra.mxu0 0
    %1162 = vmatprep.subr.bf16.mxu0 0
    %1163 = vmatpush2.bf16.msra.mxu0 0
    %1164 = vmatprep.subr.bf16.mxu0 0
    %1165 = vmatpush2.bf16.msra.mxu0 0
    %1166 = vmatprep.subr.bf16.mxu0 0
    %1167 = vmatpush2.bf16.msra.mxu0 0
    %1168 = vmatprep.subr.bf16.mxu0 0
    %1169 = vmatpush2.bf16.msra.mxu0 0
    %1170 = vmatprep.subr.bf16.mxu0 0
    %1171 = vmatpush2.bf16.msra.mxu0 0
    %1172 = vmatprep.mubr.bf16.mxu0 0
    %1173 = vmatmul.mubr.bf16.gmra.mxu0 %v1138
    %v1174 = vpop.f32.mrf.mxu0
    %v1175 = vadd.f32 0.0, %v1174
    %v1176 = vpop.f32.mrf.mxu0
    %v1177 = vpop.f32.mrf.mxu0
    %v1178 = vpop.f32.mrf.mxu0
    %1179 = vdwg.mxu0
    %v1181 = vrot.slane %v1175, 6
    %v1183 = vadd.f32 %v1046, %v1181
    %v1184 = vxor.u32 %v1183, 2147483648
    %v1185 = vmul.f32 %v1184, 1.442695
    %v1186 = vpow.pop %v1185
    %v1187 = vadd.f32 %v1186, 1.0
    %v1188 = vrcp.pop %v1187
    %v1189 = vmul.f32 1.0, %v1188
    %v1190 = vtanh.pop %v1183
    %v1192 = vrot.slane %v1126, 6
    %v1194 = vmul.f32 %v1189, %v1192
    %1196 = vrot.lane.b32.xlu0 %v1190, 32
    %v1197 = vpop.permute.xlu0 %1196
    %v1199 = vmul.f32 %v1189, %v1197
    %1201 = vrot.lane.b32.xlu0 %v1199, 32
    %v1202 = vpop.permute.xlu0 %1201
    %v1204 = vadd.f32 %v1194, %v1202
    %v1205 = vtanh.pop %v1204
    %1207 = vrot.lane.b32.xlu0 %v1205, 32
    %v1208 = vpop.permute.xlu0 %1207
    %v1210 = vmul.f32 %v1189, %v1208
    %v1211 = vpack.c.bf16 %v1210, %v1210
    %v1213 = vrot.slane %v1211, 1
    %1214 = vrot.lane.b32.xlu0 %v1213, 64
    %v1215 = vpop.permute.xlu0 %1214
    %v1217 = vsel %vm321, %v1215, 0
    %1219 = vmatprep.subr.bf16.mxu0 0
    %1220 = vmatpush1.bf16.msra.mxu0 0
    %1221 = vmatprep.subr.bf16.mxu0 0
    %1222 = vmatpush1.bf16.msra.mxu0 0
    %1223 = vmatprep.subr.bf16.mxu0 0
    %1224 = vmatpush1.bf16.msra.mxu0 0
    %1225 = vmatprep.subr.bf16.mxu0 0
    %1226 = vmatpush1.bf16.msra.mxu0 0
    %1227 = vmatprep.subr.bf16.mxu0 0
    %1228 = vmatpush1.bf16.msra.mxu0 0
    %1229 = vmatprep.subr.bf16.mxu0 0
    %1230 = vmatpush1.bf16.msra.mxu0 0
    %1231 = vmatprep.subr.bf16.mxu0 0
    %1232 = vmatpush1.bf16.msra.mxu0 %v1065
    %1233 = vmatprep.subr.bf16.mxu0 0
    %1234 = vmatpush1.bf16.msra.mxu0 %v1064
    %1235 = vmatprep.subr.bf16.mxu0 0
    %1236 = vmatpush2.bf16.msra.mxu0 0
    %1237 = vmatprep.subr.bf16.mxu0 0
    %1238 = vmatpush2.bf16.msra.mxu0 0
    %1239 = vmatprep.subr.bf16.mxu0 0
    %1240 = vmatpush2.bf16.msra.mxu0 0
    %1241 = vmatprep.subr.bf16.mxu0 0
    %1242 = vmatpush2.bf16.msra.mxu0 0
    %1243 = vmatprep.subr.bf16.mxu0 0
    %1244 = vmatpush2.bf16.msra.mxu0 0
    %1245 = vmatprep.subr.bf16.mxu0 0
    %1246 = vmatpush2.bf16.msra.mxu0 0
    %1247 = vmatprep.subr.bf16.mxu0 0
    %1248 = vmatpush2.bf16.msra.mxu0 0
    %1249 = vmatprep.subr.bf16.mxu0 0
    %1250 = vmatpush2.bf16.msra.mxu0 0
    %1251 = vmatprep.mubr.bf16.mxu0 0
    %1252 = vmatmul.mubr.bf16.gmra.mxu0 %v1217
    %v1253 = vpop.f32.mrf.mxu0
    %v1254 = vadd.f32 0.0, %v1253
    %v1255 = vpop.f32.mrf.mxu0
    %v1256 = vpop.f32.mrf.mxu0
    %v1257 = vpop.f32.mrf.mxu0
    %1258 = vdwg.mxu0
    %v1260 = vrot.slane %v1254, 4
    %v1262 = vadd.f32 %v1046, %v1260
    %v1263 = vxor.u32 %v1262, 2147483648
    %v1264 = vmul.f32 %v1263, 1.442695
    %v1265 = vpow.pop %v1264
    %v1266 = vadd.f32 %v1265, 1.0
    %v1267 = vrcp.pop %v1266
    %v1268 = vmul.f32 1.0, %v1267
    %v1269 = vtanh.pop %v1262
    %v1271 = vrot.slane %v1204, 6
    %v1273 = vmul.f32 %v1268, %v1271
    %1275 = vrot.lane.b32.xlu0 %v1269, 32
    %v1276 = vpop.permute.xlu0 %1275
    %v1278 = vmul.f32 %v1268, %v1276
    %1280 = vrot.lane.b32.xlu0 %v1278, 32
    %v1281 = vpop.permute.xlu0 %1280
    %v1283 = vadd.f32 %v1273, %v1281
    %v1284 = vtanh.pop %v1283
    %1286 = vrot.lane.b32.xlu0 %v1284, 32
    %v1287 = vpop.permute.xlu0 %1286
    %v1289 = vmul.f32 %v1268, %v1287
    %v1290 = vpack.c.bf16 %v1289, %v1289
    %v1292 = vrot.slane %v1290, 2
    %1293 = vrot.lane.b32.xlu0 %v1292, 64
    %v1294 = vpop.permute.xlu0 %1293
    %v1296 = vsel %vm321, %v1294, 0
    %1298 = vmatprep.subr.bf16.mxu0 0
    %1299 = vmatpush1.bf16.msra.mxu0 0
    %1300 = vmatprep.subr.bf16.mxu0 0
    %1301 = vmatpush1.bf16.msra.mxu0 0
    %1302 = vmatprep.subr.bf16.mxu0 0
    %1303 = vmatpush1.bf16.msra.mxu0 0
    %1304 = vmatprep.subr.bf16.mxu0 0
    %1305 = vmatpush1.bf16.msra.mxu0 0
    %1306 = vmatprep.subr.bf16.mxu0 0
    %1307 = vmatpush1.bf16.msra.mxu0 0
    %1308 = vmatprep.subr.bf16.mxu0 0
    %1309 = vmatpush1.bf16.msra.mxu0 0
    %1310 = vmatprep.subr.bf16.mxu0 0
    %1311 = vmatpush1.bf16.msra.mxu0 %v1065
    %1312 = vmatprep.subr.bf16.mxu0 0
    %1313 = vmatpush1.bf16.msra.mxu0 %v1064
    %1314 = vmatprep.subr.bf16.mxu0 0
    %1315 = vmatpush2.bf16.msra.mxu0 0
    %1316 = vmatprep.subr.bf16.mxu0 0
    %1317 = vmatpush2.bf16.msra.mxu0 0
    %1318 = vmatprep.subr.bf16.mxu0 0
    %1319 = vmatpush2.bf16.msra.mxu0 0
    %1320 = vmatprep.subr.bf16.mxu0 0
    %1321 = vmatpush2.bf16.msra.mxu0 0
    %1322 = vmatprep.subr.bf16.mxu0 0
    %1323 = vmatpush2.bf16.msra.mxu0 0
    %1324 = vmatprep.subr.bf16.mxu0 0
    %1325 = vmatpush2.bf16.msra.mxu0 0
    %1326 = vmatprep.subr.bf16.mxu0 0
    %1327 = vmatpush2.bf16.msra.mxu0 0
    %1328 = vmatprep.subr.bf16.mxu0 0
    %1329 = vmatpush2.bf16.msra.mxu0 0
    %1330 = vmatprep.mubr.bf16.mxu0 0
    %1331 = vmatmul.mubr.bf16.gmra.mxu0 %v1296
    %v1332 = vpop.f32.mrf.mxu0
    %v1333 = vadd.f32 0.0, %v1332
    %v1334 = vpop.f32.mrf.mxu0
    %v1335 = vpop.f32.mrf.mxu0
    %v1336 = vpop.f32.mrf.mxu0
    %1337 = vdwg.mxu0
    %v1339 = vrot.slane %v1333, 2
    %v1341 = vadd.f32 %v1046, %v1339
    %v1342 = vxor.u32 %v1341, 2147483648
    %v1343 = vmul.f32 %v1342, 1.442695
    %v1344 = vpow.pop %v1343
    %v1345 = vadd.f32 %v1344, 1.0
    %v1346 = vrcp.pop %v1345
    %v1347 = vmul.f32 1.0, %v1346
    %v1348 = vtanh.pop %v1341
    %v1350 = vrot.slane %v1283, 6
    %v1352 = vmul.f32 %v1347, %v1350
    %1354 = vrot.lane.b32.xlu0 %v1348, 32
    %v1355 = vpop.permute.xlu0 %1354
    %v1357 = vmul.f32 %v1347, %v1355
    %1359 = vrot.lane.b32.xlu0 %v1357, 32
    %v1360 = vpop.permute.xlu0 %1359
    %v1362 = vadd.f32 %v1352, %v1360
    %v1363 = vtanh.pop %v1362
    %1365 = vrot.lane.b32.xlu0 %v1363, 32
    %v1366 = vpop.permute.xlu0 %1365
    %v1368 = vmul.f32 %v1347, %v1366
    %v1369 = vpack.c.bf16 %v1368, %v1368
    %v1371 = vrot.slane %v1369, 3
    %1372 = vrot.lane.b32.xlu0 %v1371, 64
    %v1373 = vpop.permute.xlu0 %1372
    %v1375 = vsel %vm321, %v1373, 0
    %1377 = vmatprep.subr.bf16.mxu0 0
    %1378 = vmatpush1.bf16.msra.mxu0 0
    %1379 = vmatprep.subr.bf16.mxu0 0
    %1380 = vmatpush1.bf16.msra.mxu0 0
    %1381 = vmatprep.subr.bf16.mxu0 0
    %1382 = vmatpush1.bf16.msra.mxu0 0
    %1383 = vmatprep.subr.bf16.mxu0 0
    %1384 = vmatpush1.bf16.msra.mxu0 0
    %1385 = vmatprep.subr.bf16.mxu0 0
    %1386 = vmatpush1.bf16.msra.mxu0 0
    %1387 = vmatprep.subr.bf16.mxu0 0
    %1388 = vmatpush1.bf16.msra.mxu0 0
    %1389 = vmatprep.subr.bf16.mxu0 0
    %1390 = vmatpush1.bf16.msra.mxu0 %v1065
    %1391 = vmatprep.subr.bf16.mxu0 0
    %1392 = vmatpush1.bf16.msra.mxu0 %v1064
    %1393 = vmatprep.subr.bf16.mxu0 0
    %1394 = vmatpush2.bf16.msra.mxu0 0
    %1395 = vmatprep.subr.bf16.mxu0 0
    %1396 = vmatpush2.bf16.msra.mxu0 0
    %1397 = vmatprep.subr.bf16.mxu0 0
    %1398 = vmatpush2.bf16.msra.mxu0 0
    %1399 = vmatprep.subr.bf16.mxu0 0
    %1400 = vmatpush2.bf16.msra.mxu0 0
    %1401 = vmatprep.subr.bf16.mxu0 0
    %1402 = vmatpush2.bf16.msra.mxu0 0
    %1403 = vmatprep.subr.bf16.mxu0 0
    %1404 = vmatpush2.bf16.msra.mxu0 0
    %1405 = vmatprep.subr.bf16.mxu0 0
    %1406 = vmatpush2.bf16.msra.mxu0 0
    %1407 = vmatprep.subr.bf16.mxu0 0
    %1408 = vmatpush2.bf16.msra.mxu0 0
    %1409 = vmatprep.mubr.bf16.mxu0 0
    %1410 = vmatmul.mubr.bf16.gmra.mxu0 %v1375
    %v1411 = vpop.f32.mrf.mxu0
    %v1412 = vadd.f32 0.0, %v1411
    %v1413 = vpop.f32.mrf.mxu0
    %v1414 = vpop.f32.mrf.mxu0
    %v1415 = vpop.f32.mrf.mxu0
    %1416 = vdwg.mxu0
    %v1417 = vadd.f32 %v1049, %v1412
    %v1418 = vxor.u32 %v1417, 2147483648
    %v1419 = vmul.f32 %v1418, 1.442695
    %v1420 = vpow.pop %v1419
    %v1421 = vadd.f32 %v1420, 1.0
    %v1422 = vrcp.pop %v1421
    %v1423 = vmul.f32 1.0, %v1422
    %v1424 = vtanh.pop %v1417
    %v1426 = vrot.slane %v1362, 6
    %v1428 = vmul.f32 %v1423, %v1426
    %1430 = vrot.lane.b32.xlu0 %v1424, 32
    %v1431 = vpop.permute.xlu0 %1430
    %v1433 = vmul.f32 %v1423, %v1431
    %1435 = vrot.lane.b32.xlu0 %v1433, 32
    %v1436 = vpop.permute.xlu0 %1435
    %v1438 = vadd.f32 %v1428, %v1436
    %v1439 = vtanh.pop %v1438
    %1441 = vrot.lane.b32.xlu0 %v1439, 32
    %v1442 = vpop.permute.xlu0 %1441
    %v1444 = vmul.f32 %v1423, %v1442
    %v1445 = vpack.c.bf16 %v1444, %v1444
    %1447 = vrot.lane.b32.xlu0 %v1445, 64
    %v1448 = vpop.permute.xlu0 %1447
    %v1450 = vsel %vm321, %v1448, 0
    %1452 = vmatprep.subr.bf16.mxu0 0
    %1453 = vmatpush1.bf16.msra.mxu0 0
    %1454 = vmatprep.subr.bf16.mxu0 0
    %1455 = vmatpush1.bf16.msra.mxu0 0
    %1456 = vmatprep.subr.bf16.mxu0 0
    %1457 = vmatpush1.bf16.msra.mxu0 0
    %1458 = vmatprep.subr.bf16.mxu0 0
    %1459 = vmatpush1.bf16.msra.mxu0 0
    %1460 = vmatprep.subr.bf16.mxu0 0
    %1461 = vmatpush1.bf16.msra.mxu0 0
    %1462 = vmatprep.subr.bf16.mxu0 0
    %1463 = vmatpush1.bf16.msra.mxu0 0
    %1464 = vmatprep.subr.bf16.mxu0 0
    %1465 = vmatpush1.bf16.msra.mxu0 %v1065
    %1466 = vmatprep.subr.bf16.mxu0 0
    %1467 = vmatpush1.bf16.msra.mxu0 %v1064
    %1468 = vmatprep.subr.bf16.mxu0 0
    %1469 = vmatpush2.bf16.msra.mxu0 0
    %1470 = vmatprep.subr.bf16.mxu0 0
    %1471 = vmatpush2.bf16.msra.mxu0 0
    %1472 = vmatprep.subr.bf16.mxu0 0
    %1473 = vmatpush2.bf16.msra.mxu0 0
    %1474 = vmatprep.subr.bf16.mxu0 0
    %1475 = vmatpush2.bf16.msra.mxu0 0
    %1476 = vmatprep.subr.bf16.mxu0 0
    %1477 = vmatpush2.bf16.msra.mxu0 0
    %1478 = vmatprep.subr.bf16.mxu0 0
    %1479 = vmatpush2.bf16.msra.mxu0 0
    %1480 = vmatprep.subr.bf16.mxu0 0
    %1481 = vmatpush2.bf16.msra.mxu0 0
    %1482 = vmatprep.subr.bf16.mxu0 0
    %1483 = vmatpush2.bf16.msra.mxu0 0
    %1484 = vmatprep.mubr.bf16.mxu0 0
    %1485 = vmatmul.mubr.bf16.gmra.mxu0 %v1450
    %v1486 = vpop.f32.mrf.mxu0
    %v1487 = vadd.f32 0.0, %v1486
    %v1488 = vpop.f32.mrf.mxu0
    %v1489 = vpop.f32.mrf.mxu0
    %v1490 = vpop.f32.mrf.mxu0
    %1491 = vdwg.mxu0
    %v1493 = vrot.slane %v1487, 6
    %v1495 = vadd.f32 %v1049, %v1493
    %v1496 = vxor.u32 %v1495, 2147483648
    %v1497 = vmul.f32 %v1496, 1.442695
    %v1498 = vpow.pop %v1497
    %v1499 = vadd.f32 %v1498, 1.0
    %v1500 = vrcp.pop %v1499
    %v1501 = vmul.f32 1.0, %v1500
    %v1502 = vtanh.pop %v1495
    %v1504 = vrot.slane %v1438, 6
    %v1506 = vmul.f32 %v1501, %v1504
    %1508 = vrot.lane.b32.xlu0 %v1502, 32
    %v1509 = vpop.permute.xlu0 %1508
    %v1511 = vmul.f32 %v1501, %v1509
    %1513 = vrot.lane.b32.xlu0 %v1511, 32
    %v1514 = vpop.permute.xlu0 %1513
    %v1516 = vadd.f32 %v1506, %v1514
    %v1517 = vtanh.pop %v1516
    %1519 = vrot.lane.b32.xlu0 %v1517, 32
    %v1520 = vpop.permute.xlu0 %1519
    %v1522 = vmul.f32 %v1501, %v1520
    %v1523 = vpack.c.bf16 %v1522, %v1522
    %v1525 = vrot.slane %v1523, 1
    %1526 = vrot.lane.b32.xlu0 %v1525, 64
    %v1527 = vpop.permute.xlu0 %1526
    %v1529 = vsel %vm321, %v1527, 0
    %1531 = vmatprep.subr.bf16.mxu0 0
    %1532 = vmatpush1.bf16.msra.mxu0 0
    %1533 = vmatprep.subr.bf16.mxu0 0
    %1534 = vmatpush1.bf16.msra.mxu0 0
    %1535 = vmatprep.subr.bf16.mxu0 0
    %1536 = vmatpush1.bf16.msra.mxu0 0
    %1537 = vmatprep.subr.bf16.mxu0 0
    %1538 = vmatpush1.bf16.msra.mxu0 0
    %1539 = vmatprep.subr.bf16.mxu0 0
    %1540 = vmatpush1.bf16.msra.mxu0 0
    %1541 = vmatprep.subr.bf16.mxu0 0
    %1542 = vmatpush1.bf16.msra.mxu0 0
    %1543 = vmatprep.subr.bf16.mxu0 0
    %1544 = vmatpush1.bf16.msra.mxu0 %v1065
    %1545 = vmatprep.subr.bf16.mxu0 0
    %1546 = vmatpush1.bf16.msra.mxu0 %v1064
    %1547 = vmatprep.subr.bf16.mxu0 0
    %1548 = vmatpush2.bf16.msra.mxu0 0
    %1549 = vmatprep.subr.bf16.mxu0 0
    %1550 = vmatpush2.bf16.msra.mxu0 0
    %1551 = vmatprep.subr.bf16.mxu0 0
    %1552 = vmatpush2.bf16.msra.mxu0 0
    %1553 = vmatprep.subr.bf16.mxu0 0
    %1554 = vmatpush2.bf16.msra.mxu0 0
    %1555 = vmatprep.subr.bf16.mxu0 0
    %1556 = vmatpush2.bf16.msra.mxu0 0
    %1557 = vmatprep.subr.bf16.mxu0 0
    %1558 = vmatpush2.bf16.msra.mxu0 0
    %1559 = vmatprep.subr.bf16.mxu0 0
    %1560 = vmatpush2.bf16.msra.mxu0 0
    %1561 = vmatprep.subr.bf16.mxu0 0
    %1562 = vmatpush2.bf16.msra.mxu0 0
    %1563 = vmatprep.mubr.bf16.mxu0 0
    %1564 = vmatmul.mubr.bf16.gmra.mxu0 %v1529
    %v1565 = vpop.f32.mrf.mxu0
    %v1566 = vadd.f32 0.0, %v1565
    %v1567 = vpop.f32.mrf.mxu0
    %v1568 = vpop.f32.mrf.mxu0
    %v1569 = vpop.f32.mrf.mxu0
    %1570 = vdwg.mxu0
    %v1572 = vrot.slane %v1566, 4
    %v1574 = vadd.f32 %v1049, %v1572
    %v1575 = vxor.u32 %v1574, 2147483648
    %v1576 = vmul.f32 %v1575, 1.442695
    %v1577 = vpow.pop %v1576
    %v1578 = vadd.f32 %v1577, 1.0
    %v1579 = vrcp.pop %v1578
    %v1580 = vmul.f32 1.0, %v1579
    %v1581 = vtanh.pop %v1574
    %v1583 = vrot.slane %v1516, 6
    %v1585 = vmul.f32 %v1580, %v1583
    %1587 = vrot.lane.b32.xlu0 %v1581, 32
    %v1588 = vpop.permute.xlu0 %1587
    %v1590 = vmul.f32 %v1580, %v1588
    %1592 = vrot.lane.b32.xlu0 %v1590, 32
    %v1593 = vpop.permute.xlu0 %1592
    %v1595 = vadd.f32 %v1585, %v1593
    %v1596 = vtanh.pop %v1595
    %1598 = vrot.lane.b32.xlu0 %v1596, 32
    %v1599 = vpop.permute.xlu0 %1598
    %v1601 = vmul.f32 %v1580, %v1599
    %v1602 = vpack.c.bf16 %v1601, %v1601
    %v1604 = vrot.slane %v1602, 2
    %1605 = vrot.lane.b32.xlu0 %v1604, 64
    %v1606 = vpop.permute.xlu0 %1605
    %v1608 = vsel %vm321, %v1606, 0
    %1610 = vmatprep.subr.bf16.mxu0 0
    %1611 = vmatpush1.bf16.msra.mxu0 0
    %1612 = vmatprep.subr.bf16.mxu0 0
    %1613 = vmatpush1.bf16.msra.mxu0 0
    %1614 = vmatprep.subr.bf16.mxu0 0
    %1615 = vmatpush1.bf16.msra.mxu0 0
    %1616 = vmatprep.subr.bf16.mxu0 0
    %1617 = vmatpush1.bf16.msra.mxu0 0
    %1618 = vmatprep.subr.bf16.mxu0 0
    %1619 = vmatpush1.bf16.msra.mxu0 0
    %1620 = vmatprep.subr.bf16.mxu0 0
    %1621 = vmatpush1.bf16.msra.mxu0 0
    %1622 = vmatprep.subr.bf16.mxu0 0
    %1623 = vmatpush1.bf16.msra.mxu0 %v1065
    %1624 = vmatprep.subr.bf16.mxu0 0
    %1625 = vmatpush1.bf16.msra.mxu0 %v1064
    %1626 = vmatprep.subr.bf16.mxu0 0
    %1627 = vmatpush2.bf16.msra.mxu0 0
    %1628 = vmatprep.subr.bf16.mxu0 0
    %1629 = vmatpush2.bf16.msra.mxu0 0
    %1630 = vmatprep.subr.bf16.mxu0 0
    %1631 = vmatpush2.bf16.msra.mxu0 0
    %1632 = vmatprep.subr.bf16.mxu0 0
    %1633 = vmatpush2.bf16.msra.mxu0 0
    %1634 = vmatprep.subr.bf16.mxu0 0
    %1635 = vmatpush2.bf16.msra.mxu0 0
    %1636 = vmatprep.subr.bf16.mxu0 0
    %1637 = vmatpush2.bf16.msra.mxu0 0
    %1638 = vmatprep.subr.bf16.mxu0 0
    %1639 = vmatpush2.bf16.msra.mxu0 0
    %1640 = vmatprep.subr.bf16.mxu0 0
    %1641 = vmatpush2.bf16.msra.mxu0 0
    %1642 = vmatprep.mubr.bf16.mxu0 0
    %1643 = vmatmul.mubr.bf16.gmra.mxu0 %v1608
    %v1644 = vpop.f32.mrf.mxu0
    %v1645 = vadd.f32 0.0, %v1644
    %v1646 = vpop.f32.mrf.mxu0
    %v1647 = vpop.f32.mrf.mxu0
    %v1648 = vpop.f32.mrf.mxu0
    %1649 = vdwg.mxu0
    %v1651 = vrot.slane %v1645, 2
    %v1653 = vadd.f32 %v1049, %v1651
    %v1654 = vxor.u32 %v1653, 2147483648
    %v1655 = vmul.f32 %v1654, 1.442695
    %v1656 = vpow.pop %v1655
    %v1657 = vadd.f32 %v1656, 1.0
    %v1658 = vrcp.pop %v1657
    %v1659 = vmul.f32 1.0, %v1658
    %v1660 = vtanh.pop %v1653
    %v1662 = vrot.slane %v1595, 6
    %v1664 = vmul.f32 %v1659, %v1662
    %1666 = vrot.lane.b32.xlu0 %v1660, 32
    %v1667 = vpop.permute.xlu0 %1666
    %v1669 = vmul.f32 %v1659, %v1667
    %1671 = vrot.lane.b32.xlu0 %v1669, 32
    %v1672 = vpop.permute.xlu0 %1671
    %v1674 = vadd.f32 %v1664, %v1672
    %v1675 = vtanh.pop %v1674
    %1677 = vrot.lane.b32.xlu0 %v1675, 32
    %v1678 = vpop.permute.xlu0 %1677
    %v1680 = vmul.f32 %v1659, %v1678
    %v1681 = vtanh.pop %v1680
    %v1682 = vpack.c.bf16 %v1681, %v1681
    %v1683 = vld [vmem:[%s8] sm:$0xf]
    %v1684 = vld [vmem:[%s8 + $0x4] sm:$0xf]
    %v1685 = vld [vmem:[%s8 + $0x8] sm:$0xf]
    %v1686 = vld [vmem:[%s8 + $0xc] sm:$0xf]
    %v1687 = vld [vmem:[#allocation9] sm:$0x1]
    %v1689 = vlaneseq
    %v1690 = vshrl.u32 %v1689, 7
    %v1691 = vsub.s32 0, %v1690
    %v1692 = vrot.slane %v1687, %v1691
    %v1695 = vrot.slane %v1682, 3
    %1696 = vrot.lane.b32.xlu0 %v1695, 64
    %v1697 = vpop.permute.xlu0 %1696
    %v1702 = vunpack.c.l.b16 %v1683
    %v1703 = vunpack.c.l.b16 %v1684
    %v1704 = vunpack.c.l.b16 %v1685
    %v1705 = vunpack.c.l.b16 %v1686
    %v1706 = vpack.c.b16 %v1703, %v1702
    %v1707 = vpack.c.b16 %v1705, %v1704
    %v1711 = vsel %vm321, %v1697, 0
    %1713 = vmatprep.subr.bf16.mxu0 0
    %1714 = vmatpush1.bf16.msra.mxu0 0
    %1715 = vmatprep.subr.bf16.mxu0 0
    %1716 = vmatpush1.bf16.msra.mxu0 0
    %1717 = vmatprep.subr.bf16.mxu0 0
    %1718 = vmatpush1.bf16.msra.mxu0 0
    %1719 = vmatprep.subr.bf16.mxu0 0
    %1720 = vmatpush1.bf16.msra.mxu0 0
    %1721 = vmatprep.subr.bf16.mxu0 0
    %1722 = vmatpush1.bf16.msra.mxu0 0
    %1723 = vmatprep.subr.bf16.mxu0 0
    %1724 = vmatpush1.bf16.msra.mxu0 0
    %1725 = vmatprep.subr.bf16.mxu0 0
    %1726 = vmatpush1.bf16.msra.mxu0 %v1707
    %1727 = vmatprep.subr.bf16.mxu0 0
    %1728 = vmatpush1.bf16.msra.mxu0 %v1706
    %1729 = vmatprep.subr.bf16.mxu0 0
    %1730 = vmatpush2.bf16.msra.mxu0 0
    %1731 = vmatprep.subr.bf16.mxu0 0
    %1732 = vmatpush2.bf16.msra.mxu0 0
    %1733 = vmatprep.subr.bf16.mxu0 0
    %1734 = vmatpush2.bf16.msra.mxu0 0
    %1735 = vmatprep.subr.bf16.mxu0 0
    %1736 = vmatpush2.bf16.msra.mxu0 0
    %1737 = vmatprep.subr.bf16.mxu0 0
    %1738 = vmatpush2.bf16.msra.mxu0 0
    %1739 = vmatprep.subr.bf16.mxu0 0
    %1740 = vmatpush2.bf16.msra.mxu0 0
    %1741 = vmatprep.subr.bf16.mxu0 0
    %1742 = vmatpush2.bf16.msra.mxu0 0
    %1743 = vmatprep.subr.bf16.mxu0 0
    %1744 = vmatpush2.bf16.msra.mxu0 0
    %1745 = vmatprep.mubr.bf16.mxu0 0
    %1746 = vmatmul.mubr.bf16.gmra.mxu0 %v1711
    %v1747 = vpop.f32.mrf.mxu0
    %v1748 = vadd.f32 %v1692, %v1747
    %v1749 = vpop.f32.mrf.mxu0
    %v1750 = vpop.f32.mrf.mxu0
    %v1751 = vpop.f32.mrf.mxu0
    %1752 = vdwg.mxu0
    %v1753 = vmax.f32 %v1748, 0.0
    %v1754 = vld [vmem:[%s10] sm:$0xf]
    %v1755 = vld [vmem:[%s10 + $0x4] sm:$0xf]
    %v1756 = vld [vmem:[%s10 + $0x8] sm:$0xf]
    %v1757 = vld [vmem:[%s10 + $0xc] sm:$0xf]
    %v1758 = vld [vmem:[%s11] sm:$0x1]
    %v1760 = vlaneseq
    %v1761 = vshrl.u32 %v1760, 7
    %v1762 = vsub.s32 0, %v1761
    %v1763 = vrot.slane %v1758, %v1762
    %v1769 = vunpack.c.l.b16 %v1754
    %v1770 = vunpack.c.l.b16 %v1755
    %v1771 = vunpack.c.l.b16 %v1756
    %v1772 = vunpack.c.l.b16 %v1757
    %v1773 = vpack.c.b16 %v1770, %v1769
    %v1774 = vpack.c.b16 %v1772, %v1771
    %1777 = vmatprep.subr.bf16.mxu0 0
    %1778 = vmatpush1.bf16.msra.mxu0 0
    %1779 = vmatprep.subr.bf16.mxu0 0
    %1780 = vmatpush1.bf16.msra.mxu0 0
    %1781 = vmatprep.subr.bf16.mxu0 0
    %1782 = vmatpush1.bf16.msra.mxu0 0
    %1783 = vmatprep.subr.bf16.mxu0 0
    %1784 = vmatpush1.bf16.msra.mxu0 0
    %1785 = vmatprep.subr.bf16.mxu0 0
    %1786 = vmatpush1.bf16.msra.mxu0 0
    %1787 = vmatprep.subr.bf16.mxu0 0
    %1788 = vmatpush1.bf16.msra.mxu0 0
    %1789 = vmatprep.subr.bf16.mxu0 0
    %1790 = vmatpush1.bf16.msra.mxu0 %v1774
    %1791 = vmatprep.subr.bf16.mxu0 0
    %1792 = vmatpush1.bf16.msra.mxu0 %v1773
    %1793 = vmatprep.subr.bf16.mxu0 0
    %1794 = vmatpush2.bf16.msra.mxu0 0
    %1795 = vmatprep.subr.bf16.mxu0 0
    %1796 = vmatpush2.bf16.msra.mxu0 0
    %1797 = vmatprep.subr.bf16.mxu0 0
    %1798 = vmatpush2.bf16.msra.mxu0 0
    %1799 = vmatprep.subr.bf16.mxu0 0
    %1800 = vmatpush2.bf16.msra.mxu0 0
    %1801 = vmatprep.subr.bf16.mxu0 0
    %1802 = vmatpush2.bf16.msra.mxu0 0
    %1803 = vmatprep.subr.bf16.mxu0 0
    %1804 = vmatpush2.bf16.msra.mxu0 0
    %1805 = vmatprep.subr.bf16.mxu0 0
    %1806 = vmatpush2.bf16.msra.mxu0 0
    %1807 = vmatprep.subr.bf16.mxu0 0
    %1808 = vmatpush2.bf16.msra.mxu0 0
    %1809 = vmatprep.mubr.bf16.mxu0 0
    %1810 = vmatmul.mubr.bf16.gmra.mxu0 %v1711
    %v1811 = vpop.f32.mrf.mxu0
    %v1812 = vadd.f32 %v1763, %v1811
    %v1813 = vpop.f32.mrf.mxu0
    %v1814 = vpop.f32.mrf.mxu0
    %v1815 = vpop.f32.mrf.mxu0
    %1816 = vdwg.mxu0
    %v1817 = vmax.f32 %v1812, 0.0
    %v1818 = vmul.f32 %v1817, 0.5
    %v1819 = vmul.f32 %v1818, 1.442695
    %v1820 = vpow.pop %v1819
    %v1821 = vld [vmem:[%s1] sm:$0x3]
    %v1822 = vmul.f32 %v1820, %v1821
    %v1823 = vadd.f32 %v1753, %v1822
    %v1824 = vpack.c.bf16 %v1823, %v1823
    %v1825 = vld [vmem:[#allocation11] sm:$0xf]
    %v1826 = vld [vmem:[#allocation12] sm:$0x1]
    %v1828 = vlaneseq
    %v1829 = vshrl.u32 %v1828, 7
    %v1830 = vsub.s32 0, %v1829
    %v1831 = vrot.slane %v1826, %v1830
    %vm1833 = vcmask 64512
    %v1835 = vsel %vm1833, %v1824, 0
    %vm1837 = vcmask 1043456
    %v1839 = vsel %vm1837, %v1825, 0
    %1841 = vmatprep.subr.bf16.mxu0 0
    %1842 = vmatpush1.bf16.msra.mxu0 0
    %1843 = vmatprep.subr.bf16.mxu0 0
    %1844 = vmatpush1.bf16.msra.mxu0 0
    %1845 = vmatprep.subr.bf16.mxu0 0
    %1846 = vmatpush1.bf16.msra.mxu0 0
    %1847 = vmatprep.subr.bf16.mxu0 0
    %1848 = vmatpush1.bf16.msra.mxu0 0
    %1849 = vmatprep.subr.bf16.mxu0 0
    %1850 = vmatpush1.bf16.msra.mxu0 0
    %1851 = vmatprep.subr.bf16.mxu0 0
    %1852 = vmatpush1.bf16.msra.mxu0 0
    %1853 = vmatprep.subr.bf16.mxu0 0
    %1854 = vmatpush1.bf16.msra.mxu0 0
    %1855 = vmatprep.subr.bf16.mxu0 0
    %1856 = vmatpush1.bf16.msra.mxu0 %v1839
    %1857 = vmatprep.subr.bf16.mxu0 0
    %1858 = vmatpush2.bf16.msra.mxu0 0
    %1859 = vmatprep.subr.bf16.mxu0 0
    %1860 = vmatpush2.bf16.msra.mxu0 0
    %1861 = vmatprep.subr.bf16.mxu0 0
    %1862 = vmatpush2.bf16.msra.mxu0 0
    %1863 = vmatprep.subr.bf16.mxu0 0
    %1864 = vmatpush2.bf16.msra.mxu0 0
    %1865 = vmatprep.subr.bf16.mxu0 0
    %1866 = vmatpush2.bf16.msra.mxu0 0
    %1867 = vmatprep.subr.bf16.mxu0 0
    %1868 = vmatpush2.bf16.msra.mxu0 0
    %1869 = vmatprep.subr.bf16.mxu0 0
    %1870 = vmatpush2.bf16.msra.mxu0 0
    %1871 = vmatprep.subr.bf16.mxu0 0
    %1872 = vmatpush2.bf16.msra.mxu0 0
    %1873 = vmatprep.mubr.bf16.mxu0 0
    %1874 = vmatmul.mubr.bf16.gmra.mxu0 %v1835
    %v1875 = vpop.f32.mrf.mxu0
    %v1876 = vadd.f32 %v1831, %v1875
    %v1877 = vpop.f32.mrf.mxu0
    %v1878 = vpop.f32.mrf.mxu0
    %v1879 = vpop.f32.mrf.mxu0
    %1880 = vdwg.mxu0
    %v1881 = vld [vmem:[%s13] sm:$0xf]
    %v1882 = vld [vmem:[%s13 + $0x4] sm:$0xf]
    %v1883 = vld [vmem:[%s13 + $0x8] sm:$0xf]
    %v1884 = vld [vmem:[%s13 + $0xc] sm:$0xf]
    %v1889 = vunpack.c.l.b16 %v1881
    %v1890 = vunpack.c.l.b16 %v1882
    %v1891 = vunpack.c.l.b16 %v1883
    %v1892 = vunpack.c.l.b16 %v1884
    %v1893 = vpack.c.b16 %v1890, %v1889
    %v1894 = vpack.c.b16 %v1892, %v1891
    %1897 = vmatprep.subr.bf16.mxu0 0
    %1898 = vmatpush1.bf16.msra.mxu0 0
    %1899 = vmatprep.subr.bf16.mxu0 0
    %1900 = vmatpush1.bf16.msra.mxu0 0
    %1901 = vmatprep.subr.bf16.mxu0 0
    %1902 = vmatpush1.bf16.msra.mxu0 0
    %1903 = vmatprep.subr.bf16.mxu0 0
    %1904 = vmatpush1.bf16.msra.mxu0 0
    %1905 = vmatprep.subr.bf16.mxu0 0
    %1906 = vmatpush1.bf16.msra.mxu0 0
    %1907 = vmatprep.subr.bf16.mxu0 0
    %1908 = vmatpush1.bf16.msra.mxu0 0
    %1909 = vmatprep.subr.bf16.mxu0 0
    %1910 = vmatpush1.bf16.msra.mxu0 %v1894
    %1911 = vmatprep.subr.bf16.mxu0 0
    %1912 = vmatpush1.bf16.msra.mxu0 %v1893
    %1913 = vmatprep.subr.bf16.mxu0 0
    %1914 = vmatpush2.bf16.msra.mxu0 0
    %1915 = vmatprep.subr.bf16.mxu0 0
    %1916 = vmatpush2.bf16.msra.mxu0 0
    %1917 = vmatprep.subr.bf16.mxu0 0
    %1918 = vmatpush2.bf16.msra.mxu0 0
    %1919 = vmatprep.subr.bf16.mxu0 0
    %1920 = vmatpush2.bf16.msra.mxu0 0
    %1921 = vmatprep.subr.bf16.mxu0 0
    %1922 = vmatpush2.bf16.msra.mxu0 0
    %1923 = vmatprep.subr.bf16.mxu0 0
    %1924 = vmatpush2.bf16.msra.mxu0 0
    %1925 = vmatprep.subr.bf16.mxu0 0
    %1926 = vmatpush2.bf16.msra.mxu0 0
    %1927 = vmatprep.subr.bf16.mxu0 0
    %1928 = vmatpush2.bf16.msra.mxu0 0
    %1929 = vmatprep.mubr.bf16.mxu0 0
    %1930 = vmatmul.mubr.bf16.gmra.mxu0 %v323
    %v1931 = vpop.f32.mrf.mxu0
    %v1932 = vadd.f32 0.0, %v1931
    %v1933 = vpop.f32.mrf.mxu0
    %v1934 = vpop.f32.mrf.mxu0
    %v1935 = vpop.f32.mrf.mxu0
    %1936 = vdwg.mxu0
    %v1937 = vadd.f32 %v1876, %v1932
    %v1938 = vxor.u32 %v1937, 2147483648
    %v1939 = vmul.f32 %v1938, 1.442695
    %v1940 = vpow.pop %v1939
    %v1941 = vadd.f32 %v1940, 1.0
    %v1942 = vrcp.pop %v1941
    %v1943 = vmul.f32 1.0, %v1942
    %v1944 = vtanh.pop %v1937
    %v1945 = vmul.f32 %v1943, 0.0
    %1947 = vrot.lane.b32.xlu0 %v1944, 32
    %v1948 = vpop.permute.xlu0 %1947
    %v1950 = vmul.f32 %v1943, %v1948
    %1952 = vrot.lane.b32.xlu0 %v1950, 32
    %v1953 = vpop.permute.xlu0 %1952
    %v1955 = vadd.f32 %v1945, %v1953
    %v1956 = vtanh.pop %v1955
    %1958 = vrot.lane.b32.xlu0 %v1956, 32
    %v1959 = vpop.permute.xlu0 %1958
    %v1961 = vmul.f32 %v1943, %v1959
    %1963 = vrot.lane.b32.xlu0 %v1961, 64
    %v1964 = vpop.permute.xlu0 %1963
    %1966 = vst.msk [vmem:[#allocation2] sm:$0x3] %vm394, %v1964
    %v1967 = vpack.c.bf16 %v1961, %v1961
    %1969 = vrot.lane.b32.xlu0 %v1967, 64
    %v1970 = vpop.permute.xlu0 %1969
    %v1972 = vsel %vm321, %v1970, 0
    %1974 = vmatprep.subr.bf16.mxu0 0
    %1975 = vmatpush1.bf16.msra.mxu0 0
    %1976 = vmatprep.subr.bf16.mxu0 0
    %1977 = vmatpush1.bf16.msra.mxu0 0
    %1978 = vmatprep.subr.bf16.mxu0 0
    %1979 = vmatpush1.bf16.msra.mxu0 0
    %1980 = vmatprep.subr.bf16.mxu0 0
    %1981 = vmatpush1.bf16.msra.mxu0 0
    %1982 = vmatprep.subr.bf16.mxu0 0
    %1983 = vmatpush1.bf16.msra.mxu0 0
    %1984 = vmatprep.subr.bf16.mxu0 0
    %1985 = vmatpush1.bf16.msra.mxu0 0
    %1986 = vmatprep.subr.bf16.mxu0 0
    %1987 = vmatpush1.bf16.msra.mxu0 %v1894
    %1988 = vmatprep.subr.bf16.mxu0 0
    %1989 = vmatpush1.bf16.msra.mxu0 %v1893
    %1990 = vmatprep.subr.bf16.mxu0 0
    %1991 = vmatpush2.bf16.msra.mxu0 0
    %1992 = vmatprep.subr.bf16.mxu0 0
    %1993 = vmatpush2.bf16.msra.mxu0 0
    %1994 = vmatprep.subr.bf16.mxu0 0
    %1995 = vmatpush2.bf16.msra.mxu0 0
    %1996 = vmatprep.subr.bf16.mxu0 0
    %1997 = vmatpush2.bf16.msra.mxu0 0
    %1998 = vmatprep.subr.bf16.mxu0 0
    %1999 = vmatpush2.bf16.msra.mxu0 0
    %2000 = vmatprep.subr.bf16.mxu0 0
    %2001 = vmatpush2.bf16.msra.mxu0 0
    %2002 = vmatprep.subr.bf16.mxu0 0
    %2003 = vmatpush2.bf16.msra.mxu0 0
    %2004 = vmatprep.subr.bf16.mxu0 0
    %2005 = vmatpush2.bf16.msra.mxu0 0
    %2006 = vmatprep.mubr.bf16.mxu0 0
    %2007 = vmatmul.mubr.bf16.gmra.mxu0 %v1972
    %v2008 = vpop.f32.mrf.mxu0
    %v2009 = vadd.f32 0.0, %v2008
    %v2010 = vpop.f32.mrf.mxu0
    %v2011 = vpop.f32.mrf.mxu0
    %v2012 = vpop.f32.mrf.mxu0
    %2013 = vdwg.mxu0
    %v2014 = vadd.f32 %v1876, %v2009
    %v2015 = vxor.u32 %v2014, 2147483648
    %v2016 = vmul.f32 %v2015, 1.442695
    %v2017 = vpow.pop %v2016
    %v2018 = vadd.f32 %v2017, 1.0
    %v2019 = vrcp.pop %v2018
    %v2020 = vmul.f32 1.0, %v2019
    %v2021 = vtanh.pop %v2014
    %v2022 = vmul.f32 %v2020, %v1955
    %2024 = vrot.lane.b32.xlu0 %v2021, 32
    %v2025 = vpop.permute.xlu0 %2024
    %v2027 = vmul.f32 %v2020, %v2025
    %2029 = vrot.lane.b32.xlu0 %v2027, 32
    %v2030 = vpop.permute.xlu0 %2029
    %v2032 = vadd.f32 %v2022, %v2030
    %v2033 = vtanh.pop %v2032
    %2035 = vrot.lane.b32.xlu0 %v2033, 32
    %v2036 = vpop.permute.xlu0 %2035
    %v2038 = vmul.f32 %v2020, %v2036
    %2040 = vrot.lane.b32.xlu0 %v2038, 64
    %v2041 = vpop.permute.xlu0 %2040
    %2043 = vst.msk [vmem:[#allocation2 + $0x2] sm:$0x3] %vm394, %v2041
    %v2044 = vpack.c.bf16 %v2038, %v2038
    %2046 = vrot.lane.b32.xlu0 %v2044, 64
    %v2047 = vpop.permute.xlu0 %2046
    %v2049 = vsel %vm321, %v2047, 0
    %2051 = vmatprep.subr.bf16.mxu0 0
    %2052 = vmatpush1.bf16.msra.mxu0 0
    %2053 = vmatprep.subr.bf16.mxu0 0
    %2054 = vmatpush1.bf16.msra.mxu0 0
    %2055 = vmatprep.subr.bf16.mxu0 0
    %2056 = vmatpush1.bf16.msra.mxu0 0
    %2057 = vmatprep.subr.bf16.mxu0 0
    %2058 = vmatpush1.bf16.msra.mxu0 0
    %2059 = vmatprep.subr.bf16.mxu0 0
    %2060 = vmatpush1.bf16.msra.mxu0 0
    %2061 = vmatprep.subr.bf16.mxu0 0
    %2062 = vmatpush1.bf16.msra.mxu0 0
    %2063 = vmatprep.subr.bf16.mxu0 0
    %2064 = vmatpush1.bf16.msra.mxu0 %v1894
    %2065 = vmatprep.subr.bf16.mxu0 0
    %2066 = vmatpush1.bf16.msra.mxu0 %v1893
    %2067 = vmatprep.subr.bf16.mxu0 0
    %2068 = vmatpush2.bf16.msra.mxu0 0
    %2069 = vmatprep.subr.bf16.mxu0 0
    %2070 = vmatpush2.bf16.msra.mxu0 0
    %2071 = vmatprep.subr.bf16.mxu0 0
    %2072 = vmatpush2.bf16.msra.mxu0 0
    %2073 = vmatprep.subr.bf16.mxu0 0
    %2074 = vmatpush2.bf16.msra.mxu0 0
    %2075 = vmatprep.subr.bf16.mxu0 0
    %2076 = vmatpush2.bf16.msra.mxu0 0
    %2077 = vmatprep.subr.bf16.mxu0 0
    %2078 = vmatpush2.bf16.msra.mxu0 0
    %2079 = vmatprep.subr.bf16.mxu0 0
    %2080 = vmatpush2.bf16.msra.mxu0 0
    %2081 = vmatprep.subr.bf16.mxu0 0
    %2082 = vmatpush2.bf16.msra.mxu0 0
    %2083 = vmatprep.mubr.bf16.mxu0 0
    %2084 = vmatmul.mubr.bf16.gmra.mxu0 %v2049
    %v2085 = vpop.f32.mrf.mxu0
    %v2086 = vadd.f32 0.0, %v2085
    %v2087 = vpop.f32.mrf.mxu0
    %v2088 = vpop.f32.mrf.mxu0
    %v2089 = vpop.f32.mrf.mxu0
    %2090 = vdwg.mxu0
    %v2091 = vadd.f32 %v1876, %v2086
    %v2092 = vxor.u32 %v2091, 2147483648
    %v2093 = vmul.f32 %v2092, 1.442695
    %v2094 = vpow.pop %v2093
    %v2095 = vadd.f32 %v2094, 1.0
    %v2096 = vrcp.pop %v2095
    %v2097 = vmul.f32 1.0, %v2096
    %v2098 = vtanh.pop %v2091
    %v2099 = vmul.f32 %v2097, %v2032
    %2101 = vrot.lane.b32.xlu0 %v2098, 32
    %v2102 = vpop.permute.xlu0 %2101
    %v2104 = vmul.f32 %v2097, %v2102
    %2106 = vrot.lane.b32.xlu0 %v2104, 32
    %v2107 = vpop.permute.xlu0 %2106
    %v2109 = vadd.f32 %v2099, %v2107
    %v2110 = vtanh.pop %v2109
    %2112 = vrot.lane.b32.xlu0 %v2110, 32
    %v2113 = vpop.permute.xlu0 %2112
    %v2115 = vmul.f32 %v2097, %v2113
    %2117 = vrot.lane.b32.xlu0 %v2115, 64
    %v2118 = vpop.permute.xlu0 %2117
    %2120 = vst.msk [vmem:[#allocation2 + $0x4] sm:$0x3] %vm394, %v2118
    %v2121 = vpack.c.bf16 %v2115, %v2115
    %2123 = vrot.lane.b32.xlu0 %v2121, 64
    %v2124 = vpop.permute.xlu0 %2123
    %v2126 = vsel %vm321, %v2124, 0
    %2128 = vmatprep.subr.bf16.mxu0 0
    %2129 = vmatpush1.bf16.msra.mxu0 0
    %2130 = vmatprep.subr.bf16.mxu0 0
    %2131 = vmatpush1.bf16.msra.mxu0 0
    %2132 = vmatprep.subr.bf16.mxu0 0
    %2133 = vmatpush1.bf16.msra.mxu0 0
    %2134 = vmatprep.subr.bf16.mxu0 0
    %2135 = vmatpush1.bf16.msra.mxu0 0
    %2136 = vmatprep.subr.bf16.mxu0 0
    %2137 = vmatpush1.bf16.msra.mxu0 0
    %2138 = vmatprep.subr.bf16.mxu0 0
    %2139 = vmatpush1.bf16.msra.mxu0 0
    %2140 = vmatprep.subr.bf16.mxu0 0
    %2141 = vmatpush1.bf16.msra.mxu0 %v1894
    %2142 = vmatprep.subr.bf16.mxu0 0
    %2143 = vmatpush1.bf16.msra.mxu0 %v1893
    %2144 = vmatprep.subr.bf16.mxu0 0
    %2145 = vmatpush2.bf16.msra.mxu0 0
    %2146 = vmatprep.subr.bf16.mxu0 0
    %2147 = vmatpush2.bf16.msra.mxu0 0
    %2148 = vmatprep.subr.bf16.mxu0 0
    %2149 = vmatpush2.bf16.msra.mxu0 0
    %2150 = vmatprep.subr.bf16.mxu0 0
    %2151 = vmatpush2.bf16.msra.mxu0 0
    %2152 = vmatprep.subr.bf16.mxu0 0
    %2153 = vmatpush2.bf16.msra.mxu0 0
    %2154 = vmatprep.subr.bf16.mxu0 0
    %2155 = vmatpush2.bf16.msra.mxu0 0
    %2156 = vmatprep.subr.bf16.mxu0 0
    %2157 = vmatpush2.bf16.msra.mxu0 0
    %2158 = vmatprep.subr.bf16.mxu0 0
    %2159 = vmatpush2.bf16.msra.mxu0 0
    %2160 = vmatprep.mubr.bf16.mxu0 0
    %2161 = vmatmul.mubr.bf16.gmra.mxu0 %v2126
    %v2162 = vpop.f32.mrf.mxu0
    %v2163 = vadd.f32 0.0, %v2162
    %v2164 = vpop.f32.mrf.mxu0
    %v2165 = vpop.f32.mrf.mxu0
    %v2166 = vpop.f32.mrf.mxu0
    %2167 = vdwg.mxu0
    %v2168 = vadd.f32 %v1876, %v2163
    %v2169 = vxor.u32 %v2168, 2147483648
    %v2170 = vmul.f32 %v2169, 1.442695
    %v2171 = vpow.pop %v2170
    %v2172 = vadd.f32 %v2171, 1.0
    %v2173 = vrcp.pop %v2172
    %v2174 = vmul.f32 1.0, %v2173
    %v2175 = vtanh.pop %v2168
    %v2176 = vmul.f32 %v2174, %v2109
    %2178 = vrot.lane.b32.xlu0 %v2175, 32
    %v2179 = vpop.permute.xlu0 %2178
    %v2181 = vmul.f32 %v2174, %v2179
    %2183 = vrot.lane.b32.xlu0 %v2181, 32
    %v2184 = vpop.permute.xlu0 %2183
    %v2186 = vadd.f32 %v2176, %v2184
    %v2187 = vtanh.pop %v2186
    %2189 = vrot.lane.b32.xlu0 %v2187, 32
    %v2190 = vpop.permute.xlu0 %2189
    %v2192 = vmul.f32 %v2174, %v2190
    %2194 = vrot.lane.b32.xlu0 %v2192, 64
    %v2195 = vpop.permute.xlu0 %2194
    %2197 = vst.msk [vmem:[#allocation2 + $0x6] sm:$0x3] %vm394, %v2195
    %v2198 = vpack.c.bf16 %v2192, %v2192
    %2200 = vrot.lane.b32.xlu0 %v2198, 64
    %v2201 = vpop.permute.xlu0 %2200
    %v2203 = vsel %vm321, %v2201, 0
    %2205 = vmatprep.subr.bf16.mxu0 0
    %2206 = vmatpush1.bf16.msra.mxu0 0
    %2207 = vmatprep.subr.bf16.mxu0 0
    %2208 = vmatpush1.bf16.msra.mxu0 0
    %2209 = vmatprep.subr.bf16.mxu0 0
    %2210 = vmatpush1.bf16.msra.mxu0 0
    %2211 = vmatprep.subr.bf16.mxu0 0
    %2212 = vmatpush1.bf16.msra.mxu0 0
    %2213 = vmatprep.subr.bf16.mxu0 0
    %2214 = vmatpush1.bf16.msra.mxu0 0
    %2215 = vmatprep.subr.bf16.mxu0 0
    %2216 = vmatpush1.bf16.msra.mxu0 0
    %2217 = vmatprep.subr.bf16.mxu0 0
    %2218 = vmatpush1.bf16.msra.mxu0 %v1894
    %2219 = vmatprep.subr.bf16.mxu0 0
    %2220 = vmatpush1.bf16.msra.mxu0 %v1893
    %2221 = vmatprep.subr.bf16.mxu0 0
    %2222 = vmatpush2.bf16.msra.mxu0 0
    %2223 = vmatprep.subr.bf16.mxu0 0
    %2224 = vmatpush2.bf16.msra.mxu0 0
    %2225 = vmatprep.subr.bf16.mxu0 0
    %2226 = vmatpush2.bf16.msra.mxu0 0
    %2227 = vmatprep.subr.bf16.mxu0 0
    %2228 = vmatpush2.bf16.msra.mxu0 0
    %2229 = vmatprep.subr.bf16.mxu0 0
    %2230 = vmatpush2.bf16.msra.mxu0 0
    %2231 = vmatprep.subr.bf16.mxu0 0
    %2232 = vmatpush2.bf16.msra.mxu0 0
    %2233 = vmatprep.subr.bf16.mxu0 0
    %2234 = vmatpush2.bf16.msra.mxu0 0
    %2235 = vmatprep.subr.bf16.mxu0 0
    %2236 = vmatpush2.bf16.msra.mxu0 0
    %2237 = vmatprep.mubr.bf16.mxu0 0
    %2238 = vmatmul.mubr.bf16.gmra.mxu0 %v2203
    %v2239 = vpop.f32.mrf.mxu0
    %v2240 = vadd.f32 0.0, %v2239
    %v2241 = vpop.f32.mrf.mxu0
    %v2242 = vpop.f32.mrf.mxu0
    %v2243 = vpop.f32.mrf.mxu0
    %2244 = vdwg.mxu0
    %v2245 = vadd.f32 %v1876, %v2240
    %v2246 = vxor.u32 %v2245, 2147483648
    %v2247 = vmul.f32 %v2246, 1.442695
    %v2248 = vpow.pop %v2247
    %v2249 = vadd.f32 %v2248, 1.0
    %v2250 = vrcp.pop %v2249
    %v2251 = vmul.f32 1.0, %v2250
    %v2252 = vtanh.pop %v2245
    %v2253 = vmul.f32 %v2251, %v2186
    %2255 = vrot.lane.b32.xlu0 %v2252, 32
    %v2256 = vpop.permute.xlu0 %2255
    %v2258 = vmul.f32 %v2251, %v2256
    %2260 = vrot.lane.b32.xlu0 %v2258, 32
    %v2261 = vpop.permute.xlu0 %2260
    %v2263 = vadd.f32 %v2253, %v2261
    %v2264 = vtanh.pop %v2263
    %2266 = vrot.lane.b32.xlu0 %v2264, 32
    %v2267 = vpop.permute.xlu0 %2266
    %v2269 = vmul.f32 %v2251, %v2267
    %2271 = vrot.lane.b32.xlu0 %v2269, 64
    %v2272 = vpop.permute.xlu0 %2271
    %2274 = vst.msk [vmem:[#allocation2 + $0x8] sm:$0x3] %vm394, %v2272
    %v2275 = vpack.c.bf16 %v2269, %v2269
    %2277 = vrot.lane.b32.xlu0 %v2275, 64
    %v2278 = vpop.permute.xlu0 %2277
    %v2280 = vsel %vm321, %v2278, 0
    %2282 = vmatprep.subr.bf16.mxu0 0
    %2283 = vmatpush1.bf16.msra.mxu0 0
    %2284 = vmatprep.subr.bf16.mxu0 0
    %2285 = vmatpush1.bf16.msra.mxu0 0
    %2286 = vmatprep.subr.bf16.mxu0 0
    %2287 = vmatpush1.bf16.msra.mxu0 0
    %2288 = vmatprep.subr.bf16.mxu0 0
    %2289 = vmatpush1.bf16.msra.mxu0 0
    %2290 = vmatprep.subr.bf16.mxu0 0
    %2291 = vmatpush1.bf16.msra.mxu0 0
    %2292 = vmatprep.subr.bf16.mxu0 0
    %2293 = vmatpush1.bf16.msra.mxu0 0
    %2294 = vmatprep.subr.bf16.mxu0 0
    %2295 = vmatpush1.bf16.msra.mxu0 %v1894
    %2296 = vmatprep.subr.bf16.mxu0 0
    %2297 = vmatpush1.bf16.msra.mxu0 %v1893
    %2298 = vmatprep.subr.bf16.mxu0 0
    %2299 = vmatpush2.bf16.msra.mxu0 0
    %2300 = vmatprep.subr.bf16.mxu0 0
    %2301 = vmatpush2.bf16.msra.mxu0 0
    %2302 = vmatprep.subr.bf16.mxu0 0
    %2303 = vmatpush2.bf16.msra.mxu0 0
    %2304 = vmatprep.subr.bf16.mxu0 0
    %2305 = vmatpush2.bf16.msra.mxu0 0
    %2306 = vmatprep.subr.bf16.mxu0 0
    %2307 = vmatpush2.bf16.msra.mxu0 0
    %2308 = vmatprep.subr.bf16.mxu0 0
    %2309 = vmatpush2.bf16.msra.mxu0 0
    %2310 = vmatprep.subr.bf16.mxu0 0
    %2311 = vmatpush2.bf16.msra.mxu0 0
    %2312 = vmatprep.subr.bf16.mxu0 0
    %2313 = vmatpush2.bf16.msra.mxu0 0
    %2314 = vmatprep.mubr.bf16.mxu0 0
    %2315 = vmatmul.mubr.bf16.gmra.mxu0 %v2280
    %v2316 = vpop.f32.mrf.mxu0
    %v2317 = vadd.f32 0.0, %v2316
    %v2318 = vpop.f32.mrf.mxu0
    %v2319 = vpop.f32.mrf.mxu0
    %v2320 = vpop.f32.mrf.mxu0
    %2321 = vdwg.mxu0
    %v2322 = vadd.f32 %v1876, %v2317
    %v2323 = vxor.u32 %v2322, 2147483648
    %v2324 = vmul.f32 %v2323, 1.442695
    %v2325 = vpow.pop %v2324
    %v2326 = vadd.f32 %v2325, 1.0
    %v2327 = vrcp.pop %v2326
    %v2328 = vmul.f32 1.0, %v2327
    %v2329 = vtanh.pop %v2322
    %v2330 = vmul.f32 %v2328, %v2263
    %2332 = vrot.lane.b32.xlu0 %v2329, 32
    %v2333 = vpop.permute.xlu0 %2332
    %v2335 = vmul.f32 %v2328, %v2333
    %2337 = vrot.lane.b32.xlu0 %v2335, 32
    %v2338 = vpop.permute.xlu0 %2337
    %v2340 = vadd.f32 %v2330, %v2338
    %v2341 = vtanh.pop %v2340
    %2343 = vrot.lane.b32.xlu0 %v2341, 32
    %v2344 = vpop.permute.xlu0 %2343
    %v2346 = vmul.f32 %v2328, %v2344
    %2348 = vrot.lane.b32.xlu0 %v2346, 64
    %v2349 = vpop.permute.xlu0 %2348
    %2351 = vst.msk [vmem:[#allocation2 + $0xa] sm:$0x3] %vm394, %v2349
    %v2352 = vpack.c.bf16 %v2346, %v2346
    %2354 = vrot.lane.b32.xlu0 %v2352, 64
    %v2355 = vpop.permute.xlu0 %2354
    %v2357 = vsel %vm321, %v2355, 0
    %2359 = vmatprep.subr.bf16.mxu0 0
    %2360 = vmatpush1.bf16.msra.mxu0 0
    %2361 = vmatprep.subr.bf16.mxu0 0
    %2362 = vmatpush1.bf16.msra.mxu0 0
    %2363 = vmatprep.subr.bf16.mxu0 0
    %2364 = vmatpush1.bf16.msra.mxu0 0
    %2365 = vmatprep.subr.bf16.mxu0 0
    %2366 = vmatpush1.bf16.msra.mxu0 0
    %2367 = vmatprep.subr.bf16.mxu0 0
    %2368 = vmatpush1.bf16.msra.mxu0 0
    %2369 = vmatprep.subr.bf16.mxu0 0
    %2370 = vmatpush1.bf16.msra.mxu0 0
    %2371 = vmatprep.subr.bf16.mxu0 0
    %2372 = vmatpush1.bf16.msra.mxu0 %v1894
    %2373 = vmatprep.subr.bf16.mxu0 0
    %2374 = vmatpush1.bf16.msra.mxu0 %v1893
    %2375 = vmatprep.subr.bf16.mxu0 0
    %2376 = vmatpush2.bf16.msra.mxu0 0
    %2377 = vmatprep.subr.bf16.mxu0 0
    %2378 = vmatpush2.bf16.msra.mxu0 0
    %2379 = vmatprep.subr.bf16.mxu0 0
    %2380 = vmatpush2.bf16.msra.mxu0 0
    %2381 = vmatprep.subr.bf16.mxu0 0
    %2382 = vmatpush2.bf16.msra.mxu0 0
    %2383 = vmatprep.subr.bf16.mxu0 0
    %2384 = vmatpush2.bf16.msra.mxu0 0
    %2385 = vmatprep.subr.bf16.mxu0 0
    %2386 = vmatpush2.bf16.msra.mxu0 0
    %2387 = vmatprep.subr.bf16.mxu0 0
    %2388 = vmatpush2.bf16.msra.mxu0 0
    %2389 = vmatprep.subr.bf16.mxu0 0
    %2390 = vmatpush2.bf16.msra.mxu0 0
    %2391 = vmatprep.mubr.bf16.mxu0 0
    %2392 = vmatmul.mubr.bf16.gmra.mxu0 %v2357
    %v2393 = vpop.f32.mrf.mxu0
    %v2394 = vadd.f32 0.0, %v2393
    %v2395 = vpop.f32.mrf.mxu0
    %v2396 = vpop.f32.mrf.mxu0
    %v2397 = vpop.f32.mrf.mxu0
    %2398 = vdwg.mxu0
    %v2399 = vadd.f32 %v1876, %v2394
    %v2400 = vxor.u32 %v2399, 2147483648
    %v2401 = vmul.f32 %v2400, 1.442695
    %v2402 = vpow.pop %v2401
    %v2403 = vadd.f32 %v2402, 1.0
    %v2404 = vrcp.pop %v2403
    %v2405 = vmul.f32 1.0, %v2404
    %v2406 = vtanh.pop %v2399
    %v2407 = vmul.f32 %v2405, %v2340
    %2409 = vrot.lane.b32.xlu0 %v2406, 32
    %v2410 = vpop.permute.xlu0 %2409
    %v2412 = vmul.f32 %v2405, %v2410
    %2414 = vrot.lane.b32.xlu0 %v2412, 32
    %v2415 = vpop.permute.xlu0 %2414
    %v2417 = vadd.f32 %v2407, %v2415
    %v2418 = vtanh.pop %v2417
    %2420 = vrot.lane.b32.xlu0 %v2418, 32
    %v2421 = vpop.permute.xlu0 %2420
    %v2423 = vmul.f32 %v2405, %v2421
    %2425 = vrot.lane.b32.xlu0 %v2423, 64
    %v2426 = vpop.permute.xlu0 %2425
    %2428 = vst.msk [vmem:[#allocation2 + $0xc] sm:$0x3] %vm394, %v2426
    %v2429 = vpack.c.bf16 %v2423, %v2423
    %2431 = vrot.lane.b32.xlu0 %v2429, 64
    %v2432 = vpop.permute.xlu0 %2431
    %v2434 = vsel %vm321, %v2432, 0
    %2436 = vmatprep.subr.bf16.mxu0 0
    %2437 = vmatpush1.bf16.msra.mxu0 0
    %2438 = vmatprep.subr.bf16.mxu0 0
    %2439 = vmatpush1.bf16.msra.mxu0 0
    %2440 = vmatprep.subr.bf16.mxu0 0
    %2441 = vmatpush1.bf16.msra.mxu0 0
    %2442 = vmatprep.subr.bf16.mxu0 0
    %2443 = vmatpush1.bf16.msra.mxu0 0
    %2444 = vmatprep.subr.bf16.mxu0 0
    %2445 = vmatpush1.bf16.msra.mxu0 0
    %2446 = vmatprep.subr.bf16.mxu0 0
    %2447 = vmatpush1.bf16.msra.mxu0 0
    %2448 = vmatprep.subr.bf16.mxu0 0
    %2449 = vmatpush1.bf16.msra.mxu0 %v1894
    %2450 = vmatprep.subr.bf16.mxu0 0
    %2451 = vmatpush1.bf16.msra.mxu0 %v1893
    %2452 = vmatprep.subr.bf16.mxu0 0
    %2453 = vmatpush2.bf16.msra.mxu0 0
    %2454 = vmatprep.subr.bf16.mxu0 0
    %2455 = vmatpush2.bf16.msra.mxu0 0
    %2456 = vmatprep.subr.bf16.mxu0 0
    %2457 = vmatpush2.bf16.msra.mxu0 0
    %2458 = vmatprep.subr.bf16.mxu0 0
    %2459 = vmatpush2.bf16.msra.mxu0 0
    %2460 = vmatprep.subr.bf16.mxu0 0
    %2461 = vmatpush2.bf16.msra.mxu0 0
    %2462 = vmatprep.subr.bf16.mxu0 0
    %2463 = vmatpush2.bf16.msra.mxu0 0
    %2464 = vmatprep.subr.bf16.mxu0 0
    %2465 = vmatpush2.bf16.msra.mxu0 0
    %2466 = vmatprep.subr.bf16.mxu0 0
    %2467 = vmatpush2.bf16.msra.mxu0 0
    %2468 = vmatprep.mubr.bf16.mxu0 0
    %2469 = vmatmul.mubr.bf16.gmra.mxu0 %v2434
    %v2470 = vpop.f32.mrf.mxu0
    %v2471 = vadd.f32 0.0, %v2470
    %v2472 = vpop.f32.mrf.mxu0
    %v2473 = vpop.f32.mrf.mxu0
    %v2474 = vpop.f32.mrf.mxu0
    %2475 = vdwg.mxu0
    %v2476 = vadd.f32 %v1876, %v2471
    %v2477 = vxor.u32 %v2476, 2147483648
    %v2478 = vmul.f32 %v2477, 1.442695
    %v2479 = vpow.pop %v2478
    %v2480 = vadd.f32 %v2479, 1.0
    %v2481 = vrcp.pop %v2480
    %v2482 = vmul.f32 1.0, %v2481
    %v2483 = vtanh.pop %v2476
    %v2484 = vmul.f32 %v2482, %v2417
    %2486 = vrot.lane.b32.xlu0 %v2483, 32
    %v2487 = vpop.permute.xlu0 %2486
    %v2489 = vmul.f32 %v2482, %v2487
    %2491 = vrot.lane.b32.xlu0 %v2489, 32
    %v2492 = vpop.permute.xlu0 %2491
    %v2494 = vadd.f32 %v2484, %v2492
    %v2495 = vtanh.pop %v2494
    %2497 = vrot.lane.b32.xlu0 %v2495, 32
    %v2498 = vpop.permute.xlu0 %2497
    %v2500 = vmul.f32 %v2482, %v2498
    %2502 = vrot.lane.b32.xlu0 %v2500, 64
    %v2503 = vpop.permute.xlu0 %2502
    %2505 = vst.msk [vmem:[#allocation2 + $0xe] sm:$0x3] %vm394, %v2503
    %v2506 = vld [vmem:[#allocation2] sm:$0xff]
    %v2507 = vld [vmem:[#allocation2 + $0x8] sm:$0xff]
    %v2508 = vpack.c.bf16 %v2507, %v2506
    %v2509 = vld [vmem:[%s15] sm:$0xf]
    %v2510 = vld [vmem:[%s15 + $0x4] sm:$0xf]
    %v2511 = vld [vmem:[%s15 + $0x8] sm:$0xf]
    %v2512 = vld [vmem:[%s15 + $0xc] sm:$0xf]
    %v2513 = vld [vmem:[#allocation14] sm:$0x1]
    %v2515 = vlaneseq
    %v2516 = vshrl.u32 %v2515, 7
    %v2517 = vsub.s32 0, %v2516
    %v2518 = vrot.slane %v2513, %v2517
    %v2524 = vunpack.c.l.b16 %v2509
    %v2525 = vunpack.c.l.b16 %v2510
    %v2526 = vunpack.c.l.b16 %v2511
    %v2527 = vunpack.c.l.b16 %v2512
    %v2528 = vpack.c.b16 %v2525, %v2524
    %v2529 = vpack.c.b16 %v2527, %v2526
    %v2533 = vsel %vm321, %v2508, 0
    %2535 = vmatprep.subr.bf16.mxu0 0
    %2536 = vmatpush1.bf16.msra.mxu0 0
    %2537 = vmatprep.subr.bf16.mxu0 0
    %2538 = vmatpush1.bf16.msra.mxu0 0
    %2539 = vmatprep.subr.bf16.mxu0 0
    %2540 = vmatpush1.bf16.msra.mxu0 0
    %2541 = vmatprep.subr.bf16.mxu0 0
    %2542 = vmatpush1.bf16.msra.mxu0 0
    %2543 = vmatprep.subr.bf16.mxu0 0
    %2544 = vmatpush1.bf16.msra.mxu0 0
    %2545 = vmatprep.subr.bf16.mxu0 0
    %2546 = vmatpush1.bf16.msra.mxu0 0
    %2547 = vmatprep.subr.bf16.mxu0 0
    %2548 = vmatpush1.bf16.msra.mxu0 %v2529
    %2549 = vmatprep.subr.bf16.mxu0 0
    %2550 = vmatpush1.bf16.msra.mxu0 %v2528
    %2551 = vmatprep.subr.bf16.mxu0 0
    %2552 = vmatpush2.bf16.msra.mxu0 0
    %2553 = vmatprep.subr.bf16.mxu0 0
    %2554 = vmatpush2.bf16.msra.mxu0 0
    %2555 = vmatprep.subr.bf16.mxu0 0
    %2556 = vmatpush2.bf16.msra.mxu0 0
    %2557 = vmatprep.subr.bf16.mxu0 0
    %2558 = vmatpush2.bf16.msra.mxu0 0
    %2559 = vmatprep.subr.bf16.mxu0 0
    %2560 = vmatpush2.bf16.msra.mxu0 0
    %2561 = vmatprep.subr.bf16.mxu0 0
    %2562 = vmatpush2.bf16.msra.mxu0 0
    %2563 = vmatprep.subr.bf16.mxu0 0
    %2564 = vmatpush2.bf16.msra.mxu0 0
    %2565 = vmatprep.subr.bf16.mxu0 0
    %2566 = vmatpush2.bf16.msra.mxu0 0
    %2567 = vmatprep.mubr.bf16.mxu0 0
    %2568 = vmatmul.mubr.bf16.gmra.mxu0 %v2533
    %v2569 = vpop.f32.mrf.mxu0
    %v2570 = vadd.f32 %v2518, %v2569
    %v2571 = vpop.f32.mrf.mxu0
    %v2572 = vpop.f32.mrf.mxu0
    %v2573 = vadd.f32 %v2518, %v2572
    %v2574 = vpop.f32.mrf.mxu0
    %2575 = vdwg.mxu0
    %v2576 = vld [vmem:[%s16] sm:$0xf]
    %v2577 = vld [vmem:[%s16 + $0x4] sm:$0xf]
    %v2578 = vld [vmem:[%s16 + $0x8] sm:$0xf]
    %v2579 = vld [vmem:[%s16 + $0xc] sm:$0xf]
    %v2584 = vunpack.c.l.b16 %v2576
    %v2585 = vunpack.c.l.b16 %v2577
    %v2586 = vunpack.c.l.b16 %v2578
    %v2587 = vunpack.c.l.b16 %v2579
    %v2588 = vpack.c.b16 %v2585, %v2584
    %v2589 = vpack.c.b16 %v2587, %v2586
    %2592 = vmatprep.subr.bf16.mxu0 0
    %2593 = vmatpush1.bf16.msra.mxu0 0
    %2594 = vmatprep.subr.bf16.mxu0 0
    %2595 = vmatpush1.bf16.msra.mxu0 0
    %2596 = vmatprep.subr.bf16.mxu0 0
    %2597 = vmatpush1.bf16.msra.mxu0 0
    %2598 = vmatprep.subr.bf16.mxu0 0
    %2599 = vmatpush1.bf16.msra.mxu0 0
    %2600 = vmatprep.subr.bf16.mxu0 0
    %2601 = vmatpush1.bf16.msra.mxu0 0
    %2602 = vmatprep.subr.bf16.mxu0 0
    %2603 = vmatpush1.bf16.msra.mxu0 0
    %2604 = vmatprep.subr.bf16.mxu0 0
    %2605 = vmatpush1.bf16.msra.mxu0 %v2589
    %2606 = vmatprep.subr.bf16.mxu0 0
    %2607 = vmatpush1.bf16.msra.mxu0 %v2588
    %2608 = vmatprep.subr.bf16.mxu0 0
    %2609 = vmatpush2.bf16.msra.mxu0 0
    %2610 = vmatprep.subr.bf16.mxu0 0
    %2611 = vmatpush2.bf16.msra.mxu0 0
    %2612 = vmatprep.subr.bf16.mxu0 0
    %2613 = vmatpush2.bf16.msra.mxu0 0
    %2614 = vmatprep.subr.bf16.mxu0 0
    %2615 = vmatpush2.bf16.msra.mxu0 0
    %2616 = vmatprep.subr.bf16.mxu0 0
    %2617 = vmatpush2.bf16.msra.mxu0 0
    %2618 = vmatprep.subr.bf16.mxu0 0
    %2619 = vmatpush2.bf16.msra.mxu0 0
    %2620 = vmatprep.subr.bf16.mxu0 0
    %2621 = vmatpush2.bf16.msra.mxu0 0
    %2622 = vmatprep.subr.bf16.mxu0 0
    %2623 = vmatpush2.bf16.msra.mxu0 0
    %2624 = vmatprep.mubr.bf16.mxu0 0
    %2625 = vmatmul.mubr.bf16.gmra.mxu0 %v323
    %v2626 = vpop.f32.mrf.mxu0
    %v2627 = vadd.f32 0.0, %v2626
    %v2628 = vpop.f32.mrf.mxu0
    %v2629 = vpop.f32.mrf.mxu0
    %v2630 = vpop.f32.mrf.mxu0
    %2631 = vdwg.mxu0
    %v2632 = vadd.f32 %v2570, %v2627
    %v2633 = vxor.u32 %v2632, 2147483648
    %v2634 = vmul.f32 %v2633, 1.442695
    %v2635 = vpow.pop %v2634
    %v2636 = vadd.f32 %v2635, 1.0
    %v2637 = vrcp.pop %v2636
    %v2638 = vmul.f32 1.0, %v2637
    %v2639 = vtanh.pop %v2632
    %v2640 = vmul.f32 %v2638, 0.0
    %2642 = vrot.lane.b32.xlu0 %v2639, 32
    %v2643 = vpop.permute.xlu0 %2642
    %v2645 = vmul.f32 %v2638, %v2643
    %2647 = vrot.lane.b32.xlu0 %v2645, 32
    %v2648 = vpop.permute.xlu0 %2647
    %v2650 = vadd.f32 %v2640, %v2648
    %v2651 = vtanh.pop %v2650
    %2653 = vrot.lane.b32.xlu0 %v2651, 32
    %v2654 = vpop.permute.xlu0 %2653
    %v2656 = vmul.f32 %v2638, %v2654
    %2658 = vrot.lane.b32.xlu0 %v2656, 64
    %v2659 = vpop.permute.xlu0 %2658
    %2661 = vst.msk [vmem:[#allocation2] sm:$0x3] %vm394, %v2659
    %v2662 = vpack.c.bf16 %v2656, %v2656
    %2664 = vrot.lane.b32.xlu0 %v2662, 64
    %v2665 = vpop.permute.xlu0 %2664
    %v2667 = vsel %vm321, %v2665, 0
    %2669 = vmatprep.subr.bf16.mxu0 0
    %2670 = vmatpush1.bf16.msra.mxu0 0
    %2671 = vmatprep.subr.bf16.mxu0 0
    %2672 = vmatpush1.bf16.msra.mxu0 0
    %2673 = vmatprep.subr.bf16.mxu0 0
    %2674 = vmatpush1.bf16.msra.mxu0 0
    %2675 = vmatprep.subr.bf16.mxu0 0
    %2676 = vmatpush1.bf16.msra.mxu0 0
    %2677 = vmatprep.subr.bf16.mxu0 0
    %2678 = vmatpush1.bf16.msra.mxu0 0
    %2679 = vmatprep.subr.bf16.mxu0 0
    %2680 = vmatpush1.bf16.msra.mxu0 0
    %2681 = vmatprep.subr.bf16.mxu0 0
    %2682 = vmatpush1.bf16.msra.mxu0 %v2589
    %2683 = vmatprep.subr.bf16.mxu0 0
    %2684 = vmatpush1.bf16.msra.mxu0 %v2588
    %2685 = vmatprep.subr.bf16.mxu0 0
    %2686 = vmatpush2.bf16.msra.mxu0 0
    %2687 = vmatprep.subr.bf16.mxu0 0
    %2688 = vmatpush2.bf16.msra.mxu0 0
    %2689 = vmatprep.subr.bf16.mxu0 0
    %2690 = vmatpush2.bf16.msra.mxu0 0
    %2691 = vmatprep.subr.bf16.mxu0 0
    %2692 = vmatpush2.bf16.msra.mxu0 0
    %2693 = vmatprep.subr.bf16.mxu0 0
    %2694 = vmatpush2.bf16.msra.mxu0 0
    %2695 = vmatprep.subr.bf16.mxu0 0
    %2696 = vmatpush2.bf16.msra.mxu0 0
    %2697 = vmatprep.subr.bf16.mxu0 0
    %2698 = vmatpush2.bf16.msra.mxu0 0
    %2699 = vmatprep.subr.bf16.mxu0 0
    %2700 = vmatpush2.bf16.msra.mxu0 0
    %2701 = vmatprep.mubr.bf16.mxu0 0
    %2702 = vmatmul.mubr.bf16.gmra.mxu0 %v2667
    %v2703 = vpop.f32.mrf.mxu0
    %v2704 = vadd.f32 0.0, %v2703
    %v2705 = vpop.f32.mrf.mxu0
    %v2706 = vpop.f32.mrf.mxu0
    %v2707 = vpop.f32.mrf.mxu0
    %2708 = vdwg.mxu0
    %v2710 = vrot.slane %v2704, 6
    %v2712 = vadd.f32 %v2570, %v2710
    %v2713 = vxor.u32 %v2712, 2147483648
    %v2714 = vmul.f32 %v2713, 1.442695
    %v2715 = vpow.pop %v2714
    %v2716 = vadd.f32 %v2715, 1.0
    %v2717 = vrcp.pop %v2716
    %v2718 = vmul.f32 1.0, %v2717
    %v2719 = vtanh.pop %v2712
    %v2721 = vrot.slane %v2650, 6
    %v2723 = vmul.f32 %v2718, %v2721
    %2725 = vrot.lane.b32.xlu0 %v2719, 32
    %v2726 = vpop.permute.xlu0 %2725
    %v2728 = vmul.f32 %v2718, %v2726
    %2730 = vrot.lane.b32.xlu0 %v2728, 32
    %v2731 = vpop.permute.xlu0 %2730
    %v2733 = vadd.f32 %v2723, %v2731
    %v2734 = vtanh.pop %v2733
    %2736 = vrot.lane.b32.xlu0 %v2734, 32
    %v2737 = vpop.permute.xlu0 %2736
    %v2739 = vmul.f32 %v2718, %v2737
    %2741 = vrot.lane.b32.xlu0 %v2739, 64
    %v2742 = vpop.permute.xlu0 %2741
    %2744 = vst.msk [vmem:[#allocation2] sm:$0xc] %vm478, %v2742
    %v2745 = vpack.c.bf16 %v2739, %v2739
    %v2747 = vrot.slane %v2745, 1
    %2748 = vrot.lane.b32.xlu0 %v2747, 64
    %v2749 = vpop.permute.xlu0 %2748
    %v2751 = vsel %vm321, %v2749, 0
    %2753 = vmatprep.subr.bf16.mxu0 0
    %2754 = vmatpush1.bf16.msra.mxu0 0
    %2755 = vmatprep.subr.bf16.mxu0 0
    %2756 = vmatpush1.bf16.msra.mxu0 0
    %2757 = vmatprep.subr.bf16.mxu0 0
    %2758 = vmatpush1.bf16.msra.mxu0 0
    %2759 = vmatprep.subr.bf16.mxu0 0
    %2760 = vmatpush1.bf16.msra.mxu0 0
    %2761 = vmatprep.subr.bf16.mxu0 0
    %2762 = vmatpush1.bf16.msra.mxu0 0
    %2763 = vmatprep.subr.bf16.mxu0 0
    %2764 = vmatpush1.bf16.msra.mxu0 0
    %2765 = vmatprep.subr.bf16.mxu0 0
    %2766 = vmatpush1.bf16.msra.mxu0 %v2589
    %2767 = vmatprep.subr.bf16.mxu0 0
    %2768 = vmatpush1.bf16.msra.mxu0 %v2588
    %2769 = vmatprep.subr.bf16.mxu0 0
    %2770 = vmatpush2.bf16.msra.mxu0 0
    %2771 = vmatprep.subr.bf16.mxu0 0
    %2772 = vmatpush2.bf16.msra.mxu0 0
    %2773 = vmatprep.subr.bf16.mxu0 0
    %2774 = vmatpush2.bf16.msra.mxu0 0
    %2775 = vmatprep.subr.bf16.mxu0 0
    %2776 = vmatpush2.bf16.msra.mxu0 0
    %2777 = vmatprep.subr.bf16.mxu0 0
    %2778 = vmatpush2.bf16.msra.mxu0 0
    %2779 = vmatprep.subr.bf16.mxu0 0
    %2780 = vmatpush2.bf16.msra.mxu0 0
    %2781 = vmatprep.subr.bf16.mxu0 0
    %2782 = vmatpush2.bf16.msra.mxu0 0
    %2783 = vmatprep.subr.bf16.mxu0 0
    %2784 = vmatpush2.bf16.msra.mxu0 0
    %2785 = vmatprep.mubr.bf16.mxu0 0
    %2786 = vmatmul.mubr.bf16.gmra.mxu0 %v2751
    %v2787 = vpop.f32.mrf.mxu0
    %v2788 = vadd.f32 0.0, %v2787
    %v2789 = vpop.f32.mrf.mxu0
    %v2790 = vpop.f32.mrf.mxu0
    %v2791 = vpop.f32.mrf.mxu0
    %2792 = vdwg.mxu0
    %v2794 = vrot.slane %v2788, 4
    %v2796 = vadd.f32 %v2570, %v2794
    %v2797 = vxor.u32 %v2796, 2147483648
    %v2798 = vmul.f32 %v2797, 1.442695
    %v2799 = vpow.pop %v2798
    %v2800 = vadd.f32 %v2799, 1.0
    %v2801 = vrcp.pop %v2800
    %v2802 = vmul.f32 1.0, %v2801
    %v2803 = vtanh.pop %v2796
    %v2805 = vrot.slane %v2733, 6
    %v2807 = vmul.f32 %v2802, %v2805
    %2809 = vrot.lane.b32.xlu0 %v2803, 32
    %v2810 = vpop.permute.xlu0 %2809
    %v2812 = vmul.f32 %v2802, %v2810
    %2814 = vrot.lane.b32.xlu0 %v2812, 32
    %v2815 = vpop.permute.xlu0 %2814
    %v2817 = vadd.f32 %v2807, %v2815
    %v2818 = vtanh.pop %v2817
    %2820 = vrot.lane.b32.xlu0 %v2818, 32
    %v2821 = vpop.permute.xlu0 %2820
    %v2823 = vmul.f32 %v2802, %v2821
    %2825 = vrot.lane.b32.xlu0 %v2823, 64
    %v2826 = vpop.permute.xlu0 %2825
    %2828 = vst.msk [vmem:[#allocation2] sm:$0x30] %vm563, %v2826
    %v2829 = vpack.c.bf16 %v2823, %v2823
    %v2831 = vrot.slane %v2829, 2
    %2832 = vrot.lane.b32.xlu0 %v2831, 64
    %v2833 = vpop.permute.xlu0 %2832
    %v2835 = vsel %vm321, %v2833, 0
    %2837 = vmatprep.subr.bf16.mxu0 0
    %2838 = vmatpush1.bf16.msra.mxu0 0
    %2839 = vmatprep.subr.bf16.mxu0 0
    %2840 = vmatpush1.bf16.msra.mxu0 0
    %2841 = vmatprep.subr.bf16.mxu0 0
    %2842 = vmatpush1.bf16.msra.mxu0 0
    %2843 = vmatprep.subr.bf16.mxu0 0
    %2844 = vmatpush1.bf16.msra.mxu0 0
    %2845 = vmatprep.subr.bf16.mxu0 0
    %2846 = vmatpush1.bf16.msra.mxu0 0
    %2847 = vmatprep.subr.bf16.mxu0 0
    %2848 = vmatpush1.bf16.msra.mxu0 0
    %2849 = vmatprep.subr.bf16.mxu0 0
    %2850 = vmatpush1.bf16.msra.mxu0 %v2589
    %2851 = vmatprep.subr.bf16.mxu0 0
    %2852 = vmatpush1.bf16.msra.mxu0 %v2588
    %2853 = vmatprep.subr.bf16.mxu0 0
    %2854 = vmatpush2.bf16.msra.mxu0 0
    %2855 = vmatprep.subr.bf16.mxu0 0
    %2856 = vmatpush2.bf16.msra.mxu0 0
    %2857 = vmatprep.subr.bf16.mxu0 0
    %2858 = vmatpush2.bf16.msra.mxu0 0
    %2859 = vmatprep.subr.bf16.mxu0 0
    %2860 = vmatpush2.bf16.msra.mxu0 0
    %2861 = vmatprep.subr.bf16.mxu0 0
    %2862 = vmatpush2.bf16.msra.mxu0 0
    %2863 = vmatprep.subr.bf16.mxu0 0
    %2864 = vmatpush2.bf16.msra.mxu0 0
    %2865 = vmatprep.subr.bf16.mxu0 0
    %2866 = vmatpush2.bf16.msra.mxu0 0
    %2867 = vmatprep.subr.bf16.mxu0 0
    %2868 = vmatpush2.bf16.msra.mxu0 0
    %2869 = vmatprep.mubr.bf16.mxu0 0
    %2870 = vmatmul.mubr.bf16.gmra.mxu0 %v2835
    %v2871 = vpop.f32.mrf.mxu0
    %v2872 = vadd.f32 0.0, %v2871
    %v2873 = vpop.f32.mrf.mxu0
    %v2874 = vpop.f32.mrf.mxu0
    %v2875 = vpop.f32.mrf.mxu0
    %2876 = vdwg.mxu0
    %v2878 = vrot.slane %v2872, 2
    %v2880 = vadd.f32 %v2570, %v2878
    %v2881 = vxor.u32 %v2880, 2147483648
    %v2882 = vmul.f32 %v2881, 1.442695
    %v2883 = vpow.pop %v2882
    %v2884 = vadd.f32 %v2883, 1.0
    %v2885 = vrcp.pop %v2884
    %v2886 = vmul.f32 1.0, %v2885
    %v2887 = vtanh.pop %v2880
    %v2889 = vrot.slane %v2817, 6
    %v2891 = vmul.f32 %v2886, %v2889
    %2893 = vrot.lane.b32.xlu0 %v2887, 32
    %v2894 = vpop.permute.xlu0 %2893
    %v2896 = vmul.f32 %v2886, %v2894
    %2898 = vrot.lane.b32.xlu0 %v2896, 32
    %v2899 = vpop.permute.xlu0 %2898
    %v2901 = vadd.f32 %v2891, %v2899
    %v2902 = vtanh.pop %v2901
    %2904 = vrot.lane.b32.xlu0 %v2902, 32
    %v2905 = vpop.permute.xlu0 %2904
    %v2907 = vmul.f32 %v2886, %v2905
    %2909 = vrot.lane.b32.xlu0 %v2907, 64
    %v2910 = vpop.permute.xlu0 %2909
    %2912 = vst.msk [vmem:[#allocation2] sm:$0xc0] %vm648, %v2910
    %v2913 = vpack.c.bf16 %v2907, %v2907
    %v2915 = vrot.slane %v2913, 3
    %2916 = vrot.lane.b32.xlu0 %v2915, 64
    %v2917 = vpop.permute.xlu0 %2916
    %v2919 = vsel %vm321, %v2917, 0
    %2921 = vmatprep.subr.bf16.mxu0 0
    %2922 = vmatpush1.bf16.msra.mxu0 0
    %2923 = vmatprep.subr.bf16.mxu0 0
    %2924 = vmatpush1.bf16.msra.mxu0 0
    %2925 = vmatprep.subr.bf16.mxu0 0
    %2926 = vmatpush1.bf16.msra.mxu0 0
    %2927 = vmatprep.subr.bf16.mxu0 0
    %2928 = vmatpush1.bf16.msra.mxu0 0
    %2929 = vmatprep.subr.bf16.mxu0 0
    %2930 = vmatpush1.bf16.msra.mxu0 0
    %2931 = vmatprep.subr.bf16.mxu0 0
    %2932 = vmatpush1.bf16.msra.mxu0 0
    %2933 = vmatprep.subr.bf16.mxu0 0
    %2934 = vmatpush1.bf16.msra.mxu0 %v2589
    %2935 = vmatprep.subr.bf16.mxu0 0
    %2936 = vmatpush1.bf16.msra.mxu0 %v2588
    %2937 = vmatprep.subr.bf16.mxu0 0
    %2938 = vmatpush2.bf16.msra.mxu0 0
    %2939 = vmatprep.subr.bf16.mxu0 0
    %2940 = vmatpush2.bf16.msra.mxu0 0
    %2941 = vmatprep.subr.bf16.mxu0 0
    %2942 = vmatpush2.bf16.msra.mxu0 0
    %2943 = vmatprep.subr.bf16.mxu0 0
    %2944 = vmatpush2.bf16.msra.mxu0 0
    %2945 = vmatprep.subr.bf16.mxu0 0
    %2946 = vmatpush2.bf16.msra.mxu0 0
    %2947 = vmatprep.subr.bf16.mxu0 0
    %2948 = vmatpush2.bf16.msra.mxu0 0
    %2949 = vmatprep.subr.bf16.mxu0 0
    %2950 = vmatpush2.bf16.msra.mxu0 0
    %2951 = vmatprep.subr.bf16.mxu0 0
    %2952 = vmatpush2.bf16.msra.mxu0 0
    %2953 = vmatprep.mubr.bf16.mxu0 0
    %2954 = vmatmul.mubr.bf16.gmra.mxu0 %v2919
    %v2955 = vpop.f32.mrf.mxu0
    %v2956 = vadd.f32 0.0, %v2955
    %v2957 = vpop.f32.mrf.mxu0
    %v2958 = vpop.f32.mrf.mxu0
    %v2959 = vpop.f32.mrf.mxu0
    %2960 = vdwg.mxu0
    %v2961 = vadd.f32 %v2573, %v2956
    %v2962 = vxor.u32 %v2961, 2147483648
    %v2963 = vmul.f32 %v2962, 1.442695
    %v2964 = vpow.pop %v2963
    %v2965 = vadd.f32 %v2964, 1.0
    %v2966 = vrcp.pop %v2965
    %v2967 = vmul.f32 1.0, %v2966
    %v2968 = vtanh.pop %v2961
    %v2970 = vrot.slane %v2901, 6
    %v2972 = vmul.f32 %v2967, %v2970
    %2974 = vrot.lane.b32.xlu0 %v2968, 32
    %v2975 = vpop.permute.xlu0 %2974
    %v2977 = vmul.f32 %v2967, %v2975
    %2979 = vrot.lane.b32.xlu0 %v2977, 32
    %v2980 = vpop.permute.xlu0 %2979
    %v2982 = vadd.f32 %v2972, %v2980
    %v2983 = vtanh.pop %v2982
    %2985 = vrot.lane.b32.xlu0 %v2983, 32
    %v2986 = vpop.permute.xlu0 %2985
    %v2988 = vmul.f32 %v2967, %v2986
    %2990 = vrot.lane.b32.xlu0 %v2988, 64
    %v2991 = vpop.permute.xlu0 %2990
    %2993 = vst.msk [vmem:[#allocation2 + $0x8] sm:$0x3] %vm394, %v2991
    %v2994 = vpack.c.bf16 %v2988, %v2988
    %2996 = vrot.lane.b32.xlu0 %v2994, 64
    %v2997 = vpop.permute.xlu0 %2996
    %v2999 = vsel %vm321, %v2997, 0
    %3001 = vmatprep.subr.bf16.mxu0 0
    %3002 = vmatpush1.bf16.msra.mxu0 0
    %3003 = vmatprep.subr.bf16.mxu0 0
    %3004 = vmatpush1.bf16.msra.mxu0 0
    %3005 = vmatprep.subr.bf16.mxu0 0
    %3006 = vmatpush1.bf16.msra.mxu0 0
    %3007 = vmatprep.subr.bf16.mxu0 0
    %3008 = vmatpush1.bf16.msra.mxu0 0
    %3009 = vmatprep.subr.bf16.mxu0 0
    %3010 = vmatpush1.bf16.msra.mxu0 0
    %3011 = vmatprep.subr.bf16.mxu0 0
    %3012 = vmatpush1.bf16.msra.mxu0 0
    %3013 = vmatprep.subr.bf16.mxu0 0
    %3014 = vmatpush1.bf16.msra.mxu0 %v2589
    %3015 = vmatprep.subr.bf16.mxu0 0
    %3016 = vmatpush1.bf16.msra.mxu0 %v2588
    %3017 = vmatprep.subr.bf16.mxu0 0
    %3018 = vmatpush2.bf16.msra.mxu0 0
    %3019 = vmatprep.subr.bf16.mxu0 0
    %3020 = vmatpush2.bf16.msra.mxu0 0
    %3021 = vmatprep.subr.bf16.mxu0 0
    %3022 = vmatpush2.bf16.msra.mxu0 0
    %3023 = vmatprep.subr.bf16.mxu0 0
    %3024 = vmatpush2.bf16.msra.mxu0 0
    %3025 = vmatprep.subr.bf16.mxu0 0
    %3026 = vmatpush2.bf16.msra.mxu0 0
    %3027 = vmatprep.subr.bf16.mxu0 0
    %3028 = vmatpush2.bf16.msra.mxu0 0
    %3029 = vmatprep.subr.bf16.mxu0 0
    %3030 = vmatpush2.bf16.msra.mxu0 0
    %3031 = vmatprep.subr.bf16.mxu0 0
    %3032 = vmatpush2.bf16.msra.mxu0 0
    %3033 = vmatprep.mubr.bf16.mxu0 0
    %3034 = vmatmul.mubr.bf16.gmra.mxu0 %v2999
    %v3035 = vpop.f32.mrf.mxu0
    %v3036 = vadd.f32 0.0, %v3035
    %v3037 = vpop.f32.mrf.mxu0
    %v3038 = vpop.f32.mrf.mxu0
    %v3039 = vpop.f32.mrf.mxu0
    %3040 = vdwg.mxu0
    %v3042 = vrot.slane %v3036, 6
    %v3044 = vadd.f32 %v2573, %v3042
    %v3045 = vxor.u32 %v3044, 2147483648
    %v3046 = vmul.f32 %v3045, 1.442695
    %v3047 = vpow.pop %v3046
    %v3048 = vadd.f32 %v3047, 1.0
    %v3049 = vrcp.pop %v3048
    %v3050 = vmul.f32 1.0, %v3049
    %v3051 = vtanh.pop %v3044
    %v3053 = vrot.slane %v2982, 6
    %v3055 = vmul.f32 %v3050, %v3053
    %3057 = vrot.lane.b32.xlu0 %v3051, 32
    %v3058 = vpop.permute.xlu0 %3057
    %v3060 = vmul.f32 %v3050, %v3058
    %3062 = vrot.lane.b32.xlu0 %v3060, 32
    %v3063 = vpop.permute.xlu0 %3062
    %v3065 = vadd.f32 %v3055, %v3063
    %v3066 = vtanh.pop %v3065
    %3068 = vrot.lane.b32.xlu0 %v3066, 32
    %v3069 = vpop.permute.xlu0 %3068
    %v3071 = vmul.f32 %v3050, %v3069
    %3073 = vrot.lane.b32.xlu0 %v3071, 64
    %v3074 = vpop.permute.xlu0 %3073
    %3076 = vst.msk [vmem:[#allocation2 + $0x8] sm:$0xc] %vm478, %v3074
    %v3077 = vpack.c.bf16 %v3071, %v3071
    %v3079 = vrot.slane %v3077, 1
    %3080 = vrot.lane.b32.xlu0 %v3079, 64
    %v3081 = vpop.permute.xlu0 %3080
    %v3083 = vsel %vm321, %v3081, 0
    %3085 = vmatprep.subr.bf16.mxu0 0
    %3086 = vmatpush1.bf16.msra.mxu0 0
    %3087 = vmatprep.subr.bf16.mxu0 0
    %3088 = vmatpush1.bf16.msra.mxu0 0
    %3089 = vmatprep.subr.bf16.mxu0 0
    %3090 = vmatpush1.bf16.msra.mxu0 0
    %3091 = vmatprep.subr.bf16.mxu0 0
    %3092 = vmatpush1.bf16.msra.mxu0 0
    %3093 = vmatprep.subr.bf16.mxu0 0
    %3094 = vmatpush1.bf16.msra.mxu0 0
    %3095 = vmatprep.subr.bf16.mxu0 0
    %3096 = vmatpush1.bf16.msra.mxu0 0
    %3097 = vmatprep.subr.bf16.mxu0 0
    %3098 = vmatpush1.bf16.msra.mxu0 %v2589
    %3099 = vmatprep.subr.bf16.mxu0 0
    %3100 = vmatpush1.bf16.msra.mxu0 %v2588
    %3101 = vmatprep.subr.bf16.mxu0 0
    %3102 = vmatpush2.bf16.msra.mxu0 0
    %3103 = vmatprep.subr.bf16.mxu0 0
    %3104 = vmatpush2.bf16.msra.mxu0 0
    %3105 = vmatprep.subr.bf16.mxu0 0
    %3106 = vmatpush2.bf16.msra.mxu0 0
    %3107 = vmatprep.subr.bf16.mxu0 0
    %3108 = vmatpush2.bf16.msra.mxu0 0
    %3109 = vmatprep.subr.bf16.mxu0 0
    %3110 = vmatpush2.bf16.msra.mxu0 0
    %3111 = vmatprep.subr.bf16.mxu0 0
    %3112 = vmatpush2.bf16.msra.mxu0 0
    %3113 = vmatprep.subr.bf16.mxu0 0
    %3114 = vmatpush2.bf16.msra.mxu0 0
    %3115 = vmatprep.subr.bf16.mxu0 0
    %3116 = vmatpush2.bf16.msra.mxu0 0
    %3117 = vmatprep.mubr.bf16.mxu0 0
    %3118 = vmatmul.mubr.bf16.gmra.mxu0 %v3083
    %v3119 = vpop.f32.mrf.mxu0
    %v3120 = vadd.f32 0.0, %v3119
    %v3121 = vpop.f32.mrf.mxu0
    %v3122 = vpop.f32.mrf.mxu0
    %v3123 = vpop.f32.mrf.mxu0
    %3124 = vdwg.mxu0
    %v3126 = vrot.slane %v3120, 4
    %v3128 = vadd.f32 %v2573, %v3126
    %v3129 = vxor.u32 %v3128, 2147483648
    %v3130 = vmul.f32 %v3129, 1.442695
    %v3131 = vpow.pop %v3130
    %v3132 = vadd.f32 %v3131, 1.0
    %v3133 = vrcp.pop %v3132
    %v3134 = vmul.f32 1.0, %v3133
    %v3135 = vtanh.pop %v3128
    %v3137 = vrot.slane %v3065, 6
    %v3139 = vmul.f32 %v3134, %v3137
    %3141 = vrot.lane.b32.xlu0 %v3135, 32
    %v3142 = vpop.permute.xlu0 %3141
    %v3144 = vmul.f32 %v3134, %v3142
    %3146 = vrot.lane.b32.xlu0 %v3144, 32
    %v3147 = vpop.permute.xlu0 %3146
    %v3149 = vadd.f32 %v3139, %v3147
    %v3150 = vtanh.pop %v3149
    %3152 = vrot.lane.b32.xlu0 %v3150, 32
    %v3153 = vpop.permute.xlu0 %3152
    %v3155 = vmul.f32 %v3134, %v3153
    %3157 = vrot.lane.b32.xlu0 %v3155, 64
    %v3158 = vpop.permute.xlu0 %3157
    %3160 = vst.msk [vmem:[#allocation2 + $0x8] sm:$0x30] %vm563, %v3158
    %v3161 = vpack.c.bf16 %v3155, %v3155
    %v3163 = vrot.slane %v3161, 2
    %3164 = vrot.lane.b32.xlu0 %v3163, 64
    %v3165 = vpop.permute.xlu0 %3164
    %v3167 = vsel %vm321, %v3165, 0
    %3169 = vmatprep.subr.bf16.mxu0 0
    %3170 = vmatpush1.bf16.msra.mxu0 0
    %3171 = vmatprep.subr.bf16.mxu0 0
    %3172 = vmatpush1.bf16.msra.mxu0 0
    %3173 = vmatprep.subr.bf16.mxu0 0
    %3174 = vmatpush1.bf16.msra.mxu0 0
    %3175 = vmatprep.subr.bf16.mxu0 0
    %3176 = vmatpush1.bf16.msra.mxu0 0
    %3177 = vmatprep.subr.bf16.mxu0 0
    %3178 = vmatpush1.bf16.msra.mxu0 0
    %3179 = vmatprep.subr.bf16.mxu0 0
    %3180 = vmatpush1.bf16.msra.mxu0 0
    %3181 = vmatprep.subr.bf16.mxu0 0
    %3182 = vmatpush1.bf16.msra.mxu0 %v2589
    %3183 = vmatprep.subr.bf16.mxu0 0
    %3184 = vmatpush1.bf16.msra.mxu0 %v2588
    %3185 = vmatprep.subr.bf16.mxu0 0
    %3186 = vmatpush2.bf16.msra.mxu0 0
    %3187 = vmatprep.subr.bf16.mxu0 0
    %3188 = vmatpush2.bf16.msra.mxu0 0
    %3189 = vmatprep.subr.bf16.mxu0 0
    %3190 = vmatpush2.bf16.msra.mxu0 0
    %3191 = vmatprep.subr.bf16.mxu0 0
    %3192 = vmatpush2.bf16.msra.mxu0 0
    %3193 = vmatprep.subr.bf16.mxu0 0
    %3194 = vmatpush2.bf16.msra.mxu0 0
    %3195 = vmatprep.subr.bf16.mxu0 0
    %3196 = vmatpush2.bf16.msra.mxu0 0
    %3197 = vmatprep.subr.bf16.mxu0 0
    %3198 = vmatpush2.bf16.msra.mxu0 0
    %3199 = vmatprep.subr.bf16.mxu0 0
    %3200 = vmatpush2.bf16.msra.mxu0 0
    %3201 = vmatprep.mubr.bf16.mxu0 0
    %3202 = vmatmul.mubr.bf16.gmra.mxu0 %v3167
    %v3203 = vpop.f32.mrf.mxu0
    %v3204 = vadd.f32 0.0, %v3203
    %v3205 = vpop.f32.mrf.mxu0
    %v3206 = vpop.f32.mrf.mxu0
    %v3207 = vpop.f32.mrf.mxu0
    %3208 = vdwg.mxu0
    %v3210 = vrot.slane %v3204, 2
    %v3212 = vadd.f32 %v2573, %v3210
    %v3213 = vxor.u32 %v3212, 2147483648
    %v3214 = vmul.f32 %v3213, 1.442695
    %v3215 = vpow.pop %v3214
    %v3216 = vadd.f32 %v3215, 1.0
    %v3217 = vrcp.pop %v3216
    %v3218 = vmul.f32 1.0, %v3217
    %v3219 = vtanh.pop %v3212
    %v3221 = vrot.slane %v3149, 6
    %v3223 = vmul.f32 %v3218, %v3221
    %3225 = vrot.lane.b32.xlu0 %v3219, 32
    %v3226 = vpop.permute.xlu0 %3225
    %v3228 = vmul.f32 %v3218, %v3226
    %3230 = vrot.lane.b32.xlu0 %v3228, 32
    %v3231 = vpop.permute.xlu0 %3230
    %v3233 = vadd.f32 %v3223, %v3231
    %v3234 = vtanh.pop %v3233
    %3236 = vrot.lane.b32.xlu0 %v3234, 32
    %v3237 = vpop.permute.xlu0 %3236
    %v3239 = vmul.f32 %v3218, %v3237
    %3241 = vrot.lane.b32.xlu0 %v3239, 64
    %v3242 = vpop.permute.xlu0 %3241
    %3244 = vst.msk [vmem:[#allocation2 + $0x8] sm:$0xc0] %vm648, %v3242
    %v3245 = vld [vmem:[#allocation2] sm:$0xff]
    %v3246 = vld [vmem:[#allocation2 + $0x8] sm:$0xff]
    %v3247 = vtanh.pop %v3245
    %v3248 = vtanh.pop %v3246
    %v3249 = vpack.c.bf16 %v3248, %v3247
    %v3250 = vld [vmem:[#allocation15] sm:$0xf]
    %v3251 = vld [vmem:[#allocation15 + $0x4] sm:$0xf]
    %v3252 = vld [vmem:[#allocation15 + $0x8] sm:$0xf]
    %v3253 = vld [vmem:[#allocation15 + $0xc] sm:$0xf]
    %v3254 = vld [vmem:[#allocation18] sm:$0x1]
    %v3256 = vlaneseq
    %v3257 = vshrl.u32 %v3256, 7
    %v3258 = vsub.s32 0, %v3257
    %v3259 = vrot.slane %v3254, %v3258
    %v3265 = vunpack.c.l.b16 %v3250
    %v3266 = vunpack.c.l.b16 %v3251
    %v3267 = vunpack.c.l.b16 %v3252
    %v3268 = vunpack.c.l.b16 %v3253
    %v3269 = vpack.c.b16 %v3266, %v3265
    %v3270 = vpack.c.b16 %v3268, %v3267
    %v3274 = vsel %vm321, %v3249, 0
    %3276 = vmatprep.subr.bf16.mxu0 0
    %3277 = vmatpush1.bf16.msra.mxu0 0
    %3278 = vmatprep.subr.bf16.mxu0 0
    %3279 = vmatpush1.bf16.msra.mxu0 0
    %3280 = vmatprep.subr.bf16.mxu0 0
    %3281 = vmatpush1.bf16.msra.mxu0 0
    %3282 = vmatprep.subr.bf16.mxu0 0
    %3283 = vmatpush1.bf16.msra.mxu0 0
    %3284 = vmatprep.subr.bf16.mxu0 0
    %3285 = vmatpush1.bf16.msra.mxu0 0
    %3286 = vmatprep.subr.bf16.mxu0 0
    %3287 = vmatpush1.bf16.msra.mxu0 0
    %3288 = vmatprep.subr.bf16.mxu0 0
    %3289 = vmatpush1.bf16.msra.mxu0 %v3270
    %3290 = vmatprep.subr.bf16.mxu0 0
    %3291 = vmatpush1.bf16.msra.mxu0 %v3269
    %3292 = vmatprep.subr.bf16.mxu0 0
    %3293 = vmatpush2.bf16.msra.mxu0 0
    %3294 = vmatprep.subr.bf16.mxu0 0
    %3295 = vmatpush2.bf16.msra.mxu0 0
    %3296 = vmatprep.subr.bf16.mxu0 0
    %3297 = vmatpush2.bf16.msra.mxu0 0
    %3298 = vmatprep.subr.bf16.mxu0 0
    %3299 = vmatpush2.bf16.msra.mxu0 0
    %3300 = vmatprep.subr.bf16.mxu0 0
    %3301 = vmatpush2.bf16.msra.mxu0 0
    %3302 = vmatprep.subr.bf16.mxu0 0
    %3303 = vmatpush2.bf16.msra.mxu0 0
    %3304 = vmatprep.subr.bf16.mxu0 0
    %3305 = vmatpush2.bf16.msra.mxu0 0
    %3306 = vmatprep.subr.bf16.mxu0 0
    %3307 = vmatpush2.bf16.msra.mxu0 0
    %3308 = vmatprep.mubr.bf16.mxu0 0
    %3309 = vmatmul.mubr.bf16.gmra.mxu0 %v3274
    %v3310 = vpop.f32.mrf.mxu0
    %v3311 = vadd.f32 %v3259, %v3310
    %v3312 = vpop.f32.mrf.mxu0
    %v3313 = vpop.f32.mrf.mxu0
    %v3314 = vadd.f32 %v3259, %v3313
    %v3315 = vpop.f32.mrf.mxu0
    %3316 = vdwg.mxu0
    %v3317 = vld [vmem:[#allocation17] sm:$0xf]
    %v3318 = vld [vmem:[#allocation17 + $0x4] sm:$0xf]
    %v3321 = vunpack.c.l.b16 %v3317
    %v3322 = vunpack.c.l.b16 %v3318
    %v3323 = vpack.c.b16 %v3322, %v3321
    %v3325 = vsel %vm260, 0, 0
    %3327 = vmatprep.subr.bf16.mxu0 0
    %3328 = vmatpush1.bf16.msra.mxu0 0
    %3329 = vmatprep.subr.bf16.mxu0 0
    %3330 = vmatpush1.bf16.msra.mxu0 0
    %3331 = vmatprep.subr.bf16.mxu0 0
    %3332 = vmatpush1.bf16.msra.mxu0 0
    %3333 = vmatprep.subr.bf16.mxu0 0
    %3334 = vmatpush1.bf16.msra.mxu0 0
    %3335 = vmatprep.subr.bf16.mxu0 0
    %3336 = vmatpush1.bf16.msra.mxu0 0
    %3337 = vmatprep.subr.bf16.mxu0 0
    %3338 = vmatpush1.bf16.msra.mxu0 0
    %3339 = vmatprep.subr.bf16.mxu0 0
    %3340 = vmatpush1.bf16.msra.mxu0 0
    %3341 = vmatprep.subr.bf16.mxu0 0
    %3342 = vmatpush1.bf16.msra.mxu0 %v3323
    %3343 = vmatprep.subr.bf16.mxu0 0
    %3344 = vmatpush2.bf16.msra.mxu0 0
    %3345 = vmatprep.subr.bf16.mxu0 0
    %3346 = vmatpush2.bf16.msra.mxu0 0
    %3347 = vmatprep.subr.bf16.mxu0 0
    %3348 = vmatpush2.bf16.msra.mxu0 0
    %3349 = vmatprep.subr.bf16.mxu0 0
    %3350 = vmatpush2.bf16.msra.mxu0 0
    %3351 = vmatprep.subr.bf16.mxu0 0
    %3352 = vmatpush2.bf16.msra.mxu0 0
    %3353 = vmatprep.subr.bf16.mxu0 0
    %3354 = vmatpush2.bf16.msra.mxu0 0
    %3355 = vmatprep.subr.bf16.mxu0 0
    %3356 = vmatpush2.bf16.msra.mxu0 0
    %3357 = vmatprep.subr.bf16.mxu0 0
    %3358 = vmatpush2.bf16.msra.mxu0 0
    %3359 = vmatprep.mubr.bf16.mxu0 0
    %3360 = vmatmul.mubr.bf16.gmra.mxu0 %v3325
    %v3361 = vpop.f32.mrf.mxu0
    %v3362 = vadd.f32 0.0, %v3361
    %v3363 = vpop.f32.mrf.mxu0
    %v3364 = vpop.f32.mrf.mxu0
    %v3365 = vpop.f32.mrf.mxu0
    %3366 = vdwg.mxu0
    %v3367 = vadd.f32 %v3311, %v3362
    %v3368 = vxor.u32 %v3367, 2147483648
    %v3369 = vmul.f32 %v3368, 1.442695
    %v3370 = vpow.pop %v3369
    %v3371 = vadd.f32 %v3370, 1.0
    %v3372 = vrcp.pop %v3371
    %v3373 = vmul.f32 1.0, %v3372
    %v3374 = vtanh.pop %v3367
    %v3375 = vmul.f32 %v3373, 0.0
    %3377 = vrot.lane.b32.xlu0 %v3374, 80
    %v3378 = vpop.permute.xlu0 %3377
    %v3380 = vmul.f32 %v3373, %v3378
    %3382 = vrot.lane.b32.xlu0 %v3380, 16
    %v3383 = vpop.permute.xlu0 %3382
    %v3385 = vadd.f32 %v3375, %v3383
    %v3386 = vtanh.pop %v3385
    %3388 = vrot.lane.b32.xlu0 %v3386, 16
    %v3389 = vpop.permute.xlu0 %3388
    %v3391 = vmul.f32 %v3373, %v3389
    %3393 = vrot.lane.b32.xlu0 %v3391, 96
    %v3394 = vpop.permute.xlu0 %3393
    %vm3396 = vcmask 123904
    %3397 = vst.msk [vmem:[#allocation3] sm:$0x3] %vm3396, %v3394
    %v3398 = vpack.c.bf16 %v3391, %v3391
    %3400 = vrot.lane.b32.xlu0 %v3398, 96
    %v3401 = vpop.permute.xlu0 %3400
    %v3403 = vsel %vm260, %v3401, 0
    %3405 = vmatprep.subr.bf16.mxu0 0
    %3406 = vmatpush1.bf16.msra.mxu0 0
    %3407 = vmatprep.subr.bf16.mxu0 0
    %3408 = vmatpush1.bf16.msra.mxu0 0
    %3409 = vmatprep.subr.bf16.mxu0 0
    %3410 = vmatpush1.bf16.msra.mxu0 0
    %3411 = vmatprep.subr.bf16.mxu0 0
    %3412 = vmatpush1.bf16.msra.mxu0 0
    %3413 = vmatprep.subr.bf16.mxu0 0
    %3414 = vmatpush1.bf16.msra.mxu0 0
    %3415 = vmatprep.subr.bf16.mxu0 0
    %3416 = vmatpush1.bf16.msra.mxu0 0
    %3417 = vmatprep.subr.bf16.mxu0 0
    %3418 = vmatpush1.bf16.msra.mxu0 0
    %3419 = vmatprep.subr.bf16.mxu0 0
    %3420 = vmatpush1.bf16.msra.mxu0 %v3323
    %3421 = vmatprep.subr.bf16.mxu0 0
    %3422 = vmatpush2.bf16.msra.mxu0 0
    %3423 = vmatprep.subr.bf16.mxu0 0
    %3424 = vmatpush2.bf16.msra.mxu0 0
    %3425 = vmatprep.subr.bf16.mxu0 0
    %3426 = vmatpush2.bf16.msra.mxu0 0
    %3427 = vmatprep.subr.bf16.mxu0 0
    %3428 = vmatpush2.bf16.msra.mxu0 0
    %3429 = vmatprep.subr.bf16.mxu0 0
    %3430 = vmatpush2.bf16.msra.mxu0 0
    %3431 = vmatprep.subr.bf16.mxu0 0
    %3432 = vmatpush2.bf16.msra.mxu0 0
    %3433 = vmatprep.subr.bf16.mxu0 0
    %3434 = vmatpush2.bf16.msra.mxu0 0
    %3435 = vmatprep.subr.bf16.mxu0 0
    %3436 = vmatpush2.bf16.msra.mxu0 0
    %3437 = vmatprep.mubr.bf16.mxu0 0
    %3438 = vmatmul.mubr.bf16.gmra.mxu0 %v3403
    %v3439 = vpop.f32.mrf.mxu0
    %v3440 = vadd.f32 0.0, %v3439
    %v3441 = vpop.f32.mrf.mxu0
    %v3442 = vpop.f32.mrf.mxu0
    %v3443 = vpop.f32.mrf.mxu0
    %3444 = vdwg.mxu0
    %v3446 = vrot.slane %v3440, 6
    %v3448 = vadd.f32 %v3311, %v3446
    %v3449 = vxor.u32 %v3448, 2147483648
    %v3450 = vmul.f32 %v3449, 1.442695
    %v3451 = vpow.pop %v3450
    %v3452 = vadd.f32 %v3451, 1.0
    %v3453 = vrcp.pop %v3452
    %v3454 = vmul.f32 1.0, %v3453
    %v3455 = vtanh.pop %v3448
    %v3457 = vrot.slane %v3385, 6
    %v3459 = vmul.f32 %v3454, %v3457
    %3461 = vrot.lane.b32.xlu0 %v3455, 80
    %v3462 = vpop.permute.xlu0 %3461
    %v3464 = vmul.f32 %v3454, %v3462
    %3466 = vrot.lane.b32.xlu0 %v3464, 16
    %v3467 = vpop.permute.xlu0 %3466
    %v3469 = vadd.f32 %v3459, %v3467
    %v3470 = vtanh.pop %v3469
    %3472 = vrot.lane.b32.xlu0 %v3470, 16
    %v3473 = vpop.permute.xlu0 %3472
    %v3475 = vmul.f32 %v3454, %v3473
    %3477 = vrot.lane.b32.xlu0 %v3475, 96
    %v3478 = vpop.permute.xlu0 %3477
    %vm3480 = vcmask 125954
    %3481 = vst.msk [vmem:[#allocation3] sm:$0xc] %vm3480, %v3478
    %v3482 = vpack.c.bf16 %v3475, %v3475
    %v3484 = vrot.slane %v3482, 1
    %3485 = vrot.lane.b32.xlu0 %v3484, 96
    %v3486 = vpop.permute.xlu0 %3485
    %v3488 = vsel %vm260, %v3486, 0
    %3490 = vmatprep.subr.bf16.mxu0 0
    %3491 = vmatpush1.bf16.msra.mxu0 0
    %3492 = vmatprep.subr.bf16.mxu0 0
    %3493 = vmatpush1.bf16.msra.mxu0 0
    %3494 = vmatprep.subr.bf16.mxu0 0
    %3495 = vmatpush1.bf16.msra.mxu0 0
    %3496 = vmatprep.subr.bf16.mxu0 0
    %3497 = vmatpush1.bf16.msra.mxu0 0
    %3498 = vmatprep.subr.bf16.mxu0 0
    %3499 = vmatpush1.bf16.msra.mxu0 0
    %3500 = vmatprep.subr.bf16.mxu0 0
    %3501 = vmatpush1.bf16.msra.mxu0 0
    %3502 = vmatprep.subr.bf16.mxu0 0
    %3503 = vmatpush1.bf16.msra.mxu0 0
    %3504 = vmatprep.subr.bf16.mxu0 0
    %3505 = vmatpush1.bf16.msra.mxu0 %v3323
    %3506 = vmatprep.subr.bf16.mxu0 0
    %3507 = vmatpush2.bf16.msra.mxu0 0
    %3508 = vmatprep.subr.bf16.mxu0 0
    %3509 = vmatpush2.bf16.msra.mxu0 0
    %3510 = vmatprep.subr.bf16.mxu0 0
    %3511 = vmatpush2.bf16.msra.mxu0 0
    %3512 = vmatprep.subr.bf16.mxu0 0
    %3513 = vmatpush2.bf16.msra.mxu0 0
    %3514 = vmatprep.subr.bf16.mxu0 0
    %3515 = vmatpush2.bf16.msra.mxu0 0
    %3516 = vmatprep.subr.bf16.mxu0 0
    %3517 = vmatpush2.bf16.msra.mxu0 0
    %3518 = vmatprep.subr.bf16.mxu0 0
    %3519 = vmatpush2.bf16.msra.mxu0 0
    %3520 = vmatprep.subr.bf16.mxu0 0
    %3521 = vmatpush2.bf16.msra.mxu0 0
    %3522 = vmatprep.mubr.bf16.mxu0 0
    %3523 = vmatmul.mubr.bf16.gmra.mxu0 %v3488
    %v3524 = vpop.f32.mrf.mxu0
    %v3525 = vadd.f32 0.0, %v3524
    %v3526 = vpop.f32.mrf.mxu0
    %v3527 = vpop.f32.mrf.mxu0
    %v3528 = vpop.f32.mrf.mxu0
    %3529 = vdwg.mxu0
    %v3531 = vrot.slane %v3525, 4
    %v3533 = vadd.f32 %v3311, %v3531
    %v3534 = vxor.u32 %v3533, 2147483648
    %v3535 = vmul.f32 %v3534, 1.442695
    %v3536 = vpow.pop %v3535
    %v3537 = vadd.f32 %v3536, 1.0
    %v3538 = vrcp.pop %v3537
    %v3539 = vmul.f32 1.0, %v3538
    %v3540 = vtanh.pop %v3533
    %v3542 = vrot.slane %v3469, 6
    %v3544 = vmul.f32 %v3539, %v3542
    %3546 = vrot.lane.b32.xlu0 %v3540, 80
    %v3547 = vpop.permute.xlu0 %3546
    %v3549 = vmul.f32 %v3539, %v3547
    %3551 = vrot.lane.b32.xlu0 %v3549, 16
    %v3552 = vpop.permute.xlu0 %3551
    %v3554 = vadd.f32 %v3544, %v3552
    %v3555 = vtanh.pop %v3554
    %3557 = vrot.lane.b32.xlu0 %v3555, 16
    %v3558 = vpop.permute.xlu0 %3557
    %v3560 = vmul.f32 %v3539, %v3558
    %3562 = vrot.lane.b32.xlu0 %v3560, 96
    %v3563 = vpop.permute.xlu0 %3562
    %vm3565 = vcmask 128004
    %3566 = vst.msk [vmem:[#allocation3] sm:$0x30] %vm3565, %v3563
    %v3567 = vpack.c.bf16 %v3560, %v3560
    %v3569 = vrot.slane %v3567, 2
    %3570 = vrot.lane.b32.xlu0 %v3569, 96
    %v3571 = vpop.permute.xlu0 %3570
    %v3573 = vsel %vm260, %v3571, 0
    %3575 = vmatprep.subr.bf16.mxu0 0
    %3576 = vmatpush1.bf16.msra.mxu0 0
    %3577 = vmatprep.subr.bf16.mxu0 0
    %3578 = vmatpush1.bf16.msra.mxu0 0
    %3579 = vmatprep.subr.bf16.mxu0 0
    %3580 = vmatpush1.bf16.msra.mxu0 0
    %3581 = vmatprep.subr.bf16.mxu0 0
    %3582 = vmatpush1.bf16.msra.mxu0 0
    %3583 = vmatprep.subr.bf16.mxu0 0
    %3584 = vmatpush1.bf16.msra.mxu0 0
    %3585 = vmatprep.subr.bf16.mxu0 0
    %3586 = vmatpush1.bf16.msra.mxu0 0
    %3587 = vmatprep.subr.bf16.mxu0 0
    %3588 = vmatpush1.bf16.msra.mxu0 0
    %3589 = vmatprep.subr.bf16.mxu0 0
    %3590 = vmatpush1.bf16.msra.mxu0 %v3323
    %3591 = vmatprep.subr.bf16.mxu0 0
    %3592 = vmatpush2.bf16.msra.mxu0 0
    %3593 = vmatprep.subr.bf16.mxu0 0
    %3594 = vmatpush2.bf16.msra.mxu0 0
    %3595 = vmatprep.subr.bf16.mxu0 0
    %3596 = vmatpush2.bf16.msra.mxu0 0
    %3597 = vmatprep.subr.bf16.mxu0 0
    %3598 = vmatpush2.bf16.msra.mxu0 0
    %3599 = vmatprep.subr.bf16.mxu0 0
    %3600 = vmatpush2.bf16.msra.mxu0 0
    %3601 = vmatprep.subr.bf16.mxu0 0
    %3602 = vmatpush2.bf16.msra.mxu0 0
    %3603 = vmatprep.subr.bf16.mxu0 0
    %3604 = vmatpush2.bf16.msra.mxu0 0
    %3605 = vmatprep.subr.bf16.mxu0 0
    %3606 = vmatpush2.bf16.msra.mxu0 0
    %3607 = vmatprep.mubr.bf16.mxu0 0
    %3608 = vmatmul.mubr.bf16.gmra.mxu0 %v3573
    %v3609 = vpop.f32.mrf.mxu0
    %v3610 = vadd.f32 0.0, %v3609
    %v3611 = vpop.f32.mrf.mxu0
    %v3612 = vpop.f32.mrf.mxu0
    %v3613 = vpop.f32.mrf.mxu0
    %3614 = vdwg.mxu0
    %v3616 = vrot.slane %v3610, 2
    %v3618 = vadd.f32 %v3311, %v3616
    %v3619 = vxor.u32 %v3618, 2147483648
    %v3620 = vmul.f32 %v3619, 1.442695
    %v3621 = vpow.pop %v3620
    %v3622 = vadd.f32 %v3621, 1.0
    %v3623 = vrcp.pop %v3622
    %v3624 = vmul.f32 1.0, %v3623
    %v3625 = vtanh.pop %v3618
    %v3627 = vrot.slane %v3554, 6
    %v3629 = vmul.f32 %v3624, %v3627
    %3631 = vrot.lane.b32.xlu0 %v3625, 80
    %v3632 = vpop.permute.xlu0 %3631
    %v3634 = vmul.f32 %v3624, %v3632
    %3636 = vrot.lane.b32.xlu0 %v3634, 16
    %v3637 = vpop.permute.xlu0 %3636
    %v3639 = vadd.f32 %v3629, %v3637
    %v3640 = vtanh.pop %v3639
    %3642 = vrot.lane.b32.xlu0 %v3640, 16
    %v3643 = vpop.permute.xlu0 %3642
    %v3645 = vmul.f32 %v3624, %v3643
    %3647 = vrot.lane.b32.xlu0 %v3645, 96
    %v3648 = vpop.permute.xlu0 %3647
    %vm3650 = vcmask 130054
    %3651 = vst.msk [vmem:[#allocation3] sm:$0xc0] %vm3650, %v3648
    %v3652 = vpack.c.bf16 %v3645, %v3645
    %v3654 = vrot.slane %v3652, 3
    %3655 = vrot.lane.b32.xlu0 %v3654, 96
    %v3656 = vpop.permute.xlu0 %3655
    %v3658 = vsel %vm260, %v3656, 0
    %3660 = vmatprep.subr.bf16.mxu0 0
    %3661 = vmatpush1.bf16.msra.mxu0 0
    %3662 = vmatprep.subr.bf16.mxu0 0
    %3663 = vmatpush1.bf16.msra.mxu0 0
    %3664 = vmatprep.subr.bf16.mxu0 0
    %3665 = vmatpush1.bf16.msra.mxu0 0
    %3666 = vmatprep.subr.bf16.mxu0 0
    %3667 = vmatpush1.bf16.msra.mxu0 0
    %3668 = vmatprep.subr.bf16.mxu0 0
    %3669 = vmatpush1.bf16.msra.mxu0 0
    %3670 = vmatprep.subr.bf16.mxu0 0
    %3671 = vmatpush1.bf16.msra.mxu0 0
    %3672 = vmatprep.subr.bf16.mxu0 0
    %3673 = vmatpush1.bf16.msra.mxu0 0
    %3674 = vmatprep.subr.bf16.mxu0 0
    %3675 = vmatpush1.bf16.msra.mxu0 %v3323
    %3676 = vmatprep.subr.bf16.mxu0 0
    %3677 = vmatpush2.bf16.msra.mxu0 0
    %3678 = vmatprep.subr.bf16.mxu0 0
    %3679 = vmatpush2.bf16.msra.mxu0 0
    %3680 = vmatprep.subr.bf16.mxu0 0
    %3681 = vmatpush2.bf16.msra.mxu0 0
    %3682 = vmatprep.subr.bf16.mxu0 0
    %3683 = vmatpush2.bf16.msra.mxu0 0
    %3684 = vmatprep.subr.bf16.mxu0 0
    %3685 = vmatpush2.bf16.msra.mxu0 0
    %3686 = vmatprep.subr.bf16.mxu0 0
    %3687 = vmatpush2.bf16.msra.mxu0 0
    %3688 = vmatprep.subr.bf16.mxu0 0
    %3689 = vmatpush2.bf16.msra.mxu0 0
    %3690 = vmatprep.subr.bf16.mxu0 0
    %3691 = vmatpush2.bf16.msra.mxu0 0
    %3692 = vmatprep.mubr.bf16.mxu0 0
    %3693 = vmatmul.mubr.bf16.gmra.mxu0 %v3658
    %v3694 = vpop.f32.mrf.mxu0
    %v3695 = vadd.f32 0.0, %v3694
    %v3696 = vpop.f32.mrf.mxu0
    %v3697 = vpop.f32.mrf.mxu0
    %v3698 = vpop.f32.mrf.mxu0
    %3699 = vdwg.mxu0
    %v3700 = vadd.f32 %v3314, %v3695
    %v3701 = vxor.u32 %v3700, 2147483648
    %v3702 = vmul.f32 %v3701, 1.442695
    %v3703 = vpow.pop %v3702
    %v3704 = vadd.f32 %v3703, 1.0
    %v3705 = vrcp.pop %v3704
    %v3706 = vmul.f32 1.0, %v3705
    %v3707 = vtanh.pop %v3700
    %v3709 = vrot.slane %v3639, 6
    %v3711 = vmul.f32 %v3706, %v3709
    %3713 = vrot.lane.b32.xlu0 %v3707, 80
    %v3714 = vpop.permute.xlu0 %3713
    %v3716 = vmul.f32 %v3706, %v3714
    %3718 = vrot.lane.b32.xlu0 %v3716, 16
    %v3719 = vpop.permute.xlu0 %3718
    %v3721 = vadd.f32 %v3711, %v3719
    %v3722 = vtanh.pop %v3721
    %3724 = vrot.lane.b32.xlu0 %v3722, 16
    %v3725 = vpop.permute.xlu0 %3724
    %v3727 = vmul.f32 %v3706, %v3725
    %3729 = vrot.lane.b32.xlu0 %v3727, 96
    %v3730 = vpop.permute.xlu0 %3729
    %3732 = vst.msk [vmem:[#allocation3 + $0x8] sm:$0x3] %vm3396, %v3730
    %v3733 = vpack.c.bf16 %v3727, %v3727
    %3735 = vrot.lane.b32.xlu0 %v3733, 96
    %v3736 = vpop.permute.xlu0 %3735
    %v3738 = vsel %vm260, %v3736, 0
    %3740 = vmatprep.subr.bf16.mxu0 0
    %3741 = vmatpush1.bf16.msra.mxu0 0
    %3742 = vmatprep.subr.bf16.mxu0 0
    %3743 = vmatpush1.bf16.msra.mxu0 0
    %3744 = vmatprep.subr.bf16.mxu0 0
    %3745 = vmatpush1.bf16.msra.mxu0 0
    %3746 = vmatprep.subr.bf16.mxu0 0
    %3747 = vmatpush1.bf16.msra.mxu0 0
    %3748 = vmatprep.subr.bf16.mxu0 0
    %3749 = vmatpush1.bf16.msra.mxu0 0
    %3750 = vmatprep.subr.bf16.mxu0 0
    %3751 = vmatpush1.bf16.msra.mxu0 0
    %3752 = vmatprep.subr.bf16.mxu0 0
    %3753 = vmatpush1.bf16.msra.mxu0 0
    %3754 = vmatprep.subr.bf16.mxu0 0
    %3755 = vmatpush1.bf16.msra.mxu0 %v3323
    %3756 = vmatprep.subr.bf16.mxu0 0
    %3757 = vmatpush2.bf16.msra.mxu0 0
    %3758 = vmatprep.subr.bf16.mxu0 0
    %3759 = vmatpush2.bf16.msra.mxu0 0
    %3760 = vmatprep.subr.bf16.mxu0 0
    %3761 = vmatpush2.bf16.msra.mxu0 0
    %3762 = vmatprep.subr.bf16.mxu0 0
    %3763 = vmatpush2.bf16.msra.mxu0 0
    %3764 = vmatprep.subr.bf16.mxu0 0
    %3765 = vmatpush2.bf16.msra.mxu0 0
    %3766 = vmatprep.subr.bf16.mxu0 0
    %3767 = vmatpush2.bf16.msra.mxu0 0
    %3768 = vmatprep.subr.bf16.mxu0 0
    %3769 = vmatpush2.bf16.msra.mxu0 0
    %3770 = vmatprep.subr.bf16.mxu0 0
    %3771 = vmatpush2.bf16.msra.mxu0 0
    %3772 = vmatprep.mubr.bf16.mxu0 0
    %3773 = vmatmul.mubr.bf16.gmra.mxu0 %v3738
    %v3774 = vpop.f32.mrf.mxu0
    %v3775 = vadd.f32 0.0, %v3774
    %v3776 = vpop.f32.mrf.mxu0
    %v3777 = vpop.f32.mrf.mxu0
    %v3778 = vpop.f32.mrf.mxu0
    %3779 = vdwg.mxu0
    %v3781 = vrot.slane %v3775, 6
    %v3783 = vadd.f32 %v3314, %v3781
    %v3784 = vxor.u32 %v3783, 2147483648
    %v3785 = vmul.f32 %v3784, 1.442695
    %v3786 = vpow.pop %v3785
    %v3787 = vadd.f32 %v3786, 1.0
    %v3788 = vrcp.pop %v3787
    %v3789 = vmul.f32 1.0, %v3788
    %v3790 = vtanh.pop %v3783
    %v3792 = vrot.slane %v3721, 6
    %v3794 = vmul.f32 %v3789, %v3792
    %3796 = vrot.lane.b32.xlu0 %v3790, 80
    %v3797 = vpop.permute.xlu0 %3796
    %v3799 = vmul.f32 %v3789, %v3797
    %3801 = vrot.lane.b32.xlu0 %v3799, 16
    %v3802 = vpop.permute.xlu0 %3801
    %v3804 = vadd.f32 %v3794, %v3802
    %v3805 = vtanh.pop %v3804
    %3807 = vrot.lane.b32.xlu0 %v3805, 16
    %v3808 = vpop.permute.xlu0 %3807
    %v3810 = vmul.f32 %v3789, %v3808
    %3812 = vrot.lane.b32.xlu0 %v3810, 96
    %v3813 = vpop.permute.xlu0 %3812
    %3815 = vst.msk [vmem:[#allocation3 + $0x8] sm:$0xc] %vm3480, %v3813
    %v3816 = vpack.c.bf16 %v3810, %v3810
    %v3818 = vrot.slane %v3816, 1
    %3819 = vrot.lane.b32.xlu0 %v3818, 96
    %v3820 = vpop.permute.xlu0 %3819
    %v3822 = vsel %vm260, %v3820, 0
    %3824 = vmatprep.subr.bf16.mxu0 0
    %3825 = vmatpush1.bf16.msra.mxu0 0
    %3826 = vmatprep.subr.bf16.mxu0 0
    %3827 = vmatpush1.bf16.msra.mxu0 0
    %3828 = vmatprep.subr.bf16.mxu0 0
    %3829 = vmatpush1.bf16.msra.mxu0 0
    %3830 = vmatprep.subr.bf16.mxu0 0
    %3831 = vmatpush1.bf16.msra.mxu0 0
    %3832 = vmatprep.subr.bf16.mxu0 0
    %3833 = vmatpush1.bf16.msra.mxu0 0
    %3834 = vmatprep.subr.bf16.mxu0 0
    %3835 = vmatpush1.bf16.msra.mxu0 0
    %3836 = vmatprep.subr.bf16.mxu0 0
    %3837 = vmatpush1.bf16.msra.mxu0 0
    %3838 = vmatprep.subr.bf16.mxu0 0
    %3839 = vmatpush1.bf16.msra.mxu0 %v3323
    %3840 = vmatprep.subr.bf16.mxu0 0
    %3841 = vmatpush2.bf16.msra.mxu0 0
    %3842 = vmatprep.subr.bf16.mxu0 0
    %3843 = vmatpush2.bf16.msra.mxu0 0
    %3844 = vmatprep.subr.bf16.mxu0 0
    %3845 = vmatpush2.bf16.msra.mxu0 0
    %3846 = vmatprep.subr.bf16.mxu0 0
    %3847 = vmatpush2.bf16.msra.mxu0 0
    %3848 = vmatprep.subr.bf16.mxu0 0
    %3849 = vmatpush2.bf16.msra.mxu0 0
    %3850 = vmatprep.subr.bf16.mxu0 0
    %3851 = vmatpush2.bf16.msra.mxu0 0
    %3852 = vmatprep.subr.bf16.mxu0 0
    %3853 = vmatpush2.bf16.msra.mxu0 0
    %3854 = vmatprep.subr.bf16.mxu0 0
    %3855 = vmatpush2.bf16.msra.mxu0 0
    %3856 = vmatprep.mubr.bf16.mxu0 0
    %3857 = vmatmul.mubr.bf16.gmra.mxu0 %v3822
    %v3858 = vpop.f32.mrf.mxu0
    %v3859 = vadd.f32 0.0, %v3858
    %v3860 = vpop.f32.mrf.mxu0
    %v3861 = vpop.f32.mrf.mxu0
    %v3862 = vpop.f32.mrf.mxu0
    %3863 = vdwg.mxu0
    %v3865 = vrot.slane %v3859, 4
    %v3867 = vadd.f32 %v3314, %v3865
    %v3868 = vxor.u32 %v3867, 2147483648
    %v3869 = vmul.f32 %v3868, 1.442695
    %v3870 = vpow.pop %v3869
    %v3871 = vadd.f32 %v3870, 1.0
    %v3872 = vrcp.pop %v3871
    %v3873 = vmul.f32 1.0, %v3872
    %v3874 = vtanh.pop %v3867
    %v3876 = vrot.slane %v3804, 6
    %v3878 = vmul.f32 %v3873, %v3876
    %3880 = vrot.lane.b32.xlu0 %v3874, 80
    %v3881 = vpop.permute.xlu0 %3880
    %v3883 = vmul.f32 %v3873, %v3881
    %3885 = vrot.lane.b32.xlu0 %v3883, 16
    %v3886 = vpop.permute.xlu0 %3885
    %v3888 = vadd.f32 %v3878, %v3886
    %v3889 = vtanh.pop %v3888
    %3891 = vrot.lane.b32.xlu0 %v3889, 16
    %v3892 = vpop.permute.xlu0 %3891
    %v3894 = vmul.f32 %v3873, %v3892
    %3896 = vrot.lane.b32.xlu0 %v3894, 96
    %v3897 = vpop.permute.xlu0 %3896
    %3899 = vst.msk [vmem:[#allocation3 + $0x8] sm:$0x30] %vm3565, %v3897
    %v3900 = vpack.c.bf16 %v3894, %v3894
    %v3902 = vrot.slane %v3900, 2
    %3903 = vrot.lane.b32.xlu0 %v3902, 96
    %v3904 = vpop.permute.xlu0 %3903
    %v3906 = vsel %vm260, %v3904, 0
    %3908 = vmatprep.subr.bf16.mxu0 0
    %3909 = vmatpush1.bf16.msra.mxu0 0
    %3910 = vmatprep.subr.bf16.mxu0 0
    %3911 = vmatpush1.bf16.msra.mxu0 0
    %3912 = vmatprep.subr.bf16.mxu0 0
    %3913 = vmatpush1.bf16.msra.mxu0 0
    %3914 = vmatprep.subr.bf16.mxu0 0
    %3915 = vmatpush1.bf16.msra.mxu0 0
    %3916 = vmatprep.subr.bf16.mxu0 0
    %3917 = vmatpush1.bf16.msra.mxu0 0
    %3918 = vmatprep.subr.bf16.mxu0 0
    %3919 = vmatpush1.bf16.msra.mxu0 0
    %3920 = vmatprep.subr.bf16.mxu0 0
    %3921 = vmatpush1.bf16.msra.mxu0 0
    %3922 = vmatprep.subr.bf16.mxu0 0
    %3923 = vmatpush1.bf16.msra.mxu0 %v3323
    %3924 = vmatprep.subr.bf16.mxu0 0
    %3925 = vmatpush2.bf16.msra.mxu0 0
    %3926 = vmatprep.subr.bf16.mxu0 0
    %3927 = vmatpush2.bf16.msra.mxu0 0
    %3928 = vmatprep.subr.bf16.mxu0 0
    %3929 = vmatpush2.bf16.msra.mxu0 0
    %3930 = vmatprep.subr.bf16.mxu0 0
    %3931 = vmatpush2.bf16.msra.mxu0 0
    %3932 = vmatprep.subr.bf16.mxu0 0
    %3933 = vmatpush2.bf16.msra.mxu0 0
    %3934 = vmatprep.subr.bf16.mxu0 0
    %3935 = vmatpush2.bf16.msra.mxu0 0
    %3936 = vmatprep.subr.bf16.mxu0 0
    %3937 = vmatpush2.bf16.msra.mxu0 0
    %3938 = vmatprep.subr.bf16.mxu0 0
    %3939 = vmatpush2.bf16.msra.mxu0 0
    %3940 = vmatprep.mubr.bf16.mxu0 0
    %3941 = vmatmul.mubr.bf16.gmra.mxu0 %v3906
    %v3942 = vpop.f32.mrf.mxu0
    %v3943 = vadd.f32 0.0, %v3942
    %v3944 = vpop.f32.mrf.mxu0
    %v3945 = vpop.f32.mrf.mxu0
    %v3946 = vpop.f32.mrf.mxu0
    %3947 = vdwg.mxu0
    %v3949 = vrot.slane %v3943, 2
    %v3951 = vadd.f32 %v3314, %v3949
    %v3952 = vxor.u32 %v3951, 2147483648
    %v3953 = vmul.f32 %v3952, 1.442695
    %v3954 = vpow.pop %v3953
    %v3955 = vadd.f32 %v3954, 1.0
    %v3956 = vrcp.pop %v3955
    %v3957 = vmul.f32 1.0, %v3956
    %v3958 = vtanh.pop %v3951
    %v3960 = vrot.slane %v3888, 6
    %v3962 = vmul.f32 %v3957, %v3960
    %3964 = vrot.lane.b32.xlu0 %v3958, 80
    %v3965 = vpop.permute.xlu0 %3964
    %v3967 = vmul.f32 %v3957, %v3965
    %3969 = vrot.lane.b32.xlu0 %v3967, 16
    %v3970 = vpop.permute.xlu0 %3969
    %v3972 = vadd.f32 %v3962, %v3970
    %v3973 = vtanh.pop %v3972
    %3975 = vrot.lane.b32.xlu0 %v3973, 16
    %v3976 = vpop.permute.xlu0 %3975
    %v3978 = vmul.f32 %v3957, %v3976
    %3980 = vrot.lane.b32.xlu0 %v3978, 96
    %v3981 = vpop.permute.xlu0 %3980
    %3983 = vst.msk [vmem:[#allocation3 + $0x8] sm:$0xc0] %vm3650, %v3981
    %v3984 = vld [vmem:[#allocation3] sm:$0xff]
    %v3985 = vld [vmem:[#allocation3 + $0x8] sm:$0xff]
    %v3986 = vpack.c.bf16 %v3985, %v3984
    %v3987 = vld [vmem:[#allocation20] sm:$0xf]
    %v3988 = vld [vmem:[#allocation20 + $0x4] sm:$0xf]
    %v3989 = vld [vmem:[#allocation23] sm:$0x1]
    %v3991 = vlaneseq
    %v3992 = vshrl.u32 %v3991, 7
    %v3993 = vsub.s32 0, %v3992
    %v3994 = vrot.slane %v3989, %v3993
    %v3998 = vunpack.c.l.b16 %v3987
    %v3999 = vunpack.c.l.b16 %v3988
    %v4000 = vpack.c.b16 %v3999, %v3998
    %v4003 = vsel %vm260, %v3986, 0
    %4005 = vmatprep.subr.bf16.mxu0 0
    %4006 = vmatpush1.bf16.msra.mxu0 0
    %4007 = vmatprep.subr.bf16.mxu0 0
    %4008 = vmatpush1.bf16.msra.mxu0 0
    %4009 = vmatprep.subr.bf16.mxu0 0
    %4010 = vmatpush1.bf16.msra.mxu0 0
    %4011 = vmatprep.subr.bf16.mxu0 0
    %4012 = vmatpush1.bf16.msra.mxu0 0
    %4013 = vmatprep.subr.bf16.mxu0 0
    %4014 = vmatpush1.bf16.msra.mxu0 0
    %4015 = vmatprep.subr.bf16.mxu0 0
    %4016 = vmatpush1.bf16.msra.mxu0 0
    %4017 = vmatprep.subr.bf16.mxu0 0
    %4018 = vmatpush1.bf16.msra.mxu0 0
    %4019 = vmatprep.subr.bf16.mxu0 0
    %4020 = vmatpush1.bf16.msra.mxu0 %v4000
    %4021 = vmatprep.subr.bf16.mxu0 0
    %4022 = vmatpush2.bf16.msra.mxu0 0
    %4023 = vmatprep.subr.bf16.mxu0 0
    %4024 = vmatpush2.bf16.msra.mxu0 0
    %4025 = vmatprep.subr.bf16.mxu0 0
    %4026 = vmatpush2.bf16.msra.mxu0 0
    %4027 = vmatprep.subr.bf16.mxu0 0
    %4028 = vmatpush2.bf16.msra.mxu0 0
    %4029 = vmatprep.subr.bf16.mxu0 0
    %4030 = vmatpush2.bf16.msra.mxu0 0
    %4031 = vmatprep.subr.bf16.mxu0 0
    %4032 = vmatpush2.bf16.msra.mxu0 0
    %4033 = vmatprep.subr.bf16.mxu0 0
    %4034 = vmatpush2.bf16.msra.mxu0 0
    %4035 = vmatprep.subr.bf16.mxu0 0
    %4036 = vmatpush2.bf16.msra.mxu0 0
    %4037 = vmatprep.mubr.bf16.mxu0 0
    %4038 = vmatmul.mubr.bf16.gmra.mxu0 %v4003
    %v4039 = vpop.f32.mrf.mxu0
    %v4040 = vadd.f32 %v3994, %v4039
    %v4041 = vpop.f32.mrf.mxu0
    %v4042 = vpop.f32.mrf.mxu0
    %v4043 = vadd.f32 %v3994, %v4042
    %v4044 = vpop.f32.mrf.mxu0
    %4045 = vdwg.mxu0
    %v4046 = vld [vmem:[#allocation21] sm:$0xf]
    %v4047 = vld [vmem:[#allocation21 + $0x4] sm:$0xf]
    %v4050 = vunpack.c.l.b16 %v4046
    %v4051 = vunpack.c.l.b16 %v4047
    %v4052 = vpack.c.b16 %v4051, %v4050
    %4054 = vmatprep.subr.bf16.mxu0 0
    %4055 = vmatpush1.bf16.msra.mxu0 0
    %4056 = vmatprep.subr.bf16.mxu0 0
    %4057 = vmatpush1.bf16.msra.mxu0 0
    %4058 = vmatprep.subr.bf16.mxu0 0
    %4059 = vmatpush1.bf16.msra.mxu0 0
    %4060 = vmatprep.subr.bf16.mxu0 0
    %4061 = vmatpush1.bf16.msra.mxu0 0
    %4062 = vmatprep.subr.bf16.mxu0 0
    %4063 = vmatpush1.bf16.msra.mxu0 0
    %4064 = vmatprep.subr.bf16.mxu0 0
    %4065 = vmatpush1.bf16.msra.mxu0 0
    %4066 = vmatprep.subr.bf16.mxu0 0
    %4067 = vmatpush1.bf16.msra.mxu0 0
    %4068 = vmatprep.subr.bf16.mxu0 0
    %4069 = vmatpush1.bf16.msra.mxu0 %v4052
    %4070 = vmatprep.subr.bf16.mxu0 0
    %4071 = vmatpush2.bf16.msra.mxu0 0
    %4072 = vmatprep.subr.bf16.mxu0 0
    %4073 = vmatpush2.bf16.msra.mxu0 0
    %4074 = vmatprep.subr.bf16.mxu0 0
    %4075 = vmatpush2.bf16.msra.mxu0 0
    %4076 = vmatprep.subr.bf16.mxu0 0
    %4077 = vmatpush2.bf16.msra.mxu0 0
    %4078 = vmatprep.subr.bf16.mxu0 0
    %4079 = vmatpush2.bf16.msra.mxu0 0
    %4080 = vmatprep.subr.bf16.mxu0 0
    %4081 = vmatpush2.bf16.msra.mxu0 0
    %4082 = vmatprep.subr.bf16.mxu0 0
    %4083 = vmatpush2.bf16.msra.mxu0 0
    %4084 = vmatprep.subr.bf16.mxu0 0
    %4085 = vmatpush2.bf16.msra.mxu0 0
    %4086 = vmatprep.mubr.bf16.mxu0 0
    %4087 = vmatmul.mubr.bf16.gmra.mxu0 %v3325
    %v4088 = vpop.f32.mrf.mxu0
    %v4089 = vadd.f32 0.0, %v4088
    %v4090 = vpop.f32.mrf.mxu0
    %v4091 = vpop.f32.mrf.mxu0
    %v4092 = vpop.f32.mrf.mxu0
    %4093 = vdwg.mxu0
    %v4094 = vadd.f32 %v4040, %v4089
    %v4095 = vxor.u32 %v4094, 2147483648
    %v4096 = vmul.f32 %v4095, 1.442695
    %v4097 = vpow.pop %v4096
    %v4098 = vadd.f32 %v4097, 1.0
    %v4099 = vrcp.pop %v4098
    %v4100 = vmul.f32 1.0, %v4099
    %v4101 = vtanh.pop %v4094
    %v4102 = vmul.f32 %v4100, 0.0
    %4104 = vrot.lane.b32.xlu0 %v4101, 80
    %v4105 = vpop.permute.xlu0 %4104
    %v4107 = vmul.f32 %v4100, %v4105
    %4109 = vrot.lane.b32.xlu0 %v4107, 16
    %v4110 = vpop.permute.xlu0 %4109
    %v4112 = vadd.f32 %v4102, %v4110
    %v4113 = vtanh.pop %v4112
    %4115 = vrot.lane.b32.xlu0 %v4113, 16
    %v4116 = vpop.permute.xlu0 %4115
    %v4118 = vmul.f32 %v4100, %v4116
    %4120 = vrot.lane.b32.xlu0 %v4118, 96
    %v4121 = vpop.permute.xlu0 %4120
    %4123 = vst.msk [vmem:[#allocation3] sm:$0x3] %vm3396, %v4121
    %v4124 = vpack.c.bf16 %v4118, %v4118
    %4126 = vrot.lane.b32.xlu0 %v4124, 96
    %v4127 = vpop.permute.xlu0 %4126
    %v4129 = vsel %vm260, %v4127, 0
    %4131 = vmatprep.subr.bf16.mxu0 0
    %4132 = vmatpush1.bf16.msra.mxu0 0
    %4133 = vmatprep.subr.bf16.mxu0 0
    %4134 = vmatpush1.bf16.msra.mxu0 0
    %4135 = vmatprep.subr.bf16.mxu0 0
    %4136 = vmatpush1.bf16.msra.mxu0 0
    %4137 = vmatprep.subr.bf16.mxu0 0
    %4138 = vmatpush1.bf16.msra.mxu0 0
    %4139 = vmatprep.subr.bf16.mxu0 0
    %4140 = vmatpush1.bf16.msra.mxu0 0
    %4141 = vmatprep.subr.bf16.mxu0 0
    %4142 = vmatpush1.bf16.msra.mxu0 0
    %4143 = vmatprep.subr.bf16.mxu0 0
    %4144 = vmatpush1.bf16.msra.mxu0 0
    %4145 = vmatprep.subr.bf16.mxu0 0
    %4146 = vmatpush1.bf16.msra.mxu0 %v4052
    %4147 = vmatprep.subr.bf16.mxu0 0
    %4148 = vmatpush2.bf16.msra.mxu0 0
    %4149 = vmatprep.subr.bf16.mxu0 0
    %4150 = vmatpush2.bf16.msra.mxu0 0
    %4151 = vmatprep.subr.bf16.mxu0 0
    %4152 = vmatpush2.bf16.msra.mxu0 0
    %4153 = vmatprep.subr.bf16.mxu0 0
    %4154 = vmatpush2.bf16.msra.mxu0 0
    %4155 = vmatprep.subr.bf16.mxu0 0
    %4156 = vmatpush2.bf16.msra.mxu0 0
    %4157 = vmatprep.subr.bf16.mxu0 0
    %4158 = vmatpush2.bf16.msra.mxu0 0
    %4159 = vmatprep.subr.bf16.mxu0 0
    %4160 = vmatpush2.bf16.msra.mxu0 0
    %4161 = vmatprep.subr.bf16.mxu0 0
    %4162 = vmatpush2.bf16.msra.mxu0 0
    %4163 = vmatprep.mubr.bf16.mxu0 0
    %4164 = vmatmul.mubr.bf16.gmra.mxu0 %v4129
    %v4165 = vpop.f32.mrf.mxu0
    %v4166 = vadd.f32 0.0, %v4165
    %v4167 = vpop.f32.mrf.mxu0
    %v4168 = vpop.f32.mrf.mxu0
    %v4169 = vpop.f32.mrf.mxu0
    %4170 = vdwg.mxu0
    %v4172 = vrot.slane %v4166, 6
    %v4174 = vadd.f32 %v4040, %v4172
    %v4175 = vxor.u32 %v4174, 2147483648
    %v4176 = vmul.f32 %v4175, 1.442695
    %v4177 = vpow.pop %v4176
    %v4178 = vadd.f32 %v4177, 1.0
    %v4179 = vrcp.pop %v4178
    %v4180 = vmul.f32 1.0, %v4179
    %v4181 = vtanh.pop %v4174
    %v4183 = vrot.slane %v4112, 6
    %v4185 = vmul.f32 %v4180, %v4183
    %4187 = vrot.lane.b32.xlu0 %v4181, 80
    %v4188 = vpop.permute.xlu0 %4187
    %v4190 = vmul.f32 %v4180, %v4188
    %4192 = vrot.lane.b32.xlu0 %v4190, 16
    %v4193 = vpop.permute.xlu0 %4192
    %v4195 = vadd.f32 %v4185, %v4193
    %v4196 = vtanh.pop %v4195
    %4198 = vrot.lane.b32.xlu0 %v4196, 16
    %v4199 = vpop.permute.xlu0 %4198
    %v4201 = vmul.f32 %v4180, %v4199
    %4203 = vrot.lane.b32.xlu0 %v4201, 96
    %v4204 = vpop.permute.xlu0 %4203
    %4206 = vst.msk [vmem:[#allocation3] sm:$0xc] %vm3480, %v4204
    %v4207 = vpack.c.bf16 %v4201, %v4201
    %v4209 = vrot.slane %v4207, 1
    %4210 = vrot.lane.b32.xlu0 %v4209, 96
    %v4211 = vpop.permute.xlu0 %4210
    %v4213 = vsel %vm260, %v4211, 0
    %4215 = vmatprep.subr.bf16.mxu0 0
    %4216 = vmatpush1.bf16.msra.mxu0 0
    %4217 = vmatprep.subr.bf16.mxu0 0
    %4218 = vmatpush1.bf16.msra.mxu0 0
    %4219 = vmatprep.subr.bf16.mxu0 0
    %4220 = vmatpush1.bf16.msra.mxu0 0
    %4221 = vmatprep.subr.bf16.mxu0 0
    %4222 = vmatpush1.bf16.msra.mxu0 0
    %4223 = vmatprep.subr.bf16.mxu0 0
    %4224 = vmatpush1.bf16.msra.mxu0 0
    %4225 = vmatprep.subr.bf16.mxu0 0
    %4226 = vmatpush1.bf16.msra.mxu0 0
    %4227 = vmatprep.subr.bf16.mxu0 0
    %4228 = vmatpush1.bf16.msra.mxu0 0
    %4229 = vmatprep.subr.bf16.mxu0 0
    %4230 = vmatpush1.bf16.msra.mxu0 %v4052
    %4231 = vmatprep.subr.bf16.mxu0 0
    %4232 = vmatpush2.bf16.msra.mxu0 0
    %4233 = vmatprep.subr.bf16.mxu0 0
    %4234 = vmatpush2.bf16.msra.mxu0 0
    %4235 = vmatprep.subr.bf16.mxu0 0
    %4236 = vmatpush2.bf16.msra.mxu0 0
    %4237 = vmatprep.subr.bf16.mxu0 0
    %4238 = vmatpush2.bf16.msra.mxu0 0
    %4239 = vmatprep.subr.bf16.mxu0 0
    %4240 = vmatpush2.bf16.msra.mxu0 0
    %4241 = vmatprep.subr.bf16.mxu0 0
    %4242 = vmatpush2.bf16.msra.mxu0 0
    %4243 = vmatprep.subr.bf16.mxu0 0
    %4244 = vmatpush2.bf16.msra.mxu0 0
    %4245 = vmatprep.subr.bf16.mxu0 0
    %4246 = vmatpush2.bf16.msra.mxu0 0
    %4247 = vmatprep.mubr.bf16.mxu0 0
    %4248 = vmatmul.mubr.bf16.gmra.mxu0 %v4213
    %v4249 = vpop.f32.mrf.mxu0
    %v4250 = vadd.f32 0.0, %v4249
    %v4251 = vpop.f32.mrf.mxu0
    %v4252 = vpop.f32.mrf.mxu0
    %v4253 = vpop.f32.mrf.mxu0
    %4254 = vdwg.mxu0
    %v4256 = vrot.slane %v4250, 4
    %v4258 = vadd.f32 %v4040, %v4256
    %v4259 = vxor.u32 %v4258, 2147483648
    %v4260 = vmul.f32 %v4259, 1.442695
    %v4261 = vpow.pop %v4260
    %v4262 = vadd.f32 %v4261, 1.0
    %v4263 = vrcp.pop %v4262
    %v4264 = vmul.f32 1.0, %v4263
    %v4265 = vtanh.pop %v4258
    %v4267 = vrot.slane %v4195, 6
    %v4269 = vmul.f32 %v4264, %v4267
    %4271 = vrot.lane.b32.xlu0 %v4265, 80
    %v4272 = vpop.permute.xlu0 %4271
    %v4274 = vmul.f32 %v4264, %v4272
    %4276 = vrot.lane.b32.xlu0 %v4274, 16
    %v4277 = vpop.permute.xlu0 %4276
    %v4279 = vadd.f32 %v4269, %v4277
    %v4280 = vtanh.pop %v4279
    %4282 = vrot.lane.b32.xlu0 %v4280, 16
    %v4283 = vpop.permute.xlu0 %4282
    %v4285 = vmul.f32 %v4264, %v4283
    %4287 = vrot.lane.b32.xlu0 %v4285, 96
    %v4288 = vpop.permute.xlu0 %4287
    %4290 = vst.msk [vmem:[#allocation3] sm:$0x30] %vm3565, %v4288
    %v4291 = vpack.c.bf16 %v4285, %v4285
    %v4293 = vrot.slane %v4291, 2
    %4294 = vrot.lane.b32.xlu0 %v4293, 96
    %v4295 = vpop.permute.xlu0 %4294
    %v4297 = vsel %vm260, %v4295, 0
    %4299 = vmatprep.subr.bf16.mxu0 0
    %4300 = vmatpush1.bf16.msra.mxu0 0
    %4301 = vmatprep.subr.bf16.mxu0 0
    %4302 = vmatpush1.bf16.msra.mxu0 0
    %4303 = vmatprep.subr.bf16.mxu0 0
    %4304 = vmatpush1.bf16.msra.mxu0 0
    %4305 = vmatprep.subr.bf16.mxu0 0
    %4306 = vmatpush1.bf16.msra.mxu0 0
    %4307 = vmatprep.subr.bf16.mxu0 0
    %4308 = vmatpush1.bf16.msra.mxu0 0
    %4309 = vmatprep.subr.bf16.mxu0 0
    %4310 = vmatpush1.bf16.msra.mxu0 0
    %4311 = vmatprep.subr.bf16.mxu0 0
    %4312 = vmatpush1.bf16.msra.mxu0 0
    %4313 = vmatprep.subr.bf16.mxu0 0
    %4314 = vmatpush1.bf16.msra.mxu0 %v4052
    %4315 = vmatprep.subr.bf16.mxu0 0
    %4316 = vmatpush2.bf16.msra.mxu0 0
    %4317 = vmatprep.subr.bf16.mxu0 0
    %4318 = vmatpush2.bf16.msra.mxu0 0
    %4319 = vmatprep.subr.bf16.mxu0 0
    %4320 = vmatpush2.bf16.msra.mxu0 0
    %4321 = vmatprep.subr.bf16.mxu0 0
    %4322 = vmatpush2.bf16.msra.mxu0 0
    %4323 = vmatprep.subr.bf16.mxu0 0
    %4324 = vmatpush2.bf16.msra.mxu0 0
    %4325 = vmatprep.subr.bf16.mxu0 0
    %4326 = vmatpush2.bf16.msra.mxu0 0
    %4327 = vmatprep.subr.bf16.mxu0 0
    %4328 = vmatpush2.bf16.msra.mxu0 0
    %4329 = vmatprep.subr.bf16.mxu0 0
    %4330 = vmatpush2.bf16.msra.mxu0 0
    %4331 = vmatprep.mubr.bf16.mxu0 0
    %4332 = vmatmul.mubr.bf16.gmra.mxu0 %v4297
    %v4333 = vpop.f32.mrf.mxu0
    %v4334 = vadd.f32 0.0, %v4333
    %v4335 = vpop.f32.mrf.mxu0
    %v4336 = vpop.f32.mrf.mxu0
    %v4337 = vpop.f32.mrf.mxu0
    %4338 = vdwg.mxu0
    %v4340 = vrot.slane %v4334, 2
    %v4342 = vadd.f32 %v4040, %v4340
    %v4343 = vxor.u32 %v4342, 2147483648
    %v4344 = vmul.f32 %v4343, 1.442695
    %v4345 = vpow.pop %v4344
    %v4346 = vadd.f32 %v4345, 1.0
    %v4347 = vrcp.pop %v4346
    %v4348 = vmul.f32 1.0, %v4347
    %v4349 = vtanh.pop %v4342
    %v4351 = vrot.slane %v4279, 6
    %v4353 = vmul.f32 %v4348, %v4351
    %4355 = vrot.lane.b32.xlu0 %v4349, 80
    %v4356 = vpop.permute.xlu0 %4355
    %v4358 = vmul.f32 %v4348, %v4356
    %4360 = vrot.lane.b32.xlu0 %v4358, 16
    %v4361 = vpop.permute.xlu0 %4360
    %v4363 = vadd.f32 %v4353, %v4361
    %v4364 = vtanh.pop %v4363
    %4366 = vrot.lane.b32.xlu0 %v4364, 16
    %v4367 = vpop.permute.xlu0 %4366
    %v4369 = vmul.f32 %v4348, %v4367
    %4371 = vrot.lane.b32.xlu0 %v4369, 96
    %v4372 = vpop.permute.xlu0 %4371
    %4374 = vst.msk [vmem:[#allocation3] sm:$0xc0] %vm3650, %v4372
    %v4375 = vpack.c.bf16 %v4369, %v4369
    %v4377 = vrot.slane %v4375, 3
    %4378 = vrot.lane.b32.xlu0 %v4377, 96
    %v4379 = vpop.permute.xlu0 %4378
    %v4381 = vsel %vm260, %v4379, 0
    %4383 = vmatprep.subr.bf16.mxu0 0
    %4384 = vmatpush1.bf16.msra.mxu0 0
    %4385 = vmatprep.subr.bf16.mxu0 0
    %4386 = vmatpush1.bf16.msra.mxu0 0
    %4387 = vmatprep.subr.bf16.mxu0 0
    %4388 = vmatpush1.bf16.msra.mxu0 0
    %4389 = vmatprep.subr.bf16.mxu0 0
    %4390 = vmatpush1.bf16.msra.mxu0 0
    %4391 = vmatprep.subr.bf16.mxu0 0
    %4392 = vmatpush1.bf16.msra.mxu0 0
    %4393 = vmatprep.subr.bf16.mxu0 0
    %4394 = vmatpush1.bf16.msra.mxu0 0
    %4395 = vmatprep.subr.bf16.mxu0 0
    %4396 = vmatpush1.bf16.msra.mxu0 0
    %4397 = vmatprep.subr.bf16.mxu0 0
    %4398 = vmatpush1.bf16.msra.mxu0 %v4052
    %4399 = vmatprep.subr.bf16.mxu0 0
    %4400 = vmatpush2.bf16.msra.mxu0 0
    %4401 = vmatprep.subr.bf16.mxu0 0
    %4402 = vmatpush2.bf16.msra.mxu0 0
    %4403 = vmatprep.subr.bf16.mxu0 0
    %4404 = vmatpush2.bf16.msra.mxu0 0
    %4405 = vmatprep.subr.bf16.mxu0 0
    %4406 = vmatpush2.bf16.msra.mxu0 0
    %4407 = vmatprep.subr.bf16.mxu0 0
    %4408 = vmatpush2.bf16.msra.mxu0 0
    %4409 = vmatprep.subr.bf16.mxu0 0
    %4410 = vmatpush2.bf16.msra.mxu0 0
    %4411 = vmatprep.subr.bf16.mxu0 0
    %4412 = vmatpush2.bf16.msra.mxu0 0
    %4413 = vmatprep.subr.bf16.mxu0 0
    %4414 = vmatpush2.bf16.msra.mxu0 0
    %4415 = vmatprep.mubr.bf16.mxu0 0
    %4416 = vmatmul.mubr.bf16.gmra.mxu0 %v4381
    %v4417 = vpop.f32.mrf.mxu0
    %v4418 = vadd.f32 0.0, %v4417
    %v4419 = vpop.f32.mrf.mxu0
    %v4420 = vpop.f32.mrf.mxu0
    %v4421 = vpop.f32.mrf.mxu0
    %4422 = vdwg.mxu0
    %v4423 = vadd.f32 %v4043, %v4418
    %v4424 = vxor.u32 %v4423, 2147483648
    %v4425 = vmul.f32 %v4424, 1.442695
    %v4426 = vpow.pop %v4425
    %v4427 = vadd.f32 %v4426, 1.0
    %v4428 = vrcp.pop %v4427
    %v4429 = vmul.f32 1.0, %v4428
    %v4430 = vtanh.pop %v4423
    %v4432 = vrot.slane %v4363, 6
    %v4434 = vmul.f32 %v4429, %v4432
    %4436 = vrot.lane.b32.xlu0 %v4430, 80
    %v4437 = vpop.permute.xlu0 %4436
    %v4439 = vmul.f32 %v4429, %v4437
    %4441 = vrot.lane.b32.xlu0 %v4439, 16
    %v4442 = vpop.permute.xlu0 %4441
    %v4444 = vadd.f32 %v4434, %v4442
    %v4445 = vtanh.pop %v4444
    %4447 = vrot.lane.b32.xlu0 %v4445, 16
    %v4448 = vpop.permute.xlu0 %4447
    %v4450 = vmul.f32 %v4429, %v4448
    %4452 = vrot.lane.b32.xlu0 %v4450, 96
    %v4453 = vpop.permute.xlu0 %4452
    %4455 = vst.msk [vmem:[#allocation3 + $0x8] sm:$0x3] %vm3396, %v4453
    %v4456 = vpack.c.bf16 %v4450, %v4450
    %4458 = vrot.lane.b32.xlu0 %v4456, 96
    %v4459 = vpop.permute.xlu0 %4458
    %v4461 = vsel %vm260, %v4459, 0
    %4463 = vmatprep.subr.bf16.mxu0 0
    %4464 = vmatpush1.bf16.msra.mxu0 0
    %4465 = vmatprep.subr.bf16.mxu0 0
    %4466 = vmatpush1.bf16.msra.mxu0 0
    %4467 = vmatprep.subr.bf16.mxu0 0
    %4468 = vmatpush1.bf16.msra.mxu0 0
    %4469 = vmatprep.subr.bf16.mxu0 0
    %4470 = vmatpush1.bf16.msra.mxu0 0
    %4471 = vmatprep.subr.bf16.mxu0 0
    %4472 = vmatpush1.bf16.msra.mxu0 0
    %4473 = vmatprep.subr.bf16.mxu0 0
    %4474 = vmatpush1.bf16.msra.mxu0 0
    %4475 = vmatprep.subr.bf16.mxu0 0
    %4476 = vmatpush1.bf16.msra.mxu0 0
    %4477 = vmatprep.subr.bf16.mxu0 0
    %4478 = vmatpush1.bf16.msra.mxu0 %v4052
    %4479 = vmatprep.subr.bf16.mxu0 0
    %4480 = vmatpush2.bf16.msra.mxu0 0
    %4481 = vmatprep.subr.bf16.mxu0 0
    %4482 = vmatpush2.bf16.msra.mxu0 0
    %4483 = vmatprep.subr.bf16.mxu0 0
    %4484 = vmatpush2.bf16.msra.mxu0 0
    %4485 = vmatprep.subr.bf16.mxu0 0
    %4486 = vmatpush2.bf16.msra.mxu0 0
    %4487 = vmatprep.subr.bf16.mxu0 0
    %4488 = vmatpush2.bf16.msra.mxu0 0
    %4489 = vmatprep.subr.bf16.mxu0 0
    %4490 = vmatpush2.bf16.msra.mxu0 0
    %4491 = vmatprep.subr.bf16.mxu0 0
    %4492 = vmatpush2.bf16.msra.mxu0 0
    %4493 = vmatprep.subr.bf16.mxu0 0
    %4494 = vmatpush2.bf16.msra.mxu0 0
    %4495 = vmatprep.mubr.bf16.mxu0 0
    %4496 = vmatmul.mubr.bf16.gmra.mxu0 %v4461
    %v4497 = vpop.f32.mrf.mxu0
    %v4498 = vadd.f32 0.0, %v4497
    %v4499 = vpop.f32.mrf.mxu0
    %v4500 = vpop.f32.mrf.mxu0
    %v4501 = vpop.f32.mrf.mxu0
    %4502 = vdwg.mxu0
    %v4504 = vrot.slane %v4498, 6
    %v4506 = vadd.f32 %v4043, %v4504
    %v4507 = vxor.u32 %v4506, 2147483648
    %v4508 = vmul.f32 %v4507, 1.442695
    %v4509 = vpow.pop %v4508
    %v4510 = vadd.f32 %v4509, 1.0
    %v4511 = vrcp.pop %v4510
    %v4512 = vmul.f32 1.0, %v4511
    %v4513 = vtanh.pop %v4506
    %v4515 = vrot.slane %v4444, 6
    %v4517 = vmul.f32 %v4512, %v4515
    %4519 = vrot.lane.b32.xlu0 %v4513, 80
    %v4520 = vpop.permute.xlu0 %4519
    %v4522 = vmul.f32 %v4512, %v4520
    %4524 = vrot.lane.b32.xlu0 %v4522, 16
    %v4525 = vpop.permute.xlu0 %4524
    %v4527 = vadd.f32 %v4517, %v4525
    %v4528 = vtanh.pop %v4527
    %4530 = vrot.lane.b32.xlu0 %v4528, 16
    %v4531 = vpop.permute.xlu0 %4530
    %v4533 = vmul.f32 %v4512, %v4531
    %4535 = vrot.lane.b32.xlu0 %v4533, 96
    %v4536 = vpop.permute.xlu0 %4535
    %4538 = vst.msk [vmem:[#allocation3 + $0x8] sm:$0xc] %vm3480, %v4536
    %v4539 = vpack.c.bf16 %v4533, %v4533
    %v4541 = vrot.slane %v4539, 1
    %4542 = vrot.lane.b32.xlu0 %v4541, 96
    %v4543 = vpop.permute.xlu0 %4542
    %v4545 = vsel %vm260, %v4543, 0
    %4547 = vmatprep.subr.bf16.mxu0 0
    %4548 = vmatpush1.bf16.msra.mxu0 0
    %4549 = vmatprep.subr.bf16.mxu0 0
    %4550 = vmatpush1.bf16.msra.mxu0 0
    %4551 = vmatprep.subr.bf16.mxu0 0
    %4552 = vmatpush1.bf16.msra.mxu0 0
    %4553 = vmatprep.subr.bf16.mxu0 0
    %4554 = vmatpush1.bf16.msra.mxu0 0
    %4555 = vmatprep.subr.bf16.mxu0 0
    %4556 = vmatpush1.bf16.msra.mxu0 0
    %4557 = vmatprep.subr.bf16.mxu0 0
    %4558 = vmatpush1.bf16.msra.mxu0 0
    %4559 = vmatprep.subr.bf16.mxu0 0
    %4560 = vmatpush1.bf16.msra.mxu0 0
    %4561 = vmatprep.subr.bf16.mxu0 0
    %4562 = vmatpush1.bf16.msra.mxu0 %v4052
    %4563 = vmatprep.subr.bf16.mxu0 0
    %4564 = vmatpush2.bf16.msra.mxu0 0
    %4565 = vmatprep.subr.bf16.mxu0 0
    %4566 = vmatpush2.bf16.msra.mxu0 0
    %4567 = vmatprep.subr.bf16.mxu0 0
    %4568 = vmatpush2.bf16.msra.mxu0 0
    %4569 = vmatprep.subr.bf16.mxu0 0
    %4570 = vmatpush2.bf16.msra.mxu0 0
    %4571 = vmatprep.subr.bf16.mxu0 0
    %4572 = vmatpush2.bf16.msra.mxu0 0
    %4573 = vmatprep.subr.bf16.mxu0 0
    %4574 = vmatpush2.bf16.msra.mxu0 0
    %4575 = vmatprep.subr.bf16.mxu0 0
    %4576 = vmatpush2.bf16.msra.mxu0 0
    %4577 = vmatprep.subr.bf16.mxu0 0
    %4578 = vmatpush2.bf16.msra.mxu0 0
    %4579 = vmatprep.mubr.bf16.mxu0 0
    %4580 = vmatmul.mubr.bf16.gmra.mxu0 %v4545
    %v4581 = vpop.f32.mrf.mxu0
    %v4582 = vadd.f32 0.0, %v4581
    %v4583 = vpop.f32.mrf.mxu0
    %v4584 = vpop.f32.mrf.mxu0
    %v4585 = vpop.f32.mrf.mxu0
    %4586 = vdwg.mxu0
    %v4588 = vrot.slane %v4582, 4
    %v4590 = vadd.f32 %v4043, %v4588
    %v4591 = vxor.u32 %v4590, 2147483648
    %v4592 = vmul.f32 %v4591, 1.442695
    %v4593 = vpow.pop %v4592
    %v4594 = vadd.f32 %v4593, 1.0
    %v4595 = vrcp.pop %v4594
    %v4596 = vmul.f32 1.0, %v4595
    %v4597 = vtanh.pop %v4590
    %v4599 = vrot.slane %v4527, 6
    %v4601 = vmul.f32 %v4596, %v4599
    %4603 = vrot.lane.b32.xlu0 %v4597, 80
    %v4604 = vpop.permute.xlu0 %4603
    %v4606 = vmul.f32 %v4596, %v4604
    %4608 = vrot.lane.b32.xlu0 %v4606, 16
    %v4609 = vpop.permute.xlu0 %4608
    %v4611 = vadd.f32 %v4601, %v4609
    %v4612 = vtanh.pop %v4611
    %4614 = vrot.lane.b32.xlu0 %v4612, 16
    %v4615 = vpop.permute.xlu0 %4614
    %v4617 = vmul.f32 %v4596, %v4615
    %4619 = vrot.lane.b32.xlu0 %v4617, 96
    %v4620 = vpop.permute.xlu0 %4619
    %4622 = vst.msk [vmem:[#allocation3 + $0x8] sm:$0x30] %vm3565, %v4620
    %v4623 = vpack.c.bf16 %v4617, %v4617
    %v4625 = vrot.slane %v4623, 2
    %4626 = vrot.lane.b32.xlu0 %v4625, 96
    %v4627 = vpop.permute.xlu0 %4626
    %v4629 = vsel %vm260, %v4627, 0
    %4631 = vmatprep.subr.bf16.mxu0 0
    %4632 = vmatpush1.bf16.msra.mxu0 0
    %4633 = vmatprep.subr.bf16.mxu0 0
    %4634 = vmatpush1.bf16.msra.mxu0 0
    %4635 = vmatprep.subr.bf16.mxu0 0
    %4636 = vmatpush1.bf16.msra.mxu0 0
    %4637 = vmatprep.subr.bf16.mxu0 0
    %4638 = vmatpush1.bf16.msra.mxu0 0
    %4639 = vmatprep.subr.bf16.mxu0 0
    %4640 = vmatpush1.bf16.msra.mxu0 0
    %4641 = vmatprep.subr.bf16.mxu0 0
    %4642 = vmatpush1.bf16.msra.mxu0 0
    %4643 = vmatprep.subr.bf16.mxu0 0
    %4644 = vmatpush1.bf16.msra.mxu0 0
    %4645 = vmatprep.subr.bf16.mxu0 0
    %4646 = vmatpush1.bf16.msra.mxu0 %v4052
    %4647 = vmatprep.subr.bf16.mxu0 0
    %4648 = vmatpush2.bf16.msra.mxu0 0
    %4649 = vmatprep.subr.bf16.mxu0 0
    %4650 = vmatpush2.bf16.msra.mxu0 0
    %4651 = vmatprep.subr.bf16.mxu0 0
    %4652 = vmatpush2.bf16.msra.mxu0 0
    %4653 = vmatprep.subr.bf16.mxu0 0
    %4654 = vmatpush2.bf16.msra.mxu0 0
    %4655 = vmatprep.subr.bf16.mxu0 0
    %4656 = vmatpush2.bf16.msra.mxu0 0
    %4657 = vmatprep.subr.bf16.mxu0 0
    %4658 = vmatpush2.bf16.msra.mxu0 0
    %4659 = vmatprep.subr.bf16.mxu0 0
    %4660 = vmatpush2.bf16.msra.mxu0 0
    %4661 = vmatprep.subr.bf16.mxu0 0
    %4662 = vmatpush2.bf16.msra.mxu0 0
    %4663 = vmatprep.mubr.bf16.mxu0 0
    %4664 = vmatmul.mubr.bf16.gmra.mxu0 %v4629
    %v4665 = vpop.f32.mrf.mxu0
    %v4666 = vadd.f32 0.0, %v4665
    %v4667 = vpop.f32.mrf.mxu0
    %v4668 = vpop.f32.mrf.mxu0
    %v4669 = vpop.f32.mrf.mxu0
    %4670 = vdwg.mxu0
    %v4672 = vrot.slane %v4666, 2
    %v4674 = vadd.f32 %v4043, %v4672
    %v4675 = vxor.u32 %v4674, 2147483648
    %v4676 = vmul.f32 %v4675, 1.442695
    %v4677 = vpow.pop %v4676
    %v4678 = vadd.f32 %v4677, 1.0
    %v4679 = vrcp.pop %v4678
    %v4680 = vmul.f32 1.0, %v4679
    %v4681 = vtanh.pop %v4674
    %v4683 = vrot.slane %v4611, 6
    %v4685 = vmul.f32 %v4680, %v4683
    %4687 = vrot.lane.b32.xlu0 %v4681, 80
    %v4688 = vpop.permute.xlu0 %4687
    %v4690 = vmul.f32 %v4680, %v4688
    %4692 = vrot.lane.b32.xlu0 %v4690, 16
    %v4693 = vpop.permute.xlu0 %4692
    %v4695 = vadd.f32 %v4685, %v4693
    %v4696 = vtanh.pop %v4695
    %4698 = vrot.lane.b32.xlu0 %v4696, 16
    %v4699 = vpop.permute.xlu0 %4698
    %v4701 = vmul.f32 %v4680, %v4699
    %4703 = vrot.lane.b32.xlu0 %v4701, 96
    %v4704 = vpop.permute.xlu0 %4703
    %4706 = vst.msk [vmem:[#allocation3 + $0x8] sm:$0xc0] %vm3650, %v4704
    %v4707 = vld [vmem:[#allocation3] sm:$0xff]
    %v4708 = vld [vmem:[#allocation3 + $0x8] sm:$0xff]
    %v4709 = vtanh.pop %v4707
    %v4710 = vtanh.pop %v4708
    %4711 = vst.msk [vmem:[%s24] sm:$0xff] %vm260, %v4709
    %4712 = vst.msk [vmem:[%s24 + $0x8] sm:$0xff] %vm260, %v4710
    // Predicated region
    $region150: #{lstmvae_forward.1} parent=1 // pred_check
      _
    $region151: #{lstmvae_forward.1} parent=1 // pred_check_branch
      %4714 = sbr.rel (0) target = $region153
    $region152: #{lstmvae_forward.1} parent=1 // pred_region
      _
    $region153: #{lstmvae_forward.1} parent=1 // pred_fallthru
      _
    // Predicated region
    $region154: #{lstmvae_forward.1} parent=1 // pred_check
      _
    $region155: #{lstmvae_forward.1} parent=1 // pred_check_branch
      %4716 = sbr.rel (0) target = $region157
    $region156: #{lstmvae_forward.1} parent=1 // pred_region
      _
    $region157: #{lstmvae_forward.1} parent=1 // pred_fallthru
      _
    %4717 = vsyncpa [#allocation5], 1
    %4718 = vsyncpa [#allocation7], 1
    %4719 = vsyncpa [#allocation10], 1
    %4720 = vsyncpa [#allocation13], 1
    %4721 = vsyncpa [#allocation16], 1
    %4722 = vsyncpa [#allocation19], 1
    %4723 = vsyncpa [#allocation22], 1

</llo_original>
